<compile_context>
chip_gen: v7x
topology: tpu7x:2x2x1
jax: 0.10.0
libtpu: 0.0.40
codegen_flags: <defaults>
</compile_context>

<pallas_src>
import jax
import jax.numpy as jnp
from jax.experimental import pallas as pl
from jax.experimental.pallas import tpu as pltpu


# ---------------------------------------------------------------------------
# Fused whole-network kernel (feat1 -> acvt1 -> feat2 -> acvt2, both streams)
# ---------------------------------------------------------------------------

def _gcn_kernel(x_ref, w1t_ref, p1_ref, b1_ref, bn1s_ref, bn1h_ref, sel1_ref,
                w2t_ref, p2_ref, b2_ref, bn2s_ref, bn2h_ref, sel2_ref, o_ref):
    f32 = jnp.float32

    def conv_circ(xin, wt_ref, pt_ref, b_ref, n_taps, center):
        # Circular conv along the lane (W) axis:
        #   out[o, w] = bias[o] + sum_j wt[j, o, :] . xin[:, (w + j - center) mod W]
        # The per-tap circular shift is a one-hot permutation matmul (MXU).
        out = None
        for j in range(n_taps):
            shifted = xin if j == center else jnp.dot(
                xin, pt_ref[j], preferred_element_type=f32)
            contrib = jnp.dot(wt_ref[j], shifted, preferred_element_type=f32)
            out = contrib if out is None else out + contrib
        return out + b_ref[...]                    # bias: [O, 1] broadcast

    def attention(h1, h2):
        # GraphConv core: softmax(LeakyReLU(h1 @ h2^T, 0.2), dim=1) @ h1
        a = jax.lax.dot_general(h1, h2, (((1,), (1,)), ((), ())),
                                preferred_element_type=f32)      # [N, M]
        a = jnp.where(a > 0, a, 0.2 * a)                         # LeakyReLU(0.2)
        a = a - jnp.max(a, axis=0, keepdims=True)                # softmax(dim=1)
        e = jnp.exp(a)
        s = e / jnp.sum(e, axis=0, keepdims=True)
        return jnp.dot(s, h1, preferred_element_type=f32)

    def bn_pool_relu(y, s_ref, h_ref, sel_ref):
        # eval-BatchNorm -> MaxPool(1,2) -> ReLU (pool = even/odd selector matmuls)
        y = y * s_ref[...] + h_ref[...]
        even = jnp.dot(y, sel_ref[0], preferred_element_type=f32)
        odd = jnp.dot(y, sel_ref[1], preferred_element_type=f32)
        return jnp.maximum(jnp.maximum(even, odd), 0.0)

    # ---- layer 1: feat1(x, x) / feat1(n, n) + acvt1 (conv computed once) ----
    pooled = []
    for s in range(2):                              # stream 0 = x half, 1 = n half
        xin = x_ref[0, s]                           # [Cin*KH = 25, W = 25]
        h = conv_circ(xin, w1t_ref, p1_ref, b1_ref, 11, 5)          # [32, 25]
        att = attention(h, h)                       # h1 == h2 in feat1
        pooled.append(bn_pool_relu(att, bn1s_ref, bn1h_ref, sel1_ref))  # [32, 12]

    # ---- layer 2: feat2(x, n) / feat2(n, x) + acvt2 (cross-stream) ----
    ca = conv_circ(pooled[0], w2t_ref, p2_ref, b2_ref, 5, 2)        # [32, 12]
    cn = conv_circ(pooled[1], w2t_ref, p2_ref, b2_ref, 5, 2)
    oa = bn_pool_relu(attention(ca, cn), bn2s_ref, bn2h_ref, sel2_ref)  # [32, 6]
    on = bn_pool_relu(attention(cn, ca), bn2s_ref, bn2h_ref, sel2_ref)

    # lane-concatenated output -> the final flatten is a free reshape outside.
    o_ref[0, :, 0:6] = oa
    o_ref[0, :, 6:12] = on


def _fused_gcn(xp, kp):
    """xp: [B, 2, 25, 25] packed input -> [B, 32, 12] lane-concatenated acts."""
    B = xp.shape[0]

    def full(shape):
        return pl.BlockSpec(shape, lambda b: (0,) * len(shape))

    return pl.pallas_call(
        _gcn_kernel,
        out_shape=jax.ShapeDtypeStruct((B, 32, 12), jnp.float32),
        grid=(B,),
        in_specs=[
            pl.BlockSpec((1, 2, 25, 25), lambda b: (b, 0, 0, 0)),  # packed input
            full((11, 32, 25)),    # layer-1 conv taps
            full((11, 25, 25)),    # layer-1 circular-shift permutations
            full((32, 1)),         # b1
            full((32, 1)),         # bn1 scale
            full((32, 1)),         # bn1 shift
            full((2, 25, 12)),     # pool-1 even/odd selectors
            full((5, 32, 32)),     # layer-2 conv taps
            full((5, 12, 12)),     # layer-2 circular-shift permutations
            full((32, 1)),         # b2
            full((32, 1)),         # bn2 scale
            full((32, 1)),         # bn2 shift
            full((2, 12, 6)),      # pool-2 even/odd selectors
        ],
        out_specs=pl.BlockSpec((1, 32, 12), lambda b: (b, 0, 0)),
        compiler_params=pltpu.CompilerParams(
            dimension_semantics=("parallel",)),  # 2 TCs on v7x; cheap loop on v5e/v6e
    )(xp, kp["w1t"], kp["p1"], kp["b1"], kp["bn1_s"], kp["bn1_h"], kp["sel1"],
      kp["w2t"], kp["p2"], kp["b2"], kp["bn2_s"], kp["bn2_h"], kp["sel2"])


# ---------------------------------------------------------------------------
# Linear head kernel
# ---------------------------------------------------------------------------

def _head_kernel(x_ref, w_ref, b_ref, o_ref):
    o_ref[...] = jnp.dot(x_ref[...], w_ref[...],
                         preferred_element_type=jnp.float32) + b_ref[...]


def _head_matmul(flat, wlT, blr):
    B, K = flat.shape
    N = wlT.shape[1]
    return pl.pallas_call(
        _head_kernel,
        out_shape=jax.ShapeDtypeStruct((B, N), jnp.float32),
        grid=(1,),
        in_specs=[pl.BlockSpec((B, K), lambda i: (0, 0)),
                  pl.BlockSpec((K, N), lambda i: (0, 0)),
                  pl.BlockSpec((1, N), lambda i: (0, 0))],
        out_specs=pl.BlockSpec((B, N), lambda i: (0, 0)),
    )(flat, wlT, blr)


# ---------------------------------------------------------------------------
# Parameters (PyTorch layout) and one-time packing into kernel layout
# ---------------------------------------------------------------------------

def init_params(key):
    ks = jax.random.split(key, 6)
    return {
        "w1": 0.05 * jax.random.normal(ks[0], (32, 5, 5, 11), jnp.float32),
        "b1": 0.05 * jax.random.normal(ks[1], (32,), jnp.float32),
        "w2": 0.05 * jax.random.normal(ks[2], (32, 32, 1, 5), jnp.float32),
        "b2": 0.05 * jax.random.normal(ks[3], (32,), jnp.float32),
        "wl": 0.05 * jax.random.normal(ks[4], (13, 32 * 12), jnp.float32),
        "bl": 0.05 * jax.random.normal(ks[5], (13,), jnp.float32),
        # BatchNorm2d defaults (eval mode)
        "bn1_g": jnp.ones((32,), jnp.float32), "bn1_b": jnp.zeros((32,), jnp.float32),
        "bn1_m": jnp.zeros((32,), jnp.float32), "bn1_v": jnp.ones((32,), jnp.float32),
        "bn2_g": jnp.ones((32,), jnp.float32), "bn2_b": jnp.zeros((32,), jnp.float32),
        "bn2_m": jnp.zeros((32,), jnp.float32), "bn2_v": jnp.ones((32,), jnp.float32),
    }


def pack_params(p, eps=1e-5):
    """One-time repack into kernel-friendly layouts (no per-forward weight glue)."""
    def perms(width, center, taps):
        # P_j[v, w] = 1  iff  v == (w + j - center) mod width,
        # so (x @ P_j)[k, w] = x[k, (w + j - center) mod width].
        v = jnp.arange(width)[:, None]
        w = jnp.arange(width)[None, :]
        return jnp.stack(
            [(v == (w + j - center) % width).astype(jnp.float32)
             for j in range(taps)])

    def pool_sel(w_in):
        w_out = w_in // 2
        r = jnp.arange(w_in)[:, None]
        c = jnp.arange(w_out)[None, :]
        even = (r == 2 * c).astype(jnp.float32)
        odd = (r == 2 * c + 1).astype(jnp.float32)
        return jnp.stack([even, odd])

    def bn_fold(g, b, m, v):
        scale = g / jnp.sqrt(v + eps)
        shift = b - m * scale
        return scale.reshape(-1, 1), shift.reshape(-1, 1)

    bn1_s, bn1_h = bn_fold(p["bn1_g"], p["bn1_b"], p["bn1_m"], p["bn1_v"])
    bn2_s, bn2_h = bn_fold(p["bn2_g"], p["bn2_b"], p["bn2_m"], p["bn2_v"])
    return {
        # w1t[j, o, k] = w1[o, c, i, j] with k = c*5 + i
        "w1t": jnp.transpose(p["w1"].reshape(32, 25, 11), (2, 0, 1)),
        "p1": perms(25, 5, 11),
        "b1": p["b1"].reshape(32, 1),
        "bn1_s": bn1_s, "bn1_h": bn1_h,
        "sel1": pool_sel(25),
        # w2t[j, o, c] = w2[o, c, 0, j]
        "w2t": jnp.transpose(p["w2"][:, :, 0, :], (2, 0, 1)),
        "p2": perms(12, 2, 5),
        "b2": p["b2"].reshape(32, 1),
        "bn2_s": bn2_s, "bn2_h": bn2_h,
        "sel2": pool_sel(12),
        # head weight stored pre-transposed
        "wlT": p["wl"].T,
        "blr": p["bl"].reshape(1, 13),
    }


# ---------------------------------------------------------------------------
# Forward pass (2 pallas_calls + a handful of tiny input/flatten reshapes)
# ---------------------------------------------------------------------------

@jax.jit
def gcn_forward(x, kp):
    """x: [B, 5, 5, 50] float32 (NCHW) -> [B, 13]."""
    B, C, H, W = x.shape
    assert W % 2 == 0
    half = W // 2
    # split into the two halves, merge (Cin, KH) into the conv contraction axis
    xa = x[..., :half].reshape(B, C * H, half)
    xn = x[..., half:].reshape(B, C * H, half)
    xp = jnp.stack([xa, xn], axis=1).astype(jnp.float32)   # [B, 2, 25, 25]

    acts = _fused_gcn(xp, kp)                              # [B, 32, 12]
    flat = acts.reshape(B, 32 * 12)                        # == cat + Flatten
    # Dropout(0.2) is identity at inference.
    return _head_matmul(flat, kp["wlT"], kp["blr"])        # [B, 13]


# ---------------------------------------------------------------------------
# Pure-JAX reference (for a numerical self-check only)
# ---------------------------------------------------------------------------

@jax.jit
def _reference_forward(x, p, eps=1e-5):
    hi = jax.lax.Precision.HIGHEST

    def conv_circ(x4, w, b, pad_w):
        xpad = jnp.concatenate([x4[..., -pad_w:], x4, x4[..., :pad_w]], axis=-1)
        out = jax.lax.conv_general_dilated(
            xpad, w, window_strides=(1, 1), padding="VALID",
            dimension_numbers=("NCHW", "OIHW", "NCHW"), precision=hi)
        return out + b.reshape(1, -1, 1, 1)

    def graph_conv(xi, ni, w, b, pad_w):
        h1 = conv_circ(xi, w, b, pad_w)
        h2 = conv_circ(ni, w, b, pad_w)
        B, N, C, F = h1.shape
        xf = h1.reshape(B, N, C * F)
        nf = h2.reshape(B, N, C * F)
        a = jnp.einsum("bnf,bmf->bnm", xf, nf, precision=hi)
        a = jnp.where(a > 0, a, 0.2 * a)
        a = jax.nn.softmax(a, axis=1)
        return jnp.einsum("bnm,bmf->bnf", a, xf, precision=hi).reshape(B, N, C, F)

    def acvt(x4, g, be, m, v):
        scale = g / jnp.sqrt(v + eps)
        shift = be - m * scale
        y = x4 * scale.reshape(1, -1, 1, 1) + shift.reshape(1, -1, 1, 1)
        B, C, H, W = y.shape
        y = y[..., : (W // 2) * 2].reshape(B, C, H, W // 2, 2).max(axis=-1)
        return jnp.maximum(y, 0.0)

    B = x.shape[0]
    half = x.shape[-1] // 2
    xa, xn = x[..., :half], x[..., half:]
    xa = graph_conv(xa, xa, p["w1"], p["b1"], 5)
    xn = graph_conv(xn, xn, p["w1"], p["b1"], 5)
    xa = acvt(xa, p["bn1_g"], p["bn1_b"], p["bn1_m"], p["bn1_v"])
    xn = acvt(xn, p["bn1_g"], p["bn1_b"], p["bn1_m"], p["bn1_v"])
    xa2 = graph_conv(xa, xn, p["w2"], p["b2"], 2)
    xn2 = graph_conv(xn, xa, p["w2"], p["b2"], 2)
    xa2 = acvt(xa2, p["bn2_g"], p["bn2_b"], p["bn2_m"], p["bn2_v"])
    xn2 = acvt(xn2, p["bn2_g"], p["bn2_b"], p["bn2_m"], p["bn2_v"])
    cat = jnp.concatenate([xa2, xn2], axis=-1).reshape(B, -1)
    return jnp.dot(cat, p["wl"].T, precision=hi) + p["bl"]


if __name__ == "__main__":
    key = jax.random.PRNGKey(0)
    kx, kparam = jax.random.split(key)
    # Shape dictated by the module: Linear(32*12, 13) requires [B, 5, 5, 50].
    x = jax.random.normal(kx, (2, 5, 5, 50), jnp.float32)
    params = init_params(kparam)
    kernel_params = pack_params(params)     # one-time weight repack

    out = gcn_forward(x, kernel_params)
    out = jax.block_until_ready(out)
    assert out.shape == (2, 13), out.shape
    assert bool(jnp.all(jnp.isfinite(out)))

    ref = jax.block_until_ready(_reference_forward(x, params))
    err = float(jnp.max(jnp.abs(out - ref)))
    assert err < 1e-2, f"mismatch vs pure-JAX reference: max abs err = {err}"

    print("KERNEL_OK")
</pallas_src>

<mosaic_0001>
module attributes {stable_mosaic.version = 11 : i64} {
  func.func @_head_kernel(%arg0: i32, %arg1: memref<2x384xf32, #tpu.memory_space<vmem>>, %arg2: memref<384x13xf32, #tpu.memory_space<vmem>>, %arg3: memref<1x13xf32, #tpu.memory_space<vmem>>, %arg4: memref<2x13xf32, #tpu.memory_space<vmem>>) attributes {dimension_semantics = [#tpu.dimension_semantics<arbitrary>], iteration_bounds = array<i64: 1>, scalar_prefetch = 0 : i64, scratch_operands = 0 : i64, tpu.core_type = #tpu.core_type<tc>, window_params = [{pipeline_mode = #tpu.pipeline_mode<synchronous>, transform_indices = @transform_0, window_bounds = array<i64: 2, 384>}, {pipeline_mode = #tpu.pipeline_mode<synchronous>, transform_indices = @transform_1, window_bounds = array<i64: 384, 13>}, {pipeline_mode = #tpu.pipeline_mode<synchronous>, transform_indices = @transform_2, window_bounds = array<i64: 1, 13>}, {pipeline_mode = #tpu.pipeline_mode<synchronous>, transform_indices = @transform_3, window_bounds = array<i64: 2, 13>}]} {
    %c0 = arith.constant 0 : index
    %c0_0 = arith.constant 0 : index
    %0 = vector.load %arg1[%c0, %c0_0] : memref<2x384xf32, #tpu.memory_space<vmem>>, vector<2x384xf32>
    %c0_1 = arith.constant 0 : index
    %c0_2 = arith.constant 0 : index
    %1 = vector.load %arg2[%c0_1, %c0_2] : memref<384x13xf32, #tpu.memory_space<vmem>>, vector<384x13xf32>
    %cst = arith.constant dense<0.000000e+00> : vector<2x13xf32>
    %2 = tpu.matmul %0, %1, %cst {dimension_numbers = #tpu.dot_dimension_numbers<[1], [0], [0], [1], [0, 0, 1, 1], [], []>} : vector<2x384xf32>, vector<384x13xf32>, vector<2x13xf32> -> vector<2x13xf32>
    %c0_3 = arith.constant 0 : index
    %c0_4 = arith.constant 0 : index
    %3 = vector.load %arg3[%c0_3, %c0_4] : memref<1x13xf32, #tpu.memory_space<vmem>>, vector<1x13xf32>
    %4 = vector.broadcast %3 : vector<1x13xf32> to vector<2x13xf32>
    %5 = arith.addf %2, %4 : vector<2x13xf32>
    %c0_5 = arith.constant 0 : index
    %c0_6 = arith.constant 0 : index
    %6 = vector.load %arg4[%c0_5, %c0_6] : memref<2x13xf32, #tpu.memory_space<vmem>>, vector<2x13xf32>
    tpu.vector_store %arg4[%c0_5, %c0_6], %5 {strides = array<i32>} : memref<2x13xf32, #tpu.memory_space<vmem>>, vector<2x13xf32>,
    return
  }
  func.func @transform_0(%arg0: i32) -> (i32, i32) {
    %c0_i32 = arith.constant 0 : i32
    %c0_i32_0 = arith.constant 0 : i32
    %c0_i32_1 = arith.constant 0 : i32
    return %c0_i32, %c0_i32_0 : i32, i32
  }
  func.func @transform_1(%arg0: i32) -> (i32, i32) {
    %c0_i32 = arith.constant 0 : i32
    %c0_i32_0 = arith.constant 0 : i32
    %c0_i32_1 = arith.constant 0 : i32
    return %c0_i32, %c0_i32_0 : i32, i32
  }
  func.func @transform_2(%arg0: i32) -> (i32, i32) {
    %c0_i32 = arith.constant 0 : i32
    %c0_i32_0 = arith.constant 0 : i32
    %c0_i32_1 = arith.constant 0 : i32
    return %c0_i32, %c0_i32_0 : i32, i32
  }
  func.func @transform_3(%arg0: i32) -> (i32, i32) {
    %c0_i32 = arith.constant 0 : i32
    %c0_i32_0 = arith.constant 0 : i32
    %c0_i32_1 = arith.constant 0 : i32
    return %c0_i32, %c0_i32_0 : i32, i32
  }
}

module attributes {stable_mosaic.version = 11 : i64} {
  func.func @_gcn_kernel(%arg0: i32, %arg1: memref<1x2x25x25xf32, #tpu.memory_space<vmem>>, %arg2: memref<11x32x25xf32, #tpu.memory_space<vmem>>, %arg3: memref<11x25x25xf32, #tpu.memory_space<vmem>>, %arg4: memref<32x1xf32, #tpu.memory_space<vmem>>, %arg5: memref<32x1xf32, #tpu.memory_space<vmem>>, %arg6: memref<32x1xf32, #tpu.memory_space<vmem>>, %arg7: memref<2x25x12xf32, #tpu.memory_space<vmem>>, %arg8: memref<5x32x32xf32, #tpu.memory_space<vmem>>, %arg9: memref<5x12x12xf32, #tpu.memory_space<vmem>>, %arg10: memref<32x1xf32, #tpu.memory_space<vmem>>, %arg11: memref<32x1xf32, #tpu.memory_space<vmem>>, %arg12: memref<32x1xf32, #tpu.memory_space<vmem>>, %arg13: memref<2x12x6xf32, #tpu.memory_space<vmem>>, %arg14: memref<1x32x12xf32, #tpu.memory_space<vmem>>) attributes {dimension_semantics = [#tpu.dimension_semantics<parallel>], iteration_bounds = array<i64: 2>, scalar_prefetch = 0 : i64, scratch_operands = 0 : i64, tpu.core_type = #tpu.core_type<tc>, window_params = [{transform_indices = @transform_0, window_bounds = array<i64: 1, 2, 25, 25>}, {pipeline_mode = #tpu.pipeline_mode<synchronous>, transform_indices = @transform_1, window_bounds = array<i64: 11, 32, 25>}, {pipeline_mode = #tpu.pipeline_mode<synchronous>, transform_indices = @transform_2, window_bounds = array<i64: 11, 25, 25>}, {pipeline_mode = #tpu.pipeline_mode<synchronous>, transform_indices = @transform_3, window_bounds = array<i64: 32, 1>}, {pipeline_mode = #tpu.pipeline_mode<synchronous>, transform_indices = @transform_4, window_bounds = array<i64: 32, 1>}, {pipeline_mode = #tpu.pipeline_mode<synchronous>, transform_indices = @transform_5, window_bounds = array<i64: 32, 1>}, {pipeline_mode = #tpu.pipeline_mode<synchronous>, transform_indices = @transform_6, window_bounds = array<i64: 2, 25, 12>}, {pipeline_mode = #tpu.pipeline_mode<synchronous>, transform_indices = @transform_7, window_bounds = array<i64: 5, 32, 32>}, {pipeline_mode = #tpu.pipeline_mode<synchronous>, transform_indices = @transform_8, window_bounds = array<i64: 5, 12, 12>}, {pipeline_mode = #tpu.pipeline_mode<synchronous>, transform_indices = @transform_9, window_bounds = array<i64: 32, 1>}, {pipeline_mode = #tpu.pipeline_mode<synchronous>, transform_indices = @transform_10, window_bounds = array<i64: 32, 1>}, {pipeline_mode = #tpu.pipeline_mode<synchronous>, transform_indices = @transform_11, window_bounds = array<i64: 32, 1>}, {pipeline_mode = #tpu.pipeline_mode<synchronous>, transform_indices = @transform_12, window_bounds = array<i64: 2, 12, 6>}, {transform_indices = @transform_13, window_bounds = array<i64: 1, 32, 12>}]} {
    %c0 = arith.constant 0 : index
    %c0_0 = arith.constant 0 : index
    %c0_1 = arith.constant 0 : index
    %c0_2 = arith.constant 0 : index
    %0 = vector.load %arg1[%c0, %c0_0, %c0_1, %c0_2] : memref<1x2x25x25xf32, #tpu.memory_space<vmem>>, vector<1x1x25x25xf32>
    %1 = vector.shape_cast %0 : vector<1x1x25x25xf32> to vector<25x25xf32>
    %c0_3 = arith.constant 0 : index
    %c0_4 = arith.constant 0 : index
    %c0_5 = arith.constant 0 : index
    %2 = vector.load %arg3[%c0_3, %c0_4, %c0_5] : memref<11x25x25xf32, #tpu.memory_space<vmem>>, vector<1x25x25xf32>
    %3 = vector.shape_cast %2 : vector<1x25x25xf32> to vector<25x25xf32>
    %cst = arith.constant dense<0.000000e+00> : vector<25x25xf32>
    %4 = tpu.matmul %1, %3, %cst {dimension_numbers = #tpu.dot_dimension_numbers<[1], [0], [0], [1], [0, 0, 1, 1], [], []>} : vector<25x25xf32>, vector<25x25xf32>, vector<25x25xf32> -> vector<25x25xf32>
    %c0_6 = arith.constant 0 : index
    %c0_7 = arith.constant 0 : index
    %c0_8 = arith.constant 0 : index
    %5 = vector.load %arg2[%c0_6, %c0_7, %c0_8] : memref<11x32x25xf32, #tpu.memory_space<vmem>>, vector<1x32x25xf32>
    %6 = vector.shape_cast %5 : vector<1x32x25xf32> to vector<32x25xf32>
    %cst_9 = arith.constant dense<0.000000e+00> : vector<32x25xf32>
    %7 = tpu.matmul %6, %4, %cst_9 {dimension_numbers = #tpu.dot_dimension_numbers<[1], [0], [0], [1], [0, 0, 1, 1], [], []>} : vector<32x25xf32>, vector<25x25xf32>, vector<32x25xf32> -> vector<32x25xf32>
    %c1 = arith.constant 1 : index
    %c0_10 = arith.constant 0 : index
    %c0_11 = arith.constant 0 : index
    %8 = vector.load %arg3[%c1, %c0_10, %c0_11] : memref<11x25x25xf32, #tpu.memory_space<vmem>>, vector<1x25x25xf32>
    %9 = vector.shape_cast %8 : vector<1x25x25xf32> to vector<25x25xf32>
    %cst_12 = arith.constant dense<0.000000e+00> : vector<25x25xf32>
    %10 = tpu.matmul %1, %9, %cst_12 {dimension_numbers = #tpu.dot_dimension_numbers<[1], [0], [0], [1], [0, 0, 1, 1], [], []>} : vector<25x25xf32>, vector<25x25xf32>, vector<25x25xf32> -> vector<25x25xf32>
    %c1_13 = arith.constant 1 : index
    %c0_14 = arith.constant 0 : index
    %c0_15 = arith.constant 0 : index
    %11 = vector.load %arg2[%c1_13, %c0_14, %c0_15] : memref<11x32x25xf32, #tpu.memory_space<vmem>>, vector<1x32x25xf32>
    %12 = vector.shape_cast %11 : vector<1x32x25xf32> to vector<32x25xf32>
    %cst_16 = arith.constant dense<0.000000e+00> : vector<32x25xf32>
    %13 = tpu.matmul %12, %10, %cst_16 {dimension_numbers = #tpu.dot_dimension_numbers<[1], [0], [0], [1], [0, 0, 1, 1], [], []>} : vector<32x25xf32>, vector<25x25xf32>, vector<32x25xf32> -> vector<32x25xf32>
    %14 = arith.addf %7, %13 : vector<32x25xf32>
    %c2 = arith.constant 2 : index
    %c0_17 = arith.constant 0 : index
    %c0_18 = arith.constant 0 : index
    %15 = vector.load %arg3[%c2, %c0_17, %c0_18] : memref<11x25x25xf32, #tpu.memory_space<vmem>>, vector<1x25x25xf32>
    %16 = vector.shape_cast %15 : vector<1x25x25xf32> to vector<25x25xf32>
    %cst_19 = arith.constant dense<0.000000e+00> : vector<25x25xf32>
    %17 = tpu.matmul %1, %16, %cst_19 {dimension_numbers = #tpu.dot_dimension_numbers<[1], [0], [0], [1], [0, 0, 1, 1], [], []>} : vector<25x25xf32>, vector<25x25xf32>, vector<25x25xf32> -> vector<25x25xf32>
    %c2_20 = arith.constant 2 : index
    %c0_21 = arith.constant 0 : index
    %c0_22 = arith.constant 0 : index
    %18 = vector.load %arg2[%c2_20, %c0_21, %c0_22] : memref<11x32x25xf32, #tpu.memory_space<vmem>>, vector<1x32x25xf32>
    %19 = vector.shape_cast %18 : vector<1x32x25xf32> to vector<32x25xf32>
    %cst_23 = arith.constant dense<0.000000e+00> : vector<32x25xf32>
    %20 = tpu.matmul %19, %17, %cst_23 {dimension_numbers = #tpu.dot_dimension_numbers<[1], [0], [0], [1], [0, 0, 1, 1], [], []>} : vector<32x25xf32>, vector<25x25xf32>, vector<32x25xf32> -> vector<32x25xf32>
    %21 = arith.addf %14, %20 : vector<32x25xf32>
    %c3 = arith.constant 3 : index
    %c0_24 = arith.constant 0 : index
    %c0_25 = arith.constant 0 : index
    %22 = vector.load %arg3[%c3, %c0_24, %c0_25] : memref<11x25x25xf32, #tpu.memory_space<vmem>>, vector<1x25x25xf32>
    %23 = vector.shape_cast %22 : vector<1x25x25xf32> to vector<25x25xf32>
    %cst_26 = arith.constant dense<0.000000e+00> : vector<25x25xf32>
    %24 = tpu.matmul %1, %23, %cst_26 {dimension_numbers = #tpu.dot_dimension_numbers<[1], [0], [0], [1], [0, 0, 1, 1], [], []>} : vector<25x25xf32>, vector<25x25xf32>, vector<25x25xf32> -> vector<25x25xf32>
    %c3_27 = arith.constant 3 : index
    %c0_28 = arith.constant 0 : index
    %c0_29 = arith.constant 0 : index
    %25 = vector.load %arg2[%c3_27, %c0_28, %c0_29] : memref<11x32x25xf32, #tpu.memory_space<vmem>>, vector<1x32x25xf32>
    %26 = vector.shape_cast %25 : vector<1x32x25xf32> to vector<32x25xf32>
    %cst_30 = arith.constant dense<0.000000e+00> : vector<32x25xf32>
    %27 = tpu.matmul %26, %24, %cst_30 {dimension_numbers = #tpu.dot_dimension_numbers<[1], [0], [0], [1], [0, 0, 1, 1], [], []>} : vector<32x25xf32>, vector<25x25xf32>, vector<32x25xf32> -> vector<32x25xf32>
    %28 = arith.addf %21, %27 : vector<32x25xf32>
    %c4 = arith.constant 4 : index
    %c0_31 = arith.constant 0 : index
    %c0_32 = arith.constant 0 : index
    %29 = vector.load %arg3[%c4, %c0_31, %c0_32] : memref<11x25x25xf32, #tpu.memory_space<vmem>>, vector<1x25x25xf32>
    %30 = vector.shape_cast %29 : vector<1x25x25xf32> to vector<25x25xf32>
    %cst_33 = arith.constant dense<0.000000e+00> : vector<25x25xf32>
    %31 = tpu.matmul %1, %30, %cst_33 {dimension_numbers = #tpu.dot_dimension_numbers<[1], [0], [0], [1], [0, 0, 1, 1], [], []>} : vector<25x25xf32>, vector<25x25xf32>, vector<25x25xf32> -> vector<25x25xf32>
    %c4_34 = arith.constant 4 : index
    %c0_35 = arith.constant 0 : index
    %c0_36 = arith.constant 0 : index
    %32 = vector.load %arg2[%c4_34, %c0_35, %c0_36] : memref<11x32x25xf32, #tpu.memory_space<vmem>>, vector<1x32x25xf32>
    %33 = vector.shape_cast %32 : vector<1x32x25xf32> to vector<32x25xf32>
    %cst_37 = arith.constant dense<0.000000e+00> : vector<32x25xf32>
    %34 = tpu.matmul %33, %31, %cst_37 {dimension_numbers = #tpu.dot_dimension_numbers<[1], [0], [0], [1], [0, 0, 1, 1], [], []>} : vector<32x25xf32>, vector<25x25xf32>, vector<32x25xf32> -> vector<32x25xf32>
    %35 = arith.addf %28, %34 : vector<32x25xf32>
    %c5 = arith.constant 5 : index
    %c0_38 = arith.constant 0 : index
    %c0_39 = arith.constant 0 : index
    %36 = vector.load %arg2[%c5, %c0_38, %c0_39] : memref<11x32x25xf32, #tpu.memory_space<vmem>>, vector<1x32x25xf32>
    %37 = vector.shape_cast %36 : vector<1x32x25xf32> to vector<32x25xf32>
    %cst_40 = arith.constant dense<0.000000e+00> : vector<32x25xf32>
    %38 = tpu.matmul %37, %1, %cst_40 {dimension_numbers = #tpu.dot_dimension_numbers<[1], [0], [0], [1], [0, 0, 1, 1], [], []>} : vector<32x25xf32>, vector<25x25xf32>, vector<32x25xf32> -> vector<32x25xf32>
    %39 = arith.addf %35, %38 : vector<32x25xf32>
    %c6 = arith.constant 6 : index
    %c0_41 = arith.constant 0 : index
    %c0_42 = arith.constant 0 : index
    %40 = vector.load %arg3[%c6, %c0_41, %c0_42] : memref<11x25x25xf32, #tpu.memory_space<vmem>>, vector<1x25x25xf32>
    %41 = vector.shape_cast %40 : vector<1x25x25xf32> to vector<25x25xf32>
    %cst_43 = arith.constant dense<0.000000e+00> : vector<25x25xf32>
    %42 = tpu.matmul %1, %41, %cst_43 {dimension_numbers = #tpu.dot_dimension_numbers<[1], [0], [0], [1], [0, 0, 1, 1], [], []>} : vector<25x25xf32>, vector<25x25xf32>, vector<25x25xf32> -> vector<25x25xf32>
    %c6_44 = arith.constant 6 : index
    %c0_45 = arith.constant 0 : index
    %c0_46 = arith.constant 0 : index
    %43 = vector.load %arg2[%c6_44, %c0_45, %c0_46] : memref<11x32x25xf32, #tpu.memory_space<vmem>>, vector<1x32x25xf32>
    %44 = vector.shape_cast %43 : vector<1x32x25xf32> to vector<32x25xf32>
    %cst_47 = arith.constant dense<0.000000e+00> : vector<32x25xf32>
    %45 = tpu.matmul %44, %42, %cst_47 {dimension_numbers = #tpu.dot_dimension_numbers<[1], [0], [0], [1], [0, 0, 1, 1], [], []>} : vector<32x25xf32>, vector<25x25xf32>, vector<32x25xf32> -> vector<32x25xf32>
    %46 = arith.addf %39, %45 : vector<32x25xf32>
    %c7 = arith.constant 7 : index
    %c0_48 = arith.constant 0 : index
    %c0_49 = arith.constant 0 : index
    %47 = vector.load %arg3[%c7, %c0_48, %c0_49] : memref<11x25x25xf32, #tpu.memory_space<vmem>>, vector<1x25x25xf32>
    %48 = vector.shape_cast %47 : vector<1x25x25xf32> to vector<25x25xf32>
    %cst_50 = arith.constant dense<0.000000e+00> : vector<25x25xf32>
    %49 = tpu.matmul %1, %48, %cst_50 {dimension_numbers = #tpu.dot_dimension_numbers<[1], [0], [0], [1], [0, 0, 1, 1], [], []>} : vector<25x25xf32>, vector<25x25xf32>, vector<25x25xf32> -> vector<25x25xf32>
    %c7_51 = arith.constant 7 : index
    %c0_52 = arith.constant 0 : index
    %c0_53 = arith.constant 0 : index
    %50 = vector.load %arg2[%c7_51, %c0_52, %c0_53] : memref<11x32x25xf32, #tpu.memory_space<vmem>>, vector<1x32x25xf32>
    %51 = vector.shape_cast %50 : vector<1x32x25xf32> to vector<32x25xf32>
    %cst_54 = arith.constant dense<0.000000e+00> : vector<32x25xf32>
    %52 = tpu.matmul %51, %49, %cst_54 {dimension_numbers = #tpu.dot_dimension_numbers<[1], [0], [0], [1], [0, 0, 1, 1], [], []>} : vector<32x25xf32>, vector<25x25xf32>, vector<32x25xf32> -> vector<32x25xf32>
    %53 = arith.addf %46, %52 : vector<32x25xf32>
    %c8 = arith.constant 8 : index
    %c0_55 = arith.constant 0 : index
    %c0_56 = arith.constant 0 : index
    %54 = vector.load %arg3[%c8, %c0_55, %c0_56] : memref<11x25x25xf32, #tpu.memory_space<vmem>>, vector<1x25x25xf32>
    %55 = vector.shape_cast %54 : vector<1x25x25xf32> to vector<25x25xf32>
    %cst_57 = arith.constant dense<0.000000e+00> : vector<25x25xf32>
    %56 = tpu.matmul %1, %55, %cst_57 {dimension_numbers = #tpu.dot_dimension_numbers<[1], [0], [0], [1], [0, 0, 1, 1], [], []>} : vector<25x25xf32>, vector<25x25xf32>, vector<25x25xf32> -> vector<25x25xf32>
    %c8_58 = arith.constant 8 : index
    %c0_59 = arith.constant 0 : index
    %c0_60 = arith.constant 0 : index
    %57 = vector.load %arg2[%c8_58, %c0_59, %c0_60] : memref<11x32x25xf32, #tpu.memory_space<vmem>>, vector<1x32x25xf32>
    %58 = vector.shape_cast %57 : vector<1x32x25xf32> to vector<32x25xf32>
    %cst_61 = arith.constant dense<0.000000e+00> : vector<32x25xf32>
    %59 = tpu.matmul %58, %56, %cst_61 {dimension_numbers = #tpu.dot_dimension_numbers<[1], [0], [0], [1], [0, 0, 1, 1], [], []>} : vector<32x25xf32>, vector<25x25xf32>, vector<32x25xf32> -> vector<32x25xf32>
    %60 = arith.addf %53, %59 : vector<32x25xf32>
    %c9 = arith.constant 9 : index
    %c0_62 = arith.constant 0 : index
    %c0_63 = arith.constant 0 : index
    %61 = vector.load %arg3[%c9, %c0_62, %c0_63] : memref<11x25x25xf32, #tpu.memory_space<vmem>>, vector<1x25x25xf32>
    %62 = vector.shape_cast %61 : vector<1x25x25xf32> to vector<25x25xf32>
    %cst_64 = arith.constant dense<0.000000e+00> : vector<25x25xf32>
    %63 = tpu.matmul %1, %62, %cst_64 {dimension_numbers = #tpu.dot_dimension_numbers<[1], [0], [0], [1], [0, 0, 1, 1], [], []>} : vector<25x25xf32>, vector<25x25xf32>, vector<25x25xf32> -> vector<25x25xf32>
    %c9_65 = arith.constant 9 : index
    %c0_66 = arith.constant 0 : index
    %c0_67 = arith.constant 0 : index
    %64 = vector.load %arg2[%c9_65, %c0_66, %c0_67] : memref<11x32x25xf32, #tpu.memory_space<vmem>>, vector<1x32x25xf32>
    %65 = vector.shape_cast %64 : vector<1x32x25xf32> to vector<32x25xf32>
    %cst_68 = arith.constant dense<0.000000e+00> : vector<32x25xf32>
    %66 = tpu.matmul %65, %63, %cst_68 {dimension_numbers = #tpu.dot_dimension_numbers<[1], [0], [0], [1], [0, 0, 1, 1], [], []>} : vector<32x25xf32>, vector<25x25xf32>, vector<32x25xf32> -> vector<32x25xf32>
    %67 = arith.addf %60, %66 : vector<32x25xf32>
    %c10 = arith.constant 10 : index
    %c0_69 = arith.constant 0 : index
    %c0_70 = arith.constant 0 : index
    %68 = vector.load %arg3[%c10, %c0_69, %c0_70] : memref<11x25x25xf32, #tpu.memory_space<vmem>>, vector<1x25x25xf32>
    %69 = vector.shape_cast %68 : vector<1x25x25xf32> to vector<25x25xf32>
    %cst_71 = arith.constant dense<0.000000e+00> : vector<25x25xf32>
    %70 = tpu.matmul %1, %69, %cst_71 {dimension_numbers = #tpu.dot_dimension_numbers<[1], [0], [0], [1], [0, 0, 1, 1], [], []>} : vector<25x25xf32>, vector<25x25xf32>, vector<25x25xf32> -> vector<25x25xf32>
    %c10_72 = arith.constant 10 : index
    %c0_73 = arith.constant 0 : index
    %c0_74 = arith.constant 0 : index
    %71 = vector.load %arg2[%c10_72, %c0_73, %c0_74] : memref<11x32x25xf32, #tpu.memory_space<vmem>>, vector<1x32x25xf32>
    %72 = vector.shape_cast %71 : vector<1x32x25xf32> to vector<32x25xf32>
    %cst_75 = arith.constant dense<0.000000e+00> : vector<32x25xf32>
    %73 = tpu.matmul %72, %70, %cst_75 {dimension_numbers = #tpu.dot_dimension_numbers<[1], [0], [0], [1], [0, 0, 1, 1], [], []>} : vector<32x25xf32>, vector<25x25xf32>, vector<32x25xf32> -> vector<32x25xf32>
    %74 = arith.addf %67, %73 : vector<32x25xf32>
    %c0_76 = arith.constant 0 : index
    %c0_77 = arith.constant 0 : index
    %75 = vector.load %arg4[%c0_76, %c0_77] : memref<32x1xf32, #tpu.memory_space<vmem>>, vector<32x1xf32>
    %76 = vector.broadcast %75 : vector<32x1xf32> to vector<32x25xf32>
    %77 = arith.addf %74, %76 : vector<32x25xf32>
    %cst_78 = arith.constant dense<0.000000e+00> : vector<32x32xf32>
    %78 = tpu.matmul %77, %77, %cst_78 {dimension_numbers = #tpu.dot_dimension_numbers<[1], [1], [0], [0], [0, 0, 1, 0], [], []>} : vector<32x25xf32>, vector<32x25xf32>, vector<32x32xf32> -> vector<32x32xf32>
    %cst_79 = arith.constant 0.000000e+00 : f32
    %79 = vector.broadcast %cst_79 : f32 to vector<32x32xf32>
    %80 = arith.cmpf ogt, %78, %79 : vector<32x32xf32>
    %cst_80 = arith.constant 2.000000e-01 : f32
    %81 = vector.broadcast %cst_80 : f32 to vector<32x32xf32>
    %82 = arith.mulf %81, %78 : vector<32x32xf32>
    %83 = arith.select %80, %78, %82 : vector<32x32xi1>, vector<32x32xf32>
    %cst_81 = arith.constant dense<0xFF800000> : vector<32xf32>
    %84 = vector.multi_reduction <maximumf>, %83, %cst_81 [0] : vector<32x32xf32> to vector<32xf32>
    %85 = vector.shape_cast %84 : vector<32xf32> to vector<1x32xf32>
    %86 = vector.broadcast %85 : vector<1x32xf32> to vector<32x32xf32>
    %87 = arith.subf %83, %86 : vector<32x32xf32>
    %88 = math.exp %87 : vector<32x32xf32>
    %cst_82 = arith.constant dense<0.000000e+00> : vector<32xf32>
    %89 = vector.multi_reduction <add>, %88, %cst_82 [0] : vector<32x32xf32> to vector<32xf32>
    %90 = vector.shape_cast %89 : vector<32xf32> to vector<1x32xf32>
    %91 = vector.broadcast %90 : vector<1x32xf32> to vector<32x32xf32>
    %92 = arith.divf %88, %91 : vector<32x32xf32>
    %cst_83 = arith.constant dense<0.000000e+00> : vector<32x25xf32>
    %93 = tpu.matmul %92, %77, %cst_83 {dimension_numbers = #tpu.dot_dimension_numbers<[1], [0], [0], [1], [0, 0, 1, 1], [], []>} : vector<32x32xf32>, vector<32x25xf32>, vector<32x25xf32> -> vector<32x25xf32>
    %c0_84 = arith.constant 0 : index
    %c0_85 = arith.constant 0 : index
    %94 = vector.load %arg5[%c0_84, %c0_85] : memref<32x1xf32, #tpu.memory_space<vmem>>, vector<32x1xf32>
    %95 = vector.broadcast %94 : vector<32x1xf32> to vector<32x25xf32>
    %96 = arith.mulf %93, %95 : vector<32x25xf32>
    %c0_86 = arith.constant 0 : index
    %c0_87 = arith.constant 0 : index
    %97 = vector.load %arg6[%c0_86, %c0_87] : memref<32x1xf32, #tpu.memory_space<vmem>>, vector<32x1xf32>
    %98 = vector.broadcast %97 : vector<32x1xf32> to vector<32x25xf32>
    %99 = arith.addf %96, %98 : vector<32x25xf32>
    %c0_88 = arith.constant 0 : index
    %c0_89 = arith.constant 0 : index
    %c0_90 = arith.constant 0 : index
    %100 = vector.load %arg7[%c0_88, %c0_89, %c0_90] : memref<2x25x12xf32, #tpu.memory_space<vmem>>, vector<1x25x12xf32>
    %101 = vector.shape_cast %100 : vector<1x25x12xf32> to vector<25x12xf32>
    %cst_91 = arith.constant dense<0.000000e+00> : vector<32x12xf32>
    %102 = tpu.matmul %99, %101, %cst_91 {dimension_numbers = #tpu.dot_dimension_numbers<[1], [0], [0], [1], [0, 0, 1, 1], [], []>} : vector<32x25xf32>, vector<25x12xf32>, vector<32x12xf32> -> vector<32x12xf32>
    %c1_92 = arith.constant 1 : index
    %c0_93 = arith.constant 0 : index
    %c0_94 = arith.constant 0 : index
    %103 = vector.load %arg7[%c1_92, %c0_93, %c0_94] : memref<2x25x12xf32, #tpu.memory_space<vmem>>, vector<1x25x12xf32>
    %104 = vector.shape_cast %103 : vector<1x25x12xf32> to vector<25x12xf32>
    %cst_95 = arith.constant dense<0.000000e+00> : vector<32x12xf32>
    %105 = tpu.matmul %99, %104, %cst_95 {dimension_numbers = #tpu.dot_dimension_numbers<[1], [0], [0], [1], [0, 0, 1, 1], [], []>} : vector<32x25xf32>, vector<25x12xf32>, vector<32x12xf32> -> vector<32x12xf32>
    %106 = arith.maximumf %102, %105 : vector<32x12xf32>
    %cst_96 = arith.constant 0.000000e+00 : f32
    %107 = vector.broadcast %cst_96 : f32 to vector<32x12xf32>
    %108 = arith.maximumf %106, %107 : vector<32x12xf32>
    %c0_97 = arith.constant 0 : index
    %c1_98 = arith.constant 1 : index
    %c0_99 = arith.constant 0 : index
    %c0_100 = arith.constant 0 : index
    %109 = vector.load %arg1[%c0_97, %c1_98, %c0_99, %c0_100] : memref<1x2x25x25xf32, #tpu.memory_space<vmem>>, vector<1x1x25x25xf32>
    %110 = vector.shape_cast %109 : vector<1x1x25x25xf32> to vector<25x25xf32>
    %c0_101 = arith.constant 0 : index
    %c0_102 = arith.constant 0 : index
    %c0_103 = arith.constant 0 : index
    %111 = vector.load %arg3[%c0_101, %c0_102, %c0_103] : memref<11x25x25xf32, #tpu.memory_space<vmem>>, vector<1x25x25xf32>
    %112 = vector.shape_cast %111 : vector<1x25x25xf32> to vector<25x25xf32>
    %cst_104 = arith.constant dense<0.000000e+00> : vector<25x25xf32>
    %113 = tpu.matmul %110, %112, %cst_104 {dimension_numbers = #tpu.dot_dimension_numbers<[1], [0], [0], [1], [0, 0, 1, 1], [], []>} : vector<25x25xf32>, vector<25x25xf32>, vector<25x25xf32> -> vector<25x25xf32>
    %c0_105 = arith.constant 0 : index
    %c0_106 = arith.constant 0 : index
    %c0_107 = arith.constant 0 : index
    %114 = vector.load %arg2[%c0_105, %c0_106, %c0_107] : memref<11x32x25xf32, #tpu.memory_space<vmem>>, vector<1x32x25xf32>
    %115 = vector.shape_cast %114 : vector<1x32x25xf32> to vector<32x25xf32>
    %cst_108 = arith.constant dense<0.000000e+00> : vector<32x25xf32>
    %116 = tpu.matmul %115, %113, %cst_108 {dimension_numbers = #tpu.dot_dimension_numbers<[1], [0], [0], [1], [0, 0, 1, 1], [], []>} : vector<32x25xf32>, vector<25x25xf32>, vector<32x25xf32> -> vector<32x25xf32>
    %c1_109 = arith.constant 1 : index
    %c0_110 = arith.constant 0 : index
    %c0_111 = arith.constant 0 : index
    %117 = vector.load %arg3[%c1_109, %c0_110, %c0_111] : memref<11x25x25xf32, #tpu.memory_space<vmem>>, vector<1x25x25xf32>
    %118 = vector.shape_cast %117 : vector<1x25x25xf32> to vector<25x25xf32>
    %cst_112 = arith.constant dense<0.000000e+00> : vector<25x25xf32>
    %119 = tpu.matmul %110, %118, %cst_112 {dimension_numbers = #tpu.dot_dimension_numbers<[1], [0], [0], [1], [0, 0, 1, 1], [], []>} : vector<25x25xf32>, vector<25x25xf32>, vector<25x25xf32> -> vector<25x25xf32>
    %c1_113 = arith.constant 1 : index
    %c0_114 = arith.constant 0 : index
    %c0_115 = arith.constant 0 : index
    %120 = vector.load %arg2[%c1_113, %c0_114, %c0_115] : memref<11x32x25xf32, #tpu.memory_space<vmem>>, vector<1x32x25xf32>
    %121 = vector.shape_cast %120 : vector<1x32x25xf32> to vector<32x25xf32>
    %cst_116 = arith.constant dense<0.000000e+00> : vector<32x25xf32>
    %122 = tpu.matmul %121, %119, %cst_116 {dimension_numbers = #tpu.dot_dimension_numbers<[1], [0], [0], [1], [0, 0, 1, 1], [], []>} : vector<32x25xf32>, vector<25x25xf32>, vector<32x25xf32> -> vector<32x25xf32>
    %123 = arith.addf %116, %122 : vector<32x25xf32>
    %c2_117 = arith.constant 2 : index
    %c0_118 = arith.constant 0 : index
    %c0_119 = arith.constant 0 : index
    %124 = vector.load %arg3[%c2_117, %c0_118, %c0_119] : memref<11x25x25xf32, #tpu.memory_space<vmem>>, vector<1x25x25xf32>
    %125 = vector.shape_cast %124 : vector<1x25x25xf32> to vector<25x25xf32>
    %cst_120 = arith.constant dense<0.000000e+00> : vector<25x25xf32>
    %126 = tpu.matmul %110, %125, %cst_120 {dimension_numbers = #tpu.dot_dimension_numbers<[1], [0], [0], [1], [0, 0, 1, 1], [], []>} : vector<25x25xf32>, vector<25x25xf32>, vector<25x25xf32> -> vector<25x25xf32>
    %c2_121 = arith.constant 2 : index
    %c0_122 = arith.constant 0 : index
    %c0_123 = arith.constant 0 : index
    %127 = vector.load %arg2[%c2_121, %c0_122, %c0_123] : memref<11x32x25xf32, #tpu.memory_space<vmem>>, vector<1x32x25xf32>
    %128 = vector.shape_cast %127 : vector<1x32x25xf32> to vector<32x25xf32>
    %cst_124 = arith.constant dense<0.000000e+00> : vector<32x25xf32>
    %129 = tpu.matmul %128, %126, %cst_124 {dimension_numbers = #tpu.dot_dimension_numbers<[1], [0], [0], [1], [0, 0, 1, 1], [], []>} : vector<32x25xf32>, vector<25x25xf32>, vector<32x25xf32> -> vector<32x25xf32>
    %130 = arith.addf %123, %129 : vector<32x25xf32>
    %c3_125 = arith.constant 3 : index
    %c0_126 = arith.constant 0 : index
    %c0_127 = arith.constant 0 : index
    %131 = vector.load %arg3[%c3_125, %c0_126, %c0_127] : memref<11x25x25xf32, #tpu.memory_space<vmem>>, vector<1x25x25xf32>
    %132 = vector.shape_cast %131 : vector<1x25x25xf32> to vector<25x25xf32>
    %cst_128 = arith.constant dense<0.000000e+00> : vector<25x25xf32>
    %133 = tpu.matmul %110, %132, %cst_128 {dimension_numbers = #tpu.dot_dimension_numbers<[1], [0], [0], [1], [0, 0, 1, 1], [], []>} : vector<25x25xf32>, vector<25x25xf32>, vector<25x25xf32> -> vector<25x25xf32>
    %c3_129 = arith.constant 3 : index
    %c0_130 = arith.constant 0 : index
    %c0_131 = arith.constant 0 : index
    %134 = vector.load %arg2[%c3_129, %c0_130, %c0_131] : memref<11x32x25xf32, #tpu.memory_space<vmem>>, vector<1x32x25xf32>
    %135 = vector.shape_cast %134 : vector<1x32x25xf32> to vector<32x25xf32>
    %cst_132 = arith.constant dense<0.000000e+00> : vector<32x25xf32>
    %136 = tpu.matmul %135, %133, %cst_132 {dimension_numbers = #tpu.dot_dimension_numbers<[1], [0], [0], [1], [0, 0, 1, 1], [], []>} : vector<32x25xf32>, vector<25x25xf32>, vector<32x25xf32> -> vector<32x25xf32>
    %137 = arith.addf %130, %136 : vector<32x25xf32>
    %c4_133 = arith.constant 4 : index
    %c0_134 = arith.constant 0 : index
    %c0_135 = arith.constant 0 : index
    %138 = vector.load %arg3[%c4_133, %c0_134, %c0_135] : memref<11x25x25xf32, #tpu.memory_space<vmem>>, vector<1x25x25xf32>
    %139 = vector.shape_cast %138 : vector<1x25x25xf32> to vector<25x25xf32>
    %cst_136 = arith.constant dense<0.000000e+00> : vector<25x25xf32>
    %140 = tpu.matmul %110, %139, %cst_136 {dimension_numbers = #tpu.dot_dimension_numbers<[1], [0], [0], [1], [0, 0, 1, 1], [], []>} : vector<25x25xf32>, vector<25x25xf32>, vector<25x25xf32> -> vector<25x25xf32>
    %c4_137 = arith.constant 4 : index
    %c0_138 = arith.constant 0 : index
    %c0_139 = arith.constant 0 : index
    %141 = vector.load %arg2[%c4_137, %c0_138, %c0_139] : memref<11x32x25xf32, #tpu.memory_space<vmem>>, vector<1x32x25xf32>
    %142 = vector.shape_cast %141 : vector<1x32x25xf32> to vector<32x25xf32>
    %cst_140 = arith.constant dense<0.000000e+00> : vector<32x25xf32>
    %143 = tpu.matmul %142, %140, %cst_140 {dimension_numbers = #tpu.dot_dimension_numbers<[1], [0], [0], [1], [0, 0, 1, 1], [], []>} : vector<32x25xf32>, vector<25x25xf32>, vector<32x25xf32> -> vector<32x25xf32>
    %144 = arith.addf %137, %143 : vector<32x25xf32>
    %c5_141 = arith.constant 5 : index
    %c0_142 = arith.constant 0 : index
    %c0_143 = arith.constant 0 : index
    %145 = vector.load %arg2[%c5_141, %c0_142, %c0_143] : memref<11x32x25xf32, #tpu.memory_space<vmem>>, vector<1x32x25xf32>
    %146 = vector.shape_cast %145 : vector<1x32x25xf32> to vector<32x25xf32>
    %cst_144 = arith.constant dense<0.000000e+00> : vector<32x25xf32>
    %147 = tpu.matmul %146, %110, %cst_144 {dimension_numbers = #tpu.dot_dimension_numbers<[1], [0], [0], [1], [0, 0, 1, 1], [], []>} : vector<32x25xf32>, vector<25x25xf32>, vector<32x25xf32> -> vector<32x25xf32>
    %148 = arith.addf %144, %147 : vector<32x25xf32>
    %c6_145 = arith.constant 6 : index
    %c0_146 = arith.constant 0 : index
    %c0_147 = arith.constant 0 : index
    %149 = vector.load %arg3[%c6_145, %c0_146, %c0_147] : memref<11x25x25xf32, #tpu.memory_space<vmem>>, vector<1x25x25xf32>
    %150 = vector.shape_cast %149 : vector<1x25x25xf32> to vector<25x25xf32>
    %cst_148 = arith.constant dense<0.000000e+00> : vector<25x25xf32>
    %151 = tpu.matmul %110, %150, %cst_148 {dimension_numbers = #tpu.dot_dimension_numbers<[1], [0], [0], [1], [0, 0, 1, 1], [], []>} : vector<25x25xf32>, vector<25x25xf32>, vector<25x25xf32> -> vector<25x25xf32>
    %c6_149 = arith.constant 6 : index
    %c0_150 = arith.constant 0 : index
    %c0_151 = arith.constant 0 : index
    %152 = vector.load %arg2[%c6_149, %c0_150, %c0_151] : memref<11x32x25xf32, #tpu.memory_space<vmem>>, vector<1x32x25xf32>
    %153 = vector.shape_cast %152 : vector<1x32x25xf32> to vector<32x25xf32>
    %cst_152 = arith.constant dense<0.000000e+00> : vector<32x25xf32>
    %154 = tpu.matmul %153, %151, %cst_152 {dimension_numbers = #tpu.dot_dimension_numbers<[1], [0], [0], [1], [0, 0, 1, 1], [], []>} : vector<32x25xf32>, vector<25x25xf32>, vector<32x25xf32> -> vector<32x25xf32>
    %155 = arith.addf %148, %154 : vector<32x25xf32>
    %c7_153 = arith.constant 7 : index
    %c0_154 = arith.constant 0 : index
    %c0_155 = arith.constant 0 : index
    %156 = vector.load %arg3[%c7_153, %c0_154, %c0_155] : memref<11x25x25xf32, #tpu.memory_space<vmem>>, vector<1x25x25xf32>
    %157 = vector.shape_cast %156 : vector<1x25x25xf32> to vector<25x25xf32>
    %cst_156 = arith.constant dense<0.000000e+00> : vector<25x25xf32>
    %158 = tpu.matmul %110, %157, %cst_156 {dimension_numbers = #tpu.dot_dimension_numbers<[1], [0], [0], [1], [0, 0, 1, 1], [], []>} : vector<25x25xf32>, vector<25x25xf32>, vector<25x25xf32> -> vector<25x25xf32>
    %c7_157 = arith.constant 7 : index
    %c0_158 = arith.constant 0 : index
    %c0_159 = arith.constant 0 : index
    %159 = vector.load %arg2[%c7_157, %c0_158, %c0_159] : memref<11x32x25xf32, #tpu.memory_space<vmem>>, vector<1x32x25xf32>
    %160 = vector.shape_cast %159 : vector<1x32x25xf32> to vector<32x25xf32>
    %cst_160 = arith.constant dense<0.000000e+00> : vector<32x25xf32>
    %161 = tpu.matmul %160, %158, %cst_160 {dimension_numbers = #tpu.dot_dimension_numbers<[1], [0], [0], [1], [0, 0, 1, 1], [], []>} : vector<32x25xf32>, vector<25x25xf32>, vector<32x25xf32> -> vector<32x25xf32>
    %162 = arith.addf %155, %161 : vector<32x25xf32>
    %c8_161 = arith.constant 8 : index
    %c0_162 = arith.constant 0 : index
    %c0_163 = arith.constant 0 : index
    %163 = vector.load %arg3[%c8_161, %c0_162, %c0_163] : memref<11x25x25xf32, #tpu.memory_space<vmem>>, vector<1x25x25xf32>
    %164 = vector.shape_cast %163 : vector<1x25x25xf32> to vector<25x25xf32>
    %cst_164 = arith.constant dense<0.000000e+00> : vector<25x25xf32>
    %165 = tpu.matmul %110, %164, %cst_164 {dimension_numbers = #tpu.dot_dimension_numbers<[1], [0], [0], [1], [0, 0, 1, 1], [], []>} : vector<25x25xf32>, vector<25x25xf32>, vector<25x25xf32> -> vector<25x25xf32>
    %c8_165 = arith.constant 8 : index
    %c0_166 = arith.constant 0 : index
    %c0_167 = arith.constant 0 : index
    %166 = vector.load %arg2[%c8_165, %c0_166, %c0_167] : memref<11x32x25xf32, #tpu.memory_space<vmem>>, vector<1x32x25xf32>
    %167 = vector.shape_cast %166 : vector<1x32x25xf32> to vector<32x25xf32>
    %cst_168 = arith.constant dense<0.000000e+00> : vector<32x25xf32>
    %168 = tpu.matmul %167, %165, %cst_168 {dimension_numbers = #tpu.dot_dimension_numbers<[1], [0], [0], [1], [0, 0, 1, 1], [], []>} : vector<32x25xf32>, vector<25x25xf32>, vector<32x25xf32> -> vector<32x25xf32>
    %169 = arith.addf %162, %168 : vector<32x25xf32>
    %c9_169 = arith.constant 9 : index
    %c0_170 = arith.constant 0 : index
    %c0_171 = arith.constant 0 : index
    %170 = vector.load %arg3[%c9_169, %c0_170, %c0_171] : memref<11x25x25xf32, #tpu.memory_space<vmem>>, vector<1x25x25xf32>
    %171 = vector.shape_cast %170 : vector<1x25x25xf32> to vector<25x25xf32>
    %cst_172 = arith.constant dense<0.000000e+00> : vector<25x25xf32>
    %172 = tpu.matmul %110, %171, %cst_172 {dimension_numbers = #tpu.dot_dimension_numbers<[1], [0], [0], [1], [0, 0, 1, 1], [], []>} : vector<25x25xf32>, vector<25x25xf32>, vector<25x25xf32> -> vector<25x25xf32>
    %c9_173 = arith.constant 9 : index
    %c0_174 = arith.constant 0 : index
    %c0_175 = arith.constant 0 : index
    %173 = vector.load %arg2[%c9_173, %c0_174, %c0_175] : memref<11x32x25xf32, #tpu.memory_space<vmem>>, vector<1x32x25xf32>
    %174 = vector.shape_cast %173 : vector<1x32x25xf32> to vector<32x25xf32>
    %cst_176 = arith.constant dense<0.000000e+00> : vector<32x25xf32>
    %175 = tpu.matmul %174, %172, %cst_176 {dimension_numbers = #tpu.dot_dimension_numbers<[1], [0], [0], [1], [0, 0, 1, 1], [], []>} : vector<32x25xf32>, vector<25x25xf32>, vector<32x25xf32> -> vector<32x25xf32>
    %176 = arith.addf %169, %175 : vector<32x25xf32>
    %c10_177 = arith.constant 10 : index
    %c0_178 = arith.constant 0 : index
    %c0_179 = arith.constant 0 : index
    %177 = vector.load %arg3[%c10_177, %c0_178, %c0_179] : memref<11x25x25xf32, #tpu.memory_space<vmem>>, vector<1x25x25xf32>
    %178 = vector.shape_cast %177 : vector<1x25x25xf32> to vector<25x25xf32>
    %cst_180 = arith.constant dense<0.000000e+00> : vector<25x25xf32>
    %179 = tpu.matmul %110, %178, %cst_180 {dimension_numbers = #tpu.dot_dimension_numbers<[1], [0], [0], [1], [0, 0, 1, 1], [], []>} : vector<25x25xf32>, vector<25x25xf32>, vector<25x25xf32> -> vector<25x25xf32>
    %c10_181 = arith.constant 10 : index
    %c0_182 = arith.constant 0 : index
    %c0_183 = arith.constant 0 : index
    %180 = vector.load %arg2[%c10_181, %c0_182, %c0_183] : memref<11x32x25xf32, #tpu.memory_space<vmem>>, vector<1x32x25xf32>
    %181 = vector.shape_cast %180 : vector<1x32x25xf32> to vector<32x25xf32>
    %cst_184 = arith.constant dense<0.000000e+00> : vector<32x25xf32>
    %182 = tpu.matmul %181, %179, %cst_184 {dimension_numbers = #tpu.dot_dimension_numbers<[1], [0], [0], [1], [0, 0, 1, 1], [], []>} : vector<32x25xf32>, vector<25x25xf32>, vector<32x25xf32> -> vector<32x25xf32>
    %183 = arith.addf %176, %182 : vector<32x25xf32>
    %c0_185 = arith.constant 0 : index
    %c0_186 = arith.constant 0 : index
    %184 = vector.load %arg4[%c0_185, %c0_186] : memref<32x1xf32, #tpu.memory_space<vmem>>, vector<32x1xf32>
    %185 = vector.broadcast %184 : vector<32x1xf32> to vector<32x25xf32>
    %186 = arith.addf %183, %185 : vector<32x25xf32>
    %cst_187 = arith.constant dense<0.000000e+00> : vector<32x32xf32>
    %187 = tpu.matmul %186, %186, %cst_187 {dimension_numbers = #tpu.dot_dimension_numbers<[1], [1], [0], [0], [0, 0, 1, 0], [], []>} : vector<32x25xf32>, vector<32x25xf32>, vector<32x32xf32> -> vector<32x32xf32>
    %cst_188 = arith.constant 0.000000e+00 : f32
    %188 = vector.broadcast %cst_188 : f32 to vector<32x32xf32>
    %189 = arith.cmpf ogt, %187, %188 : vector<32x32xf32>
    %cst_189 = arith.constant 2.000000e-01 : f32
    %190 = vector.broadcast %cst_189 : f32 to vector<32x32xf32>
    %191 = arith.mulf %190, %187 : vector<32x32xf32>
    %192 = arith.select %189, %187, %191 : vector<32x32xi1>, vector<32x32xf32>
    %cst_190 = arith.constant dense<0xFF800000> : vector<32xf32>
    %193 = vector.multi_reduction <maximumf>, %192, %cst_190 [0] : vector<32x32xf32> to vector<32xf32>
    %194 = vector.shape_cast %193 : vector<32xf32> to vector<1x32xf32>
    %195 = vector.broadcast %194 : vector<1x32xf32> to vector<32x32xf32>
    %196 = arith.subf %192, %195 : vector<32x32xf32>
    %197 = math.exp %196 : vector<32x32xf32>
    %cst_191 = arith.constant dense<0.000000e+00> : vector<32xf32>
    %198 = vector.multi_reduction <add>, %197, %cst_191 [0] : vector<32x32xf32> to vector<32xf32>
    %199 = vector.shape_cast %198 : vector<32xf32> to vector<1x32xf32>
    %200 = vector.broadcast %199 : vector<1x32xf32> to vector<32x32xf32>
    %201 = arith.divf %197, %200 : vector<32x32xf32>
    %cst_192 = arith.constant dense<0.000000e+00> : vector<32x25xf32>
    %202 = tpu.matmul %201, %186, %cst_192 {dimension_numbers = #tpu.dot_dimension_numbers<[1], [0], [0], [1], [0, 0, 1, 1], [], []>} : vector<32x32xf32>, vector<32x25xf32>, vector<32x25xf32> -> vector<32x25xf32>
    %c0_193 = arith.constant 0 : index
    %c0_194 = arith.constant 0 : index
    %203 = vector.load %arg5[%c0_193, %c0_194] : memref<32x1xf32, #tpu.memory_space<vmem>>, vector<32x1xf32>
    %204 = vector.broadcast %203 : vector<32x1xf32> to vector<32x25xf32>
    %205 = arith.mulf %202, %204 : vector<32x25xf32>
    %c0_195 = arith.constant 0 : index
    %c0_196 = arith.constant 0 : index
    %206 = vector.load %arg6[%c0_195, %c0_196] : memref<32x1xf32, #tpu.memory_space<vmem>>, vector<32x1xf32>
    %207 = vector.broadcast %206 : vector<32x1xf32> to vector<32x25xf32>
    %208 = arith.addf %205, %207 : vector<32x25xf32>
    %c0_197 = arith.constant 0 : index
    %c0_198 = arith.constant 0 : index
    %c0_199 = arith.constant 0 : index
    %209 = vector.load %arg7[%c0_197, %c0_198, %c0_199] : memref<2x25x12xf32, #tpu.memory_space<vmem>>, vector<1x25x12xf32>
    %210 = vector.shape_cast %209 : vector<1x25x12xf32> to vector<25x12xf32>
    %cst_200 = arith.constant dense<0.000000e+00> : vector<32x12xf32>
    %211 = tpu.matmul %208, %210, %cst_200 {dimension_numbers = #tpu.dot_dimension_numbers<[1], [0], [0], [1], [0, 0, 1, 1], [], []>} : vector<32x25xf32>, vector<25x12xf32>, vector<32x12xf32> -> vector<32x12xf32>
    %c1_201 = arith.constant 1 : index
    %c0_202 = arith.constant 0 : index
    %c0_203 = arith.constant 0 : index
    %212 = vector.load %arg7[%c1_201, %c0_202, %c0_203] : memref<2x25x12xf32, #tpu.memory_space<vmem>>, vector<1x25x12xf32>
    %213 = vector.shape_cast %212 : vector<1x25x12xf32> to vector<25x12xf32>
    %cst_204 = arith.constant dense<0.000000e+00> : vector<32x12xf32>
    %214 = tpu.matmul %208, %213, %cst_204 {dimension_numbers = #tpu.dot_dimension_numbers<[1], [0], [0], [1], [0, 0, 1, 1], [], []>} : vector<32x25xf32>, vector<25x12xf32>, vector<32x12xf32> -> vector<32x12xf32>
    %215 = arith.maximumf %211, %214 : vector<32x12xf32>
    %cst_205 = arith.constant 0.000000e+00 : f32
    %216 = vector.broadcast %cst_205 : f32 to vector<32x12xf32>
    %217 = arith.maximumf %215, %216 : vector<32x12xf32>
    %c0_206 = arith.constant 0 : index
    %c0_207 = arith.constant 0 : index
    %c0_208 = arith.constant 0 : index
    %218 = vector.load %arg9[%c0_206, %c0_207, %c0_208] : memref<5x12x12xf32, #tpu.memory_space<vmem>>, vector<1x12x12xf32>
    %219 = vector.shape_cast %218 : vector<1x12x12xf32> to vector<12x12xf32>
    %cst_209 = arith.constant dense<0.000000e+00> : vector<32x12xf32>
    %220 = tpu.matmul %108, %219, %cst_209 {dimension_numbers = #tpu.dot_dimension_numbers<[1], [0], [0], [1], [0, 0, 1, 1], [], []>} : vector<32x12xf32>, vector<12x12xf32>, vector<32x12xf32> -> vector<32x12xf32>
    %c0_210 = arith.constant 0 : index
    %c0_211 = arith.constant 0 : index
    %c0_212 = arith.constant 0 : index
    %221 = vector.load %arg8[%c0_210, %c0_211, %c0_212] : memref<5x32x32xf32, #tpu.memory_space<vmem>>, vector<1x32x32xf32>
    %222 = vector.shape_cast %221 : vector<1x32x32xf32> to vector<32x32xf32>
    %cst_213 = arith.constant dense<0.000000e+00> : vector<32x12xf32>
    %223 = tpu.matmul %222, %220, %cst_213 {dimension_numbers = #tpu.dot_dimension_numbers<[1], [0], [0], [1], [0, 0, 1, 1], [], []>} : vector<32x32xf32>, vector<32x12xf32>, vector<32x12xf32> -> vector<32x12xf32>
    %c1_214 = arith.constant 1 : index
    %c0_215 = arith.constant 0 : index
    %c0_216 = arith.constant 0 : index
    %224 = vector.load %arg9[%c1_214, %c0_215, %c0_216] : memref<5x12x12xf32, #tpu.memory_space<vmem>>, vector<1x12x12xf32>
    %225 = vector.shape_cast %224 : vector<1x12x12xf32> to vector<12x12xf32>
    %cst_217 = arith.constant dense<0.000000e+00> : vector<32x12xf32>
    %226 = tpu.matmul %108, %225, %cst_217 {dimension_numbers = #tpu.dot_dimension_numbers<[1], [0], [0], [1], [0, 0, 1, 1], [], []>} : vector<32x12xf32>, vector<12x12xf32>, vector<32x12xf32> -> vector<32x12xf32>
    %c1_218 = arith.constant 1 : index
    %c0_219 = arith.constant 0 : index
    %c0_220 = arith.constant 0 : index
    %227 = vector.load %arg8[%c1_218, %c0_219, %c0_220] : memref<5x32x32xf32, #tpu.memory_space<vmem>>, vector<1x32x32xf32>
    %228 = vector.shape_cast %227 : vector<1x32x32xf32> to vector<32x32xf32>
    %cst_221 = arith.constant dense<0.000000e+00> : vector<32x12xf32>
    %229 = tpu.matmul %228, %226, %cst_221 {dimension_numbers = #tpu.dot_dimension_numbers<[1], [0], [0], [1], [0, 0, 1, 1], [], []>} : vector<32x32xf32>, vector<32x12xf32>, vector<32x12xf32> -> vector<32x12xf32>
    %230 = arith.addf %223, %229 : vector<32x12xf32>
    %c2_222 = arith.constant 2 : index
    %c0_223 = arith.constant 0 : index
    %c0_224 = arith.constant 0 : index
    %231 = vector.load %arg8[%c2_222, %c0_223, %c0_224] : memref<5x32x32xf32, #tpu.memory_space<vmem>>, vector<1x32x32xf32>
    %232 = vector.shape_cast %231 : vector<1x32x32xf32> to vector<32x32xf32>
    %cst_225 = arith.constant dense<0.000000e+00> : vector<32x12xf32>
    %233 = tpu.matmul %232, %108, %cst_225 {dimension_numbers = #tpu.dot_dimension_numbers<[1], [0], [0], [1], [0, 0, 1, 1], [], []>} : vector<32x32xf32>, vector<32x12xf32>, vector<32x12xf32> -> vector<32x12xf32>
    %234 = arith.addf %230, %233 : vector<32x12xf32>
    %c3_226 = arith.constant 3 : index
    %c0_227 = arith.constant 0 : index
    %c0_228 = arith.constant 0 : index
    %235 = vector.load %arg9[%c3_226, %c0_227, %c0_228] : memref<5x12x12xf32, #tpu.memory_space<vmem>>, vector<1x12x12xf32>
    %236 = vector.shape_cast %235 : vector<1x12x12xf32> to vector<12x12xf32>
    %cst_229 = arith.constant dense<0.000000e+00> : vector<32x12xf32>
    %237 = tpu.matmul %108, %236, %cst_229 {dimension_numbers = #tpu.dot_dimension_numbers<[1], [0], [0], [1], [0, 0, 1, 1], [], []>} : vector<32x12xf32>, vector<12x12xf32>, vector<32x12xf32> -> vector<32x12xf32>
    %c3_230 = arith.constant 3 : index
    %c0_231 = arith.constant 0 : index
    %c0_232 = arith.constant 0 : index
    %238 = vector.load %arg8[%c3_230, %c0_231, %c0_232] : memref<5x32x32xf32, #tpu.memory_space<vmem>>, vector<1x32x32xf32>
    %239 = vector.shape_cast %238 : vector<1x32x32xf32> to vector<32x32xf32>
    %cst_233 = arith.constant dense<0.000000e+00> : vector<32x12xf32>
    %240 = tpu.matmul %239, %237, %cst_233 {dimension_numbers = #tpu.dot_dimension_numbers<[1], [0], [0], [1], [0, 0, 1, 1], [], []>} : vector<32x32xf32>, vector<32x12xf32>, vector<32x12xf32> -> vector<32x12xf32>
    %241 = arith.addf %234, %240 : vector<32x12xf32>
    %c4_234 = arith.constant 4 : index
    %c0_235 = arith.constant 0 : index
    %c0_236 = arith.constant 0 : index
    %242 = vector.load %arg9[%c4_234, %c0_235, %c0_236] : memref<5x12x12xf32, #tpu.memory_space<vmem>>, vector<1x12x12xf32>
    %243 = vector.shape_cast %242 : vector<1x12x12xf32> to vector<12x12xf32>
    %cst_237 = arith.constant dense<0.000000e+00> : vector<32x12xf32>
    %244 = tpu.matmul %108, %243, %cst_237 {dimension_numbers = #tpu.dot_dimension_numbers<[1], [0], [0], [1], [0, 0, 1, 1], [], []>} : vector<32x12xf32>, vector<12x12xf32>, vector<32x12xf32> -> vector<32x12xf32>
    %c4_238 = arith.constant 4 : index
    %c0_239 = arith.constant 0 : index
    %c0_240 = arith.constant 0 : index
    %245 = vector.load %arg8[%c4_238, %c0_239, %c0_240] : memref<5x32x32xf32, #tpu.memory_space<vmem>>, vector<1x32x32xf32>
    %246 = vector.shape_cast %245 : vector<1x32x32xf32> to vector<32x32xf32>
    %cst_241 = arith.constant dense<0.000000e+00> : vector<32x12xf32>
    %247 = tpu.matmul %246, %244, %cst_241 {dimension_numbers = #tpu.dot_dimension_numbers<[1], [0], [0], [1], [0, 0, 1, 1], [], []>} : vector<32x32xf32>, vector<32x12xf32>, vector<32x12xf32> -> vector<32x12xf32>
    %248 = arith.addf %241, %247 : vector<32x12xf32>
    %c0_242 = arith.constant 0 : index
    %c0_243 = arith.constant 0 : index
    %249 = vector.load %arg10[%c0_242, %c0_243] : memref<32x1xf32, #tpu.memory_space<vmem>>, vector<32x1xf32>
    %250 = vector.broadcast %249 : vector<32x1xf32> to vector<32x12xf32>
    %251 = arith.addf %248, %250 : vector<32x12xf32>
    %c0_244 = arith.constant 0 : index
    %c0_245 = arith.constant 0 : index
    %c0_246 = arith.constant 0 : index
    %252 = vector.load %arg9[%c0_244, %c0_245, %c0_246] : memref<5x12x12xf32, #tpu.memory_space<vmem>>, vector<1x12x12xf32>
    %253 = vector.shape_cast %252 : vector<1x12x12xf32> to vector<12x12xf32>
    %cst_247 = arith.constant dense<0.000000e+00> : vector<32x12xf32>
    %254 = tpu.matmul %217, %253, %cst_247 {dimension_numbers = #tpu.dot_dimension_numbers<[1], [0], [0], [1], [0, 0, 1, 1], [], []>} : vector<32x12xf32>, vector<12x12xf32>, vector<32x12xf32> -> vector<32x12xf32>
    %c0_248 = arith.constant 0 : index
    %c0_249 = arith.constant 0 : index
    %c0_250 = arith.constant 0 : index
    %255 = vector.load %arg8[%c0_248, %c0_249, %c0_250] : memref<5x32x32xf32, #tpu.memory_space<vmem>>, vector<1x32x32xf32>
    %256 = vector.shape_cast %255 : vector<1x32x32xf32> to vector<32x32xf32>
    %cst_251 = arith.constant dense<0.000000e+00> : vector<32x12xf32>
    %257 = tpu.matmul %256, %254, %cst_251 {dimension_numbers = #tpu.dot_dimension_numbers<[1], [0], [0], [1], [0, 0, 1, 1], [], []>} : vector<32x32xf32>, vector<32x12xf32>, vector<32x12xf32> -> vector<32x12xf32>
    %c1_252 = arith.constant 1 : index
    %c0_253 = arith.constant 0 : index
    %c0_254 = arith.constant 0 : index
    %258 = vector.load %arg9[%c1_252, %c0_253, %c0_254] : memref<5x12x12xf32, #tpu.memory_space<vmem>>, vector<1x12x12xf32>
    %259 = vector.shape_cast %258 : vector<1x12x12xf32> to vector<12x12xf32>
    %cst_255 = arith.constant dense<0.000000e+00> : vector<32x12xf32>
    %260 = tpu.matmul %217, %259, %cst_255 {dimension_numbers = #tpu.dot_dimension_numbers<[1], [0], [0], [1], [0, 0, 1, 1], [], []>} : vector<32x12xf32>, vector<12x12xf32>, vector<32x12xf32> -> vector<32x12xf32>
    %c1_256 = arith.constant 1 : index
    %c0_257 = arith.constant 0 : index
    %c0_258 = arith.constant 0 : index
    %261 = vector.load %arg8[%c1_256, %c0_257, %c0_258] : memref<5x32x32xf32, #tpu.memory_space<vmem>>, vector<1x32x32xf32>
    %262 = vector.shape_cast %261 : vector<1x32x32xf32> to vector<32x32xf32>
    %cst_259 = arith.constant dense<0.000000e+00> : vector<32x12xf32>
    %263 = tpu.matmul %262, %260, %cst_259 {dimension_numbers = #tpu.dot_dimension_numbers<[1], [0], [0], [1], [0, 0, 1, 1], [], []>} : vector<32x32xf32>, vector<32x12xf32>, vector<32x12xf32> -> vector<32x12xf32>
    %264 = arith.addf %257, %263 : vector<32x12xf32>
    %c2_260 = arith.constant 2 : index
    %c0_261 = arith.constant 0 : index
    %c0_262 = arith.constant 0 : index
    %265 = vector.load %arg8[%c2_260, %c0_261, %c0_262] : memref<5x32x32xf32, #tpu.memory_space<vmem>>, vector<1x32x32xf32>
    %266 = vector.shape_cast %265 : vector<1x32x32xf32> to vector<32x32xf32>
    %cst_263 = arith.constant dense<0.000000e+00> : vector<32x12xf32>
    %267 = tpu.matmul %266, %217, %cst_263 {dimension_numbers = #tpu.dot_dimension_numbers<[1], [0], [0], [1], [0, 0, 1, 1], [], []>} : vector<32x32xf32>, vector<32x12xf32>, vector<32x12xf32> -> vector<32x12xf32>
    %268 = arith.addf %264, %267 : vector<32x12xf32>
    %c3_264 = arith.constant 3 : index
    %c0_265 = arith.constant 0 : index
    %c0_266 = arith.constant 0 : index
    %269 = vector.load %arg9[%c3_264, %c0_265, %c0_266] : memref<5x12x12xf32, #tpu.memory_space<vmem>>, vector<1x12x12xf32>
    %270 = vector.shape_cast %269 : vector<1x12x12xf32> to vector<12x12xf32>
    %cst_267 = arith.constant dense<0.000000e+00> : vector<32x12xf32>
    %271 = tpu.matmul %217, %270, %cst_267 {dimension_numbers = #tpu.dot_dimension_numbers<[1], [0], [0], [1], [0, 0, 1, 1], [], []>} : vector<32x12xf32>, vector<12x12xf32>, vector<32x12xf32> -> vector<32x12xf32>
    %c3_268 = arith.constant 3 : index
    %c0_269 = arith.constant 0 : index
    %c0_270 = arith.constant 0 : index
    %272 = vector.load %arg8[%c3_268, %c0_269, %c0_270] : memref<5x32x32xf32, #tpu.memory_space<vmem>>, vector<1x32x32xf32>
    %273 = vector.shape_cast %272 : vector<1x32x32xf32> to vector<32x32xf32>
    %cst_271 = arith.constant dense<0.000000e+00> : vector<32x12xf32>
    %274 = tpu.matmul %273, %271, %cst_271 {dimension_numbers = #tpu.dot_dimension_numbers<[1], [0], [0], [1], [0, 0, 1, 1], [], []>} : vector<32x32xf32>, vector<32x12xf32>, vector<32x12xf32> -> vector<32x12xf32>
    %275 = arith.addf %268, %274 : vector<32x12xf32>
    %c4_272 = arith.constant 4 : index
    %c0_273 = arith.constant 0 : index
    %c0_274 = arith.constant 0 : index
    %276 = vector.load %arg9[%c4_272, %c0_273, %c0_274] : memref<5x12x12xf32, #tpu.memory_space<vmem>>, vector<1x12x12xf32>
    %277 = vector.shape_cast %276 : vector<1x12x12xf32> to vector<12x12xf32>
    %cst_275 = arith.constant dense<0.000000e+00> : vector<32x12xf32>
    %278 = tpu.matmul %217, %277, %cst_275 {dimension_numbers = #tpu.dot_dimension_numbers<[1], [0], [0], [1], [0, 0, 1, 1], [], []>} : vector<32x12xf32>, vector<12x12xf32>, vector<32x12xf32> -> vector<32x12xf32>
    %c4_276 = arith.constant 4 : index
    %c0_277 = arith.constant 0 : index
    %c0_278 = arith.constant 0 : index
    %279 = vector.load %arg8[%c4_276, %c0_277, %c0_278] : memref<5x32x32xf32, #tpu.memory_space<vmem>>, vector<1x32x32xf32>
    %280 = vector.shape_cast %279 : vector<1x32x32xf32> to vector<32x32xf32>
    %cst_279 = arith.constant dense<0.000000e+00> : vector<32x12xf32>
    %281 = tpu.matmul %280, %278, %cst_279 {dimension_numbers = #tpu.dot_dimension_numbers<[1], [0], [0], [1], [0, 0, 1, 1], [], []>} : vector<32x32xf32>, vector<32x12xf32>, vector<32x12xf32> -> vector<32x12xf32>
    %282 = arith.addf %275, %281 : vector<32x12xf32>
    %c0_280 = arith.constant 0 : index
    %c0_281 = arith.constant 0 : index
    %283 = vector.load %arg10[%c0_280, %c0_281] : memref<32x1xf32, #tpu.memory_space<vmem>>, vector<32x1xf32>
    %284 = vector.broadcast %283 : vector<32x1xf32> to vector<32x12xf32>
    %285 = arith.addf %282, %284 : vector<32x12xf32>
    %cst_282 = arith.constant dense<0.000000e+00> : vector<32x32xf32>
    %286 = tpu.matmul %251, %285, %cst_282 {dimension_numbers = #tpu.dot_dimension_numbers<[1], [1], [0], [0], [0, 0, 1, 0], [], []>} : vector<32x12xf32>, vector<32x12xf32>, vector<32x32xf32> -> vector<32x32xf32>
    %cst_283 = arith.constant 0.000000e+00 : f32
    %287 = vector.broadcast %cst_283 : f32 to vector<32x32xf32>
    %288 = arith.cmpf ogt, %286, %287 : vector<32x32xf32>
    %cst_284 = arith.constant 2.000000e-01 : f32
    %289 = vector.broadcast %cst_284 : f32 to vector<32x32xf32>
    %290 = arith.mulf %289, %286 : vector<32x32xf32>
    %291 = arith.select %288, %286, %290 : vector<32x32xi1>, vector<32x32xf32>
    %cst_285 = arith.constant dense<0xFF800000> : vector<32xf32>
    %292 = vector.multi_reduction <maximumf>, %291, %cst_285 [0] : vector<32x32xf32> to vector<32xf32>
    %293 = vector.shape_cast %292 : vector<32xf32> to vector<1x32xf32>
    %294 = vector.broadcast %293 : vector<1x32xf32> to vector<32x32xf32>
    %295 = arith.subf %291, %294 : vector<32x32xf32>
    %296 = math.exp %295 : vector<32x32xf32>
    %cst_286 = arith.constant dense<0.000000e+00> : vector<32xf32>
    %297 = vector.multi_reduction <add>, %296, %cst_286 [0] : vector<32x32xf32> to vector<32xf32>
    %298 = vector.shape_cast %297 : vector<32xf32> to vector<1x32xf32>
    %299 = vector.broadcast %298 : vector<1x32xf32> to vector<32x32xf32>
    %300 = arith.divf %296, %299 : vector<32x32xf32>
    %cst_287 = arith.constant dense<0.000000e+00> : vector<32x12xf32>
    %301 = tpu.matmul %300, %251, %cst_287 {dimension_numbers = #tpu.dot_dimension_numbers<[1], [0], [0], [1], [0, 0, 1, 1], [], []>} : vector<32x32xf32>, vector<32x12xf32>, vector<32x12xf32> -> vector<32x12xf32>
    %c0_288 = arith.constant 0 : index
    %c0_289 = arith.constant 0 : index
    %302 = vector.load %arg11[%c0_288, %c0_289] : memref<32x1xf32, #tpu.memory_space<vmem>>, vector<32x1xf32>
    %303 = vector.broadcast %302 : vector<32x1xf32> to vector<32x12xf32>
    %304 = arith.mulf %301, %303 : vector<32x12xf32>
    %c0_290 = arith.constant 0 : index
    %c0_291 = arith.constant 0 : index
    %305 = vector.load %arg12[%c0_290, %c0_291] : memref<32x1xf32, #tpu.memory_space<vmem>>, vector<32x1xf32>
    %306 = vector.broadcast %305 : vector<32x1xf32> to vector<32x12xf32>
    %307 = arith.addf %304, %306 : vector<32x12xf32>
    %c0_292 = arith.constant 0 : index
    %c0_293 = arith.constant 0 : index
    %c0_294 = arith.constant 0 : index
    %308 = vector.load %arg13[%c0_292, %c0_293, %c0_294] : memref<2x12x6xf32, #tpu.memory_space<vmem>>, vector<1x12x6xf32>
    %309 = vector.shape_cast %308 : vector<1x12x6xf32> to vector<12x6xf32>
    %cst_295 = arith.constant dense<0.000000e+00> : vector<32x6xf32>
    %310 = tpu.matmul %307, %309, %cst_295 {dimension_numbers = #tpu.dot_dimension_numbers<[1], [0], [0], [1], [0, 0, 1, 1], [], []>} : vector<32x12xf32>, vector<12x6xf32>, vector<32x6xf32> -> vector<32x6xf32>
    %c1_296 = arith.constant 1 : index
    %c0_297 = arith.constant 0 : index
    %c0_298 = arith.constant 0 : index
    %311 = vector.load %arg13[%c1_296, %c0_297, %c0_298] : memref<2x12x6xf32, #tpu.memory_space<vmem>>, vector<1x12x6xf32>
    %312 = vector.shape_cast %311 : vector<1x12x6xf32> to vector<12x6xf32>
    %cst_299 = arith.constant dense<0.000000e+00> : vector<32x6xf32>
    %313 = tpu.matmul %307, %312, %cst_299 {dimension_numbers = #tpu.dot_dimension_numbers<[1], [0], [0], [1], [0, 0, 1, 1], [], []>} : vector<32x12xf32>, vector<12x6xf32>, vector<32x6xf32> -> vector<32x6xf32>
    %314 = arith.maximumf %310, %313 : vector<32x6xf32>
    %cst_300 = arith.constant 0.000000e+00 : f32
    %315 = vector.broadcast %cst_300 : f32 to vector<32x6xf32>
    %316 = arith.maximumf %314, %315 : vector<32x6xf32>
    %cst_301 = arith.constant dense<0.000000e+00> : vector<32x32xf32>
    %317 = tpu.matmul %285, %251, %cst_301 {dimension_numbers = #tpu.dot_dimension_numbers<[1], [1], [0], [0], [0, 0, 1, 0], [], []>} : vector<32x12xf32>, vector<32x12xf32>, vector<32x32xf32> -> vector<32x32xf32>
    %cst_302 = arith.constant 0.000000e+00 : f32
    %318 = vector.broadcast %cst_302 : f32 to vector<32x32xf32>
    %319 = arith.cmpf ogt, %317, %318 : vector<32x32xf32>
    %cst_303 = arith.constant 2.000000e-01 : f32
    %320 = vector.broadcast %cst_303 : f32 to vector<32x32xf32>
    %321 = arith.mulf %320, %317 : vector<32x32xf32>
    %322 = arith.select %319, %317, %321 : vector<32x32xi1>, vector<32x32xf32>
    %cst_304 = arith.constant dense<0xFF800000> : vector<32xf32>
    %323 = vector.multi_reduction <maximumf>, %322, %cst_304 [0] : vector<32x32xf32> to vector<32xf32>
    %324 = vector.shape_cast %323 : vector<32xf32> to vector<1x32xf32>
    %325 = vector.broadcast %324 : vector<1x32xf32> to vector<32x32xf32>
    %326 = arith.subf %322, %325 : vector<32x32xf32>
    %327 = math.exp %326 : vector<32x32xf32>
    %cst_305 = arith.constant dense<0.000000e+00> : vector<32xf32>
    %328 = vector.multi_reduction <add>, %327, %cst_305 [0] : vector<32x32xf32> to vector<32xf32>
    %329 = vector.shape_cast %328 : vector<32xf32> to vector<1x32xf32>
    %330 = vector.broadcast %329 : vector<1x32xf32> to vector<32x32xf32>
    %331 = arith.divf %327, %330 : vector<32x32xf32>
    %cst_306 = arith.constant dense<0.000000e+00> : vector<32x12xf32>
    %332 = tpu.matmul %331, %285, %cst_306 {dimension_numbers = #tpu.dot_dimension_numbers<[1], [0], [0], [1], [0, 0, 1, 1], [], []>} : vector<32x32xf32>, vector<32x12xf32>, vector<32x12xf32> -> vector<32x12xf32>
    %c0_307 = arith.constant 0 : index
    %c0_308 = arith.constant 0 : index
    %333 = vector.load %arg11[%c0_307, %c0_308] : memref<32x1xf32, #tpu.memory_space<vmem>>, vector<32x1xf32>
    %334 = vector.broadcast %333 : vector<32x1xf32> to vector<32x12xf32>
    %335 = arith.mulf %332, %334 : vector<32x12xf32>
    %c0_309 = arith.constant 0 : index
    %c0_310 = arith.constant 0 : index
    %336 = vector.load %arg12[%c0_309, %c0_310] : memref<32x1xf32, #tpu.memory_space<vmem>>, vector<32x1xf32>
    %337 = vector.broadcast %336 : vector<32x1xf32> to vector<32x12xf32>
    %338 = arith.addf %335, %337 : vector<32x12xf32>
    %c0_311 = arith.constant 0 : index
    %c0_312 = arith.constant 0 : index
    %c0_313 = arith.constant 0 : index
    %339 = vector.load %arg13[%c0_311, %c0_312, %c0_313] : memref<2x12x6xf32, #tpu.memory_space<vmem>>, vector<1x12x6xf32>
    %340 = vector.shape_cast %339 : vector<1x12x6xf32> to vector<12x6xf32>
    %cst_314 = arith.constant dense<0.000000e+00> : vector<32x6xf32>
    %341 = tpu.matmul %338, %340, %cst_314 {dimension_numbers = #tpu.dot_dimension_numbers<[1], [0], [0], [1], [0, 0, 1, 1], [], []>} : vector<32x12xf32>, vector<12x6xf32>, vector<32x6xf32> -> vector<32x6xf32>
    %c1_315 = arith.constant 1 : index
    %c0_316 = arith.constant 0 : index
    %c0_317 = arith.constant 0 : index
    %342 = vector.load %arg13[%c1_315, %c0_316, %c0_317] : memref<2x12x6xf32, #tpu.memory_space<vmem>>, vector<1x12x6xf32>
    %343 = vector.shape_cast %342 : vector<1x12x6xf32> to vector<12x6xf32>
    %cst_318 = arith.constant dense<0.000000e+00> : vector<32x6xf32>
    %344 = tpu.matmul %338, %343, %cst_318 {dimension_numbers = #tpu.dot_dimension_numbers<[1], [0], [0], [1], [0, 0, 1, 1], [], []>} : vector<32x12xf32>, vector<12x6xf32>, vector<32x6xf32> -> vector<32x6xf32>
    %345 = arith.maximumf %341, %344 : vector<32x6xf32>
    %cst_319 = arith.constant 0.000000e+00 : f32
    %346 = vector.broadcast %cst_319 : f32 to vector<32x6xf32>
    %347 = arith.maximumf %345, %346 : vector<32x6xf32>
    %c0_320 = arith.constant 0 : index
    %c0_321 = arith.constant 0 : index
    %c0_322 = arith.constant 0 : index
    %348 = vector.load %arg14[%c0_320, %c0_321, %c0_322] : memref<1x32x12xf32, #tpu.memory_space<vmem>>, vector<1x32x6xf32>
    %349 = vector.shape_cast %348 : vector<1x32x6xf32> to vector<32x6xf32>
    %350 = vector.shape_cast %316 : vector<32x6xf32> to vector<1x32x6xf32>
    tpu.vector_store %arg14[%c0_320, %c0_321, %c0_322], %350 {strides = array<i32>} : memref<1x32x12xf32, #tpu.memory_space<vmem>>, vector<1x32x6xf32>,
    %c0_323 = arith.constant 0 : index
    %c0_324 = arith.constant 0 : index
    %c6_325 = arith.constant 6 : index
    %351 = vector.load %arg14[%c0_323, %c0_324, %c6_325] : memref<1x32x12xf32, #tpu.memory_space<vmem>>, vector<1x32x6xf32>
    %352 = vector.shape_cast %351 : vector<1x32x6xf32> to vector<32x6xf32>
    %353 = vector.shape_cast %347 : vector<32x6xf32> to vector<1x32x6xf32>
    tpu.vector_store %arg14[%c0_323, %c0_324, %c6_325], %353 {strides = array<i32>} : memref<1x32x12xf32, #tpu.memory_space<vmem>>, vector<1x32x6xf32>,
    return
  }
  func.func @transform_0(%arg0: i32) -> (i32, i32, i32, i32) {
    %c0_i32 = arith.constant 0 : i32
    %c0_i32_0 = arith.constant 0 : i32
    %c0_i32_1 = arith.constant 0 : i32
    %c0_i32_2 = arith.constant 0 : i32
    return %arg0, %c0_i32, %c0_i32_0, %c0_i32_1 : i32, i32, i32, i32
  }
  func.func @transform_1(%arg0: i32) -> (i32, i32, i32) {
    %c0_i32 = arith.constant 0 : i32
    %c0_i32_0 = arith.constant 0 : i32
    %c0_i32_1 = arith.constant 0 : i32
    %c0_i32_2 = arith.constant 0 : i32
    return %c0_i32, %c0_i32_0, %c0_i32_1 : i32, i32, i32
  }
  func.func @transform_2(%arg0: i32) -> (i32, i32, i32) {
    %c0_i32 = arith.constant 0 : i32
    %c0_i32_0 = arith.constant 0 : i32
    %c0_i32_1 = arith.constant 0 : i32
    %c0_i32_2 = arith.constant 0 : i32
    return %c0_i32, %c0_i32_0, %c0_i32_1 : i32, i32, i32
  }
  func.func @transform_3(%arg0: i32) -> (i32, i32) {
    %c0_i32 = arith.constant 0 : i32
    %c0_i32_0 = arith.constant 0 : i32
    %c0_i32_1 = arith.constant 0 : i32
    return %c0_i32, %c0_i32_0 : i32, i32
  }
  func.func @transform_4(%arg0: i32) -> (i32, i32) {
    %c0_i32 = arith.constant 0 : i32
    %c0_i32_0 = arith.constant 0 : i32
    %c0_i32_1 = arith.constant 0 : i32
    return %c0_i32, %c0_i32_0 : i32, i32
  }
  func.func @transform_5(%arg0: i32) -> (i32, i32) {
    %c0_i32 = arith.constant 0 : i32
    %c0_i32_0 = arith.constant 0 : i32
    %c0_i32_1 = arith.constant 0 : i32
    return %c0_i32, %c0_i32_0 : i32, i32
  }
  func.func @transform_6(%arg0: i32) -> (i32, i32, i32) {
    %c0_i32 = arith.constant 0 : i32
    %c0_i32_0 = arith.constant 0 : i32
    %c0_i32_1 = arith.constant 0 : i32
    %c0_i32_2 = arith.constant 0 : i32
    return %c0_i32, %c0_i32_0, %c0_i32_1 : i32, i32, i32
  }
  func.func @transform_7(%arg0: i32) -> (i32, i32, i32) {
    %c0_i32 = arith.constant 0 : i32
    %c0_i32_0 = arith.constant 0 : i32
    %c0_i32_1 = arith.constant 0 : i32
    %c0_i32_2 = arith.constant 0 : i32
    return %c0_i32, %c0_i32_0, %c0_i32_1 : i32, i32, i32
  }
  func.func @transform_8(%arg0: i32) -> (i32, i32, i32) {
    %c0_i32 = arith.constant 0 : i32
    %c0_i32_0 = arith.constant 0 : i32
    %c0_i32_1 = arith.constant 0 : i32
    %c0_i32_2 = arith.constant 0 : i32
    return %c0_i32, %c0_i32_0, %c0_i32_1 : i32, i32, i32
  }
  func.func @transform_9(%arg0: i32) -> (i32, i32) {
    %c0_i32 = arith.constant 0 : i32
    %c0_i32_0 = arith.constant 0 : i32
    %c0_i32_1 = arith.constant 0 : i32
    return %c0_i32, %c0_i32_0 : i32, i32
  }
  func.func @transform_10(%arg0: i32) -> (i32, i32) {
    %c0_i32 = arith.constant 0 : i32
    %c0_i32_0 = arith.constant 0 : i32
    %c0_i32_1 = arith.constant 0 : i32
    return %c0_i32, %c0_i32_0 : i32, i32
  }
  func.func @transform_11(%arg0: i32) -> (i32, i32) {
    %c0_i32 = arith.constant 0 : i32
    %c0_i32_0 = arith.constant 0 : i32
    %c0_i32_1 = arith.constant 0 : i32
    return %c0_i32, %c0_i32_0 : i32, i32
  }
  func.func @transform_12(%arg0: i32) -> (i32, i32, i32) {
    %c0_i32 = arith.constant 0 : i32
    %c0_i32_0 = arith.constant 0 : i32
    %c0_i32_1 = arith.constant 0 : i32
    %c0_i32_2 = arith.constant 0 : i32
    return %c0_i32, %c0_i32_0, %c0_i32_1 : i32, i32, i32
  }
  func.func @transform_13(%arg0: i32) -> (i32, i32, i32) {
    %c0_i32 = arith.constant 0 : i32
    %c0_i32_0 = arith.constant 0 : i32
    %c0_i32_1 = arith.constant 0 : i32
    return %arg0, %c0_i32, %c0_i32_0 : i32, i32, i32
  }
}

</mosaic_0001>

<llo_original>
// kernel: gcn_forward.3
$region0: #{gcn_forward.3}
  #allocation0 [shape = 'u32[]', space=smem, size = 0x4, offset = 0x4, fixed_abs, tag = 'smem constant byte address 0x4 - core index']
  #allocation1 [shape = 'u32[144,128]{1,0:T(1,128)}', space=vmem, size = 0x12000, scoped, tag = 'internal scratch']
  %s0 = inlined_call_operand.vmem [shape: f32[2,384], index: 0, kind: input, shape index: {}]
  %s1 = inlined_call_operand.vmem [shape: f32[384,13], index: 1, kind: input, shape index: {}]
  %s2 = inlined_call_operand.vmem [shape: f32[1,13], index: 2, kind: input, shape index: {}]
  %s3 = inlined_call_operand.hbm [shape: f32[2,13], index: 3, kind: output, shape index: {}]
  %s4 = sld [smem:[#allocation0]]
  $region22: #{gcn_forward.3} parent=0
    _
  %s6 = ssub.s32 1, %s4
  %s7 = scalar_select 0, %s6, %s4
  $region1: #{gcn_forward.3} parent=0
    #allocation2 [shape = 'u8[1024]{0}', space=vmem, size = 0x400, scoped, tag = 'output window, operand 0, single buffered']
    #allocation3 [shape = 's32[1]{0}', space=sflag, size = 0x4, scoped, tag = 'scoped memory for gcn_forward.3']
    %8 = vsyncpa [#allocation3], 0
    // Predicated region
    $region2: #{gcn_forward.3} parent=1 // pred_check
      _
    $region3: #{gcn_forward.3} parent=1 // pred_check_branch
      %10 = sbr.rel (0) target = $region5
    $region4: #{gcn_forward.3} parent=1 // pred_region
      _
    $region5: #{gcn_forward.3} parent=1 // pred_fallthru
      _
    // Predicated region
    $region6: #{gcn_forward.3} parent=1 // pred_check
      _
    $region7: #{gcn_forward.3} parent=1 // pred_check_branch
      %12 = sbr.rel (0) target = $region9
    $region8: #{gcn_forward.3} parent=1 // pred_region
      _
    $region9: #{gcn_forward.3} parent=1 // pred_fallthru
      _
    // Predicated region
    $region10: #{gcn_forward.3} parent=1 // pred_check
      _
    $region11: #{gcn_forward.3} parent=1 // pred_check_branch
      %14 = sbr.rel (0) target = $region13
    $region12: #{gcn_forward.3} parent=1 // pred_region
      _
    $region13: #{gcn_forward.3} parent=1 // pred_fallthru
      _
    %v15 = vld [vmem:[%s0] sm:$0x3f]
    %v16 = vld [vmem:[%s1] sm:$0xff]
    %v17 = vld [vmem:[%s1 + $0x8] sm:$0xff]
    %v18 = vld [vmem:[%s1 + $0x10] sm:$0xff]
    %v19 = vld [vmem:[%s1 + $0x18] sm:$0xff]
    %v20 = vld [vmem:[%s1 + $0x20] sm:$0xff]
    %v21 = vld [vmem:[%s1 + $0x28] sm:$0xff]
    %v22 = vld [vmem:[%s1 + $0x30] sm:$0xff]
    %v23 = vld [vmem:[%s1 + $0x38] sm:$0xff]
    %v24 = vld [vmem:[%s1 + $0x40] sm:$0xff]
    %v25 = vld [vmem:[%s1 + $0x48] sm:$0xff]
    %v26 = vld [vmem:[%s1 + $0x50] sm:$0xff]
    %v27 = vld [vmem:[%s1 + $0x58] sm:$0xff]
    %v28 = vld [vmem:[%s1 + $0x60] sm:$0xff]
    %v29 = vld [vmem:[%s1 + $0x68] sm:$0xff]
    %v30 = vld [vmem:[%s1 + $0x70] sm:$0xff]
    %v31 = vld [vmem:[%s1 + $0x78] sm:$0xff]
    %v32 = vld [vmem:[%s1 + $0x80] sm:$0xff]
    %v33 = vld [vmem:[%s1 + $0x88] sm:$0xff]
    %v34 = vld [vmem:[%s1 + $0x90] sm:$0xff]
    %v35 = vld [vmem:[%s1 + $0x98] sm:$0xff]
    %v36 = vld [vmem:[%s1 + $0xa0] sm:$0xff]
    %v37 = vld [vmem:[%s1 + $0xa8] sm:$0xff]
    %v38 = vld [vmem:[%s1 + $0xb0] sm:$0xff]
    %v39 = vld [vmem:[%s1 + $0xb8] sm:$0xff]
    %v40 = vld [vmem:[%s1 + $0xc0] sm:$0xff]
    %v41 = vld [vmem:[%s1 + $0xc8] sm:$0xff]
    %v42 = vld [vmem:[%s1 + $0xd0] sm:$0xff]
    %v43 = vld [vmem:[%s1 + $0xd8] sm:$0xff]
    %v44 = vld [vmem:[%s1 + $0xe0] sm:$0xff]
    %v45 = vld [vmem:[%s1 + $0xe8] sm:$0xff]
    %v46 = vld [vmem:[%s1 + $0xf0] sm:$0xff]
    %v47 = vld [vmem:[%s1 + $0xf8] sm:$0xff]
    %v48 = vld [vmem:[%s1 + $0x100] sm:$0xff]
    %v49 = vld [vmem:[%s1 + $0x108] sm:$0xff]
    %v50 = vld [vmem:[%s1 + $0x110] sm:$0xff]
    %v51 = vld [vmem:[%s1 + $0x118] sm:$0xff]
    %v52 = vld [vmem:[%s1 + $0x120] sm:$0xff]
    %v53 = vld [vmem:[%s1 + $0x128] sm:$0xff]
    %v54 = vld [vmem:[%s1 + $0x130] sm:$0xff]
    %v55 = vld [vmem:[%s1 + $0x138] sm:$0xff]
    %v56 = vld [vmem:[%s1 + $0x140] sm:$0xff]
    %v57 = vld [vmem:[%s1 + $0x148] sm:$0xff]
    %v58 = vld [vmem:[%s1 + $0x150] sm:$0xff]
    %v59 = vld [vmem:[%s1 + $0x158] sm:$0xff]
    %v60 = vld [vmem:[%s1 + $0x160] sm:$0xff]
    %v61 = vld [vmem:[%s1 + $0x168] sm:$0xff]
    %v62 = vld [vmem:[%s1 + $0x170] sm:$0xff]
    %v63 = vld [vmem:[%s1 + $0x178] sm:$0xff]
    %v64 = vld [vmem:[%s2] sm:$0x1]
    %v66 = vlaneseq
    %v67 = vshrl.u32 %v66, 7
    %v68 = vsub.s32 0, %v67
    %v69 = vrot.slane %v64, %v68
    %v72 = vcombine.high %v15, %v15
    %v74 = vunpack.c.l.s4 1983009808
    %v75 = vunpack.c.0.s8 %v74
    %v76 = vlaneseq
    %v77 = vshrl.u32 %v76, 7
    %v78 = vsub.s32 %v75, %v77
    %v79 = vrot.slane %v15, %v78
    %v81 = vunpack.c.l.s4 1983009808
    %v82 = vunpack.c.0.s8 %v81
    %v83 = vlaneseq
    %v84 = vshrl.u32 %v83, 7
    %v85 = vsub.s32 %v82, %v84
    %v86 = vrot.slane %v72, %v85
    %v87 = vcombine.high %v79, %v79
    %91 = vmatprep.subr.mxu0 0.0
    %92 = vmatpush1.msra.mxu0 %v16
    %93 = vmatprep.subr.mxu0 0.0
    %94 = vmatpush1.msra.mxu0 %v17
    %95 = vmatprep.subr.mxu0 0.0
    %96 = vmatpush1.msra.mxu0 %v18
    %97 = vmatprep.subr.mxu0 0.0
    %98 = vmatpush1.msra.mxu0 %v19
    %99 = vmatprep.subr.mxu0 0.0
    %100 = vmatpush1.msra.mxu0 %v20
    %101 = vmatprep.subr.mxu0 0.0
    %102 = vmatpush1.msra.mxu0 %v21
    %103 = vmatprep.subr.mxu0 0.0
    %104 = vmatpush1.msra.mxu0 %v22
    %105 = vmatprep.subr.mxu0 0.0
    %106 = vmatpush1.msra.mxu0 %v23
    %107 = vmatprep.subr.mxu0 0.0
    %108 = vmatpush1.msra.mxu0 %v24
    %109 = vmatprep.subr.mxu0 0.0
    %110 = vmatpush1.msra.mxu0 %v25
    %111 = vmatprep.subr.mxu0 0.0
    %112 = vmatpush1.msra.mxu0 %v26
    %113 = vmatprep.subr.mxu0 0.0
    %114 = vmatpush1.msra.mxu0 %v27
    %115 = vmatprep.subr.mxu0 0.0
    %116 = vmatpush1.msra.mxu0 %v28
    %117 = vmatprep.subr.mxu0 0.0
    %118 = vmatpush1.msra.mxu0 %v29
    %119 = vmatprep.subr.mxu0 0.0
    %120 = vmatpush1.msra.mxu0 %v30
    %121 = vmatprep.subr.mxu0 0.0
    %122 = vmatpush1.msra.mxu0 %v31
    %123 = vmatprep.subr.mxu0 0.0
    %124 = vmatpush1.msra.mxu0 %v32
    %125 = vmatprep.subr.mxu0 0.0
    %126 = vmatpush1.msra.mxu0 %v33
    %127 = vmatprep.subr.mxu0 0.0
    %128 = vmatpush1.msra.mxu0 %v34
    %129 = vmatprep.subr.mxu0 0.0
    %130 = vmatpush1.msra.mxu0 %v35
    %131 = vmatprep.subr.mxu0 0.0
    %132 = vmatpush1.msra.mxu0 %v36
    %133 = vmatprep.subr.mxu0 0.0
    %134 = vmatpush1.msra.mxu0 %v37
    %135 = vmatprep.subr.mxu0 0.0
    %136 = vmatpush1.msra.mxu0 %v38
    %137 = vmatprep.subr.mxu0 0.0
    %138 = vmatpush1.msra.mxu0 %v39
    %139 = vmatprep.subr.mxu0 0.0
    %140 = vmatpush1.msra.mxu0 %v40
    %141 = vmatprep.subr.mxu0 0.0
    %142 = vmatpush1.msra.mxu0 %v41
    %143 = vmatprep.subr.mxu0 0.0
    %144 = vmatpush1.msra.mxu0 %v42
    %145 = vmatprep.subr.mxu0 0.0
    %146 = vmatpush1.msra.mxu0 %v43
    %147 = vmatprep.subr.mxu0 0.0
    %148 = vmatpush1.msra.mxu0 %v44
    %149 = vmatprep.subr.mxu0 0.0
    %150 = vmatpush1.msra.mxu0 %v45
    %151 = vmatprep.subr.mxu0 0.0
    %152 = vmatpush1.msra.mxu0 %v46
    %153 = vmatprep.subr.mxu0 0.0
    %154 = vmatpush1.msra.mxu0 %v47
    %155 = vmatprep.mubr.f32.mxu0 %v87
    %156 = vmatmul.mubr.f32.gmra.mrb[0].mxu0 %v79
    %v157 = vpop.f32.mrb[0].mxu0
    %v158 = vadd.f32 %v69, %v157
    %v159 = vpop.f32.mrb[0].mxu0
    %160 = vdwg.mxu0
    %161 = vmatprep.subr.mxu0 0.0
    %162 = vmatpush1.msra.mxu0 %v48
    %163 = vmatprep.subr.mxu0 0.0
    %164 = vmatpush1.msra.mxu0 %v49
    %165 = vmatprep.subr.mxu0 0.0
    %166 = vmatpush1.msra.mxu0 %v50
    %167 = vmatprep.subr.mxu0 0.0
    %168 = vmatpush1.msra.mxu0 %v51
    %169 = vmatprep.subr.mxu0 0.0
    %170 = vmatpush1.msra.mxu0 %v52
    %171 = vmatprep.subr.mxu0 0.0
    %172 = vmatpush1.msra.mxu0 %v53
    %173 = vmatprep.subr.mxu0 0.0
    %174 = vmatpush1.msra.mxu0 %v54
    %175 = vmatprep.subr.mxu0 0.0
    %176 = vmatpush1.msra.mxu0 %v55
    %177 = vmatprep.subr.mxu0 0.0
    %178 = vmatpush1.msra.mxu0 %v56
    %179 = vmatprep.subr.mxu0 0.0
    %180 = vmatpush1.msra.mxu0 %v57
    %181 = vmatprep.subr.mxu0 0.0
    %182 = vmatpush1.msra.mxu0 %v58
    %183 = vmatprep.subr.mxu0 0.0
    %184 = vmatpush1.msra.mxu0 %v59
    %185 = vmatprep.subr.mxu0 0.0
    %186 = vmatpush1.msra.mxu0 %v60
    %187 = vmatprep.subr.mxu0 0.0
    %188 = vmatpush1.msra.mxu0 %v61
    %189 = vmatprep.subr.mxu0 0.0
    %190 = vmatpush1.msra.mxu0 %v62
    %191 = vmatprep.subr.mxu0 0.0
    %192 = vmatpush1.msra.mxu0 %v63
    %193 = vmatprep.subr.mxu0 0.0
    %194 = vmatpush1.msra.mxu0 0.0
    %195 = vmatprep.subr.mxu0 0.0
    %196 = vmatpush1.msra.mxu0 0.0
    %197 = vmatprep.subr.mxu0 0.0
    %198 = vmatpush1.msra.mxu0 0.0
    %199 = vmatprep.subr.mxu0 0.0
    %200 = vmatpush1.msra.mxu0 0.0
    %201 = vmatprep.subr.mxu0 0.0
    %202 = vmatpush1.msra.mxu0 0.0
    %203 = vmatprep.subr.mxu0 0.0
    %204 = vmatpush1.msra.mxu0 0.0
    %205 = vmatprep.subr.mxu0 0.0
    %206 = vmatpush1.msra.mxu0 0.0
    %207 = vmatprep.subr.mxu0 0.0
    %208 = vmatpush1.msra.mxu0 0.0
    %209 = vmatprep.subr.mxu0 0.0
    %210 = vmatpush1.msra.mxu0 0.0
    %211 = vmatprep.subr.mxu0 0.0
    %212 = vmatpush1.msra.mxu0 0.0
    %213 = vmatprep.subr.mxu0 0.0
    %214 = vmatpush1.msra.mxu0 0.0
    %215 = vmatprep.subr.mxu0 0.0
    %216 = vmatpush1.msra.mxu0 0.0
    %217 = vmatprep.subr.mxu0 0.0
    %218 = vmatpush1.msra.mxu0 0.0
    %219 = vmatprep.subr.mxu0 0.0
    %220 = vmatpush1.msra.mxu0 0.0
    %221 = vmatprep.subr.mxu0 0.0
    %222 = vmatpush1.msra.mxu0 0.0
    %223 = vmatprep.subr.mxu0 0.0
    %224 = vmatpush1.msra.mxu0 0.0
    %225 = vmatprep.mubr.f32.mxu0 0.0
    %226 = vmatmul.mubr.f32.gmra.mrb[0].mxu0 %v86
    %v227 = vpop.f32.mrb[0].mxu0
    %v228 = vadd.f32 %v158, %v227
    %v229 = vpop.f32.mrb[0].mxu0
    %230 = vdwg.mxu0
    %vm231 = vcmask 99328
    %232 = vst.msk [vmem:[#allocation2] sm:$0x3] %vm231, %v228
    // Predicated region
    $region14: #{gcn_forward.3} parent=1 // pred_check
      _
    $region15: #{gcn_forward.3} parent=1 // pred_check_branch
      %234 = sbr.rel (0) target = $region17
    $region16: #{gcn_forward.3} parent=1 // pred_region
      %s236 = ssub.s32 32, 32
      %237 = vsyncadd [#allocation3], %s236
      %s239 = sshll.u32 [#allocation2], 4
      %s240 = int_to_ptr.vmem [resolvable:$true] %s239
      %242 = dma.vmem_to_hbm [thread:$0]  %s240, 32, %s3, [#allocation3]
    $region17: #{gcn_forward.3} parent=1 // pred_fallthru
      _
    // Predicated region
    $region18: #{gcn_forward.3} parent=1 // pred_check
      _
    $region19: #{gcn_forward.3} parent=1 // pred_check_branch
      %244 = sbr.rel (0) target = $region21
    $region20: #{gcn_forward.3} parent=1 // pred_region
      %245 = dma.done [#allocation3], 32
    $region21: #{gcn_forward.3} parent=1 // pred_fallthru
      _
    %246 = vsyncpa [#allocation3], 1

// kernel: gcn_forward.2
$region0: #{gcn_forward.2}
  #allocation0 [shape = 'u32[]', space=smem, size = 0x4, offset = 0x4, fixed_abs, tag = 'smem constant byte address 0x4 - core index']
  #allocation1 [shape = 'u32[144,128]{1,0:T(1,128)}', space=vmem, size = 0x12000, scoped, tag = 'internal scratch']
  %s0 = inlined_call_operand.vmem [shape: f32[2,2,25,25], index: 0, kind: input, shape index: {}]
  %s1 = inlined_call_operand.vmem [shape: f32[11,32,25], index: 1, kind: input, shape index: {}]
  %s2 = inlined_call_operand.vmem [shape: f32[11,25,25], index: 2, kind: input, shape index: {}]
  %s3 = inlined_call_operand.vmem [shape: f32[32,1], index: 3, kind: input, shape index: {}]
  %s4 = inlined_call_operand.vmem [shape: f32[32,1], index: 4, kind: input, shape index: {}]
  %s5 = inlined_call_operand.vmem [shape: f32[32,1], index: 5, kind: input, shape index: {}]
  %s6 = inlined_call_operand.vmem [shape: f32[2,25,12], index: 6, kind: input, shape index: {}]
  %s7 = inlined_call_operand.vmem [shape: f32[5,32,32], index: 7, kind: input, shape index: {}]
  %s8 = inlined_call_operand.vmem [shape: f32[5,12,12], index: 8, kind: input, shape index: {}]
  %s9 = inlined_call_operand.vmem [shape: f32[32,1], index: 9, kind: input, shape index: {}]
  %s10 = inlined_call_operand.vmem [shape: f32[32,1], index: 10, kind: input, shape index: {}]
  %s11 = inlined_call_operand.vmem [shape: f32[32,1], index: 11, kind: input, shape index: {}]
  %s12 = inlined_call_operand.vmem [shape: f32[2,12,6], index: 12, kind: input, shape index: {}]
  %s13 = inlined_call_operand.vmem [shape: f32[2,32,12], index: 13, kind: output, shape index: {}]
  %s14 = sld [smem:[#allocation0]]
  $region85: #{gcn_forward.2} parent=0
    _
  %s16 = ssub.s32 1, %s14
  %s17 = scalar_select 0, %s16, %s14
  loop: start=0, step=1, limit=4
  $region2: #{gcn_forward.2} parent=0 // loop_pre_header
    _
  $region3: #{gcn_forward.2} parent=0 // loop_header
    %s19 = sphi 0, %s23
    %p20 = scmp.ge.s32.totalorder %s19, 4
    %s29 = sphi 0, %s31
    %s32 = sphi 0, %s29
    %s33 = sphi 0, %s32
    %s49 = sphi 0, %s33
    %s53 = sphi 0, %s53
    %s55 = sphi 0, %s53
    %s56 = sphi 0, %s55
    %s70 = sphi 0, %s56
    %s74 = sphi 0, %s74
    %s76 = sphi 0, %s74
    %s77 = sphi 0, %s76
    %s91 = sphi 0, %s77
    %s95 = sphi 0, %s95
    %s97 = sphi 0, %s95
    %s98 = sphi 0, %s97
    %s112 = sphi 0, %s98
    %s116 = sphi 0, %s116
    %s118 = sphi 0, %s116
    %s119 = sphi 0, %s118
    %s133 = sphi 0, %s119
    %s137 = sphi 0, %s137
    %s139 = sphi 0, %s137
    %s140 = sphi 0, %s139
    %s154 = sphi 0, %s140
    %s158 = sphi 0, %s158
    %s160 = sphi 0, %s158
    %s161 = sphi 0, %s160
    %s175 = sphi 0, %s161
    %s179 = sphi 0, %s179
    %s181 = sphi 0, %s179
    %s182 = sphi 0, %s181
    %s196 = sphi 0, %s182
    %s200 = sphi 0, %s200
    %s202 = sphi 0, %s200
    %s203 = sphi 0, %s202
    %s217 = sphi 0, %s203
    %s221 = sphi 0, %s221
    %s223 = sphi 0, %s221
    %s224 = sphi 0, %s223
    %s238 = sphi 0, %s224
    %s242 = sphi 0, %s242
    %s244 = sphi 0, %s242
    %s245 = sphi 0, %s244
    %s259 = sphi 0, %s245
    %s263 = sphi 0, %s263
    %s265 = sphi 0, %s263
    %s266 = sphi 0, %s265
    %s280 = sphi 0, %s266
    %s284 = sphi 0, %s284
    %s286 = sphi 0, %s284
    %s287 = sphi 0, %s286
    %s301 = sphi 0, %s287
    %s307 = sphi 0, %s309
    %s310 = sphi 0, %s307
    %s311 = sphi 0, %s310
    %s327 = sphi 0, %s311
  $region4: #{gcn_forward.2} parent=0 // loop_header_branch
    %22 = sbr.rel (%p20) target = $region8
  $region5: #{gcn_forward.2} parent=0 // loop_body
    %s24 = ssub.s32 %s19, 1
    %s25 = ssub.s32 %s19, 2
    %s26 = sadd.s32 %s19, 1
    %s27 = ssub.s32 %s19, %s26
    %p28 = scmp.eq.s32.totalorder %s27, 0
    %s30 = sadd.s32 %s29, 1
    %s31 = scalar_select %p28, %s29, %s30
    %p34 = pneg %p28
    %p35 = scmp.eq.s32.totalorder %s19, 1
    %p36 = por %p34, %p35
    %p37 = scmp.ne.s32.totalorder %s29, %s32
    %p38 = scmp.eq.s32.totalorder %s19, 0
    %p39 = por %p37, %p38
    %p40 = scmp.ne.s32.totalorder %s29, %s32
    %p41 = scmp.eq.s32.totalorder %s24, 1
    %p42 = por %p40, %p41
    %p43 = scmp.ne.s32.totalorder %s32, %s33
    %p44 = scmp.eq.s32.totalorder %s24, 0
    %p45 = por %p43, %p44
    %p46 = scmp.ne.s32.totalorder %s32, %s33
    %p47 = scmp.eq.s32.totalorder %s25, 1
    %p48 = por %p46, %p47
    %p50 = scmp.ne.s32.totalorder %s33, %s49
    %p51 = scmp.eq.s32.totalorder %s25, 0
    %p52 = por %p50, %p51
    %s54 = sadd.s32 %s53, 1
    %p57 = scmp.eq.s32.totalorder %s19, 1
    %p58 = scmp.ne.s32.totalorder %s53, %s55
    %p59 = scmp.eq.s32.totalorder %s19, 0
    %p60 = por %p58, %p59
    %p61 = scmp.ne.s32.totalorder %s53, %s55
    %p62 = scmp.eq.s32.totalorder %s24, 1
    %p63 = por %p61, %p62
    %p64 = scmp.ne.s32.totalorder %s55, %s56
    %p65 = scmp.eq.s32.totalorder %s24, 0
    %p66 = por %p64, %p65
    %p67 = scmp.ne.s32.totalorder %s55, %s56
    %p68 = scmp.eq.s32.totalorder %s25, 1
    %p69 = por %p67, %p68
    %p71 = scmp.ne.s32.totalorder %s56, %s70
    %p72 = scmp.eq.s32.totalorder %s25, 0
    %p73 = por %p71, %p72
    %s75 = sadd.s32 %s74, 1
    %p78 = scmp.eq.s32.totalorder %s19, 1
    %p79 = scmp.ne.s32.totalorder %s74, %s76
    %p80 = scmp.eq.s32.totalorder %s19, 0
    %p81 = por %p79, %p80
    %p82 = scmp.ne.s32.totalorder %s74, %s76
    %p83 = scmp.eq.s32.totalorder %s24, 1
    %p84 = por %p82, %p83
    %p85 = scmp.ne.s32.totalorder %s76, %s77
    %p86 = scmp.eq.s32.totalorder %s24, 0
    %p87 = por %p85, %p86
    %p88 = scmp.ne.s32.totalorder %s76, %s77
    %p89 = scmp.eq.s32.totalorder %s25, 1
    %p90 = por %p88, %p89
    %p92 = scmp.ne.s32.totalorder %s77, %s91
    %p93 = scmp.eq.s32.totalorder %s25, 0
    %p94 = por %p92, %p93
    %s96 = sadd.s32 %s95, 1
    %p99 = scmp.eq.s32.totalorder %s19, 1
    %p100 = scmp.ne.s32.totalorder %s95, %s97
    %p101 = scmp.eq.s32.totalorder %s19, 0
    %p102 = por %p100, %p101
    %p103 = scmp.ne.s32.totalorder %s95, %s97
    %p104 = scmp.eq.s32.totalorder %s24, 1
    %p105 = por %p103, %p104
    %p106 = scmp.ne.s32.totalorder %s97, %s98
    %p107 = scmp.eq.s32.totalorder %s24, 0
    %p108 = por %p106, %p107
    %p109 = scmp.ne.s32.totalorder %s97, %s98
    %p110 = scmp.eq.s32.totalorder %s25, 1
    %p111 = por %p109, %p110
    %p113 = scmp.ne.s32.totalorder %s98, %s112
    %p114 = scmp.eq.s32.totalorder %s25, 0
    %p115 = por %p113, %p114
    %s117 = sadd.s32 %s116, 1
    %p120 = scmp.eq.s32.totalorder %s19, 1
    %p121 = scmp.ne.s32.totalorder %s116, %s118
    %p122 = scmp.eq.s32.totalorder %s19, 0
    %p123 = por %p121, %p122
    %p124 = scmp.ne.s32.totalorder %s116, %s118
    %p125 = scmp.eq.s32.totalorder %s24, 1
    %p126 = por %p124, %p125
    %p127 = scmp.ne.s32.totalorder %s118, %s119
    %p128 = scmp.eq.s32.totalorder %s24, 0
    %p129 = por %p127, %p128
    %p130 = scmp.ne.s32.totalorder %s118, %s119
    %p131 = scmp.eq.s32.totalorder %s25, 1
    %p132 = por %p130, %p131
    %p134 = scmp.ne.s32.totalorder %s119, %s133
    %p135 = scmp.eq.s32.totalorder %s25, 0
    %p136 = por %p134, %p135
    %s138 = sadd.s32 %s137, 1
    %p141 = scmp.eq.s32.totalorder %s19, 1
    %p142 = scmp.ne.s32.totalorder %s137, %s139
    %p143 = scmp.eq.s32.totalorder %s19, 0
    %p144 = por %p142, %p143
    %p145 = scmp.ne.s32.totalorder %s137, %s139
    %p146 = scmp.eq.s32.totalorder %s24, 1
    %p147 = por %p145, %p146
    %p148 = scmp.ne.s32.totalorder %s139, %s140
    %p149 = scmp.eq.s32.totalorder %s24, 0
    %p150 = por %p148, %p149
    %p151 = scmp.ne.s32.totalorder %s139, %s140
    %p152 = scmp.eq.s32.totalorder %s25, 1
    %p153 = por %p151, %p152
    %p155 = scmp.ne.s32.totalorder %s140, %s154
    %p156 = scmp.eq.s32.totalorder %s25, 0
    %p157 = por %p155, %p156
    %s159 = sadd.s32 %s158, 1
    %p162 = scmp.eq.s32.totalorder %s19, 1
    %p163 = scmp.ne.s32.totalorder %s158, %s160
    %p164 = scmp.eq.s32.totalorder %s19, 0
    %p165 = por %p163, %p164
    %p166 = scmp.ne.s32.totalorder %s158, %s160
    %p167 = scmp.eq.s32.totalorder %s24, 1
    %p168 = por %p166, %p167
    %p169 = scmp.ne.s32.totalorder %s160, %s161
    %p170 = scmp.eq.s32.totalorder %s24, 0
    %p171 = por %p169, %p170
    %p172 = scmp.ne.s32.totalorder %s160, %s161
    %p173 = scmp.eq.s32.totalorder %s25, 1
    %p174 = por %p172, %p173
    %p176 = scmp.ne.s32.totalorder %s161, %s175
    %p177 = scmp.eq.s32.totalorder %s25, 0
    %p178 = por %p176, %p177
    %s180 = sadd.s32 %s179, 1
    %p183 = scmp.eq.s32.totalorder %s19, 1
    %p184 = scmp.ne.s32.totalorder %s179, %s181
    %p185 = scmp.eq.s32.totalorder %s19, 0
    %p186 = por %p184, %p185
    %p187 = scmp.ne.s32.totalorder %s179, %s181
    %p188 = scmp.eq.s32.totalorder %s24, 1
    %p189 = por %p187, %p188
    %p190 = scmp.ne.s32.totalorder %s181, %s182
    %p191 = scmp.eq.s32.totalorder %s24, 0
    %p192 = por %p190, %p191
    %p193 = scmp.ne.s32.totalorder %s181, %s182
    %p194 = scmp.eq.s32.totalorder %s25, 1
    %p195 = por %p193, %p194
    %p197 = scmp.ne.s32.totalorder %s182, %s196
    %p198 = scmp.eq.s32.totalorder %s25, 0
    %p199 = por %p197, %p198
    %s201 = sadd.s32 %s200, 1
    %p204 = scmp.eq.s32.totalorder %s19, 1
    %p205 = scmp.ne.s32.totalorder %s200, %s202
    %p206 = scmp.eq.s32.totalorder %s19, 0
    %p207 = por %p205, %p206
    %p208 = scmp.ne.s32.totalorder %s200, %s202
    %p209 = scmp.eq.s32.totalorder %s24, 1
    %p210 = por %p208, %p209
    %p211 = scmp.ne.s32.totalorder %s202, %s203
    %p212 = scmp.eq.s32.totalorder %s24, 0
    %p213 = por %p211, %p212
    %p214 = scmp.ne.s32.totalorder %s202, %s203
    %p215 = scmp.eq.s32.totalorder %s25, 1
    %p216 = por %p214, %p215
    %p218 = scmp.ne.s32.totalorder %s203, %s217
    %p219 = scmp.eq.s32.totalorder %s25, 0
    %p220 = por %p218, %p219
    %s222 = sadd.s32 %s221, 1
    %p225 = scmp.eq.s32.totalorder %s19, 1
    %p226 = scmp.ne.s32.totalorder %s221, %s223
    %p227 = scmp.eq.s32.totalorder %s19, 0
    %p228 = por %p226, %p227
    %p229 = scmp.ne.s32.totalorder %s221, %s223
    %p230 = scmp.eq.s32.totalorder %s24, 1
    %p231 = por %p229, %p230
    %p232 = scmp.ne.s32.totalorder %s223, %s224
    %p233 = scmp.eq.s32.totalorder %s24, 0
    %p234 = por %p232, %p233
    %p235 = scmp.ne.s32.totalorder %s223, %s224
    %p236 = scmp.eq.s32.totalorder %s25, 1
    %p237 = por %p235, %p236
    %p239 = scmp.ne.s32.totalorder %s224, %s238
    %p240 = scmp.eq.s32.totalorder %s25, 0
    %p241 = por %p239, %p240
    %s243 = sadd.s32 %s242, 1
    %p246 = scmp.eq.s32.totalorder %s19, 1
    %p247 = scmp.ne.s32.totalorder %s242, %s244
    %p248 = scmp.eq.s32.totalorder %s19, 0
    %p249 = por %p247, %p248
    %p250 = scmp.ne.s32.totalorder %s242, %s244
    %p251 = scmp.eq.s32.totalorder %s24, 1
    %p252 = por %p250, %p251
    %p253 = scmp.ne.s32.totalorder %s244, %s245
    %p254 = scmp.eq.s32.totalorder %s24, 0
    %p255 = por %p253, %p254
    %p256 = scmp.ne.s32.totalorder %s244, %s245
    %p257 = scmp.eq.s32.totalorder %s25, 1
    %p258 = por %p256, %p257
    %p260 = scmp.ne.s32.totalorder %s245, %s259
    %p261 = scmp.eq.s32.totalorder %s25, 0
    %p262 = por %p260, %p261
    %s264 = sadd.s32 %s263, 1
    %p267 = scmp.eq.s32.totalorder %s19, 1
    %p268 = scmp.ne.s32.totalorder %s263, %s265
    %p269 = scmp.eq.s32.totalorder %s19, 0
    %p270 = por %p268, %p269
    %p271 = scmp.ne.s32.totalorder %s263, %s265
    %p272 = scmp.eq.s32.totalorder %s24, 1
    %p273 = por %p271, %p272
    %p274 = scmp.ne.s32.totalorder %s265, %s266
    %p275 = scmp.eq.s32.totalorder %s24, 0
    %p276 = por %p274, %p275
    %p277 = scmp.ne.s32.totalorder %s265, %s266
    %p278 = scmp.eq.s32.totalorder %s25, 1
    %p279 = por %p277, %p278
    %p281 = scmp.ne.s32.totalorder %s266, %s280
    %p282 = scmp.eq.s32.totalorder %s25, 0
    %p283 = por %p281, %p282
    %s285 = sadd.s32 %s284, 1
    %p288 = scmp.eq.s32.totalorder %s19, 1
    %p289 = scmp.ne.s32.totalorder %s284, %s286
    %p290 = scmp.eq.s32.totalorder %s19, 0
    %p291 = por %p289, %p290
    %p292 = scmp.ne.s32.totalorder %s284, %s286
    %p293 = scmp.eq.s32.totalorder %s24, 1
    %p294 = por %p292, %p293
    %p295 = scmp.ne.s32.totalorder %s286, %s287
    %p296 = scmp.eq.s32.totalorder %s24, 0
    %p297 = por %p295, %p296
    %p298 = scmp.ne.s32.totalorder %s286, %s287
    %p299 = scmp.eq.s32.totalorder %s25, 1
    %p300 = por %p298, %p299
    %p302 = scmp.ne.s32.totalorder %s287, %s301
    %p303 = scmp.eq.s32.totalorder %s25, 0
    %p304 = por %p302, %p303
    %s305 = ssub.s32 %s19, %s26
    %p306 = scmp.eq.s32.totalorder %s305, 0
    %s308 = sadd.s32 %s307, 1
    %s309 = scalar_select %p306, %s307, %s308
    %p312 = pneg %p306
    %p313 = scmp.eq.s32.totalorder %s19, 1
    %p314 = por %p312, %p313
    %p315 = scmp.ne.s32.totalorder %s307, %s310
    %p316 = scmp.eq.s32.totalorder %s19, 0
    %p317 = por %p315, %p316
    %p318 = scmp.ne.s32.totalorder %s307, %s310
    %p319 = scmp.eq.s32.totalorder %s24, 1
    %p320 = por %p318, %p319
    %p321 = scmp.ne.s32.totalorder %s310, %s311
    %p322 = scmp.eq.s32.totalorder %s24, 0
    %p323 = por %p321, %p322
    %p324 = scmp.ne.s32.totalorder %s310, %s311
    %p325 = scmp.eq.s32.totalorder %s25, 1
    %p326 = por %p324, %p325
    %p328 = scmp.ne.s32.totalorder %s311, %s327
    %p329 = scmp.eq.s32.totalorder %s25, 0
    %p330 = por %p328, %p329
    %p331 = scmp.le.s32.totalorder 1, %s19
    %p332 = scmp.lt.s32.totalorder %s19, 3
    %p333 = pnand %p331, %p332
    %p334 = pneg %p333
    // Predicated region
    $region9: #{gcn_forward.2} parent=5 // pred_check
      _
    $region10: #{gcn_forward.2} parent=5 // pred_check_branch
      %336 = sbr.rel (%p333) target = $region12
    $region11: #{gcn_forward.2} parent=5 // pred_region
      %s337 = ssub.s32 %s19, 1
      // Predicated region
      $region13: #{gcn_forward.2} parent=11 // pred_check
        %p338 = pneg %p66
      $region14: #{gcn_forward.2} parent=11 // pred_check_branch
        %340 = sbr.rel (%p338) target = $region16
      $region15: #{gcn_forward.2} parent=11 // pred_region
        _
      $region16: #{gcn_forward.2} parent=11 // pred_fallthru
        _
      // Predicated region
      $region17: #{gcn_forward.2} parent=11 // pred_check
        %p341 = pneg %p87
      $region18: #{gcn_forward.2} parent=11 // pred_check_branch
        %343 = sbr.rel (%p341) target = $region20
      $region19: #{gcn_forward.2} parent=11 // pred_region
        _
      $region20: #{gcn_forward.2} parent=11 // pred_fallthru
        _
      // Predicated region
      $region21: #{gcn_forward.2} parent=11 // pred_check
        %p344 = pneg %p108
      $region22: #{gcn_forward.2} parent=11 // pred_check_branch
        %346 = sbr.rel (%p344) target = $region24
      $region23: #{gcn_forward.2} parent=11 // pred_region
        _
      $region24: #{gcn_forward.2} parent=11 // pred_fallthru
        _
      // Predicated region
      $region25: #{gcn_forward.2} parent=11 // pred_check
        %p347 = pneg %p129
      $region26: #{gcn_forward.2} parent=11 // pred_check_branch
        %349 = sbr.rel (%p347) target = $region28
      $region27: #{gcn_forward.2} parent=11 // pred_region
        _
      $region28: #{gcn_forward.2} parent=11 // pred_fallthru
        _
      // Predicated region
      $region29: #{gcn_forward.2} parent=11 // pred_check
        %p350 = pneg %p150
      $region30: #{gcn_forward.2} parent=11 // pred_check_branch
        %352 = sbr.rel (%p350) target = $region32
      $region31: #{gcn_forward.2} parent=11 // pred_region
        _
      $region32: #{gcn_forward.2} parent=11 // pred_fallthru
        _
      // Predicated region
      $region33: #{gcn_forward.2} parent=11 // pred_check
        %p353 = pneg %p171
      $region34: #{gcn_forward.2} parent=11 // pred_check_branch
        %355 = sbr.rel (%p353) target = $region36
      $region35: #{gcn_forward.2} parent=11 // pred_region
        _
      $region36: #{gcn_forward.2} parent=11 // pred_fallthru
        _
      // Predicated region
      $region37: #{gcn_forward.2} parent=11 // pred_check
        %p356 = pneg %p192
      $region38: #{gcn_forward.2} parent=11 // pred_check_branch
        %358 = sbr.rel (%p356) target = $region40
      $region39: #{gcn_forward.2} parent=11 // pred_region
        _
      $region40: #{gcn_forward.2} parent=11 // pred_fallthru
        _
      // Predicated region
      $region41: #{gcn_forward.2} parent=11 // pred_check
        %p359 = pneg %p213
      $region42: #{gcn_forward.2} parent=11 // pred_check_branch
        %361 = sbr.rel (%p359) target = $region44
      $region43: #{gcn_forward.2} parent=11 // pred_region
        _
      $region44: #{gcn_forward.2} parent=11 // pred_fallthru
        _
      // Predicated region
      $region45: #{gcn_forward.2} parent=11 // pred_check
        %p362 = pneg %p234
      $region46: #{gcn_forward.2} parent=11 // pred_check_branch
        %364 = sbr.rel (%p362) target = $region48
      $region47: #{gcn_forward.2} parent=11 // pred_region
        _
      $region48: #{gcn_forward.2} parent=11 // pred_fallthru
        _
      // Predicated region
      $region49: #{gcn_forward.2} parent=11 // pred_check
        %p365 = pneg %p255
      $region50: #{gcn_forward.2} parent=11 // pred_check_branch
        %367 = sbr.rel (%p365) target = $region52
      $region51: #{gcn_forward.2} parent=11 // pred_region
        _
      $region52: #{gcn_forward.2} parent=11 // pred_fallthru
        _
      // Predicated region
      $region53: #{gcn_forward.2} parent=11 // pred_check
        %p368 = pneg %p276
      $region54: #{gcn_forward.2} parent=11 // pred_check_branch
        %370 = sbr.rel (%p368) target = $region56
      $region55: #{gcn_forward.2} parent=11 // pred_region
        _
      $region56: #{gcn_forward.2} parent=11 // pred_fallthru
        _
      // Predicated region
      $region57: #{gcn_forward.2} parent=11 // pred_check
        %p371 = pneg %p297
      $region58: #{gcn_forward.2} parent=11 // pred_check_branch
        %373 = sbr.rel (%p371) target = $region60
      $region59: #{gcn_forward.2} parent=11 // pred_region
        _
      $region60: #{gcn_forward.2} parent=11 // pred_fallthru
        _
    $region12: #{gcn_forward.2} parent=5 // pred_fallthru
      _
    %p374 = scmp.lt.s32.totalorder %s19, 2
    // Predicated region
    $region61: #{gcn_forward.2} parent=5 // pred_check
      %p375 = pneg %p374
    $region62: #{gcn_forward.2} parent=5 // pred_check_branch
      %377 = sbr.rel (%p375) target = $region64
    $region63: #{gcn_forward.2} parent=5 // pred_region
      // Predicated region
      $region65: #{gcn_forward.2} parent=63 // pred_check
        %p378 = pneg %p39
      $region66: #{gcn_forward.2} parent=63 // pred_check_branch
        %380 = sbr.rel (%p378) target = $region68
      $region67: #{gcn_forward.2} parent=63 // pred_region
        %p381 = scmp.lt.s32.totalorder %s19, 1
        %s382 = scalar_select %p381, %s19, 1
        %s383 = smul.addr %s382, 8
        %s384 = smul.addr %s383, 8
        %s385 = scalar_lea.vmem %s0, %s384
      $region68: #{gcn_forward.2} parent=63 // pred_fallthru
        _
    $region64: #{gcn_forward.2} parent=5 // pred_fallthru
      _
    %p386 = scmp.le.s32.totalorder 1, %s19
    %p387 = scmp.lt.s32.totalorder %s19, 3
    %p388 = pnand %p386, %p387
    %p389 = pneg %p388
    // Predicated region
    $region69: #{gcn_forward.2} parent=5 // pred_check
      _
    $region70: #{gcn_forward.2} parent=5 // pred_check_branch
      %391 = sbr.rel (%p388) target = $region72
    $region71: #{gcn_forward.2} parent=5 // pred_region
      %s392 = ssub.s32 %s19, 1
      %p393 = scmp.lt.s32.totalorder %s24, 1
      %s394 = scalar_select %p393, %s24, 1
      %s395 = smul.addr %s394, 8
      %s396 = smul.addr %s395, 8
      %s397 = scalar_lea.vmem %s0, %s396
      %p398 = pneg %p45
      %p399 = pneg %p42
      %p400 = pneg %p66
      %p401 = pneg %p63
      %p402 = pneg %p87
      %p403 = pneg %p84
      %p404 = pneg %p108
      %p405 = pneg %p105
      %p406 = pneg %p129
      %p407 = pneg %p126
      %p408 = pneg %p150
      %p409 = pneg %p147
      %p410 = pneg %p171
      %p411 = pneg %p168
      %p412 = pneg %p192
      %p413 = pneg %p189
      %p414 = pneg %p213
      %p415 = pneg %p210
      %p416 = pneg %p234
      %p417 = pneg %p231
      %p418 = pneg %p255
      %p419 = pneg %p252
      %p420 = pneg %p276
      %p421 = pneg %p273
      %p422 = pneg %p297
      %p423 = pneg %p294
      %p424 = pneg %p323
      %p425 = pneg %p320
      %p426 = scmp.lt.s32.totalorder %s24, 1
      %s427 = scalar_select %p426, %s24, 1
      %s428 = smul.addr %s427, 4
      %s429 = smul.addr %s428, 8
      %s430 = scalar_lea.vmem %s13, %s429
      %p431 = scmp.lt.s32.totalorder %s24, 1
      %s432 = scalar_select %p431, %s24, 1
      %s433 = smul.addr %s432, 8
      %s434 = smul.addr %s433, 8
      %s435 = scalar_lea.vmem %s0, %s434
      %p436 = scmp.lt.s32.totalorder %s24, 1
      %s437 = scalar_select %p436, %s24, 1
      %s438 = smul.addr %s437, 4
      %s439 = smul.addr %s438, 8
      %s440 = scalar_lea.vmem %s13, %s439
      %v441 = vld [vmem:[%s435] sm:$0xff]
      %v442 = vld [vmem:[%s435 + $0x8] sm:$0xff]
      %v443 = vld [vmem:[%s435 + $0x10] sm:$0xff]
      %v444 = vld [vmem:[%s435 + $0x18] sm:$0x1]
      %v445 = vld [vmem:[%s2] sm:$0xff]
      %v446 = vld [vmem:[%s2 + $0x8] sm:$0xff]
      %v447 = vld [vmem:[%s2 + $0x10] sm:$0xff]
      %v448 = vld [vmem:[%s2 + $0x18] sm:$0x1]
      %vm449 = vcmask 203776
      %v451 = vsel %vm449, %v441, 0
      %v454 = vsel %vm449, %v442, 0
      %v457 = vsel %vm449, %v443, 0
      %v460 = vsel %vm449, %v444, 0
      %vm462 = vcmask 1040384
      %v464 = vsel %vm462, %v448, 0
      %466 = vmatprep.subr.mxu0 0.0
      %467 = vmatpush1.msra.mxu0 %v445
      %468 = vmatprep.subr.mxu0 0.0
      %469 = vmatpush1.msra.mxu0 %v446
      %470 = vmatprep.subr.mxu0 0.0
      %471 = vmatpush1.msra.mxu0 %v447
      %472 = vmatprep.subr.mxu0 0.0
      %473 = vmatpush1.msra.mxu0 %v464
      %474 = vmatprep.subr.mxu0 0.0
      %475 = vmatpush1.msra.mxu0 0.0
      %476 = vmatprep.subr.mxu0 0.0
      %477 = vmatpush1.msra.mxu0 0.0
      %478 = vmatprep.subr.mxu0 0.0
      %479 = vmatpush1.msra.mxu0 0.0
      %480 = vmatprep.subr.mxu0 0.0
      %481 = vmatpush1.msra.mxu0 0.0
      %482 = vmatprep.subr.mxu0 0.0
      %483 = vmatpush1.msra.mxu0 0.0
      %484 = vmatprep.subr.mxu0 0.0
      %485 = vmatpush1.msra.mxu0 0.0
      %486 = vmatprep.subr.mxu0 0.0
      %487 = vmatpush1.msra.mxu0 0.0
      %488 = vmatprep.subr.mxu0 0.0
      %489 = vmatpush1.msra.mxu0 0.0
      %490 = vmatprep.subr.mxu0 0.0
      %491 = vmatpush1.msra.mxu0 0.0
      %492 = vmatprep.subr.mxu0 0.0
      %493 = vmatpush1.msra.mxu0 0.0
      %494 = vmatprep.subr.mxu0 0.0
      %495 = vmatpush1.msra.mxu0 0.0
      %496 = vmatprep.subr.mxu0 0.0
      %497 = vmatpush1.msra.mxu0 0.0
      %498 = vmatprep.subr.mxu0 0.0
      %499 = vmatpush1.msra.mxu0 0.0
      %500 = vmatprep.subr.mxu0 0.0
      %501 = vmatpush1.msra.mxu0 0.0
      %502 = vmatprep.subr.mxu0 0.0
      %503 = vmatpush1.msra.mxu0 0.0
      %504 = vmatprep.subr.mxu0 0.0
      %505 = vmatpush1.msra.mxu0 0.0
      %506 = vmatprep.subr.mxu0 0.0
      %507 = vmatpush1.msra.mxu0 0.0
      %508 = vmatprep.subr.mxu0 0.0
      %509 = vmatpush1.msra.mxu0 0.0
      %510 = vmatprep.subr.mxu0 0.0
      %511 = vmatpush1.msra.mxu0 0.0
      %512 = vmatprep.subr.mxu0 0.0
      %513 = vmatpush1.msra.mxu0 0.0
      %514 = vmatprep.subr.mxu0 0.0
      %515 = vmatpush1.msra.mxu0 0.0
      %516 = vmatprep.subr.mxu0 0.0
      %517 = vmatpush1.msra.mxu0 0.0
      %518 = vmatprep.subr.mxu0 0.0
      %519 = vmatpush1.msra.mxu0 0.0
      %520 = vmatprep.subr.mxu0 0.0
      %521 = vmatpush1.msra.mxu0 0.0
      %522 = vmatprep.subr.mxu0 0.0
      %523 = vmatpush1.msra.mxu0 0.0
      %524 = vmatprep.subr.mxu0 0.0
      %525 = vmatpush1.msra.mxu0 0.0
      %526 = vmatprep.subr.mxu0 0.0
      %527 = vmatpush1.msra.mxu0 0.0
      %528 = vmatprep.subr.mxu0 0.0
      %529 = vmatpush1.msra.mxu0 0.0
      %530 = vmatprep.mubr.f32.mxu0 0.0
      %531 = vmatmul.mubr.f32.gmra.mrb[0].mxu0 %v451
      %v532 = vpop.f32.mrb[0].mxu0
      %v533 = vadd.f32 0.0, %v532
      %v534 = vpop.f32.mrb[0].mxu0
      %535 = vmatprep.mubr.f32.mxu0 0.0
      %536 = vmatmul.mubr.f32.gmra.mrb[0].mxu0 %v454
      %v537 = vpop.f32.mrb[0].mxu0
      %v538 = vadd.f32 0.0, %v537
      %v539 = vpop.f32.mrb[0].mxu0
      %540 = vmatprep.mubr.f32.mxu0 0.0
      %541 = vmatmul.mubr.f32.gmra.mrb[0].mxu0 %v457
      %v542 = vpop.f32.mrb[0].mxu0
      %v543 = vadd.f32 0.0, %v542
      %v544 = vpop.f32.mrb[0].mxu0
      %545 = vmatprep.mubr.f32.mxu0 0.0
      %546 = vmatmul.mubr.f32.gmra.mrb[0].mxu0 %v460
      %v547 = vpop.f32.mrb[0].mxu0
      %v548 = vadd.f32 0.0, %v547
      %v549 = vpop.f32.mrb[0].mxu0
      %550 = vdwg.mxu0
      %v551 = vld [vmem:[%s1] sm:$0xff]
      %v552 = vld [vmem:[%s1 + $0x8] sm:$0xff]
      %v553 = vld [vmem:[%s1 + $0x10] sm:$0xff]
      %v554 = vld [vmem:[%s1 + $0x18] sm:$0xff]
      %s555 = scalar_lea.vmem %s2, 32
      %v556 = vld [vmem:[%s555] sm:$0xff]
      %v557 = vld [vmem:[%s555 + $0x8] sm:$0xff]
      %v558 = vld [vmem:[%s555 + $0x10] sm:$0xff]
      %v559 = vld [vmem:[%s555 + $0x18] sm:$0x1]
      %v561 = vsel %vm462, %v559, 0
      %563 = vmatprep.subr.mxu0 0.0
      %564 = vmatpush1.msra.mxu0 %v556
      %565 = vmatprep.subr.mxu0 0.0
      %566 = vmatpush1.msra.mxu0 %v557
      %567 = vmatprep.subr.mxu0 0.0
      %568 = vmatpush1.msra.mxu0 %v558
      %569 = vmatprep.subr.mxu0 0.0
      %570 = vmatpush1.msra.mxu0 %v561
      %571 = vmatprep.subr.mxu0 0.0
      %572 = vmatpush1.msra.mxu0 0.0
      %573 = vmatprep.subr.mxu0 0.0
      %574 = vmatpush1.msra.mxu0 0.0
      %575 = vmatprep.subr.mxu0 0.0
      %576 = vmatpush1.msra.mxu0 0.0
      %577 = vmatprep.subr.mxu0 0.0
      %578 = vmatpush1.msra.mxu0 0.0
      %579 = vmatprep.subr.mxu0 0.0
      %580 = vmatpush1.msra.mxu0 0.0
      %581 = vmatprep.subr.mxu0 0.0
      %582 = vmatpush1.msra.mxu0 0.0
      %583 = vmatprep.subr.mxu0 0.0
      %584 = vmatpush1.msra.mxu0 0.0
      %585 = vmatprep.subr.mxu0 0.0
      %586 = vmatpush1.msra.mxu0 0.0
      %587 = vmatprep.subr.mxu0 0.0
      %588 = vmatpush1.msra.mxu0 0.0
      %589 = vmatprep.subr.mxu0 0.0
      %590 = vmatpush1.msra.mxu0 0.0
      %591 = vmatprep.subr.mxu0 0.0
      %592 = vmatpush1.msra.mxu0 0.0
      %593 = vmatprep.subr.mxu0 0.0
      %594 = vmatpush1.msra.mxu0 0.0
      %595 = vmatprep.subr.mxu0 0.0
      %596 = vmatpush1.msra.mxu0 0.0
      %597 = vmatprep.subr.mxu0 0.0
      %598 = vmatpush1.msra.mxu0 0.0
      %599 = vmatprep.subr.mxu0 0.0
      %600 = vmatpush1.msra.mxu0 0.0
      %601 = vmatprep.subr.mxu0 0.0
      %602 = vmatpush1.msra.mxu0 0.0
      %603 = vmatprep.subr.mxu0 0.0
      %604 = vmatpush1.msra.mxu0 0.0
      %605 = vmatprep.subr.mxu0 0.0
      %606 = vmatpush1.msra.mxu0 0.0
      %607 = vmatprep.subr.mxu0 0.0
      %608 = vmatpush1.msra.mxu0 0.0
      %609 = vmatprep.subr.mxu0 0.0
      %610 = vmatpush1.msra.mxu0 0.0
      %611 = vmatprep.subr.mxu0 0.0
      %612 = vmatpush1.msra.mxu0 0.0
      %613 = vmatprep.subr.mxu0 0.0
      %614 = vmatpush1.msra.mxu0 0.0
      %615 = vmatprep.subr.mxu0 0.0
      %616 = vmatpush1.msra.mxu0 0.0
      %617 = vmatprep.subr.mxu0 0.0
      %618 = vmatpush1.msra.mxu0 0.0
      %619 = vmatprep.subr.mxu0 0.0
      %620 = vmatpush1.msra.mxu0 0.0
      %621 = vmatprep.subr.mxu0 0.0
      %622 = vmatpush1.msra.mxu0 0.0
      %623 = vmatprep.subr.mxu0 0.0
      %624 = vmatpush1.msra.mxu0 0.0
      %625 = vmatprep.subr.mxu0 0.0
      %626 = vmatpush1.msra.mxu0 0.0
      %627 = vmatprep.mubr.f32.mxu0 0.0
      %628 = vmatmul.mubr.f32.gmra.mrb[0].mxu0 %v451
      %v629 = vpop.f32.mrb[0].mxu0
      %v630 = vadd.f32 0.0, %v629
      %v631 = vpop.f32.mrb[0].mxu0
      %632 = vmatprep.mubr.f32.mxu0 0.0
      %633 = vmatmul.mubr.f32.gmra.mrb[0].mxu0 %v454
      %v634 = vpop.f32.mrb[0].mxu0
      %v635 = vadd.f32 0.0, %v634
      %v636 = vpop.f32.mrb[0].mxu0
      %637 = vmatprep.mubr.f32.mxu0 0.0
      %638 = vmatmul.mubr.f32.gmra.mrb[0].mxu0 %v457
      %v639 = vpop.f32.mrb[0].mxu0
      %v640 = vadd.f32 0.0, %v639
      %v641 = vpop.f32.mrb[0].mxu0
      %642 = vmatprep.mubr.f32.mxu0 0.0
      %643 = vmatmul.mubr.f32.gmra.mrb[0].mxu0 %v460
      %v644 = vpop.f32.mrb[0].mxu0
      %v645 = vadd.f32 0.0, %v644
      %v646 = vpop.f32.mrb[0].mxu0
      %647 = vdwg.mxu0
      %s648 = scalar_lea.vmem %s1, 32
      %v649 = vld [vmem:[%s648] sm:$0xff]
      %v650 = vld [vmem:[%s648 + $0x8] sm:$0xff]
      %v651 = vld [vmem:[%s648 + $0x10] sm:$0xff]
      %v652 = vld [vmem:[%s648 + $0x18] sm:$0xff]
      %v654 = vsel %vm449, %v649, 0
      %v657 = vsel %vm449, %v650, 0
      %v660 = vsel %vm449, %v651, 0
      %v663 = vsel %vm449, %v652, 0
      %v666 = vsel %vm462, %v645, 0
      %668 = vmatprep.subr.mxu0 0.0
      %669 = vmatpush1.msra.mxu0 %v630
      %670 = vmatprep.subr.mxu0 0.0
      %671 = vmatpush1.msra.mxu0 %v635
      %672 = vmatprep.subr.mxu0 0.0
      %673 = vmatpush1.msra.mxu0 %v640
      %674 = vmatprep.subr.mxu0 0.0
      %675 = vmatpush1.msra.mxu0 %v666
      %676 = vmatprep.subr.mxu0 0.0
      %677 = vmatpush1.msra.mxu0 0.0
      %678 = vmatprep.subr.mxu0 0.0
      %679 = vmatpush1.msra.mxu0 0.0
      %680 = vmatprep.subr.mxu0 0.0
      %681 = vmatpush1.msra.mxu0 0.0
      %682 = vmatprep.subr.mxu0 0.0
      %683 = vmatpush1.msra.mxu0 0.0
      %684 = vmatprep.subr.mxu0 0.0
      %685 = vmatpush1.msra.mxu0 0.0
      %686 = vmatprep.subr.mxu0 0.0
      %687 = vmatpush1.msra.mxu0 0.0
      %688 = vmatprep.subr.mxu0 0.0
      %689 = vmatpush1.msra.mxu0 0.0
      %690 = vmatprep.subr.mxu0 0.0
      %691 = vmatpush1.msra.mxu0 0.0
      %692 = vmatprep.subr.mxu0 0.0
      %693 = vmatpush1.msra.mxu0 0.0
      %694 = vmatprep.subr.mxu0 0.0
      %695 = vmatpush1.msra.mxu0 0.0
      %696 = vmatprep.subr.mxu0 0.0
      %697 = vmatpush1.msra.mxu0 0.0
      %698 = vmatprep.subr.mxu0 0.0
      %699 = vmatpush1.msra.mxu0 0.0
      %700 = vmatprep.subr.mxu0 0.0
      %701 = vmatpush1.msra.mxu0 0.0
      %702 = vmatprep.subr.mxu0 0.0
      %703 = vmatpush1.msra.mxu0 0.0
      %704 = vmatprep.subr.mxu0 0.0
      %705 = vmatpush1.msra.mxu0 0.0
      %706 = vmatprep.subr.mxu0 0.0
      %707 = vmatpush1.msra.mxu0 0.0
      %708 = vmatprep.subr.mxu0 0.0
      %709 = vmatpush1.msra.mxu0 0.0
      %710 = vmatprep.subr.mxu0 0.0
      %711 = vmatpush1.msra.mxu0 0.0
      %712 = vmatprep.subr.mxu0 0.0
      %713 = vmatpush1.msra.mxu0 0.0
      %714 = vmatprep.subr.mxu0 0.0
      %715 = vmatpush1.msra.mxu0 0.0
      %716 = vmatprep.subr.mxu0 0.0
      %717 = vmatpush1.msra.mxu0 0.0
      %718 = vmatprep.subr.mxu0 0.0
      %719 = vmatpush1.msra.mxu0 0.0
      %720 = vmatprep.subr.mxu0 0.0
      %721 = vmatpush1.msra.mxu0 0.0
      %722 = vmatprep.subr.mxu0 0.0
      %723 = vmatpush1.msra.mxu0 0.0
      %724 = vmatprep.subr.mxu0 0.0
      %725 = vmatpush1.msra.mxu0 0.0
      %726 = vmatprep.subr.mxu0 0.0
      %727 = vmatpush1.msra.mxu0 0.0
      %728 = vmatprep.subr.mxu0 0.0
      %729 = vmatpush1.msra.mxu0 0.0
      %730 = vmatprep.subr.mxu0 0.0
      %731 = vmatpush1.msra.mxu0 0.0
      %732 = vmatprep.mubr.f32.mxu0 0.0
      %733 = vmatmul.mubr.f32.gmra.mrb[0].mxu0 %v654
      %v734 = vpop.f32.mrb[0].mxu0
      %v735 = vadd.f32 0.0, %v734
      %v736 = vpop.f32.mrb[0].mxu0
      %737 = vmatprep.mubr.f32.mxu0 0.0
      %738 = vmatmul.mubr.f32.gmra.mrb[0].mxu0 %v657
      %v739 = vpop.f32.mrb[0].mxu0
      %v740 = vadd.f32 0.0, %v739
      %v741 = vpop.f32.mrb[0].mxu0
      %742 = vmatprep.mubr.f32.mxu0 0.0
      %743 = vmatmul.mubr.f32.gmra.mrb[0].mxu0 %v660
      %v744 = vpop.f32.mrb[0].mxu0
      %v745 = vadd.f32 0.0, %v744
      %v746 = vpop.f32.mrb[0].mxu0
      %747 = vmatprep.mubr.f32.mxu0 0.0
      %748 = vmatmul.mubr.f32.gmra.mrb[0].mxu0 %v663
      %v749 = vpop.f32.mrb[0].mxu0
      %v750 = vadd.f32 0.0, %v749
      %v751 = vpop.f32.mrb[0].mxu0
      %752 = vdwg.mxu0
      %v754 = vsel %vm449, %v551, 0
      %v757 = vsel %vm449, %v552, 0
      %v760 = vsel %vm449, %v553, 0
      %v763 = vsel %vm449, %v554, 0
      %v766 = vsel %vm462, %v548, 0
      %768 = vmatprep.subr.mxu0 0.0
      %769 = vmatpush1.msra.mxu0 %v533
      %770 = vmatprep.subr.mxu0 0.0
      %771 = vmatpush1.msra.mxu0 %v538
      %772 = vmatprep.subr.mxu0 0.0
      %773 = vmatpush1.msra.mxu0 %v543
      %774 = vmatprep.subr.mxu0 0.0
      %775 = vmatpush1.msra.mxu0 %v766
      %776 = vmatprep.subr.mxu0 0.0
      %777 = vmatpush1.msra.mxu0 0.0
      %778 = vmatprep.subr.mxu0 0.0
      %779 = vmatpush1.msra.mxu0 0.0
      %780 = vmatprep.subr.mxu0 0.0
      %781 = vmatpush1.msra.mxu0 0.0
      %782 = vmatprep.subr.mxu0 0.0
      %783 = vmatpush1.msra.mxu0 0.0
      %784 = vmatprep.subr.mxu0 0.0
      %785 = vmatpush1.msra.mxu0 0.0
      %786 = vmatprep.subr.mxu0 0.0
      %787 = vmatpush1.msra.mxu0 0.0
      %788 = vmatprep.subr.mxu0 0.0
      %789 = vmatpush1.msra.mxu0 0.0
      %790 = vmatprep.subr.mxu0 0.0
      %791 = vmatpush1.msra.mxu0 0.0
      %792 = vmatprep.subr.mxu0 0.0
      %793 = vmatpush1.msra.mxu0 0.0
      %794 = vmatprep.subr.mxu0 0.0
      %795 = vmatpush1.msra.mxu0 0.0
      %796 = vmatprep.subr.mxu0 0.0
      %797 = vmatpush1.msra.mxu0 0.0
      %798 = vmatprep.subr.mxu0 0.0
      %799 = vmatpush1.msra.mxu0 0.0
      %800 = vmatprep.subr.mxu0 0.0
      %801 = vmatpush1.msra.mxu0 0.0
      %802 = vmatprep.subr.mxu0 0.0
      %803 = vmatpush1.msra.mxu0 0.0
      %804 = vmatprep.subr.mxu0 0.0
      %805 = vmatpush1.msra.mxu0 0.0
      %806 = vmatprep.subr.mxu0 0.0
      %807 = vmatpush1.msra.mxu0 0.0
      %808 = vmatprep.subr.mxu0 0.0
      %809 = vmatpush1.msra.mxu0 0.0
      %810 = vmatprep.subr.mxu0 0.0
      %811 = vmatpush1.msra.mxu0 0.0
      %812 = vmatprep.subr.mxu0 0.0
      %813 = vmatpush1.msra.mxu0 0.0
      %814 = vmatprep.subr.mxu0 0.0
      %815 = vmatpush1.msra.mxu0 0.0
      %816 = vmatprep.subr.mxu0 0.0
      %817 = vmatpush1.msra.mxu0 0.0
      %818 = vmatprep.subr.mxu0 0.0
      %819 = vmatpush1.msra.mxu0 0.0
      %820 = vmatprep.subr.mxu0 0.0
      %821 = vmatpush1.msra.mxu0 0.0
      %822 = vmatprep.subr.mxu0 0.0
      %823 = vmatpush1.msra.mxu0 0.0
      %824 = vmatprep.subr.mxu0 0.0
      %825 = vmatpush1.msra.mxu0 0.0
      %826 = vmatprep.subr.mxu0 0.0
      %827 = vmatpush1.msra.mxu0 0.0
      %828 = vmatprep.subr.mxu0 0.0
      %829 = vmatpush1.msra.mxu0 0.0
      %830 = vmatprep.subr.mxu0 0.0
      %831 = vmatpush1.msra.mxu0 0.0
      %832 = vmatprep.mubr.f32.mxu0 0.0
      %833 = vmatmul.mubr.f32.gmra.mrb[0].mxu0 %v754
      %v834 = vpop.f32.mrb[0].mxu0
      %v835 = vadd.f32 %v735, %v834
      %v836 = vpop.f32.mrb[0].mxu0
      %837 = vmatprep.mubr.f32.mxu0 0.0
      %838 = vmatmul.mubr.f32.gmra.mrb[0].mxu0 %v757
      %v839 = vpop.f32.mrb[0].mxu0
      %v840 = vadd.f32 %v740, %v839
      %v841 = vpop.f32.mrb[0].mxu0
      %842 = vmatprep.mubr.f32.mxu0 0.0
      %843 = vmatmul.mubr.f32.gmra.mrb[0].mxu0 %v760
      %v844 = vpop.f32.mrb[0].mxu0
      %v845 = vadd.f32 %v745, %v844
      %v846 = vpop.f32.mrb[0].mxu0
      %847 = vmatprep.mubr.f32.mxu0 0.0
      %848 = vmatmul.mubr.f32.gmra.mrb[0].mxu0 %v763
      %v849 = vpop.f32.mrb[0].mxu0
      %v850 = vadd.f32 %v750, %v849
      %v851 = vpop.f32.mrb[0].mxu0
      %852 = vdwg.mxu0
      %s853 = scalar_lea.vmem %s2, 64
      %v854 = vld [vmem:[%s853] sm:$0xff]
      %v855 = vld [vmem:[%s853 + $0x8] sm:$0xff]
      %v856 = vld [vmem:[%s853 + $0x10] sm:$0xff]
      %v857 = vld [vmem:[%s853 + $0x18] sm:$0x1]
      %v859 = vsel %vm462, %v857, 0
      %861 = vmatprep.subr.mxu0 0.0
      %862 = vmatpush1.msra.mxu0 %v854
      %863 = vmatprep.subr.mxu0 0.0
      %864 = vmatpush1.msra.mxu0 %v855
      %865 = vmatprep.subr.mxu0 0.0
      %866 = vmatpush1.msra.mxu0 %v856
      %867 = vmatprep.subr.mxu0 0.0
      %868 = vmatpush1.msra.mxu0 %v859
      %869 = vmatprep.subr.mxu0 0.0
      %870 = vmatpush1.msra.mxu0 0.0
      %871 = vmatprep.subr.mxu0 0.0
      %872 = vmatpush1.msra.mxu0 0.0
      %873 = vmatprep.subr.mxu0 0.0
      %874 = vmatpush1.msra.mxu0 0.0
      %875 = vmatprep.subr.mxu0 0.0
      %876 = vmatpush1.msra.mxu0 0.0
      %877 = vmatprep.subr.mxu0 0.0
      %878 = vmatpush1.msra.mxu0 0.0
      %879 = vmatprep.subr.mxu0 0.0
      %880 = vmatpush1.msra.mxu0 0.0
      %881 = vmatprep.subr.mxu0 0.0
      %882 = vmatpush1.msra.mxu0 0.0
      %883 = vmatprep.subr.mxu0 0.0
      %884 = vmatpush1.msra.mxu0 0.0
      %885 = vmatprep.subr.mxu0 0.0
      %886 = vmatpush1.msra.mxu0 0.0
      %887 = vmatprep.subr.mxu0 0.0
      %888 = vmatpush1.msra.mxu0 0.0
      %889 = vmatprep.subr.mxu0 0.0
      %890 = vmatpush1.msra.mxu0 0.0
      %891 = vmatprep.subr.mxu0 0.0
      %892 = vmatpush1.msra.mxu0 0.0
      %893 = vmatprep.subr.mxu0 0.0
      %894 = vmatpush1.msra.mxu0 0.0
      %895 = vmatprep.subr.mxu0 0.0
      %896 = vmatpush1.msra.mxu0 0.0
      %897 = vmatprep.subr.mxu0 0.0
      %898 = vmatpush1.msra.mxu0 0.0
      %899 = vmatprep.subr.mxu0 0.0
      %900 = vmatpush1.msra.mxu0 0.0
      %901 = vmatprep.subr.mxu0 0.0
      %902 = vmatpush1.msra.mxu0 0.0
      %903 = vmatprep.subr.mxu0 0.0
      %904 = vmatpush1.msra.mxu0 0.0
      %905 = vmatprep.subr.mxu0 0.0
      %906 = vmatpush1.msra.mxu0 0.0
      %907 = vmatprep.subr.mxu0 0.0
      %908 = vmatpush1.msra.mxu0 0.0
      %909 = vmatprep.subr.mxu0 0.0
      %910 = vmatpush1.msra.mxu0 0.0
      %911 = vmatprep.subr.mxu0 0.0
      %912 = vmatpush1.msra.mxu0 0.0
      %913 = vmatprep.subr.mxu0 0.0
      %914 = vmatpush1.msra.mxu0 0.0
      %915 = vmatprep.subr.mxu0 0.0
      %916 = vmatpush1.msra.mxu0 0.0
      %917 = vmatprep.subr.mxu0 0.0
      %918 = vmatpush1.msra.mxu0 0.0
      %919 = vmatprep.subr.mxu0 0.0
      %920 = vmatpush1.msra.mxu0 0.0
      %921 = vmatprep.subr.mxu0 0.0
      %922 = vmatpush1.msra.mxu0 0.0
      %923 = vmatprep.subr.mxu0 0.0
      %924 = vmatpush1.msra.mxu0 0.0
      %925 = vmatprep.mubr.f32.mxu0 0.0
      %926 = vmatmul.mubr.f32.gmra.mrb[0].mxu0 %v451
      %v927 = vpop.f32.mrb[0].mxu0
      %v928 = vadd.f32 0.0, %v927
      %v929 = vpop.f32.mrb[0].mxu0
      %930 = vmatprep.mubr.f32.mxu0 0.0
      %931 = vmatmul.mubr.f32.gmra.mrb[0].mxu0 %v454
      %v932 = vpop.f32.mrb[0].mxu0
      %v933 = vadd.f32 0.0, %v932
      %v934 = vpop.f32.mrb[0].mxu0
      %935 = vmatprep.mubr.f32.mxu0 0.0
      %936 = vmatmul.mubr.f32.gmra.mrb[0].mxu0 %v457
      %v937 = vpop.f32.mrb[0].mxu0
      %v938 = vadd.f32 0.0, %v937
      %v939 = vpop.f32.mrb[0].mxu0
      %940 = vmatprep.mubr.f32.mxu0 0.0
      %941 = vmatmul.mubr.f32.gmra.mrb[0].mxu0 %v460
      %v942 = vpop.f32.mrb[0].mxu0
      %v943 = vadd.f32 0.0, %v942
      %v944 = vpop.f32.mrb[0].mxu0
      %945 = vdwg.mxu0
      %s946 = scalar_lea.vmem %s1, 64
      %v947 = vld [vmem:[%s946] sm:$0xff]
      %v948 = vld [vmem:[%s946 + $0x8] sm:$0xff]
      %v949 = vld [vmem:[%s946 + $0x10] sm:$0xff]
      %v950 = vld [vmem:[%s946 + $0x18] sm:$0xff]
      %v952 = vsel %vm449, %v947, 0
      %v955 = vsel %vm449, %v948, 0
      %v958 = vsel %vm449, %v949, 0
      %v961 = vsel %vm449, %v950, 0
      %v964 = vsel %vm462, %v943, 0
      %966 = vmatprep.subr.mxu0 0.0
      %967 = vmatpush1.msra.mxu0 %v928
      %968 = vmatprep.subr.mxu0 0.0
      %969 = vmatpush1.msra.mxu0 %v933
      %970 = vmatprep.subr.mxu0 0.0
      %971 = vmatpush1.msra.mxu0 %v938
      %972 = vmatprep.subr.mxu0 0.0
      %973 = vmatpush1.msra.mxu0 %v964
      %974 = vmatprep.subr.mxu0 0.0
      %975 = vmatpush1.msra.mxu0 0.0
      %976 = vmatprep.subr.mxu0 0.0
      %977 = vmatpush1.msra.mxu0 0.0
      %978 = vmatprep.subr.mxu0 0.0
      %979 = vmatpush1.msra.mxu0 0.0
      %980 = vmatprep.subr.mxu0 0.0
      %981 = vmatpush1.msra.mxu0 0.0
      %982 = vmatprep.subr.mxu0 0.0
      %983 = vmatpush1.msra.mxu0 0.0
      %984 = vmatprep.subr.mxu0 0.0
      %985 = vmatpush1.msra.mxu0 0.0
      %986 = vmatprep.subr.mxu0 0.0
      %987 = vmatpush1.msra.mxu0 0.0
      %988 = vmatprep.subr.mxu0 0.0
      %989 = vmatpush1.msra.mxu0 0.0
      %990 = vmatprep.subr.mxu0 0.0
      %991 = vmatpush1.msra.mxu0 0.0
      %992 = vmatprep.subr.mxu0 0.0
      %993 = vmatpush1.msra.mxu0 0.0
      %994 = vmatprep.subr.mxu0 0.0
      %995 = vmatpush1.msra.mxu0 0.0
      %996 = vmatprep.subr.mxu0 0.0
      %997 = vmatpush1.msra.mxu0 0.0
      %998 = vmatprep.subr.mxu0 0.0
      %999 = vmatpush1.msra.mxu0 0.0
      %1000 = vmatprep.subr.mxu0 0.0
      %1001 = vmatpush1.msra.mxu0 0.0
      %1002 = vmatprep.subr.mxu0 0.0
      %1003 = vmatpush1.msra.mxu0 0.0
      %1004 = vmatprep.subr.mxu0 0.0
      %1005 = vmatpush1.msra.mxu0 0.0
      %1006 = vmatprep.subr.mxu0 0.0
      %1007 = vmatpush1.msra.mxu0 0.0
      %1008 = vmatprep.subr.mxu0 0.0
      %1009 = vmatpush1.msra.mxu0 0.0
      %1010 = vmatprep.subr.mxu0 0.0
      %1011 = vmatpush1.msra.mxu0 0.0
      %1012 = vmatprep.subr.mxu0 0.0
      %1013 = vmatpush1.msra.mxu0 0.0
      %1014 = vmatprep.subr.mxu0 0.0
      %1015 = vmatpush1.msra.mxu0 0.0
      %1016 = vmatprep.subr.mxu0 0.0
      %1017 = vmatpush1.msra.mxu0 0.0
      %1018 = vmatprep.subr.mxu0 0.0
      %1019 = vmatpush1.msra.mxu0 0.0
      %1020 = vmatprep.subr.mxu0 0.0
      %1021 = vmatpush1.msra.mxu0 0.0
      %1022 = vmatprep.subr.mxu0 0.0
      %1023 = vmatpush1.msra.mxu0 0.0
      %1024 = vmatprep.subr.mxu0 0.0
      %1025 = vmatpush1.msra.mxu0 0.0
      %1026 = vmatprep.subr.mxu0 0.0
      %1027 = vmatpush1.msra.mxu0 0.0
      %1028 = vmatprep.subr.mxu0 0.0
      %1029 = vmatpush1.msra.mxu0 0.0
      %1030 = vmatprep.mubr.f32.mxu0 0.0
      %1031 = vmatmul.mubr.f32.gmra.mrb[0].mxu0 %v952
      %v1032 = vpop.f32.mrb[0].mxu0
      %v1033 = vadd.f32 0.0, %v1032
      %v1034 = vpop.f32.mrb[0].mxu0
      %1035 = vmatprep.mubr.f32.mxu0 0.0
      %1036 = vmatmul.mubr.f32.gmra.mrb[0].mxu0 %v955
      %v1037 = vpop.f32.mrb[0].mxu0
      %v1038 = vadd.f32 0.0, %v1037
      %v1039 = vpop.f32.mrb[0].mxu0
      %1040 = vmatprep.mubr.f32.mxu0 0.0
      %1041 = vmatmul.mubr.f32.gmra.mrb[0].mxu0 %v958
      %v1042 = vpop.f32.mrb[0].mxu0
      %v1043 = vadd.f32 0.0, %v1042
      %v1044 = vpop.f32.mrb[0].mxu0
      %1045 = vmatprep.mubr.f32.mxu0 0.0
      %1046 = vmatmul.mubr.f32.gmra.mrb[0].mxu0 %v961
      %v1047 = vpop.f32.mrb[0].mxu0
      %v1048 = vadd.f32 0.0, %v1047
      %v1049 = vpop.f32.mrb[0].mxu0
      %1050 = vdwg.mxu0
      %v1051 = vadd.f32 %v835, %v1033
      %v1052 = vadd.f32 %v840, %v1038
      %v1053 = vadd.f32 %v845, %v1043
      %v1054 = vadd.f32 %v850, %v1048
      %s1055 = scalar_lea.vmem %s2, 96
      %v1056 = vld [vmem:[%s1055] sm:$0xff]
      %v1057 = vld [vmem:[%s1055 + $0x8] sm:$0xff]
      %v1058 = vld [vmem:[%s1055 + $0x10] sm:$0xff]
      %v1059 = vld [vmem:[%s1055 + $0x18] sm:$0x1]
      %v1061 = vsel %vm462, %v1059, 0
      %1063 = vmatprep.subr.mxu0 0.0
      %1064 = vmatpush1.msra.mxu0 %v1056
      %1065 = vmatprep.subr.mxu0 0.0
      %1066 = vmatpush1.msra.mxu0 %v1057
      %1067 = vmatprep.subr.mxu0 0.0
      %1068 = vmatpush1.msra.mxu0 %v1058
      %1069 = vmatprep.subr.mxu0 0.0
      %1070 = vmatpush1.msra.mxu0 %v1061
      %1071 = vmatprep.subr.mxu0 0.0
      %1072 = vmatpush1.msra.mxu0 0.0
      %1073 = vmatprep.subr.mxu0 0.0
      %1074 = vmatpush1.msra.mxu0 0.0
      %1075 = vmatprep.subr.mxu0 0.0
      %1076 = vmatpush1.msra.mxu0 0.0
      %1077 = vmatprep.subr.mxu0 0.0
      %1078 = vmatpush1.msra.mxu0 0.0
      %1079 = vmatprep.subr.mxu0 0.0
      %1080 = vmatpush1.msra.mxu0 0.0
      %1081 = vmatprep.subr.mxu0 0.0
      %1082 = vmatpush1.msra.mxu0 0.0
      %1083 = vmatprep.subr.mxu0 0.0
      %1084 = vmatpush1.msra.mxu0 0.0
      %1085 = vmatprep.subr.mxu0 0.0
      %1086 = vmatpush1.msra.mxu0 0.0
      %1087 = vmatprep.subr.mxu0 0.0
      %1088 = vmatpush1.msra.mxu0 0.0
      %1089 = vmatprep.subr.mxu0 0.0
      %1090 = vmatpush1.msra.mxu0 0.0
      %1091 = vmatprep.subr.mxu0 0.0
      %1092 = vmatpush1.msra.mxu0 0.0
      %1093 = vmatprep.subr.mxu0 0.0
      %1094 = vmatpush1.msra.mxu0 0.0
      %1095 = vmatprep.subr.mxu0 0.0
      %1096 = vmatpush1.msra.mxu0 0.0
      %1097 = vmatprep.subr.mxu0 0.0
      %1098 = vmatpush1.msra.mxu0 0.0
      %1099 = vmatprep.subr.mxu0 0.0
      %1100 = vmatpush1.msra.mxu0 0.0
      %1101 = vmatprep.subr.mxu0 0.0
      %1102 = vmatpush1.msra.mxu0 0.0
      %1103 = vmatprep.subr.mxu0 0.0
      %1104 = vmatpush1.msra.mxu0 0.0
      %1105 = vmatprep.subr.mxu0 0.0
      %1106 = vmatpush1.msra.mxu0 0.0
      %1107 = vmatprep.subr.mxu0 0.0
      %1108 = vmatpush1.msra.mxu0 0.0
      %1109 = vmatprep.subr.mxu0 0.0
      %1110 = vmatpush1.msra.mxu0 0.0
      %1111 = vmatprep.subr.mxu0 0.0
      %1112 = vmatpush1.msra.mxu0 0.0
      %1113 = vmatprep.subr.mxu0 0.0
      %1114 = vmatpush1.msra.mxu0 0.0
      %1115 = vmatprep.subr.mxu0 0.0
      %1116 = vmatpush1.msra.mxu0 0.0
      %1117 = vmatprep.subr.mxu0 0.0
      %1118 = vmatpush1.msra.mxu0 0.0
      %1119 = vmatprep.subr.mxu0 0.0
      %1120 = vmatpush1.msra.mxu0 0.0
      %1121 = vmatprep.subr.mxu0 0.0
      %1122 = vmatpush1.msra.mxu0 0.0
      %1123 = vmatprep.subr.mxu0 0.0
      %1124 = vmatpush1.msra.mxu0 0.0
      %1125 = vmatprep.subr.mxu0 0.0
      %1126 = vmatpush1.msra.mxu0 0.0
      %1127 = vmatprep.mubr.f32.mxu0 0.0
      %1128 = vmatmul.mubr.f32.gmra.mrb[0].mxu0 %v451
      %v1129 = vpop.f32.mrb[0].mxu0
      %v1130 = vadd.f32 0.0, %v1129
      %v1131 = vpop.f32.mrb[0].mxu0
      %1132 = vmatprep.mubr.f32.mxu0 0.0
      %1133 = vmatmul.mubr.f32.gmra.mrb[0].mxu0 %v454
      %v1134 = vpop.f32.mrb[0].mxu0
      %v1135 = vadd.f32 0.0, %v1134
      %v1136 = vpop.f32.mrb[0].mxu0
      %1137 = vmatprep.mubr.f32.mxu0 0.0
      %1138 = vmatmul.mubr.f32.gmra.mrb[0].mxu0 %v457
      %v1139 = vpop.f32.mrb[0].mxu0
      %v1140 = vadd.f32 0.0, %v1139
      %v1141 = vpop.f32.mrb[0].mxu0
      %1142 = vmatprep.mubr.f32.mxu0 0.0
      %1143 = vmatmul.mubr.f32.gmra.mrb[0].mxu0 %v460
      %v1144 = vpop.f32.mrb[0].mxu0
      %v1145 = vadd.f32 0.0, %v1144
      %v1146 = vpop.f32.mrb[0].mxu0
      %1147 = vdwg.mxu0
      %s1148 = scalar_lea.vmem %s1, 96
      %v1149 = vld [vmem:[%s1148] sm:$0xff]
      %v1150 = vld [vmem:[%s1148 + $0x8] sm:$0xff]
      %v1151 = vld [vmem:[%s1148 + $0x10] sm:$0xff]
      %v1152 = vld [vmem:[%s1148 + $0x18] sm:$0xff]
      %v1154 = vsel %vm449, %v1149, 0
      %v1157 = vsel %vm449, %v1150, 0
      %v1160 = vsel %vm449, %v1151, 0
      %v1163 = vsel %vm449, %v1152, 0
      %v1166 = vsel %vm462, %v1145, 0
      %1168 = vmatprep.subr.mxu0 0.0
      %1169 = vmatpush1.msra.mxu0 %v1130
      %1170 = vmatprep.subr.mxu0 0.0
      %1171 = vmatpush1.msra.mxu0 %v1135
      %1172 = vmatprep.subr.mxu0 0.0
      %1173 = vmatpush1.msra.mxu0 %v1140
      %1174 = vmatprep.subr.mxu0 0.0
      %1175 = vmatpush1.msra.mxu0 %v1166
      %1176 = vmatprep.subr.mxu0 0.0
      %1177 = vmatpush1.msra.mxu0 0.0
      %1178 = vmatprep.subr.mxu0 0.0
      %1179 = vmatpush1.msra.mxu0 0.0
      %1180 = vmatprep.subr.mxu0 0.0
      %1181 = vmatpush1.msra.mxu0 0.0
      %1182 = vmatprep.subr.mxu0 0.0
      %1183 = vmatpush1.msra.mxu0 0.0
      %1184 = vmatprep.subr.mxu0 0.0
      %1185 = vmatpush1.msra.mxu0 0.0
      %1186 = vmatprep.subr.mxu0 0.0
      %1187 = vmatpush1.msra.mxu0 0.0
      %1188 = vmatprep.subr.mxu0 0.0
      %1189 = vmatpush1.msra.mxu0 0.0
      %1190 = vmatprep.subr.mxu0 0.0
      %1191 = vmatpush1.msra.mxu0 0.0
      %1192 = vmatprep.subr.mxu0 0.0
      %1193 = vmatpush1.msra.mxu0 0.0
      %1194 = vmatprep.subr.mxu0 0.0
      %1195 = vmatpush1.msra.mxu0 0.0
      %1196 = vmatprep.subr.mxu0 0.0
      %1197 = vmatpush1.msra.mxu0 0.0
      %1198 = vmatprep.subr.mxu0 0.0
      %1199 = vmatpush1.msra.mxu0 0.0
      %1200 = vmatprep.subr.mxu0 0.0
      %1201 = vmatpush1.msra.mxu0 0.0
      %1202 = vmatprep.subr.mxu0 0.0
      %1203 = vmatpush1.msra.mxu0 0.0
      %1204 = vmatprep.subr.mxu0 0.0
      %1205 = vmatpush1.msra.mxu0 0.0
      %1206 = vmatprep.subr.mxu0 0.0
      %1207 = vmatpush1.msra.mxu0 0.0
      %1208 = vmatprep.subr.mxu0 0.0
      %1209 = vmatpush1.msra.mxu0 0.0
      %1210 = vmatprep.subr.mxu0 0.0
      %1211 = vmatpush1.msra.mxu0 0.0
      %1212 = vmatprep.subr.mxu0 0.0
      %1213 = vmatpush1.msra.mxu0 0.0
      %1214 = vmatprep.subr.mxu0 0.0
      %1215 = vmatpush1.msra.mxu0 0.0
      %1216 = vmatprep.subr.mxu0 0.0
      %1217 = vmatpush1.msra.mxu0 0.0
      %1218 = vmatprep.subr.mxu0 0.0
      %1219 = vmatpush1.msra.mxu0 0.0
      %1220 = vmatprep.subr.mxu0 0.0
      %1221 = vmatpush1.msra.mxu0 0.0
      %1222 = vmatprep.subr.mxu0 0.0
      %1223 = vmatpush1.msra.mxu0 0.0
      %1224 = vmatprep.subr.mxu0 0.0
      %1225 = vmatpush1.msra.mxu0 0.0
      %1226 = vmatprep.subr.mxu0 0.0
      %1227 = vmatpush1.msra.mxu0 0.0
      %1228 = vmatprep.subr.mxu0 0.0
      %1229 = vmatpush1.msra.mxu0 0.0
      %1230 = vmatprep.subr.mxu0 0.0
      %1231 = vmatpush1.msra.mxu0 0.0
      %1232 = vmatprep.mubr.f32.mxu0 0.0
      %1233 = vmatmul.mubr.f32.gmra.mrb[0].mxu0 %v1154
      %v1234 = vpop.f32.mrb[0].mxu0
      %v1235 = vadd.f32 0.0, %v1234
      %v1236 = vpop.f32.mrb[0].mxu0
      %1237 = vmatprep.mubr.f32.mxu0 0.0
      %1238 = vmatmul.mubr.f32.gmra.mrb[0].mxu0 %v1157
      %v1239 = vpop.f32.mrb[0].mxu0
      %v1240 = vadd.f32 0.0, %v1239
      %v1241 = vpop.f32.mrb[0].mxu0
      %1242 = vmatprep.mubr.f32.mxu0 0.0
      %1243 = vmatmul.mubr.f32.gmra.mrb[0].mxu0 %v1160
      %v1244 = vpop.f32.mrb[0].mxu0
      %v1245 = vadd.f32 0.0, %v1244
      %v1246 = vpop.f32.mrb[0].mxu0
      %1247 = vmatprep.mubr.f32.mxu0 0.0
      %1248 = vmatmul.mubr.f32.gmra.mrb[0].mxu0 %v1163
      %v1249 = vpop.f32.mrb[0].mxu0
      %v1250 = vadd.f32 0.0, %v1249
      %v1251 = vpop.f32.mrb[0].mxu0
      %1252 = vdwg.mxu0
      %v1253 = vadd.f32 %v1051, %v1235
      %v1254 = vadd.f32 %v1052, %v1240
      %v1255 = vadd.f32 %v1053, %v1245
      %v1256 = vadd.f32 %v1054, %v1250
      %s1257 = scalar_lea.vmem %s2, 128
      %v1258 = vld [vmem:[%s1257] sm:$0xff]
      %v1259 = vld [vmem:[%s1257 + $0x8] sm:$0xff]
      %v1260 = vld [vmem:[%s1257 + $0x10] sm:$0xff]
      %v1261 = vld [vmem:[%s1257 + $0x18] sm:$0x1]
      %v1263 = vsel %vm462, %v1261, 0
      %1265 = vmatprep.subr.mxu0 0.0
      %1266 = vmatpush1.msra.mxu0 %v1258
      %1267 = vmatprep.subr.mxu0 0.0
      %1268 = vmatpush1.msra.mxu0 %v1259
      %1269 = vmatprep.subr.mxu0 0.0
      %1270 = vmatpush1.msra.mxu0 %v1260
      %1271 = vmatprep.subr.mxu0 0.0
      %1272 = vmatpush1.msra.mxu0 %v1263
      %1273 = vmatprep.subr.mxu0 0.0
      %1274 = vmatpush1.msra.mxu0 0.0
      %1275 = vmatprep.subr.mxu0 0.0
      %1276 = vmatpush1.msra.mxu0 0.0
      %1277 = vmatprep.subr.mxu0 0.0
      %1278 = vmatpush1.msra.mxu0 0.0
      %1279 = vmatprep.subr.mxu0 0.0
      %1280 = vmatpush1.msra.mxu0 0.0
      %1281 = vmatprep.subr.mxu0 0.0
      %1282 = vmatpush1.msra.mxu0 0.0
      %1283 = vmatprep.subr.mxu0 0.0
      %1284 = vmatpush1.msra.mxu0 0.0
      %1285 = vmatprep.subr.mxu0 0.0
      %1286 = vmatpush1.msra.mxu0 0.0
      %1287 = vmatprep.subr.mxu0 0.0
      %1288 = vmatpush1.msra.mxu0 0.0
      %1289 = vmatprep.subr.mxu0 0.0
      %1290 = vmatpush1.msra.mxu0 0.0
      %1291 = vmatprep.subr.mxu0 0.0
      %1292 = vmatpush1.msra.mxu0 0.0
      %1293 = vmatprep.subr.mxu0 0.0
      %1294 = vmatpush1.msra.mxu0 0.0
      %1295 = vmatprep.subr.mxu0 0.0
      %1296 = vmatpush1.msra.mxu0 0.0
      %1297 = vmatprep.subr.mxu0 0.0
      %1298 = vmatpush1.msra.mxu0 0.0
      %1299 = vmatprep.subr.mxu0 0.0
      %1300 = vmatpush1.msra.mxu0 0.0
      %1301 = vmatprep.subr.mxu0 0.0
      %1302 = vmatpush1.msra.mxu0 0.0
      %1303 = vmatprep.subr.mxu0 0.0
      %1304 = vmatpush1.msra.mxu0 0.0
      %1305 = vmatprep.subr.mxu0 0.0
      %1306 = vmatpush1.msra.mxu0 0.0
      %1307 = vmatprep.subr.mxu0 0.0
      %1308 = vmatpush1.msra.mxu0 0.0
      %1309 = vmatprep.subr.mxu0 0.0
      %1310 = vmatpush1.msra.mxu0 0.0
      %1311 = vmatprep.subr.mxu0 0.0
      %1312 = vmatpush1.msra.mxu0 0.0
      %1313 = vmatprep.subr.mxu0 0.0
      %1314 = vmatpush1.msra.mxu0 0.0
      %1315 = vmatprep.subr.mxu0 0.0
      %1316 = vmatpush1.msra.mxu0 0.0
      %1317 = vmatprep.subr.mxu0 0.0
      %1318 = vmatpush1.msra.mxu0 0.0
      %1319 = vmatprep.subr.mxu0 0.0
      %1320 = vmatpush1.msra.mxu0 0.0
      %1321 = vmatprep.subr.mxu0 0.0
      %1322 = vmatpush1.msra.mxu0 0.0
      %1323 = vmatprep.subr.mxu0 0.0
      %1324 = vmatpush1.msra.mxu0 0.0
      %1325 = vmatprep.subr.mxu0 0.0
      %1326 = vmatpush1.msra.mxu0 0.0
      %1327 = vmatprep.subr.mxu0 0.0
      %1328 = vmatpush1.msra.mxu0 0.0
      %1329 = vmatprep.mubr.f32.mxu0 0.0
      %1330 = vmatmul.mubr.f32.gmra.mrb[0].mxu0 %v451
      %v1331 = vpop.f32.mrb[0].mxu0
      %v1332 = vadd.f32 0.0, %v1331
      %v1333 = vpop.f32.mrb[0].mxu0
      %1334 = vmatprep.mubr.f32.mxu0 0.0
      %1335 = vmatmul.mubr.f32.gmra.mrb[0].mxu0 %v454
      %v1336 = vpop.f32.mrb[0].mxu0
      %v1337 = vadd.f32 0.0, %v1336
      %v1338 = vpop.f32.mrb[0].mxu0
      %1339 = vmatprep.mubr.f32.mxu0 0.0
      %1340 = vmatmul.mubr.f32.gmra.mrb[0].mxu0 %v457
      %v1341 = vpop.f32.mrb[0].mxu0
      %v1342 = vadd.f32 0.0, %v1341
      %v1343 = vpop.f32.mrb[0].mxu0
      %1344 = vmatprep.mubr.f32.mxu0 0.0
      %1345 = vmatmul.mubr.f32.gmra.mrb[0].mxu0 %v460
      %v1346 = vpop.f32.mrb[0].mxu0
      %v1347 = vadd.f32 0.0, %v1346
      %v1348 = vpop.f32.mrb[0].mxu0
      %1349 = vdwg.mxu0
      %s1350 = scalar_lea.vmem %s1, 128
      %v1351 = vld [vmem:[%s1350] sm:$0xff]
      %v1352 = vld [vmem:[%s1350 + $0x8] sm:$0xff]
      %v1353 = vld [vmem:[%s1350 + $0x10] sm:$0xff]
      %v1354 = vld [vmem:[%s1350 + $0x18] sm:$0xff]
      %v1356 = vsel %vm449, %v1351, 0
      %v1359 = vsel %vm449, %v1352, 0
      %v1362 = vsel %vm449, %v1353, 0
      %v1365 = vsel %vm449, %v1354, 0
      %v1368 = vsel %vm462, %v1347, 0
      %1370 = vmatprep.subr.mxu0 0.0
      %1371 = vmatpush1.msra.mxu0 %v1332
      %1372 = vmatprep.subr.mxu0 0.0
      %1373 = vmatpush1.msra.mxu0 %v1337
      %1374 = vmatprep.subr.mxu0 0.0
      %1375 = vmatpush1.msra.mxu0 %v1342
      %1376 = vmatprep.subr.mxu0 0.0
      %1377 = vmatpush1.msra.mxu0 %v1368
      %1378 = vmatprep.subr.mxu0 0.0
      %1379 = vmatpush1.msra.mxu0 0.0
      %1380 = vmatprep.subr.mxu0 0.0
      %1381 = vmatpush1.msra.mxu0 0.0
      %1382 = vmatprep.subr.mxu0 0.0
      %1383 = vmatpush1.msra.mxu0 0.0
      %1384 = vmatprep.subr.mxu0 0.0
      %1385 = vmatpush1.msra.mxu0 0.0
      %1386 = vmatprep.subr.mxu0 0.0
      %1387 = vmatpush1.msra.mxu0 0.0
      %1388 = vmatprep.subr.mxu0 0.0
      %1389 = vmatpush1.msra.mxu0 0.0
      %1390 = vmatprep.subr.mxu0 0.0
      %1391 = vmatpush1.msra.mxu0 0.0
      %1392 = vmatprep.subr.mxu0 0.0
      %1393 = vmatpush1.msra.mxu0 0.0
      %1394 = vmatprep.subr.mxu0 0.0
      %1395 = vmatpush1.msra.mxu0 0.0
      %1396 = vmatprep.subr.mxu0 0.0
      %1397 = vmatpush1.msra.mxu0 0.0
      %1398 = vmatprep.subr.mxu0 0.0
      %1399 = vmatpush1.msra.mxu0 0.0
      %1400 = vmatprep.subr.mxu0 0.0
      %1401 = vmatpush1.msra.mxu0 0.0
      %1402 = vmatprep.subr.mxu0 0.0
      %1403 = vmatpush1.msra.mxu0 0.0
      %1404 = vmatprep.subr.mxu0 0.0
      %1405 = vmatpush1.msra.mxu0 0.0
      %1406 = vmatprep.subr.mxu0 0.0
      %1407 = vmatpush1.msra.mxu0 0.0
      %1408 = vmatprep.subr.mxu0 0.0
      %1409 = vmatpush1.msra.mxu0 0.0
      %1410 = vmatprep.subr.mxu0 0.0
      %1411 = vmatpush1.msra.mxu0 0.0
      %1412 = vmatprep.subr.mxu0 0.0
      %1413 = vmatpush1.msra.mxu0 0.0
      %1414 = vmatprep.subr.mxu0 0.0
      %1415 = vmatpush1.msra.mxu0 0.0
      %1416 = vmatprep.subr.mxu0 0.0
      %1417 = vmatpush1.msra.mxu0 0.0
      %1418 = vmatprep.subr.mxu0 0.0
      %1419 = vmatpush1.msra.mxu0 0.0
      %1420 = vmatprep.subr.mxu0 0.0
      %1421 = vmatpush1.msra.mxu0 0.0
      %1422 = vmatprep.subr.mxu0 0.0
      %1423 = vmatpush1.msra.mxu0 0.0
      %1424 = vmatprep.subr.mxu0 0.0
      %1425 = vmatpush1.msra.mxu0 0.0
      %1426 = vmatprep.subr.mxu0 0.0
      %1427 = vmatpush1.msra.mxu0 0.0
      %1428 = vmatprep.subr.mxu0 0.0
      %1429 = vmatpush1.msra.mxu0 0.0
      %1430 = vmatprep.subr.mxu0 0.0
      %1431 = vmatpush1.msra.mxu0 0.0
      %1432 = vmatprep.subr.mxu0 0.0
      %1433 = vmatpush1.msra.mxu0 0.0
      %1434 = vmatprep.mubr.f32.mxu0 0.0
      %1435 = vmatmul.mubr.f32.gmra.mrb[0].mxu0 %v1356
      %v1436 = vpop.f32.mrb[0].mxu0
      %v1437 = vadd.f32 0.0, %v1436
      %v1438 = vpop.f32.mrb[0].mxu0
      %1439 = vmatprep.mubr.f32.mxu0 0.0
      %1440 = vmatmul.mubr.f32.gmra.mrb[0].mxu0 %v1359
      %v1441 = vpop.f32.mrb[0].mxu0
      %v1442 = vadd.f32 0.0, %v1441
      %v1443 = vpop.f32.mrb[0].mxu0
      %1444 = vmatprep.mubr.f32.mxu0 0.0
      %1445 = vmatmul.mubr.f32.gmra.mrb[0].mxu0 %v1362
      %v1446 = vpop.f32.mrb[0].mxu0
      %v1447 = vadd.f32 0.0, %v1446
      %v1448 = vpop.f32.mrb[0].mxu0
      %1449 = vmatprep.mubr.f32.mxu0 0.0
      %1450 = vmatmul.mubr.f32.gmra.mrb[0].mxu0 %v1365
      %v1451 = vpop.f32.mrb[0].mxu0
      %v1452 = vadd.f32 0.0, %v1451
      %v1453 = vpop.f32.mrb[0].mxu0
      %1454 = vdwg.mxu0
      %v1455 = vadd.f32 %v1253, %v1437
      %v1456 = vadd.f32 %v1254, %v1442
      %v1457 = vadd.f32 %v1255, %v1447
      %v1458 = vadd.f32 %v1256, %v1452
      %s1459 = scalar_lea.vmem %s1, 160
      %v1460 = vld [vmem:[%s1459] sm:$0xff]
      %v1461 = vld [vmem:[%s1459 + $0x8] sm:$0xff]
      %v1462 = vld [vmem:[%s1459 + $0x10] sm:$0xff]
      %v1463 = vld [vmem:[%s1459 + $0x18] sm:$0xff]
      %v1465 = vsel %vm449, %v1460, 0
      %v1468 = vsel %vm449, %v1461, 0
      %v1471 = vsel %vm449, %v1462, 0
      %v1474 = vsel %vm449, %v1463, 0
      %v1476 = vsel %vm462, %v444, 0
      %1478 = vmatprep.subr.mxu0 0.0
      %1479 = vmatpush1.msra.mxu0 %v441
      %1480 = vmatprep.subr.mxu0 0.0
      %1481 = vmatpush1.msra.mxu0 %v442
      %1482 = vmatprep.subr.mxu0 0.0
      %1483 = vmatpush1.msra.mxu0 %v443
      %1484 = vmatprep.subr.mxu0 0.0
      %1485 = vmatpush1.msra.mxu0 %v1476
      %1486 = vmatprep.subr.mxu0 0.0
      %1487 = vmatpush1.msra.mxu0 0.0
      %1488 = vmatprep.subr.mxu0 0.0
      %1489 = vmatpush1.msra.mxu0 0.0
      %1490 = vmatprep.subr.mxu0 0.0
      %1491 = vmatpush1.msra.mxu0 0.0
      %1492 = vmatprep.subr.mxu0 0.0
      %1493 = vmatpush1.msra.mxu0 0.0
      %1494 = vmatprep.subr.mxu0 0.0
      %1495 = vmatpush1.msra.mxu0 0.0
      %1496 = vmatprep.subr.mxu0 0.0
      %1497 = vmatpush1.msra.mxu0 0.0
      %1498 = vmatprep.subr.mxu0 0.0
      %1499 = vmatpush1.msra.mxu0 0.0
      %1500 = vmatprep.subr.mxu0 0.0
      %1501 = vmatpush1.msra.mxu0 0.0
      %1502 = vmatprep.subr.mxu0 0.0
      %1503 = vmatpush1.msra.mxu0 0.0
      %1504 = vmatprep.subr.mxu0 0.0
      %1505 = vmatpush1.msra.mxu0 0.0
      %1506 = vmatprep.subr.mxu0 0.0
      %1507 = vmatpush1.msra.mxu0 0.0
      %1508 = vmatprep.subr.mxu0 0.0
      %1509 = vmatpush1.msra.mxu0 0.0
      %1510 = vmatprep.subr.mxu0 0.0
      %1511 = vmatpush1.msra.mxu0 0.0
      %1512 = vmatprep.subr.mxu0 0.0
      %1513 = vmatpush1.msra.mxu0 0.0
      %1514 = vmatprep.subr.mxu0 0.0
      %1515 = vmatpush1.msra.mxu0 0.0
      %1516 = vmatprep.subr.mxu0 0.0
      %1517 = vmatpush1.msra.mxu0 0.0
      %1518 = vmatprep.subr.mxu0 0.0
      %1519 = vmatpush1.msra.mxu0 0.0
      %1520 = vmatprep.subr.mxu0 0.0
      %1521 = vmatpush1.msra.mxu0 0.0
      %1522 = vmatprep.subr.mxu0 0.0
      %1523 = vmatpush1.msra.mxu0 0.0
      %1524 = vmatprep.subr.mxu0 0.0
      %1525 = vmatpush1.msra.mxu0 0.0
      %1526 = vmatprep.subr.mxu0 0.0
      %1527 = vmatpush1.msra.mxu0 0.0
      %1528 = vmatprep.subr.mxu0 0.0
      %1529 = vmatpush1.msra.mxu0 0.0
      %1530 = vmatprep.subr.mxu0 0.0
      %1531 = vmatpush1.msra.mxu0 0.0
      %1532 = vmatprep.subr.mxu0 0.0
      %1533 = vmatpush1.msra.mxu0 0.0
      %1534 = vmatprep.subr.mxu0 0.0
      %1535 = vmatpush1.msra.mxu0 0.0
      %1536 = vmatprep.subr.mxu0 0.0
      %1537 = vmatpush1.msra.mxu0 0.0
      %1538 = vmatprep.subr.mxu0 0.0
      %1539 = vmatpush1.msra.mxu0 0.0
      %1540 = vmatprep.subr.mxu0 0.0
      %1541 = vmatpush1.msra.mxu0 0.0
      %1542 = vmatprep.mubr.f32.mxu0 0.0
      %1543 = vmatmul.mubr.f32.gmra.mrb[0].mxu0 %v1465
      %v1544 = vpop.f32.mrb[0].mxu0
      %v1545 = vadd.f32 0.0, %v1544
      %v1546 = vpop.f32.mrb[0].mxu0
      %1547 = vmatprep.mubr.f32.mxu0 0.0
      %1548 = vmatmul.mubr.f32.gmra.mrb[0].mxu0 %v1468
      %v1549 = vpop.f32.mrb[0].mxu0
      %v1550 = vadd.f32 0.0, %v1549
      %v1551 = vpop.f32.mrb[0].mxu0
      %1552 = vmatprep.mubr.f32.mxu0 0.0
      %1553 = vmatmul.mubr.f32.gmra.mrb[0].mxu0 %v1471
      %v1554 = vpop.f32.mrb[0].mxu0
      %v1555 = vadd.f32 0.0, %v1554
      %v1556 = vpop.f32.mrb[0].mxu0
      %1557 = vmatprep.mubr.f32.mxu0 0.0
      %1558 = vmatmul.mubr.f32.gmra.mrb[0].mxu0 %v1474
      %v1559 = vpop.f32.mrb[0].mxu0
      %v1560 = vadd.f32 0.0, %v1559
      %v1561 = vpop.f32.mrb[0].mxu0
      %1562 = vdwg.mxu0
      %v1563 = vadd.f32 %v1455, %v1545
      %v1564 = vadd.f32 %v1456, %v1550
      %v1565 = vadd.f32 %v1457, %v1555
      %v1566 = vadd.f32 %v1458, %v1560
      %s1567 = scalar_lea.vmem %s2, 192
      %v1568 = vld [vmem:[%s1567] sm:$0xff]
      %v1569 = vld [vmem:[%s1567 + $0x8] sm:$0xff]
      %v1570 = vld [vmem:[%s1567 + $0x10] sm:$0xff]
      %v1571 = vld [vmem:[%s1567 + $0x18] sm:$0x1]
      %v1573 = vsel %vm462, %v1571, 0
      %1575 = vmatprep.subr.mxu0 0.0
      %1576 = vmatpush1.msra.mxu0 %v1568
      %1577 = vmatprep.subr.mxu0 0.0
      %1578 = vmatpush1.msra.mxu0 %v1569
      %1579 = vmatprep.subr.mxu0 0.0
      %1580 = vmatpush1.msra.mxu0 %v1570
      %1581 = vmatprep.subr.mxu0 0.0
      %1582 = vmatpush1.msra.mxu0 %v1573
      %1583 = vmatprep.subr.mxu0 0.0
      %1584 = vmatpush1.msra.mxu0 0.0
      %1585 = vmatprep.subr.mxu0 0.0
      %1586 = vmatpush1.msra.mxu0 0.0
      %1587 = vmatprep.subr.mxu0 0.0
      %1588 = vmatpush1.msra.mxu0 0.0
      %1589 = vmatprep.subr.mxu0 0.0
      %1590 = vmatpush1.msra.mxu0 0.0
      %1591 = vmatprep.subr.mxu0 0.0
      %1592 = vmatpush1.msra.mxu0 0.0
      %1593 = vmatprep.subr.mxu0 0.0
      %1594 = vmatpush1.msra.mxu0 0.0
      %1595 = vmatprep.subr.mxu0 0.0
      %1596 = vmatpush1.msra.mxu0 0.0
      %1597 = vmatprep.subr.mxu0 0.0
      %1598 = vmatpush1.msra.mxu0 0.0
      %1599 = vmatprep.subr.mxu0 0.0
      %1600 = vmatpush1.msra.mxu0 0.0
      %1601 = vmatprep.subr.mxu0 0.0
      %1602 = vmatpush1.msra.mxu0 0.0
      %1603 = vmatprep.subr.mxu0 0.0
      %1604 = vmatpush1.msra.mxu0 0.0
      %1605 = vmatprep.subr.mxu0 0.0
      %1606 = vmatpush1.msra.mxu0 0.0
      %1607 = vmatprep.subr.mxu0 0.0
      %1608 = vmatpush1.msra.mxu0 0.0
      %1609 = vmatprep.subr.mxu0 0.0
      %1610 = vmatpush1.msra.mxu0 0.0
      %1611 = vmatprep.subr.mxu0 0.0
      %1612 = vmatpush1.msra.mxu0 0.0
      %1613 = vmatprep.subr.mxu0 0.0
      %1614 = vmatpush1.msra.mxu0 0.0
      %1615 = vmatprep.subr.mxu0 0.0
      %1616 = vmatpush1.msra.mxu0 0.0
      %1617 = vmatprep.subr.mxu0 0.0
      %1618 = vmatpush1.msra.mxu0 0.0
      %1619 = vmatprep.subr.mxu0 0.0
      %1620 = vmatpush1.msra.mxu0 0.0
      %1621 = vmatprep.subr.mxu0 0.0
      %1622 = vmatpush1.msra.mxu0 0.0
      %1623 = vmatprep.subr.mxu0 0.0
      %1624 = vmatpush1.msra.mxu0 0.0
      %1625 = vmatprep.subr.mxu0 0.0
      %1626 = vmatpush1.msra.mxu0 0.0
      %1627 = vmatprep.subr.mxu0 0.0
      %1628 = vmatpush1.msra.mxu0 0.0
      %1629 = vmatprep.subr.mxu0 0.0
      %1630 = vmatpush1.msra.mxu0 0.0
      %1631 = vmatprep.subr.mxu0 0.0
      %1632 = vmatpush1.msra.mxu0 0.0
      %1633 = vmatprep.subr.mxu0 0.0
      %1634 = vmatpush1.msra.mxu0 0.0
      %1635 = vmatprep.subr.mxu0 0.0
      %1636 = vmatpush1.msra.mxu0 0.0
      %1637 = vmatprep.subr.mxu0 0.0
      %1638 = vmatpush1.msra.mxu0 0.0
      %1639 = vmatprep.mubr.f32.mxu0 0.0
      %1640 = vmatmul.mubr.f32.gmra.mrb[0].mxu0 %v451
      %v1641 = vpop.f32.mrb[0].mxu0
      %v1642 = vadd.f32 0.0, %v1641
      %v1643 = vpop.f32.mrb[0].mxu0
      %1644 = vmatprep.mubr.f32.mxu0 0.0
      %1645 = vmatmul.mubr.f32.gmra.mrb[0].mxu0 %v454
      %v1646 = vpop.f32.mrb[0].mxu0
      %v1647 = vadd.f32 0.0, %v1646
      %v1648 = vpop.f32.mrb[0].mxu0
      %1649 = vmatprep.mubr.f32.mxu0 0.0
      %1650 = vmatmul.mubr.f32.gmra.mrb[0].mxu0 %v457
      %v1651 = vpop.f32.mrb[0].mxu0
      %v1652 = vadd.f32 0.0, %v1651
      %v1653 = vpop.f32.mrb[0].mxu0
      %1654 = vmatprep.mubr.f32.mxu0 0.0
      %1655 = vmatmul.mubr.f32.gmra.mrb[0].mxu0 %v460
      %v1656 = vpop.f32.mrb[0].mxu0
      %v1657 = vadd.f32 0.0, %v1656
      %v1658 = vpop.f32.mrb[0].mxu0
      %1659 = vdwg.mxu0
      %s1660 = scalar_lea.vmem %s1, 192
      %v1661 = vld [vmem:[%s1660] sm:$0xff]
      %v1662 = vld [vmem:[%s1660 + $0x8] sm:$0xff]
      %v1663 = vld [vmem:[%s1660 + $0x10] sm:$0xff]
      %v1664 = vld [vmem:[%s1660 + $0x18] sm:$0xff]
      %v1666 = vsel %vm449, %v1661, 0
      %v1669 = vsel %vm449, %v1662, 0
      %v1672 = vsel %vm449, %v1663, 0
      %v1675 = vsel %vm449, %v1664, 0
      %v1678 = vsel %vm462, %v1657, 0
      %1680 = vmatprep.subr.mxu0 0.0
      %1681 = vmatpush1.msra.mxu0 %v1642
      %1682 = vmatprep.subr.mxu0 0.0
      %1683 = vmatpush1.msra.mxu0 %v1647
      %1684 = vmatprep.subr.mxu0 0.0
      %1685 = vmatpush1.msra.mxu0 %v1652
      %1686 = vmatprep.subr.mxu0 0.0
      %1687 = vmatpush1.msra.mxu0 %v1678
      %1688 = vmatprep.subr.mxu0 0.0
      %1689 = vmatpush1.msra.mxu0 0.0
      %1690 = vmatprep.subr.mxu0 0.0
      %1691 = vmatpush1.msra.mxu0 0.0
      %1692 = vmatprep.subr.mxu0 0.0
      %1693 = vmatpush1.msra.mxu0 0.0
      %1694 = vmatprep.subr.mxu0 0.0
      %1695 = vmatpush1.msra.mxu0 0.0
      %1696 = vmatprep.subr.mxu0 0.0
      %1697 = vmatpush1.msra.mxu0 0.0
      %1698 = vmatprep.subr.mxu0 0.0
      %1699 = vmatpush1.msra.mxu0 0.0
      %1700 = vmatprep.subr.mxu0 0.0
      %1701 = vmatpush1.msra.mxu0 0.0
      %1702 = vmatprep.subr.mxu0 0.0
      %1703 = vmatpush1.msra.mxu0 0.0
      %1704 = vmatprep.subr.mxu0 0.0
      %1705 = vmatpush1.msra.mxu0 0.0
      %1706 = vmatprep.subr.mxu0 0.0
      %1707 = vmatpush1.msra.mxu0 0.0
      %1708 = vmatprep.subr.mxu0 0.0
      %1709 = vmatpush1.msra.mxu0 0.0
      %1710 = vmatprep.subr.mxu0 0.0
      %1711 = vmatpush1.msra.mxu0 0.0
      %1712 = vmatprep.subr.mxu0 0.0
      %1713 = vmatpush1.msra.mxu0 0.0
      %1714 = vmatprep.subr.mxu0 0.0
      %1715 = vmatpush1.msra.mxu0 0.0
      %1716 = vmatprep.subr.mxu0 0.0
      %1717 = vmatpush1.msra.mxu0 0.0
      %1718 = vmatprep.subr.mxu0 0.0
      %1719 = vmatpush1.msra.mxu0 0.0
      %1720 = vmatprep.subr.mxu0 0.0
      %1721 = vmatpush1.msra.mxu0 0.0
      %1722 = vmatprep.subr.mxu0 0.0
      %1723 = vmatpush1.msra.mxu0 0.0
      %1724 = vmatprep.subr.mxu0 0.0
      %1725 = vmatpush1.msra.mxu0 0.0
      %1726 = vmatprep.subr.mxu0 0.0
      %1727 = vmatpush1.msra.mxu0 0.0
      %1728 = vmatprep.subr.mxu0 0.0
      %1729 = vmatpush1.msra.mxu0 0.0
      %1730 = vmatprep.subr.mxu0 0.0
      %1731 = vmatpush1.msra.mxu0 0.0
      %1732 = vmatprep.subr.mxu0 0.0
      %1733 = vmatpush1.msra.mxu0 0.0
      %1734 = vmatprep.subr.mxu0 0.0
      %1735 = vmatpush1.msra.mxu0 0.0
      %1736 = vmatprep.subr.mxu0 0.0
      %1737 = vmatpush1.msra.mxu0 0.0
      %1738 = vmatprep.subr.mxu0 0.0
      %1739 = vmatpush1.msra.mxu0 0.0
      %1740 = vmatprep.subr.mxu0 0.0
      %1741 = vmatpush1.msra.mxu0 0.0
      %1742 = vmatprep.subr.mxu0 0.0
      %1743 = vmatpush1.msra.mxu0 0.0
      %1744 = vmatprep.mubr.f32.mxu0 0.0
      %1745 = vmatmul.mubr.f32.gmra.mrb[0].mxu0 %v1666
      %v1746 = vpop.f32.mrb[0].mxu0
      %v1747 = vadd.f32 0.0, %v1746
      %v1748 = vpop.f32.mrb[0].mxu0
      %1749 = vmatprep.mubr.f32.mxu0 0.0
      %1750 = vmatmul.mubr.f32.gmra.mrb[0].mxu0 %v1669
      %v1751 = vpop.f32.mrb[0].mxu0
      %v1752 = vadd.f32 0.0, %v1751
      %v1753 = vpop.f32.mrb[0].mxu0
      %1754 = vmatprep.mubr.f32.mxu0 0.0
      %1755 = vmatmul.mubr.f32.gmra.mrb[0].mxu0 %v1672
      %v1756 = vpop.f32.mrb[0].mxu0
      %v1757 = vadd.f32 0.0, %v1756
      %v1758 = vpop.f32.mrb[0].mxu0
      %1759 = vmatprep.mubr.f32.mxu0 0.0
      %1760 = vmatmul.mubr.f32.gmra.mrb[0].mxu0 %v1675
      %v1761 = vpop.f32.mrb[0].mxu0
      %v1762 = vadd.f32 0.0, %v1761
      %v1763 = vpop.f32.mrb[0].mxu0
      %1764 = vdwg.mxu0
      %v1765 = vadd.f32 %v1563, %v1747
      %v1766 = vadd.f32 %v1564, %v1752
      %v1767 = vadd.f32 %v1565, %v1757
      %v1768 = vadd.f32 %v1566, %v1762
      %s1769 = scalar_lea.vmem %s2, 224
      %v1770 = vld [vmem:[%s1769] sm:$0xff]
      %v1771 = vld [vmem:[%s1769 + $0x8] sm:$0xff]
      %v1772 = vld [vmem:[%s1769 + $0x10] sm:$0xff]
      %v1773 = vld [vmem:[%s1769 + $0x18] sm:$0x1]
      %v1775 = vsel %vm462, %v1773, 0
      %1777 = vmatprep.subr.mxu0 0.0
      %1778 = vmatpush1.msra.mxu0 %v1770
      %1779 = vmatprep.subr.mxu0 0.0
      %1780 = vmatpush1.msra.mxu0 %v1771
      %1781 = vmatprep.subr.mxu0 0.0
      %1782 = vmatpush1.msra.mxu0 %v1772
      %1783 = vmatprep.subr.mxu0 0.0
      %1784 = vmatpush1.msra.mxu0 %v1775
      %1785 = vmatprep.subr.mxu0 0.0
      %1786 = vmatpush1.msra.mxu0 0.0
      %1787 = vmatprep.subr.mxu0 0.0
      %1788 = vmatpush1.msra.mxu0 0.0
      %1789 = vmatprep.subr.mxu0 0.0
      %1790 = vmatpush1.msra.mxu0 0.0
      %1791 = vmatprep.subr.mxu0 0.0
      %1792 = vmatpush1.msra.mxu0 0.0
      %1793 = vmatprep.subr.mxu0 0.0
      %1794 = vmatpush1.msra.mxu0 0.0
      %1795 = vmatprep.subr.mxu0 0.0
      %1796 = vmatpush1.msra.mxu0 0.0
      %1797 = vmatprep.subr.mxu0 0.0
      %1798 = vmatpush1.msra.mxu0 0.0
      %1799 = vmatprep.subr.mxu0 0.0
      %1800 = vmatpush1.msra.mxu0 0.0
      %1801 = vmatprep.subr.mxu0 0.0
      %1802 = vmatpush1.msra.mxu0 0.0
      %1803 = vmatprep.subr.mxu0 0.0
      %1804 = vmatpush1.msra.mxu0 0.0
      %1805 = vmatprep.subr.mxu0 0.0
      %1806 = vmatpush1.msra.mxu0 0.0
      %1807 = vmatprep.subr.mxu0 0.0
      %1808 = vmatpush1.msra.mxu0 0.0
      %1809 = vmatprep.subr.mxu0 0.0
      %1810 = vmatpush1.msra.mxu0 0.0
      %1811 = vmatprep.subr.mxu0 0.0
      %1812 = vmatpush1.msra.mxu0 0.0
      %1813 = vmatprep.subr.mxu0 0.0
      %1814 = vmatpush1.msra.mxu0 0.0
      %1815 = vmatprep.subr.mxu0 0.0
      %1816 = vmatpush1.msra.mxu0 0.0
      %1817 = vmatprep.subr.mxu0 0.0
      %1818 = vmatpush1.msra.mxu0 0.0
      %1819 = vmatprep.subr.mxu0 0.0
      %1820 = vmatpush1.msra.mxu0 0.0
      %1821 = vmatprep.subr.mxu0 0.0
      %1822 = vmatpush1.msra.mxu0 0.0
      %1823 = vmatprep.subr.mxu0 0.0
      %1824 = vmatpush1.msra.mxu0 0.0
      %1825 = vmatprep.subr.mxu0 0.0
      %1826 = vmatpush1.msra.mxu0 0.0
      %1827 = vmatprep.subr.mxu0 0.0
      %1828 = vmatpush1.msra.mxu0 0.0
      %1829 = vmatprep.subr.mxu0 0.0
      %1830 = vmatpush1.msra.mxu0 0.0
      %1831 = vmatprep.subr.mxu0 0.0
      %1832 = vmatpush1.msra.mxu0 0.0
      %1833 = vmatprep.subr.mxu0 0.0
      %1834 = vmatpush1.msra.mxu0 0.0
      %1835 = vmatprep.subr.mxu0 0.0
      %1836 = vmatpush1.msra.mxu0 0.0
      %1837 = vmatprep.subr.mxu0 0.0
      %1838 = vmatpush1.msra.mxu0 0.0
      %1839 = vmatprep.subr.mxu0 0.0
      %1840 = vmatpush1.msra.mxu0 0.0
      %1841 = vmatprep.mubr.f32.mxu0 0.0
      %1842 = vmatmul.mubr.f32.gmra.mrb[0].mxu0 %v451
      %v1843 = vpop.f32.mrb[0].mxu0
      %v1844 = vadd.f32 0.0, %v1843
      %v1845 = vpop.f32.mrb[0].mxu0
      %1846 = vmatprep.mubr.f32.mxu0 0.0
      %1847 = vmatmul.mubr.f32.gmra.mrb[0].mxu0 %v454
      %v1848 = vpop.f32.mrb[0].mxu0
      %v1849 = vadd.f32 0.0, %v1848
      %v1850 = vpop.f32.mrb[0].mxu0
      %1851 = vmatprep.mubr.f32.mxu0 0.0
      %1852 = vmatmul.mubr.f32.gmra.mrb[0].mxu0 %v457
      %v1853 = vpop.f32.mrb[0].mxu0
      %v1854 = vadd.f32 0.0, %v1853
      %v1855 = vpop.f32.mrb[0].mxu0
      %1856 = vmatprep.mubr.f32.mxu0 0.0
      %1857 = vmatmul.mubr.f32.gmra.mrb[0].mxu0 %v460
      %v1858 = vpop.f32.mrb[0].mxu0
      %v1859 = vadd.f32 0.0, %v1858
      %v1860 = vpop.f32.mrb[0].mxu0
      %1861 = vdwg.mxu0
      %s1862 = scalar_lea.vmem %s1, 224
      %v1863 = vld [vmem:[%s1862] sm:$0xff]
      %v1864 = vld [vmem:[%s1862 + $0x8] sm:$0xff]
      %v1865 = vld [vmem:[%s1862 + $0x10] sm:$0xff]
      %v1866 = vld [vmem:[%s1862 + $0x18] sm:$0xff]
      %v1868 = vsel %vm449, %v1863, 0
      %v1871 = vsel %vm449, %v1864, 0
      %v1874 = vsel %vm449, %v1865, 0
      %v1877 = vsel %vm449, %v1866, 0
      %v1880 = vsel %vm462, %v1859, 0
      %1882 = vmatprep.subr.mxu0 0.0
      %1883 = vmatpush1.msra.mxu0 %v1844
      %1884 = vmatprep.subr.mxu0 0.0
      %1885 = vmatpush1.msra.mxu0 %v1849
      %1886 = vmatprep.subr.mxu0 0.0
      %1887 = vmatpush1.msra.mxu0 %v1854
      %1888 = vmatprep.subr.mxu0 0.0
      %1889 = vmatpush1.msra.mxu0 %v1880
      %1890 = vmatprep.subr.mxu0 0.0
      %1891 = vmatpush1.msra.mxu0 0.0
      %1892 = vmatprep.subr.mxu0 0.0
      %1893 = vmatpush1.msra.mxu0 0.0
      %1894 = vmatprep.subr.mxu0 0.0
      %1895 = vmatpush1.msra.mxu0 0.0
      %1896 = vmatprep.subr.mxu0 0.0
      %1897 = vmatpush1.msra.mxu0 0.0
      %1898 = vmatprep.subr.mxu0 0.0
      %1899 = vmatpush1.msra.mxu0 0.0
      %1900 = vmatprep.subr.mxu0 0.0
      %1901 = vmatpush1.msra.mxu0 0.0
      %1902 = vmatprep.subr.mxu0 0.0
      %1903 = vmatpush1.msra.mxu0 0.0
      %1904 = vmatprep.subr.mxu0 0.0
      %1905 = vmatpush1.msra.mxu0 0.0
      %1906 = vmatprep.subr.mxu0 0.0
      %1907 = vmatpush1.msra.mxu0 0.0
      %1908 = vmatprep.subr.mxu0 0.0
      %1909 = vmatpush1.msra.mxu0 0.0
      %1910 = vmatprep.subr.mxu0 0.0
      %1911 = vmatpush1.msra.mxu0 0.0
      %1912 = vmatprep.subr.mxu0 0.0
      %1913 = vmatpush1.msra.mxu0 0.0
      %1914 = vmatprep.subr.mxu0 0.0
      %1915 = vmatpush1.msra.mxu0 0.0
      %1916 = vmatprep.subr.mxu0 0.0
      %1917 = vmatpush1.msra.mxu0 0.0
      %1918 = vmatprep.subr.mxu0 0.0
      %1919 = vmatpush1.msra.mxu0 0.0
      %1920 = vmatprep.subr.mxu0 0.0
      %1921 = vmatpush1.msra.mxu0 0.0
      %1922 = vmatprep.subr.mxu0 0.0
      %1923 = vmatpush1.msra.mxu0 0.0
      %1924 = vmatprep.subr.mxu0 0.0
      %1925 = vmatpush1.msra.mxu0 0.0
      %1926 = vmatprep.subr.mxu0 0.0
      %1927 = vmatpush1.msra.mxu0 0.0
      %1928 = vmatprep.subr.mxu0 0.0
      %1929 = vmatpush1.msra.mxu0 0.0
      %1930 = vmatprep.subr.mxu0 0.0
      %1931 = vmatpush1.msra.mxu0 0.0
      %1932 = vmatprep.subr.mxu0 0.0
      %1933 = vmatpush1.msra.mxu0 0.0
      %1934 = vmatprep.subr.mxu0 0.0
      %1935 = vmatpush1.msra.mxu0 0.0
      %1936 = vmatprep.subr.mxu0 0.0
      %1937 = vmatpush1.msra.mxu0 0.0
      %1938 = vmatprep.subr.mxu0 0.0
      %1939 = vmatpush1.msra.mxu0 0.0
      %1940 = vmatprep.subr.mxu0 0.0
      %1941 = vmatpush1.msra.mxu0 0.0
      %1942 = vmatprep.subr.mxu0 0.0
      %1943 = vmatpush1.msra.mxu0 0.0
      %1944 = vmatprep.subr.mxu0 0.0
      %1945 = vmatpush1.msra.mxu0 0.0
      %1946 = vmatprep.mubr.f32.mxu0 0.0
      %1947 = vmatmul.mubr.f32.gmra.mrb[0].mxu0 %v1868
      %v1948 = vpop.f32.mrb[0].mxu0
      %v1949 = vadd.f32 0.0, %v1948
      %v1950 = vpop.f32.mrb[0].mxu0
      %1951 = vmatprep.mubr.f32.mxu0 0.0
      %1952 = vmatmul.mubr.f32.gmra.mrb[0].mxu0 %v1871
      %v1953 = vpop.f32.mrb[0].mxu0
      %v1954 = vadd.f32 0.0, %v1953
      %v1955 = vpop.f32.mrb[0].mxu0
      %1956 = vmatprep.mubr.f32.mxu0 0.0
      %1957 = vmatmul.mubr.f32.gmra.mrb[0].mxu0 %v1874
      %v1958 = vpop.f32.mrb[0].mxu0
      %v1959 = vadd.f32 0.0, %v1958
      %v1960 = vpop.f32.mrb[0].mxu0
      %1961 = vmatprep.mubr.f32.mxu0 0.0
      %1962 = vmatmul.mubr.f32.gmra.mrb[0].mxu0 %v1877
      %v1963 = vpop.f32.mrb[0].mxu0
      %v1964 = vadd.f32 0.0, %v1963
      %v1965 = vpop.f32.mrb[0].mxu0
      %1966 = vdwg.mxu0
      %v1967 = vadd.f32 %v1765, %v1949
      %v1968 = vadd.f32 %v1766, %v1954
      %v1969 = vadd.f32 %v1767, %v1959
      %v1970 = vadd.f32 %v1768, %v1964
      %s1971 = scalar_lea.vmem %s2, 256
      %v1972 = vld [vmem:[%s1971] sm:$0xff]
      %v1973 = vld [vmem:[%s1971 + $0x8] sm:$0xff]
      %v1974 = vld [vmem:[%s1971 + $0x10] sm:$0xff]
      %v1975 = vld [vmem:[%s1971 + $0x18] sm:$0x1]
      %v1977 = vsel %vm462, %v1975, 0
      %1979 = vmatprep.subr.mxu0 0.0
      %1980 = vmatpush1.msra.mxu0 %v1972
      %1981 = vmatprep.subr.mxu0 0.0
      %1982 = vmatpush1.msra.mxu0 %v1973
      %1983 = vmatprep.subr.mxu0 0.0
      %1984 = vmatpush1.msra.mxu0 %v1974
      %1985 = vmatprep.subr.mxu0 0.0
      %1986 = vmatpush1.msra.mxu0 %v1977
      %1987 = vmatprep.subr.mxu0 0.0
      %1988 = vmatpush1.msra.mxu0 0.0
      %1989 = vmatprep.subr.mxu0 0.0
      %1990 = vmatpush1.msra.mxu0 0.0
      %1991 = vmatprep.subr.mxu0 0.0
      %1992 = vmatpush1.msra.mxu0 0.0
      %1993 = vmatprep.subr.mxu0 0.0
      %1994 = vmatpush1.msra.mxu0 0.0
      %1995 = vmatprep.subr.mxu0 0.0
      %1996 = vmatpush1.msra.mxu0 0.0
      %1997 = vmatprep.subr.mxu0 0.0
      %1998 = vmatpush1.msra.mxu0 0.0
      %1999 = vmatprep.subr.mxu0 0.0
      %2000 = vmatpush1.msra.mxu0 0.0
      %2001 = vmatprep.subr.mxu0 0.0
      %2002 = vmatpush1.msra.mxu0 0.0
      %2003 = vmatprep.subr.mxu0 0.0
      %2004 = vmatpush1.msra.mxu0 0.0
      %2005 = vmatprep.subr.mxu0 0.0
      %2006 = vmatpush1.msra.mxu0 0.0
      %2007 = vmatprep.subr.mxu0 0.0
      %2008 = vmatpush1.msra.mxu0 0.0
      %2009 = vmatprep.subr.mxu0 0.0
      %2010 = vmatpush1.msra.mxu0 0.0
      %2011 = vmatprep.subr.mxu0 0.0
      %2012 = vmatpush1.msra.mxu0 0.0
      %2013 = vmatprep.subr.mxu0 0.0
      %2014 = vmatpush1.msra.mxu0 0.0
      %2015 = vmatprep.subr.mxu0 0.0
      %2016 = vmatpush1.msra.mxu0 0.0
      %2017 = vmatprep.subr.mxu0 0.0
      %2018 = vmatpush1.msra.mxu0 0.0
      %2019 = vmatprep.subr.mxu0 0.0
      %2020 = vmatpush1.msra.mxu0 0.0
      %2021 = vmatprep.subr.mxu0 0.0
      %2022 = vmatpush1.msra.mxu0 0.0
      %2023 = vmatprep.subr.mxu0 0.0
      %2024 = vmatpush1.msra.mxu0 0.0
      %2025 = vmatprep.subr.mxu0 0.0
      %2026 = vmatpush1.msra.mxu0 0.0
      %2027 = vmatprep.subr.mxu0 0.0
      %2028 = vmatpush1.msra.mxu0 0.0
      %2029 = vmatprep.subr.mxu0 0.0
      %2030 = vmatpush1.msra.mxu0 0.0
      %2031 = vmatprep.subr.mxu0 0.0
      %2032 = vmatpush1.msra.mxu0 0.0
      %2033 = vmatprep.subr.mxu0 0.0
      %2034 = vmatpush1.msra.mxu0 0.0
      %2035 = vmatprep.subr.mxu0 0.0
      %2036 = vmatpush1.msra.mxu0 0.0
      %2037 = vmatprep.subr.mxu0 0.0
      %2038 = vmatpush1.msra.mxu0 0.0
      %2039 = vmatprep.subr.mxu0 0.0
      %2040 = vmatpush1.msra.mxu0 0.0
      %2041 = vmatprep.subr.mxu0 0.0
      %2042 = vmatpush1.msra.mxu0 0.0
      %2043 = vmatprep.mubr.f32.mxu0 0.0
      %2044 = vmatmul.mubr.f32.gmra.mrb[0].mxu0 %v451
      %v2045 = vpop.f32.mrb[0].mxu0
      %v2046 = vadd.f32 0.0, %v2045
      %v2047 = vpop.f32.mrb[0].mxu0
      %2048 = vmatprep.mubr.f32.mxu0 0.0
      %2049 = vmatmul.mubr.f32.gmra.mrb[0].mxu0 %v454
      %v2050 = vpop.f32.mrb[0].mxu0
      %v2051 = vadd.f32 0.0, %v2050
      %v2052 = vpop.f32.mrb[0].mxu0
      %2053 = vmatprep.mubr.f32.mxu0 0.0
      %2054 = vmatmul.mubr.f32.gmra.mrb[0].mxu0 %v457
      %v2055 = vpop.f32.mrb[0].mxu0
      %v2056 = vadd.f32 0.0, %v2055
      %v2057 = vpop.f32.mrb[0].mxu0
      %2058 = vmatprep.mubr.f32.mxu0 0.0
      %2059 = vmatmul.mubr.f32.gmra.mrb[0].mxu0 %v460
      %v2060 = vpop.f32.mrb[0].mxu0
      %v2061 = vadd.f32 0.0, %v2060
      %v2062 = vpop.f32.mrb[0].mxu0
      %2063 = vdwg.mxu0
      %s2064 = scalar_lea.vmem %s1, 256
      %v2065 = vld [vmem:[%s2064] sm:$0xff]
      %v2066 = vld [vmem:[%s2064 + $0x8] sm:$0xff]
      %v2067 = vld [vmem:[%s2064 + $0x10] sm:$0xff]
      %v2068 = vld [vmem:[%s2064 + $0x18] sm:$0xff]
      %v2070 = vsel %vm449, %v2065, 0
      %v2073 = vsel %vm449, %v2066, 0
      %v2076 = vsel %vm449, %v2067, 0
      %v2079 = vsel %vm449, %v2068, 0
      %v2082 = vsel %vm462, %v2061, 0
      %2084 = vmatprep.subr.mxu0 0.0
      %2085 = vmatpush1.msra.mxu0 %v2046
      %2086 = vmatprep.subr.mxu0 0.0
      %2087 = vmatpush1.msra.mxu0 %v2051
      %2088 = vmatprep.subr.mxu0 0.0
      %2089 = vmatpush1.msra.mxu0 %v2056
      %2090 = vmatprep.subr.mxu0 0.0
      %2091 = vmatpush1.msra.mxu0 %v2082
      %2092 = vmatprep.subr.mxu0 0.0
      %2093 = vmatpush1.msra.mxu0 0.0
      %2094 = vmatprep.subr.mxu0 0.0
      %2095 = vmatpush1.msra.mxu0 0.0
      %2096 = vmatprep.subr.mxu0 0.0
      %2097 = vmatpush1.msra.mxu0 0.0
      %2098 = vmatprep.subr.mxu0 0.0
      %2099 = vmatpush1.msra.mxu0 0.0
      %2100 = vmatprep.subr.mxu0 0.0
      %2101 = vmatpush1.msra.mxu0 0.0
      %2102 = vmatprep.subr.mxu0 0.0
      %2103 = vmatpush1.msra.mxu0 0.0
      %2104 = vmatprep.subr.mxu0 0.0
      %2105 = vmatpush1.msra.mxu0 0.0
      %2106 = vmatprep.subr.mxu0 0.0
      %2107 = vmatpush1.msra.mxu0 0.0
      %2108 = vmatprep.subr.mxu0 0.0
      %2109 = vmatpush1.msra.mxu0 0.0
      %2110 = vmatprep.subr.mxu0 0.0
      %2111 = vmatpush1.msra.mxu0 0.0
      %2112 = vmatprep.subr.mxu0 0.0
      %2113 = vmatpush1.msra.mxu0 0.0
      %2114 = vmatprep.subr.mxu0 0.0
      %2115 = vmatpush1.msra.mxu0 0.0
      %2116 = vmatprep.subr.mxu0 0.0
      %2117 = vmatpush1.msra.mxu0 0.0
      %2118 = vmatprep.subr.mxu0 0.0
      %2119 = vmatpush1.msra.mxu0 0.0
      %2120 = vmatprep.subr.mxu0 0.0
      %2121 = vmatpush1.msra.mxu0 0.0
      %2122 = vmatprep.subr.mxu0 0.0
      %2123 = vmatpush1.msra.mxu0 0.0
      %2124 = vmatprep.subr.mxu0 0.0
      %2125 = vmatpush1.msra.mxu0 0.0
      %2126 = vmatprep.subr.mxu0 0.0
      %2127 = vmatpush1.msra.mxu0 0.0
      %2128 = vmatprep.subr.mxu0 0.0
      %2129 = vmatpush1.msra.mxu0 0.0
      %2130 = vmatprep.subr.mxu0 0.0
      %2131 = vmatpush1.msra.mxu0 0.0
      %2132 = vmatprep.subr.mxu0 0.0
      %2133 = vmatpush1.msra.mxu0 0.0
      %2134 = vmatprep.subr.mxu0 0.0
      %2135 = vmatpush1.msra.mxu0 0.0
      %2136 = vmatprep.subr.mxu0 0.0
      %2137 = vmatpush1.msra.mxu0 0.0
      %2138 = vmatprep.subr.mxu0 0.0
      %2139 = vmatpush1.msra.mxu0 0.0
      %2140 = vmatprep.subr.mxu0 0.0
      %2141 = vmatpush1.msra.mxu0 0.0
      %2142 = vmatprep.subr.mxu0 0.0
      %2143 = vmatpush1.msra.mxu0 0.0
      %2144 = vmatprep.subr.mxu0 0.0
      %2145 = vmatpush1.msra.mxu0 0.0
      %2146 = vmatprep.subr.mxu0 0.0
      %2147 = vmatpush1.msra.mxu0 0.0
      %2148 = vmatprep.mubr.f32.mxu0 0.0
      %2149 = vmatmul.mubr.f32.gmra.mrb[0].mxu0 %v2070
      %v2150 = vpop.f32.mrb[0].mxu0
      %v2151 = vadd.f32 0.0, %v2150
      %v2152 = vpop.f32.mrb[0].mxu0
      %2153 = vmatprep.mubr.f32.mxu0 0.0
      %2154 = vmatmul.mubr.f32.gmra.mrb[0].mxu0 %v2073
      %v2155 = vpop.f32.mrb[0].mxu0
      %v2156 = vadd.f32 0.0, %v2155
      %v2157 = vpop.f32.mrb[0].mxu0
      %2158 = vmatprep.mubr.f32.mxu0 0.0
      %2159 = vmatmul.mubr.f32.gmra.mrb[0].mxu0 %v2076
      %v2160 = vpop.f32.mrb[0].mxu0
      %v2161 = vadd.f32 0.0, %v2160
      %v2162 = vpop.f32.mrb[0].mxu0
      %2163 = vmatprep.mubr.f32.mxu0 0.0
      %2164 = vmatmul.mubr.f32.gmra.mrb[0].mxu0 %v2079
      %v2165 = vpop.f32.mrb[0].mxu0
      %v2166 = vadd.f32 0.0, %v2165
      %v2167 = vpop.f32.mrb[0].mxu0
      %2168 = vdwg.mxu0
      %v2169 = vadd.f32 %v1967, %v2151
      %v2170 = vadd.f32 %v1968, %v2156
      %v2171 = vadd.f32 %v1969, %v2161
      %v2172 = vadd.f32 %v1970, %v2166
      %s2173 = scalar_lea.vmem %s2, 288
      %v2174 = vld [vmem:[%s2173] sm:$0xff]
      %v2175 = vld [vmem:[%s2173 + $0x8] sm:$0xff]
      %v2176 = vld [vmem:[%s2173 + $0x10] sm:$0xff]
      %v2177 = vld [vmem:[%s2173 + $0x18] sm:$0x1]
      %v2179 = vsel %vm462, %v2177, 0
      %2181 = vmatprep.subr.mxu0 0.0
      %2182 = vmatpush1.msra.mxu0 %v2174
      %2183 = vmatprep.subr.mxu0 0.0
      %2184 = vmatpush1.msra.mxu0 %v2175
      %2185 = vmatprep.subr.mxu0 0.0
      %2186 = vmatpush1.msra.mxu0 %v2176
      %2187 = vmatprep.subr.mxu0 0.0
      %2188 = vmatpush1.msra.mxu0 %v2179
      %2189 = vmatprep.subr.mxu0 0.0
      %2190 = vmatpush1.msra.mxu0 0.0
      %2191 = vmatprep.subr.mxu0 0.0
      %2192 = vmatpush1.msra.mxu0 0.0
      %2193 = vmatprep.subr.mxu0 0.0
      %2194 = vmatpush1.msra.mxu0 0.0
      %2195 = vmatprep.subr.mxu0 0.0
      %2196 = vmatpush1.msra.mxu0 0.0
      %2197 = vmatprep.subr.mxu0 0.0
      %2198 = vmatpush1.msra.mxu0 0.0
      %2199 = vmatprep.subr.mxu0 0.0
      %2200 = vmatpush1.msra.mxu0 0.0
      %2201 = vmatprep.subr.mxu0 0.0
      %2202 = vmatpush1.msra.mxu0 0.0
      %2203 = vmatprep.subr.mxu0 0.0
      %2204 = vmatpush1.msra.mxu0 0.0
      %2205 = vmatprep.subr.mxu0 0.0
      %2206 = vmatpush1.msra.mxu0 0.0
      %2207 = vmatprep.subr.mxu0 0.0
      %2208 = vmatpush1.msra.mxu0 0.0
      %2209 = vmatprep.subr.mxu0 0.0
      %2210 = vmatpush1.msra.mxu0 0.0
      %2211 = vmatprep.subr.mxu0 0.0
      %2212 = vmatpush1.msra.mxu0 0.0
      %2213 = vmatprep.subr.mxu0 0.0
      %2214 = vmatpush1.msra.mxu0 0.0
      %2215 = vmatprep.subr.mxu0 0.0
      %2216 = vmatpush1.msra.mxu0 0.0
      %2217 = vmatprep.subr.mxu0 0.0
      %2218 = vmatpush1.msra.mxu0 0.0
      %2219 = vmatprep.subr.mxu0 0.0
      %2220 = vmatpush1.msra.mxu0 0.0
      %2221 = vmatprep.subr.mxu0 0.0
      %2222 = vmatpush1.msra.mxu0 0.0
      %2223 = vmatprep.subr.mxu0 0.0
      %2224 = vmatpush1.msra.mxu0 0.0
      %2225 = vmatprep.subr.mxu0 0.0
      %2226 = vmatpush1.msra.mxu0 0.0
      %2227 = vmatprep.subr.mxu0 0.0
      %2228 = vmatpush1.msra.mxu0 0.0
      %2229 = vmatprep.subr.mxu0 0.0
      %2230 = vmatpush1.msra.mxu0 0.0
      %2231 = vmatprep.subr.mxu0 0.0
      %2232 = vmatpush1.msra.mxu0 0.0
      %2233 = vmatprep.subr.mxu0 0.0
      %2234 = vmatpush1.msra.mxu0 0.0
      %2235 = vmatprep.subr.mxu0 0.0
      %2236 = vmatpush1.msra.mxu0 0.0
      %2237 = vmatprep.subr.mxu0 0.0
      %2238 = vmatpush1.msra.mxu0 0.0
      %2239 = vmatprep.subr.mxu0 0.0
      %2240 = vmatpush1.msra.mxu0 0.0
      %2241 = vmatprep.subr.mxu0 0.0
      %2242 = vmatpush1.msra.mxu0 0.0
      %2243 = vmatprep.subr.mxu0 0.0
      %2244 = vmatpush1.msra.mxu0 0.0
      %2245 = vmatprep.mubr.f32.mxu0 0.0
      %2246 = vmatmul.mubr.f32.gmra.mrb[0].mxu0 %v451
      %v2247 = vpop.f32.mrb[0].mxu0
      %v2248 = vadd.f32 0.0, %v2247
      %v2249 = vpop.f32.mrb[0].mxu0
      %2250 = vmatprep.mubr.f32.mxu0 0.0
      %2251 = vmatmul.mubr.f32.gmra.mrb[0].mxu0 %v454
      %v2252 = vpop.f32.mrb[0].mxu0
      %v2253 = vadd.f32 0.0, %v2252
      %v2254 = vpop.f32.mrb[0].mxu0
      %2255 = vmatprep.mubr.f32.mxu0 0.0
      %2256 = vmatmul.mubr.f32.gmra.mrb[0].mxu0 %v457
      %v2257 = vpop.f32.mrb[0].mxu0
      %v2258 = vadd.f32 0.0, %v2257
      %v2259 = vpop.f32.mrb[0].mxu0
      %2260 = vmatprep.mubr.f32.mxu0 0.0
      %2261 = vmatmul.mubr.f32.gmra.mrb[0].mxu0 %v460
      %v2262 = vpop.f32.mrb[0].mxu0
      %v2263 = vadd.f32 0.0, %v2262
      %v2264 = vpop.f32.mrb[0].mxu0
      %2265 = vdwg.mxu0
      %s2266 = scalar_lea.vmem %s1, 288
      %v2267 = vld [vmem:[%s2266] sm:$0xff]
      %v2268 = vld [vmem:[%s2266 + $0x8] sm:$0xff]
      %v2269 = vld [vmem:[%s2266 + $0x10] sm:$0xff]
      %v2270 = vld [vmem:[%s2266 + $0x18] sm:$0xff]
      %v2272 = vsel %vm449, %v2267, 0
      %v2275 = vsel %vm449, %v2268, 0
      %v2278 = vsel %vm449, %v2269, 0
      %v2281 = vsel %vm449, %v2270, 0
      %v2284 = vsel %vm462, %v2263, 0
      %2286 = vmatprep.subr.mxu0 0.0
      %2287 = vmatpush1.msra.mxu0 %v2248
      %2288 = vmatprep.subr.mxu0 0.0
      %2289 = vmatpush1.msra.mxu0 %v2253
      %2290 = vmatprep.subr.mxu0 0.0
      %2291 = vmatpush1.msra.mxu0 %v2258
      %2292 = vmatprep.subr.mxu0 0.0
      %2293 = vmatpush1.msra.mxu0 %v2284
      %2294 = vmatprep.subr.mxu0 0.0
      %2295 = vmatpush1.msra.mxu0 0.0
      %2296 = vmatprep.subr.mxu0 0.0
      %2297 = vmatpush1.msra.mxu0 0.0
      %2298 = vmatprep.subr.mxu0 0.0
      %2299 = vmatpush1.msra.mxu0 0.0
      %2300 = vmatprep.subr.mxu0 0.0
      %2301 = vmatpush1.msra.mxu0 0.0
      %2302 = vmatprep.subr.mxu0 0.0
      %2303 = vmatpush1.msra.mxu0 0.0
      %2304 = vmatprep.subr.mxu0 0.0
      %2305 = vmatpush1.msra.mxu0 0.0
      %2306 = vmatprep.subr.mxu0 0.0
      %2307 = vmatpush1.msra.mxu0 0.0
      %2308 = vmatprep.subr.mxu0 0.0
      %2309 = vmatpush1.msra.mxu0 0.0
      %2310 = vmatprep.subr.mxu0 0.0
      %2311 = vmatpush1.msra.mxu0 0.0
      %2312 = vmatprep.subr.mxu0 0.0
      %2313 = vmatpush1.msra.mxu0 0.0
      %2314 = vmatprep.subr.mxu0 0.0
      %2315 = vmatpush1.msra.mxu0 0.0
      %2316 = vmatprep.subr.mxu0 0.0
      %2317 = vmatpush1.msra.mxu0 0.0
      %2318 = vmatprep.subr.mxu0 0.0
      %2319 = vmatpush1.msra.mxu0 0.0
      %2320 = vmatprep.subr.mxu0 0.0
      %2321 = vmatpush1.msra.mxu0 0.0
      %2322 = vmatprep.subr.mxu0 0.0
      %2323 = vmatpush1.msra.mxu0 0.0
      %2324 = vmatprep.subr.mxu0 0.0
      %2325 = vmatpush1.msra.mxu0 0.0
      %2326 = vmatprep.subr.mxu0 0.0
      %2327 = vmatpush1.msra.mxu0 0.0
      %2328 = vmatprep.subr.mxu0 0.0
      %2329 = vmatpush1.msra.mxu0 0.0
      %2330 = vmatprep.subr.mxu0 0.0
      %2331 = vmatpush1.msra.mxu0 0.0
      %2332 = vmatprep.subr.mxu0 0.0
      %2333 = vmatpush1.msra.mxu0 0.0
      %2334 = vmatprep.subr.mxu0 0.0
      %2335 = vmatpush1.msra.mxu0 0.0
      %2336 = vmatprep.subr.mxu0 0.0
      %2337 = vmatpush1.msra.mxu0 0.0
      %2338 = vmatprep.subr.mxu0 0.0
      %2339 = vmatpush1.msra.mxu0 0.0
      %2340 = vmatprep.subr.mxu0 0.0
      %2341 = vmatpush1.msra.mxu0 0.0
      %2342 = vmatprep.subr.mxu0 0.0
      %2343 = vmatpush1.msra.mxu0 0.0
      %2344 = vmatprep.subr.mxu0 0.0
      %2345 = vmatpush1.msra.mxu0 0.0
      %2346 = vmatprep.subr.mxu0 0.0
      %2347 = vmatpush1.msra.mxu0 0.0
      %2348 = vmatprep.subr.mxu0 0.0
      %2349 = vmatpush1.msra.mxu0 0.0
      %2350 = vmatprep.mubr.f32.mxu0 0.0
      %2351 = vmatmul.mubr.f32.gmra.mrb[0].mxu0 %v2272
      %v2352 = vpop.f32.mrb[0].mxu0
      %v2353 = vadd.f32 0.0, %v2352
      %v2354 = vpop.f32.mrb[0].mxu0
      %2355 = vmatprep.mubr.f32.mxu0 0.0
      %2356 = vmatmul.mubr.f32.gmra.mrb[0].mxu0 %v2275
      %v2357 = vpop.f32.mrb[0].mxu0
      %v2358 = vadd.f32 0.0, %v2357
      %v2359 = vpop.f32.mrb[0].mxu0
      %2360 = vmatprep.mubr.f32.mxu0 0.0
      %2361 = vmatmul.mubr.f32.gmra.mrb[0].mxu0 %v2278
      %v2362 = vpop.f32.mrb[0].mxu0
      %v2363 = vadd.f32 0.0, %v2362
      %v2364 = vpop.f32.mrb[0].mxu0
      %2365 = vmatprep.mubr.f32.mxu0 0.0
      %2366 = vmatmul.mubr.f32.gmra.mrb[0].mxu0 %v2281
      %v2367 = vpop.f32.mrb[0].mxu0
      %v2368 = vadd.f32 0.0, %v2367
      %v2369 = vpop.f32.mrb[0].mxu0
      %2370 = vdwg.mxu0
      %v2371 = vadd.f32 %v2169, %v2353
      %v2372 = vadd.f32 %v2170, %v2358
      %v2373 = vadd.f32 %v2171, %v2363
      %v2374 = vadd.f32 %v2172, %v2368
      %s2375 = scalar_lea.vmem %s2, 320
      %v2376 = vld [vmem:[%s2375] sm:$0xff]
      %v2377 = vld [vmem:[%s2375 + $0x8] sm:$0xff]
      %v2378 = vld [vmem:[%s2375 + $0x10] sm:$0xff]
      %v2379 = vld [vmem:[%s2375 + $0x18] sm:$0x1]
      %v2381 = vsel %vm462, %v2379, 0
      %2383 = vmatprep.subr.mxu0 0.0
      %2384 = vmatpush1.msra.mxu0 %v2376
      %2385 = vmatprep.subr.mxu0 0.0
      %2386 = vmatpush1.msra.mxu0 %v2377
      %2387 = vmatprep.subr.mxu0 0.0
      %2388 = vmatpush1.msra.mxu0 %v2378
      %2389 = vmatprep.subr.mxu0 0.0
      %2390 = vmatpush1.msra.mxu0 %v2381
      %2391 = vmatprep.subr.mxu0 0.0
      %2392 = vmatpush1.msra.mxu0 0.0
      %2393 = vmatprep.subr.mxu0 0.0
      %2394 = vmatpush1.msra.mxu0 0.0
      %2395 = vmatprep.subr.mxu0 0.0
      %2396 = vmatpush1.msra.mxu0 0.0
      %2397 = vmatprep.subr.mxu0 0.0
      %2398 = vmatpush1.msra.mxu0 0.0
      %2399 = vmatprep.subr.mxu0 0.0
      %2400 = vmatpush1.msra.mxu0 0.0
      %2401 = vmatprep.subr.mxu0 0.0
      %2402 = vmatpush1.msra.mxu0 0.0
      %2403 = vmatprep.subr.mxu0 0.0
      %2404 = vmatpush1.msra.mxu0 0.0
      %2405 = vmatprep.subr.mxu0 0.0
      %2406 = vmatpush1.msra.mxu0 0.0
      %2407 = vmatprep.subr.mxu0 0.0
      %2408 = vmatpush1.msra.mxu0 0.0
      %2409 = vmatprep.subr.mxu0 0.0
      %2410 = vmatpush1.msra.mxu0 0.0
      %2411 = vmatprep.subr.mxu0 0.0
      %2412 = vmatpush1.msra.mxu0 0.0
      %2413 = vmatprep.subr.mxu0 0.0
      %2414 = vmatpush1.msra.mxu0 0.0
      %2415 = vmatprep.subr.mxu0 0.0
      %2416 = vmatpush1.msra.mxu0 0.0
      %2417 = vmatprep.subr.mxu0 0.0
      %2418 = vmatpush1.msra.mxu0 0.0
      %2419 = vmatprep.subr.mxu0 0.0
      %2420 = vmatpush1.msra.mxu0 0.0
      %2421 = vmatprep.subr.mxu0 0.0
      %2422 = vmatpush1.msra.mxu0 0.0
      %2423 = vmatprep.subr.mxu0 0.0
      %2424 = vmatpush1.msra.mxu0 0.0
      %2425 = vmatprep.subr.mxu0 0.0
      %2426 = vmatpush1.msra.mxu0 0.0
      %2427 = vmatprep.subr.mxu0 0.0
      %2428 = vmatpush1.msra.mxu0 0.0
      %2429 = vmatprep.subr.mxu0 0.0
      %2430 = vmatpush1.msra.mxu0 0.0
      %2431 = vmatprep.subr.mxu0 0.0
      %2432 = vmatpush1.msra.mxu0 0.0
      %2433 = vmatprep.subr.mxu0 0.0
      %2434 = vmatpush1.msra.mxu0 0.0
      %2435 = vmatprep.subr.mxu0 0.0
      %2436 = vmatpush1.msra.mxu0 0.0
      %2437 = vmatprep.subr.mxu0 0.0
      %2438 = vmatpush1.msra.mxu0 0.0
      %2439 = vmatprep.subr.mxu0 0.0
      %2440 = vmatpush1.msra.mxu0 0.0
      %2441 = vmatprep.subr.mxu0 0.0
      %2442 = vmatpush1.msra.mxu0 0.0
      %2443 = vmatprep.subr.mxu0 0.0
      %2444 = vmatpush1.msra.mxu0 0.0
      %2445 = vmatprep.subr.mxu0 0.0
      %2446 = vmatpush1.msra.mxu0 0.0
      %2447 = vmatprep.mubr.f32.mxu0 0.0
      %2448 = vmatmul.mubr.f32.gmra.mrb[0].mxu0 %v451
      %v2449 = vpop.f32.mrb[0].mxu0
      %v2450 = vadd.f32 0.0, %v2449
      %v2451 = vpop.f32.mrb[0].mxu0
      %2452 = vmatprep.mubr.f32.mxu0 0.0
      %2453 = vmatmul.mubr.f32.gmra.mrb[0].mxu0 %v454
      %v2454 = vpop.f32.mrb[0].mxu0
      %v2455 = vadd.f32 0.0, %v2454
      %v2456 = vpop.f32.mrb[0].mxu0
      %2457 = vmatprep.mubr.f32.mxu0 0.0
      %2458 = vmatmul.mubr.f32.gmra.mrb[0].mxu0 %v457
      %v2459 = vpop.f32.mrb[0].mxu0
      %v2460 = vadd.f32 0.0, %v2459
      %v2461 = vpop.f32.mrb[0].mxu0
      %2462 = vmatprep.mubr.f32.mxu0 0.0
      %2463 = vmatmul.mubr.f32.gmra.mrb[0].mxu0 %v460
      %v2464 = vpop.f32.mrb[0].mxu0
      %v2465 = vadd.f32 0.0, %v2464
      %v2466 = vpop.f32.mrb[0].mxu0
      %2467 = vdwg.mxu0
      %s2468 = scalar_lea.vmem %s1, 320
      %v2469 = vld [vmem:[%s2468] sm:$0xff]
      %v2470 = vld [vmem:[%s2468 + $0x8] sm:$0xff]
      %v2471 = vld [vmem:[%s2468 + $0x10] sm:$0xff]
      %v2472 = vld [vmem:[%s2468 + $0x18] sm:$0xff]
      %v2474 = vsel %vm449, %v2469, 0
      %v2477 = vsel %vm449, %v2470, 0
      %v2480 = vsel %vm449, %v2471, 0
      %v2483 = vsel %vm449, %v2472, 0
      %v2486 = vsel %vm462, %v2465, 0
      %2488 = vmatprep.subr.mxu0 0.0
      %2489 = vmatpush1.msra.mxu0 %v2450
      %2490 = vmatprep.subr.mxu0 0.0
      %2491 = vmatpush1.msra.mxu0 %v2455
      %2492 = vmatprep.subr.mxu0 0.0
      %2493 = vmatpush1.msra.mxu0 %v2460
      %2494 = vmatprep.subr.mxu0 0.0
      %2495 = vmatpush1.msra.mxu0 %v2486
      %2496 = vmatprep.subr.mxu0 0.0
      %2497 = vmatpush1.msra.mxu0 0.0
      %2498 = vmatprep.subr.mxu0 0.0
      %2499 = vmatpush1.msra.mxu0 0.0
      %2500 = vmatprep.subr.mxu0 0.0
      %2501 = vmatpush1.msra.mxu0 0.0
      %2502 = vmatprep.subr.mxu0 0.0
      %2503 = vmatpush1.msra.mxu0 0.0
      %2504 = vmatprep.subr.mxu0 0.0
      %2505 = vmatpush1.msra.mxu0 0.0
      %2506 = vmatprep.subr.mxu0 0.0
      %2507 = vmatpush1.msra.mxu0 0.0
      %2508 = vmatprep.subr.mxu0 0.0
      %2509 = vmatpush1.msra.mxu0 0.0
      %2510 = vmatprep.subr.mxu0 0.0
      %2511 = vmatpush1.msra.mxu0 0.0
      %2512 = vmatprep.subr.mxu0 0.0
      %2513 = vmatpush1.msra.mxu0 0.0
      %2514 = vmatprep.subr.mxu0 0.0
      %2515 = vmatpush1.msra.mxu0 0.0
      %2516 = vmatprep.subr.mxu0 0.0
      %2517 = vmatpush1.msra.mxu0 0.0
      %2518 = vmatprep.subr.mxu0 0.0
      %2519 = vmatpush1.msra.mxu0 0.0
      %2520 = vmatprep.subr.mxu0 0.0
      %2521 = vmatpush1.msra.mxu0 0.0
      %2522 = vmatprep.subr.mxu0 0.0
      %2523 = vmatpush1.msra.mxu0 0.0
      %2524 = vmatprep.subr.mxu0 0.0
      %2525 = vmatpush1.msra.mxu0 0.0
      %2526 = vmatprep.subr.mxu0 0.0
      %2527 = vmatpush1.msra.mxu0 0.0
      %2528 = vmatprep.subr.mxu0 0.0
      %2529 = vmatpush1.msra.mxu0 0.0
      %2530 = vmatprep.subr.mxu0 0.0
      %2531 = vmatpush1.msra.mxu0 0.0
      %2532 = vmatprep.subr.mxu0 0.0
      %2533 = vmatpush1.msra.mxu0 0.0
      %2534 = vmatprep.subr.mxu0 0.0
      %2535 = vmatpush1.msra.mxu0 0.0
      %2536 = vmatprep.subr.mxu0 0.0
      %2537 = vmatpush1.msra.mxu0 0.0
      %2538 = vmatprep.subr.mxu0 0.0
      %2539 = vmatpush1.msra.mxu0 0.0
      %2540 = vmatprep.subr.mxu0 0.0
      %2541 = vmatpush1.msra.mxu0 0.0
      %2542 = vmatprep.subr.mxu0 0.0
      %2543 = vmatpush1.msra.mxu0 0.0
      %2544 = vmatprep.subr.mxu0 0.0
      %2545 = vmatpush1.msra.mxu0 0.0
      %2546 = vmatprep.subr.mxu0 0.0
      %2547 = vmatpush1.msra.mxu0 0.0
      %2548 = vmatprep.subr.mxu0 0.0
      %2549 = vmatpush1.msra.mxu0 0.0
      %2550 = vmatprep.subr.mxu0 0.0
      %2551 = vmatpush1.msra.mxu0 0.0
      %2552 = vmatprep.mubr.f32.mxu0 0.0
      %2553 = vmatmul.mubr.f32.gmra.mrb[0].mxu0 %v2474
      %v2554 = vpop.f32.mrb[0].mxu0
      %v2555 = vadd.f32 0.0, %v2554
      %v2556 = vpop.f32.mrb[0].mxu0
      %2557 = vmatprep.mubr.f32.mxu0 0.0
      %2558 = vmatmul.mubr.f32.gmra.mrb[0].mxu0 %v2477
      %v2559 = vpop.f32.mrb[0].mxu0
      %v2560 = vadd.f32 0.0, %v2559
      %v2561 = vpop.f32.mrb[0].mxu0
      %2562 = vmatprep.mubr.f32.mxu0 0.0
      %2563 = vmatmul.mubr.f32.gmra.mrb[0].mxu0 %v2480
      %v2564 = vpop.f32.mrb[0].mxu0
      %v2565 = vadd.f32 0.0, %v2564
      %v2566 = vpop.f32.mrb[0].mxu0
      %2567 = vmatprep.mubr.f32.mxu0 0.0
      %2568 = vmatmul.mubr.f32.gmra.mrb[0].mxu0 %v2483
      %v2569 = vpop.f32.mrb[0].mxu0
      %v2570 = vadd.f32 0.0, %v2569
      %v2571 = vpop.f32.mrb[0].mxu0
      %2572 = vdwg.mxu0
      %v2573 = vadd.f32 %v2371, %v2555
      %v2574 = vadd.f32 %v2372, %v2560
      %v2575 = vadd.f32 %v2373, %v2565
      %v2576 = vadd.f32 %v2374, %v2570
      %v2577 = vld [vmem:[%s3] sm:$0xff]
      %v2578 = vld [vmem:[%s3 + $0x8] sm:$0xff]
      %v2579 = vld [vmem:[%s3 + $0x10] sm:$0xff]
      %v2580 = vld [vmem:[%s3 + $0x18] sm:$0xff]
      %2582 = vset.pattern.permute.xlu0 0
      %2583 = vperm.xlu0 %2582, %v2577
      %v2584 = vpop.permute.xlu0 %2583
      %2587 = vset.pattern.permute.xlu0 0
      %2588 = vperm.xlu0 %2587, %v2578
      %v2589 = vpop.permute.xlu0 %2588
      %2592 = vset.pattern.permute.xlu0 0
      %2593 = vperm.xlu0 %2592, %v2579
      %v2594 = vpop.permute.xlu0 %2593
      %2597 = vset.pattern.permute.xlu0 0
      %2598 = vperm.xlu0 %2597, %v2580
      %v2599 = vpop.permute.xlu0 %2598
      %v2601 = vadd.f32 %v2573, %v2584
      %v2602 = vadd.f32 %v2574, %v2589
      %v2603 = vadd.f32 %v2575, %v2594
      %v2604 = vadd.f32 %v2576, %v2599
      %v2606 = vsel %vm449, %v2601, 0
      %v2609 = vsel %vm449, %v2602, 0
      %v2612 = vsel %vm449, %v2603, 0
      %v2615 = vsel %vm449, %v2604, 0
      %2617 = vmatprep.subr.mxu0 0.0
      %2618 = vmatpush1.xpose.msra.mxu0 %v2606
      %2619 = vmatprep.subr.mxu0 0.0
      %2620 = vmatpush1.xpose.msra.mxu0 %v2609
      %2621 = vmatprep.subr.mxu0 0.0
      %2622 = vmatpush1.xpose.msra.mxu0 %v2612
      %2623 = vmatprep.subr.mxu0 0.0
      %2624 = vmatpush1.xpose.msra.mxu0 %v2615
      %2625 = vmatprep.subr.mxu0 0.0
      %2626 = vmatpush1.xpose.msra.mxu0 0.0
      %2627 = vmatprep.subr.mxu0 0.0
      %2628 = vmatpush1.xpose.msra.mxu0 0.0
      %2629 = vmatprep.subr.mxu0 0.0
      %2630 = vmatpush1.xpose.msra.mxu0 0.0
      %2631 = vmatprep.subr.mxu0 0.0
      %2632 = vmatpush1.xpose.msra.mxu0 0.0
      %2633 = vmatprep.subr.mxu0 0.0
      %2634 = vmatpush1.xpose.msra.mxu0 0.0
      %2635 = vmatprep.subr.mxu0 0.0
      %2636 = vmatpush1.xpose.msra.mxu0 0.0
      %2637 = vmatprep.subr.mxu0 0.0
      %2638 = vmatpush1.xpose.msra.mxu0 0.0
      %2639 = vmatprep.subr.mxu0 0.0
      %2640 = vmatpush1.xpose.msra.mxu0 0.0
      %2641 = vmatprep.subr.mxu0 0.0
      %2642 = vmatpush1.xpose.msra.mxu0 0.0
      %2643 = vmatprep.subr.mxu0 0.0
      %2644 = vmatpush1.xpose.msra.mxu0 0.0
      %2645 = vmatprep.subr.mxu0 0.0
      %2646 = vmatpush1.xpose.msra.mxu0 0.0
      %2647 = vmatprep.subr.mxu0 0.0
      %2648 = vmatpush1.xpose.msra.mxu0 0.0
      %2649 = vmatprep.subr.mxu0 0.0
      %2650 = vmatpush1.xpose.msra.mxu0 0.0
      %2651 = vmatprep.subr.mxu0 0.0
      %2652 = vmatpush1.xpose.msra.mxu0 0.0
      %2653 = vmatprep.subr.mxu0 0.0
      %2654 = vmatpush1.xpose.msra.mxu0 0.0
      %2655 = vmatprep.subr.mxu0 0.0
      %2656 = vmatpush1.xpose.msra.mxu0 0.0
      %2657 = vmatprep.subr.mxu0 0.0
      %2658 = vmatpush1.xpose.msra.mxu0 0.0
      %2659 = vmatprep.subr.mxu0 0.0
      %2660 = vmatpush1.xpose.msra.mxu0 0.0
      %2661 = vmatprep.subr.mxu0 0.0
      %2662 = vmatpush1.xpose.msra.mxu0 0.0
      %2663 = vmatprep.subr.mxu0 0.0
      %2664 = vmatpush1.xpose.msra.mxu0 0.0
      %2665 = vmatprep.subr.mxu0 0.0
      %2666 = vmatpush1.xpose.msra.mxu0 0.0
      %2667 = vmatprep.subr.mxu0 0.0
      %2668 = vmatpush1.xpose.msra.mxu0 0.0
      %2669 = vmatprep.subr.mxu0 0.0
      %2670 = vmatpush1.xpose.msra.mxu0 0.0
      %2671 = vmatprep.subr.mxu0 0.0
      %2672 = vmatpush1.xpose.msra.mxu0 0.0
      %2673 = vmatprep.subr.mxu0 0.0
      %2674 = vmatpush1.xpose.msra.mxu0 0.0
      %2675 = vmatprep.subr.mxu0 0.0
      %2676 = vmatpush1.xpose.msra.mxu0 0.0
      %2677 = vmatprep.subr.mxu0 0.0
      %2678 = vmatpush1.xpose.msra.mxu0 0.0
      %2679 = vmatprep.subr.mxu0 0.0
      %2680 = vmatpush1.xpose.msra.mxu0 0.0
      %2681 = vmatprep.mubr.f32.mxu0 0.0
      %2682 = vmatmul.mubr.f32.gmra.mrb[0].mxu0 %v2606
      %v2683 = vpop.f32.mrb[0].mxu0
      %v2684 = vadd.f32 0.0, %v2683
      %v2685 = vpop.f32.mrb[0].mxu0
      %2686 = vmatprep.mubr.f32.mxu0 0.0
      %2687 = vmatmul.mubr.f32.gmra.mrb[0].mxu0 %v2609
      %v2688 = vpop.f32.mrb[0].mxu0
      %v2689 = vadd.f32 0.0, %v2688
      %v2690 = vpop.f32.mrb[0].mxu0
      %2691 = vmatprep.mubr.f32.mxu0 0.0
      %2692 = vmatmul.mubr.f32.gmra.mrb[0].mxu0 %v2612
      %v2693 = vpop.f32.mrb[0].mxu0
      %v2694 = vadd.f32 0.0, %v2693
      %v2695 = vpop.f32.mrb[0].mxu0
      %2696 = vmatprep.mubr.f32.mxu0 0.0
      %2697 = vmatmul.mubr.f32.gmra.mrb[0].mxu0 %v2615
      %v2698 = vpop.f32.mrb[0].mxu0
      %v2699 = vadd.f32 0.0, %v2698
      %v2700 = vpop.f32.mrb[0].mxu0
      %2701 = vdwg.mxu0
      %vm2702 = vcmp.gt.f32.partialorder %v2684, 0.0
      %vm2703 = vcmp.gt.f32.partialorder %v2689, 0.0
      %vm2704 = vcmp.gt.f32.partialorder %v2694, 0.0
      %vm2705 = vcmp.gt.f32.partialorder %v2699, 0.0
      %v2706 = vmul.f32 %v2684, 0.2
      %v2707 = vmul.f32 %v2689, 0.2
      %v2708 = vmul.f32 %v2694, 0.2
      %v2709 = vmul.f32 %v2699, 0.2
      %v2710 = vsel %vm2702, %v2684, %v2706
      %v2711 = vsel %vm2703, %v2689, %v2707
      %v2712 = vsel %vm2704, %v2694, %v2708
      %v2713 = vsel %vm2705, %v2699, %v2709
      %vm2714 = vcmask 261120
      %v2715 = vsel %vm2714, %v2710, -inf
      %v2716 = vsel %vm2714, %v2711, -inf
      %v2717 = vsel %vm2714, %v2712, -inf
      %v2718 = vsel %vm2714, %v2713, -inf
      %v2719 = vmax.f32 %v2715, %v2716
      %v2720 = vmax.f32 %v2717, %v2718
      %v2721 = vmax.f32 %v2719, %v2720
      %v2722 = vrot.slane %v2721, 4
      %v2723 = vmax.f32 %v2721, %v2722
      %v2724 = vrot.slane %v2723, 2
      %v2725 = vmax.f32 %v2723, %v2724
      %v2726 = vrot.slane %v2725, 1
      %v2727 = vmax.f32 %v2725, %v2726
      %v2728 = vsub.f32 %v2710, %v2727
      %v2729 = vsub.f32 %v2711, %v2727
      %v2730 = vsub.f32 %v2712, %v2727
      %v2731 = vsub.f32 %v2713, %v2727
      %v2732 = vmul.f32 %v2728, 1.442695
      %v2733 = vpow.pop %v2732
      %v2734 = vmul.f32 %v2729, 1.442695
      %v2735 = vpow.pop %v2734
      %v2736 = vmul.f32 %v2730, 1.442695
      %v2737 = vpow.pop %v2736
      %v2738 = vmul.f32 %v2731, 1.442695
      %v2739 = vpow.pop %v2738
      %v2740 = vsel %vm2714, %v2733, 0.0
      %v2741 = vsel %vm2714, %v2735, 0.0
      %v2742 = vadd.f32 %v2740, %v2741
      %v2743 = vsel %vm2714, %v2737, 0.0
      %v2744 = vadd.f32 %v2742, %v2743
      %v2745 = vsel %vm2714, %v2739, 0.0
      %v2746 = vadd.f32 %v2744, %v2745
      %v2747 = vrot.slane %v2746, 4
      %v2748 = vadd.f32 %v2746, %v2747
      %v2749 = vrot.slane %v2748, 2
      %v2750 = vadd.f32 %v2748, %v2749
      %v2751 = vrot.slane %v2750, 1
      %v2752 = vadd.f32 %v2750, %v2751
      %v2753 = vrcp.pop %v2752
      %v2754 = vmul.f32 %v2733, %v2753
      %v2755 = vmul.f32 %v2735, %v2753
      %v2756 = vmul.f32 %v2737, %v2753
      %v2757 = vmul.f32 %v2739, %v2753
      %v2759 = vsel %vm2714, %v2754, 0
      %v2762 = vsel %vm2714, %v2755, 0
      %v2765 = vsel %vm2714, %v2756, 0
      %v2768 = vsel %vm2714, %v2757, 0
      %2770 = vmatprep.subr.mxu0 0.0
      %2771 = vmatpush1.msra.mxu0 %v2601
      %2772 = vmatprep.subr.mxu0 0.0
      %2773 = vmatpush1.msra.mxu0 %v2602
      %2774 = vmatprep.subr.mxu0 0.0
      %2775 = vmatpush1.msra.mxu0 %v2603
      %2776 = vmatprep.subr.mxu0 0.0
      %2777 = vmatpush1.msra.mxu0 %v2604
      %2778 = vmatprep.subr.mxu0 0.0
      %2779 = vmatpush1.msra.mxu0 0.0
      %2780 = vmatprep.subr.mxu0 0.0
      %2781 = vmatpush1.msra.mxu0 0.0
      %2782 = vmatprep.subr.mxu0 0.0
      %2783 = vmatpush1.msra.mxu0 0.0
      %2784 = vmatprep.subr.mxu0 0.0
      %2785 = vmatpush1.msra.mxu0 0.0
      %2786 = vmatprep.subr.mxu0 0.0
      %2787 = vmatpush1.msra.mxu0 0.0
      %2788 = vmatprep.subr.mxu0 0.0
      %2789 = vmatpush1.msra.mxu0 0.0
      %2790 = vmatprep.subr.mxu0 0.0
      %2791 = vmatpush1.msra.mxu0 0.0
      %2792 = vmatprep.subr.mxu0 0.0
      %2793 = vmatpush1.msra.mxu0 0.0
      %2794 = vmatprep.subr.mxu0 0.0
      %2795 = vmatpush1.msra.mxu0 0.0
      %2796 = vmatprep.subr.mxu0 0.0
      %2797 = vmatpush1.msra.mxu0 0.0
      %2798 = vmatprep.subr.mxu0 0.0
      %2799 = vmatpush1.msra.mxu0 0.0
      %2800 = vmatprep.subr.mxu0 0.0
      %2801 = vmatpush1.msra.mxu0 0.0
      %2802 = vmatprep.subr.mxu0 0.0
      %2803 = vmatpush1.msra.mxu0 0.0
      %2804 = vmatprep.subr.mxu0 0.0
      %2805 = vmatpush1.msra.mxu0 0.0
      %2806 = vmatprep.subr.mxu0 0.0
      %2807 = vmatpush1.msra.mxu0 0.0
      %2808 = vmatprep.subr.mxu0 0.0
      %2809 = vmatpush1.msra.mxu0 0.0
      %2810 = vmatprep.subr.mxu0 0.0
      %2811 = vmatpush1.msra.mxu0 0.0
      %2812 = vmatprep.subr.mxu0 0.0
      %2813 = vmatpush1.msra.mxu0 0.0
      %2814 = vmatprep.subr.mxu0 0.0
      %2815 = vmatpush1.msra.mxu0 0.0
      %2816 = vmatprep.subr.mxu0 0.0
      %2817 = vmatpush1.msra.mxu0 0.0
      %2818 = vmatprep.subr.mxu0 0.0
      %2819 = vmatpush1.msra.mxu0 0.0
      %2820 = vmatprep.subr.mxu0 0.0
      %2821 = vmatpush1.msra.mxu0 0.0
      %2822 = vmatprep.subr.mxu0 0.0
      %2823 = vmatpush1.msra.mxu0 0.0
      %2824 = vmatprep.subr.mxu0 0.0
      %2825 = vmatpush1.msra.mxu0 0.0
      %2826 = vmatprep.subr.mxu0 0.0
      %2827 = vmatpush1.msra.mxu0 0.0
      %2828 = vmatprep.subr.mxu0 0.0
      %2829 = vmatpush1.msra.mxu0 0.0
      %2830 = vmatprep.subr.mxu0 0.0
      %2831 = vmatpush1.msra.mxu0 0.0
      %2832 = vmatprep.subr.mxu0 0.0
      %2833 = vmatpush1.msra.mxu0 0.0
      %2834 = vmatprep.mubr.f32.mxu0 0.0
      %2835 = vmatmul.mubr.f32.gmra.mrb[0].mxu0 %v2759
      %v2836 = vpop.f32.mrb[0].mxu0
      %v2837 = vadd.f32 0.0, %v2836
      %v2838 = vpop.f32.mrb[0].mxu0
      %2839 = vmatprep.mubr.f32.mxu0 0.0
      %2840 = vmatmul.mubr.f32.gmra.mrb[0].mxu0 %v2762
      %v2841 = vpop.f32.mrb[0].mxu0
      %v2842 = vadd.f32 0.0, %v2841
      %v2843 = vpop.f32.mrb[0].mxu0
      %2844 = vmatprep.mubr.f32.mxu0 0.0
      %2845 = vmatmul.mubr.f32.gmra.mrb[0].mxu0 %v2765
      %v2846 = vpop.f32.mrb[0].mxu0
      %v2847 = vadd.f32 0.0, %v2846
      %v2848 = vpop.f32.mrb[0].mxu0
      %2849 = vmatprep.mubr.f32.mxu0 0.0
      %2850 = vmatmul.mubr.f32.gmra.mrb[0].mxu0 %v2768
      %v2851 = vpop.f32.mrb[0].mxu0
      %v2852 = vadd.f32 0.0, %v2851
      %v2853 = vpop.f32.mrb[0].mxu0
      %2854 = vdwg.mxu0
      %v2855 = vld [vmem:[%s4] sm:$0xff]
      %v2856 = vld [vmem:[%s4 + $0x8] sm:$0xff]
      %v2857 = vld [vmem:[%s4 + $0x10] sm:$0xff]
      %v2858 = vld [vmem:[%s4 + $0x18] sm:$0xff]
      %2860 = vset.pattern.permute.xlu0 0
      %2861 = vperm.xlu0 %2860, %v2855
      %v2862 = vpop.permute.xlu0 %2861
      %2865 = vset.pattern.permute.xlu0 0
      %2866 = vperm.xlu0 %2865, %v2856
      %v2867 = vpop.permute.xlu0 %2866
      %2870 = vset.pattern.permute.xlu0 0
      %2871 = vperm.xlu0 %2870, %v2857
      %v2872 = vpop.permute.xlu0 %2871
      %2875 = vset.pattern.permute.xlu0 0
      %2876 = vperm.xlu0 %2875, %v2858
      %v2877 = vpop.permute.xlu0 %2876
      %v2879 = vmul.f32 %v2837, %v2862
      %v2880 = vmul.f32 %v2842, %v2867
      %v2881 = vmul.f32 %v2847, %v2872
      %v2882 = vmul.f32 %v2852, %v2877
      %v2883 = vld [vmem:[%s5] sm:$0xff]
      %v2884 = vld [vmem:[%s5 + $0x8] sm:$0xff]
      %v2885 = vld [vmem:[%s5 + $0x10] sm:$0xff]
      %v2886 = vld [vmem:[%s5 + $0x18] sm:$0xff]
      %2888 = vset.pattern.permute.xlu0 0
      %2889 = vperm.xlu0 %2888, %v2883
      %v2890 = vpop.permute.xlu0 %2889
      %2893 = vset.pattern.permute.xlu0 0
      %2894 = vperm.xlu0 %2893, %v2884
      %v2895 = vpop.permute.xlu0 %2894
      %2898 = vset.pattern.permute.xlu0 0
      %2899 = vperm.xlu0 %2898, %v2885
      %v2900 = vpop.permute.xlu0 %2899
      %2903 = vset.pattern.permute.xlu0 0
      %2904 = vperm.xlu0 %2903, %v2886
      %v2905 = vpop.permute.xlu0 %2904
      %v2907 = vadd.f32 %v2879, %v2890
      %v2908 = vadd.f32 %v2880, %v2895
      %v2909 = vadd.f32 %v2881, %v2900
      %v2910 = vadd.f32 %v2882, %v2905
      %v2911 = vld [vmem:[%s6] sm:$0xff]
      %v2912 = vld [vmem:[%s6 + $0x8] sm:$0xff]
      %v2913 = vld [vmem:[%s6 + $0x10] sm:$0xff]
      %v2914 = vld [vmem:[%s6 + $0x18] sm:$0x1]
      %v2916 = vsel %vm449, %v2907, 0
      %v2919 = vsel %vm449, %v2908, 0
      %v2922 = vsel %vm449, %v2909, 0
      %v2925 = vsel %vm449, %v2910, 0
      %v2928 = vsel %vm462, %v2914, 0
      %2930 = vmatprep.subr.mxu0 0.0
      %2931 = vmatpush1.msra.mxu0 %v2911
      %2932 = vmatprep.subr.mxu0 0.0
      %2933 = vmatpush1.msra.mxu0 %v2912
      %2934 = vmatprep.subr.mxu0 0.0
      %2935 = vmatpush1.msra.mxu0 %v2913
      %2936 = vmatprep.subr.mxu0 0.0
      %2937 = vmatpush1.msra.mxu0 %v2928
      %2938 = vmatprep.subr.mxu0 0.0
      %2939 = vmatpush1.msra.mxu0 0.0
      %2940 = vmatprep.subr.mxu0 0.0
      %2941 = vmatpush1.msra.mxu0 0.0
      %2942 = vmatprep.subr.mxu0 0.0
      %2943 = vmatpush1.msra.mxu0 0.0
      %2944 = vmatprep.subr.mxu0 0.0
      %2945 = vmatpush1.msra.mxu0 0.0
      %2946 = vmatprep.subr.mxu0 0.0
      %2947 = vmatpush1.msra.mxu0 0.0
      %2948 = vmatprep.subr.mxu0 0.0
      %2949 = vmatpush1.msra.mxu0 0.0
      %2950 = vmatprep.subr.mxu0 0.0
      %2951 = vmatpush1.msra.mxu0 0.0
      %2952 = vmatprep.subr.mxu0 0.0
      %2953 = vmatpush1.msra.mxu0 0.0
      %2954 = vmatprep.subr.mxu0 0.0
      %2955 = vmatpush1.msra.mxu0 0.0
      %2956 = vmatprep.subr.mxu0 0.0
      %2957 = vmatpush1.msra.mxu0 0.0
      %2958 = vmatprep.subr.mxu0 0.0
      %2959 = vmatpush1.msra.mxu0 0.0
      %2960 = vmatprep.subr.mxu0 0.0
      %2961 = vmatpush1.msra.mxu0 0.0
      %2962 = vmatprep.subr.mxu0 0.0
      %2963 = vmatpush1.msra.mxu0 0.0
      %2964 = vmatprep.subr.mxu0 0.0
      %2965 = vmatpush1.msra.mxu0 0.0
      %2966 = vmatprep.subr.mxu0 0.0
      %2967 = vmatpush1.msra.mxu0 0.0
      %2968 = vmatprep.subr.mxu0 0.0
      %2969 = vmatpush1.msra.mxu0 0.0
      %2970 = vmatprep.subr.mxu0 0.0
      %2971 = vmatpush1.msra.mxu0 0.0
      %2972 = vmatprep.subr.mxu0 0.0
      %2973 = vmatpush1.msra.mxu0 0.0
      %2974 = vmatprep.subr.mxu0 0.0
      %2975 = vmatpush1.msra.mxu0 0.0
      %2976 = vmatprep.subr.mxu0 0.0
      %2977 = vmatpush1.msra.mxu0 0.0
      %2978 = vmatprep.subr.mxu0 0.0
      %2979 = vmatpush1.msra.mxu0 0.0
      %2980 = vmatprep.subr.mxu0 0.0
      %2981 = vmatpush1.msra.mxu0 0.0
      %2982 = vmatprep.subr.mxu0 0.0
      %2983 = vmatpush1.msra.mxu0 0.0
      %2984 = vmatprep.subr.mxu0 0.0
      %2985 = vmatpush1.msra.mxu0 0.0
      %2986 = vmatprep.subr.mxu0 0.0
      %2987 = vmatpush1.msra.mxu0 0.0
      %2988 = vmatprep.subr.mxu0 0.0
      %2989 = vmatpush1.msra.mxu0 0.0
      %2990 = vmatprep.subr.mxu0 0.0
      %2991 = vmatpush1.msra.mxu0 0.0
      %2992 = vmatprep.subr.mxu0 0.0
      %2993 = vmatpush1.msra.mxu0 0.0
      %2994 = vmatprep.mubr.f32.mxu0 0.0
      %2995 = vmatmul.mubr.f32.gmra.mrb[0].mxu0 %v2916
      %v2996 = vpop.f32.mrb[0].mxu0
      %v2997 = vadd.f32 0.0, %v2996
      %v2998 = vpop.f32.mrb[0].mxu0
      %2999 = vmatprep.mubr.f32.mxu0 0.0
      %3000 = vmatmul.mubr.f32.gmra.mrb[0].mxu0 %v2919
      %v3001 = vpop.f32.mrb[0].mxu0
      %v3002 = vadd.f32 0.0, %v3001
      %v3003 = vpop.f32.mrb[0].mxu0
      %3004 = vmatprep.mubr.f32.mxu0 0.0
      %3005 = vmatmul.mubr.f32.gmra.mrb[0].mxu0 %v2922
      %v3006 = vpop.f32.mrb[0].mxu0
      %v3007 = vadd.f32 0.0, %v3006
      %v3008 = vpop.f32.mrb[0].mxu0
      %3009 = vmatprep.mubr.f32.mxu0 0.0
      %3010 = vmatmul.mubr.f32.gmra.mrb[0].mxu0 %v2925
      %v3011 = vpop.f32.mrb[0].mxu0
      %v3012 = vadd.f32 0.0, %v3011
      %v3013 = vpop.f32.mrb[0].mxu0
      %3014 = vdwg.mxu0
      %s3015 = scalar_lea.vmem %s6, 32
      %v3016 = vld [vmem:[%s3015] sm:$0xff]
      %v3017 = vld [vmem:[%s3015 + $0x8] sm:$0xff]
      %v3018 = vld [vmem:[%s3015 + $0x10] sm:$0xff]
      %v3019 = vld [vmem:[%s3015 + $0x18] sm:$0x1]
      %v3021 = vsel %vm462, %v3019, 0
      %3023 = vmatprep.subr.mxu0 0.0
      %3024 = vmatpush1.msra.mxu0 %v3016
      %3025 = vmatprep.subr.mxu0 0.0
      %3026 = vmatpush1.msra.mxu0 %v3017
      %3027 = vmatprep.subr.mxu0 0.0
      %3028 = vmatpush1.msra.mxu0 %v3018
      %3029 = vmatprep.subr.mxu0 0.0
      %3030 = vmatpush1.msra.mxu0 %v3021
      %3031 = vmatprep.subr.mxu0 0.0
      %3032 = vmatpush1.msra.mxu0 0.0
      %3033 = vmatprep.subr.mxu0 0.0
      %3034 = vmatpush1.msra.mxu0 0.0
      %3035 = vmatprep.subr.mxu0 0.0
      %3036 = vmatpush1.msra.mxu0 0.0
      %3037 = vmatprep.subr.mxu0 0.0
      %3038 = vmatpush1.msra.mxu0 0.0
      %3039 = vmatprep.subr.mxu0 0.0
      %3040 = vmatpush1.msra.mxu0 0.0
      %3041 = vmatprep.subr.mxu0 0.0
      %3042 = vmatpush1.msra.mxu0 0.0
      %3043 = vmatprep.subr.mxu0 0.0
      %3044 = vmatpush1.msra.mxu0 0.0
      %3045 = vmatprep.subr.mxu0 0.0
      %3046 = vmatpush1.msra.mxu0 0.0
      %3047 = vmatprep.subr.mxu0 0.0
      %3048 = vmatpush1.msra.mxu0 0.0
      %3049 = vmatprep.subr.mxu0 0.0
      %3050 = vmatpush1.msra.mxu0 0.0
      %3051 = vmatprep.subr.mxu0 0.0
      %3052 = vmatpush1.msra.mxu0 0.0
      %3053 = vmatprep.subr.mxu0 0.0
      %3054 = vmatpush1.msra.mxu0 0.0
      %3055 = vmatprep.subr.mxu0 0.0
      %3056 = vmatpush1.msra.mxu0 0.0
      %3057 = vmatprep.subr.mxu0 0.0
      %3058 = vmatpush1.msra.mxu0 0.0
      %3059 = vmatprep.subr.mxu0 0.0
      %3060 = vmatpush1.msra.mxu0 0.0
      %3061 = vmatprep.subr.mxu0 0.0
      %3062 = vmatpush1.msra.mxu0 0.0
      %3063 = vmatprep.subr.mxu0 0.0
      %3064 = vmatpush1.msra.mxu0 0.0
      %3065 = vmatprep.subr.mxu0 0.0
      %3066 = vmatpush1.msra.mxu0 0.0
      %3067 = vmatprep.subr.mxu0 0.0
      %3068 = vmatpush1.msra.mxu0 0.0
      %3069 = vmatprep.subr.mxu0 0.0
      %3070 = vmatpush1.msra.mxu0 0.0
      %3071 = vmatprep.subr.mxu0 0.0
      %3072 = vmatpush1.msra.mxu0 0.0
      %3073 = vmatprep.subr.mxu0 0.0
      %3074 = vmatpush1.msra.mxu0 0.0
      %3075 = vmatprep.subr.mxu0 0.0
      %3076 = vmatpush1.msra.mxu0 0.0
      %3077 = vmatprep.subr.mxu0 0.0
      %3078 = vmatpush1.msra.mxu0 0.0
      %3079 = vmatprep.subr.mxu0 0.0
      %3080 = vmatpush1.msra.mxu0 0.0
      %3081 = vmatprep.subr.mxu0 0.0
      %3082 = vmatpush1.msra.mxu0 0.0
      %3083 = vmatprep.subr.mxu0 0.0
      %3084 = vmatpush1.msra.mxu0 0.0
      %3085 = vmatprep.subr.mxu0 0.0
      %3086 = vmatpush1.msra.mxu0 0.0
      %3087 = vmatprep.mubr.f32.mxu0 0.0
      %3088 = vmatmul.mubr.f32.gmra.mrb[0].mxu0 %v2916
      %v3089 = vpop.f32.mrb[0].mxu0
      %v3090 = vadd.f32 0.0, %v3089
      %v3091 = vpop.f32.mrb[0].mxu0
      %3092 = vmatprep.mubr.f32.mxu0 0.0
      %3093 = vmatmul.mubr.f32.gmra.mrb[0].mxu0 %v2919
      %v3094 = vpop.f32.mrb[0].mxu0
      %v3095 = vadd.f32 0.0, %v3094
      %v3096 = vpop.f32.mrb[0].mxu0
      %3097 = vmatprep.mubr.f32.mxu0 0.0
      %3098 = vmatmul.mubr.f32.gmra.mrb[0].mxu0 %v2922
      %v3099 = vpop.f32.mrb[0].mxu0
      %v3100 = vadd.f32 0.0, %v3099
      %v3101 = vpop.f32.mrb[0].mxu0
      %3102 = vmatprep.mubr.f32.mxu0 0.0
      %3103 = vmatmul.mubr.f32.gmra.mrb[0].mxu0 %v2925
      %v3104 = vpop.f32.mrb[0].mxu0
      %v3105 = vadd.f32 0.0, %v3104
      %v3106 = vpop.f32.mrb[0].mxu0
      %3107 = vdwg.mxu0
      %v3108 = vmax.f32 %v2997, %v3090
      %v3109 = vmax.f32 %v3002, %v3095
      %v3110 = vmax.f32 %v3007, %v3100
      %v3111 = vmax.f32 %v3012, %v3105
      %v3112 = vmax.f32 %v3108, 0.0
      %v3113 = vmax.f32 %v3109, 0.0
      %v3114 = vmax.f32 %v3110, 0.0
      %v3115 = vmax.f32 %v3111, 0.0
      %s3116 = scalar_lea.vmem %s435, 32
      %v3117 = vld [vmem:[%s3116] sm:$0xff]
      %v3118 = vld [vmem:[%s3116 + $0x8] sm:$0xff]
      %v3119 = vld [vmem:[%s3116 + $0x10] sm:$0xff]
      %v3120 = vld [vmem:[%s3116 + $0x18] sm:$0x1]
      %v3122 = vsel %vm449, %v3117, 0
      %v3125 = vsel %vm449, %v3118, 0
      %v3128 = vsel %vm449, %v3119, 0
      %v3131 = vsel %vm449, %v3120, 0
      %3133 = vmatprep.subr.mxu0 0.0
      %3134 = vmatpush1.msra.mxu0 %v445
      %3135 = vmatprep.subr.mxu0 0.0
      %3136 = vmatpush1.msra.mxu0 %v446
      %3137 = vmatprep.subr.mxu0 0.0
      %3138 = vmatpush1.msra.mxu0 %v447
      %3139 = vmatprep.subr.mxu0 0.0
      %3140 = vmatpush1.msra.mxu0 %v464
      %3141 = vmatprep.subr.mxu0 0.0
      %3142 = vmatpush1.msra.mxu0 0.0
      %3143 = vmatprep.subr.mxu0 0.0
      %3144 = vmatpush1.msra.mxu0 0.0
      %3145 = vmatprep.subr.mxu0 0.0
      %3146 = vmatpush1.msra.mxu0 0.0
      %3147 = vmatprep.subr.mxu0 0.0
      %3148 = vmatpush1.msra.mxu0 0.0
      %3149 = vmatprep.subr.mxu0 0.0
      %3150 = vmatpush1.msra.mxu0 0.0
      %3151 = vmatprep.subr.mxu0 0.0
      %3152 = vmatpush1.msra.mxu0 0.0
      %3153 = vmatprep.subr.mxu0 0.0
      %3154 = vmatpush1.msra.mxu0 0.0
      %3155 = vmatprep.subr.mxu0 0.0
      %3156 = vmatpush1.msra.mxu0 0.0
      %3157 = vmatprep.subr.mxu0 0.0
      %3158 = vmatpush1.msra.mxu0 0.0
      %3159 = vmatprep.subr.mxu0 0.0
      %3160 = vmatpush1.msra.mxu0 0.0
      %3161 = vmatprep.subr.mxu0 0.0
      %3162 = vmatpush1.msra.mxu0 0.0
      %3163 = vmatprep.subr.mxu0 0.0
      %3164 = vmatpush1.msra.mxu0 0.0
      %3165 = vmatprep.subr.mxu0 0.0
      %3166 = vmatpush1.msra.mxu0 0.0
      %3167 = vmatprep.subr.mxu0 0.0
      %3168 = vmatpush1.msra.mxu0 0.0
      %3169 = vmatprep.subr.mxu0 0.0
      %3170 = vmatpush1.msra.mxu0 0.0
      %3171 = vmatprep.subr.mxu0 0.0
      %3172 = vmatpush1.msra.mxu0 0.0
      %3173 = vmatprep.subr.mxu0 0.0
      %3174 = vmatpush1.msra.mxu0 0.0
      %3175 = vmatprep.subr.mxu0 0.0
      %3176 = vmatpush1.msra.mxu0 0.0
      %3177 = vmatprep.subr.mxu0 0.0
      %3178 = vmatpush1.msra.mxu0 0.0
      %3179 = vmatprep.subr.mxu0 0.0
      %3180 = vmatpush1.msra.mxu0 0.0
      %3181 = vmatprep.subr.mxu0 0.0
      %3182 = vmatpush1.msra.mxu0 0.0
      %3183 = vmatprep.subr.mxu0 0.0
      %3184 = vmatpush1.msra.mxu0 0.0
      %3185 = vmatprep.subr.mxu0 0.0
      %3186 = vmatpush1.msra.mxu0 0.0
      %3187 = vmatprep.subr.mxu0 0.0
      %3188 = vmatpush1.msra.mxu0 0.0
      %3189 = vmatprep.subr.mxu0 0.0
      %3190 = vmatpush1.msra.mxu0 0.0
      %3191 = vmatprep.subr.mxu0 0.0
      %3192 = vmatpush1.msra.mxu0 0.0
      %3193 = vmatprep.subr.mxu0 0.0
      %3194 = vmatpush1.msra.mxu0 0.0
      %3195 = vmatprep.subr.mxu0 0.0
      %3196 = vmatpush1.msra.mxu0 0.0
      %3197 = vmatprep.mubr.f32.mxu0 0.0
      %3198 = vmatmul.mubr.f32.gmra.mrb[0].mxu0 %v3122
      %v3199 = vpop.f32.mrb[0].mxu0
      %v3200 = vadd.f32 0.0, %v3199
      %v3201 = vpop.f32.mrb[0].mxu0
      %3202 = vmatprep.mubr.f32.mxu0 0.0
      %3203 = vmatmul.mubr.f32.gmra.mrb[0].mxu0 %v3125
      %v3204 = vpop.f32.mrb[0].mxu0
      %v3205 = vadd.f32 0.0, %v3204
      %v3206 = vpop.f32.mrb[0].mxu0
      %3207 = vmatprep.mubr.f32.mxu0 0.0
      %3208 = vmatmul.mubr.f32.gmra.mrb[0].mxu0 %v3128
      %v3209 = vpop.f32.mrb[0].mxu0
      %v3210 = vadd.f32 0.0, %v3209
      %v3211 = vpop.f32.mrb[0].mxu0
      %3212 = vmatprep.mubr.f32.mxu0 0.0
      %3213 = vmatmul.mubr.f32.gmra.mrb[0].mxu0 %v3131
      %v3214 = vpop.f32.mrb[0].mxu0
      %v3215 = vadd.f32 0.0, %v3214
      %v3216 = vpop.f32.mrb[0].mxu0
      %3217 = vdwg.mxu0
      %3218 = vmatprep.subr.mxu0 0.0
      %3219 = vmatpush1.msra.mxu0 %v556
      %3220 = vmatprep.subr.mxu0 0.0
      %3221 = vmatpush1.msra.mxu0 %v557
      %3222 = vmatprep.subr.mxu0 0.0
      %3223 = vmatpush1.msra.mxu0 %v558
      %3224 = vmatprep.subr.mxu0 0.0
      %3225 = vmatpush1.msra.mxu0 %v561
      %3226 = vmatprep.subr.mxu0 0.0
      %3227 = vmatpush1.msra.mxu0 0.0
      %3228 = vmatprep.subr.mxu0 0.0
      %3229 = vmatpush1.msra.mxu0 0.0
      %3230 = vmatprep.subr.mxu0 0.0
      %3231 = vmatpush1.msra.mxu0 0.0
      %3232 = vmatprep.subr.mxu0 0.0
      %3233 = vmatpush1.msra.mxu0 0.0
      %3234 = vmatprep.subr.mxu0 0.0
      %3235 = vmatpush1.msra.mxu0 0.0
      %3236 = vmatprep.subr.mxu0 0.0
      %3237 = vmatpush1.msra.mxu0 0.0
      %3238 = vmatprep.subr.mxu0 0.0
      %3239 = vmatpush1.msra.mxu0 0.0
      %3240 = vmatprep.subr.mxu0 0.0
      %3241 = vmatpush1.msra.mxu0 0.0
      %3242 = vmatprep.subr.mxu0 0.0
      %3243 = vmatpush1.msra.mxu0 0.0
      %3244 = vmatprep.subr.mxu0 0.0
      %3245 = vmatpush1.msra.mxu0 0.0
      %3246 = vmatprep.subr.mxu0 0.0
      %3247 = vmatpush1.msra.mxu0 0.0
      %3248 = vmatprep.subr.mxu0 0.0
      %3249 = vmatpush1.msra.mxu0 0.0
      %3250 = vmatprep.subr.mxu0 0.0
      %3251 = vmatpush1.msra.mxu0 0.0
      %3252 = vmatprep.subr.mxu0 0.0
      %3253 = vmatpush1.msra.mxu0 0.0
      %3254 = vmatprep.subr.mxu0 0.0
      %3255 = vmatpush1.msra.mxu0 0.0
      %3256 = vmatprep.subr.mxu0 0.0
      %3257 = vmatpush1.msra.mxu0 0.0
      %3258 = vmatprep.subr.mxu0 0.0
      %3259 = vmatpush1.msra.mxu0 0.0
      %3260 = vmatprep.subr.mxu0 0.0
      %3261 = vmatpush1.msra.mxu0 0.0
      %3262 = vmatprep.subr.mxu0 0.0
      %3263 = vmatpush1.msra.mxu0 0.0
      %3264 = vmatprep.subr.mxu0 0.0
      %3265 = vmatpush1.msra.mxu0 0.0
      %3266 = vmatprep.subr.mxu0 0.0
      %3267 = vmatpush1.msra.mxu0 0.0
      %3268 = vmatprep.subr.mxu0 0.0
      %3269 = vmatpush1.msra.mxu0 0.0
      %3270 = vmatprep.subr.mxu0 0.0
      %3271 = vmatpush1.msra.mxu0 0.0
      %3272 = vmatprep.subr.mxu0 0.0
      %3273 = vmatpush1.msra.mxu0 0.0
      %3274 = vmatprep.subr.mxu0 0.0
      %3275 = vmatpush1.msra.mxu0 0.0
      %3276 = vmatprep.subr.mxu0 0.0
      %3277 = vmatpush1.msra.mxu0 0.0
      %3278 = vmatprep.subr.mxu0 0.0
      %3279 = vmatpush1.msra.mxu0 0.0
      %3280 = vmatprep.subr.mxu0 0.0
      %3281 = vmatpush1.msra.mxu0 0.0
      %3282 = vmatprep.mubr.f32.mxu0 0.0
      %3283 = vmatmul.mubr.f32.gmra.mrb[0].mxu0 %v3122
      %v3284 = vpop.f32.mrb[0].mxu0
      %v3285 = vadd.f32 0.0, %v3284
      %v3286 = vpop.f32.mrb[0].mxu0
      %3287 = vmatprep.mubr.f32.mxu0 0.0
      %3288 = vmatmul.mubr.f32.gmra.mrb[0].mxu0 %v3125
      %v3289 = vpop.f32.mrb[0].mxu0
      %v3290 = vadd.f32 0.0, %v3289
      %v3291 = vpop.f32.mrb[0].mxu0
      %3292 = vmatprep.mubr.f32.mxu0 0.0
      %3293 = vmatmul.mubr.f32.gmra.mrb[0].mxu0 %v3128
      %v3294 = vpop.f32.mrb[0].mxu0
      %v3295 = vadd.f32 0.0, %v3294
      %v3296 = vpop.f32.mrb[0].mxu0
      %3297 = vmatprep.mubr.f32.mxu0 0.0
      %3298 = vmatmul.mubr.f32.gmra.mrb[0].mxu0 %v3131
      %v3299 = vpop.f32.mrb[0].mxu0
      %v3300 = vadd.f32 0.0, %v3299
      %v3301 = vpop.f32.mrb[0].mxu0
      %3302 = vdwg.mxu0
      %v3304 = vsel %vm462, %v3300, 0
      %3306 = vmatprep.subr.mxu0 0.0
      %3307 = vmatpush1.msra.mxu0 %v3285
      %3308 = vmatprep.subr.mxu0 0.0
      %3309 = vmatpush1.msra.mxu0 %v3290
      %3310 = vmatprep.subr.mxu0 0.0
      %3311 = vmatpush1.msra.mxu0 %v3295
      %3312 = vmatprep.subr.mxu0 0.0
      %3313 = vmatpush1.msra.mxu0 %v3304
      %3314 = vmatprep.subr.mxu0 0.0
      %3315 = vmatpush1.msra.mxu0 0.0
      %3316 = vmatprep.subr.mxu0 0.0
      %3317 = vmatpush1.msra.mxu0 0.0
      %3318 = vmatprep.subr.mxu0 0.0
      %3319 = vmatpush1.msra.mxu0 0.0
      %3320 = vmatprep.subr.mxu0 0.0
      %3321 = vmatpush1.msra.mxu0 0.0
      %3322 = vmatprep.subr.mxu0 0.0
      %3323 = vmatpush1.msra.mxu0 0.0
      %3324 = vmatprep.subr.mxu0 0.0
      %3325 = vmatpush1.msra.mxu0 0.0
      %3326 = vmatprep.subr.mxu0 0.0
      %3327 = vmatpush1.msra.mxu0 0.0
      %3328 = vmatprep.subr.mxu0 0.0
      %3329 = vmatpush1.msra.mxu0 0.0
      %3330 = vmatprep.subr.mxu0 0.0
      %3331 = vmatpush1.msra.mxu0 0.0
      %3332 = vmatprep.subr.mxu0 0.0
      %3333 = vmatpush1.msra.mxu0 0.0
      %3334 = vmatprep.subr.mxu0 0.0
      %3335 = vmatpush1.msra.mxu0 0.0
      %3336 = vmatprep.subr.mxu0 0.0
      %3337 = vmatpush1.msra.mxu0 0.0
      %3338 = vmatprep.subr.mxu0 0.0
      %3339 = vmatpush1.msra.mxu0 0.0
      %3340 = vmatprep.subr.mxu0 0.0
      %3341 = vmatpush1.msra.mxu0 0.0
      %3342 = vmatprep.subr.mxu0 0.0
      %3343 = vmatpush1.msra.mxu0 0.0
      %3344 = vmatprep.subr.mxu0 0.0
      %3345 = vmatpush1.msra.mxu0 0.0
      %3346 = vmatprep.subr.mxu0 0.0
      %3347 = vmatpush1.msra.mxu0 0.0
      %3348 = vmatprep.subr.mxu0 0.0
      %3349 = vmatpush1.msra.mxu0 0.0
      %3350 = vmatprep.subr.mxu0 0.0
      %3351 = vmatpush1.msra.mxu0 0.0
      %3352 = vmatprep.subr.mxu0 0.0
      %3353 = vmatpush1.msra.mxu0 0.0
      %3354 = vmatprep.subr.mxu0 0.0
      %3355 = vmatpush1.msra.mxu0 0.0
      %3356 = vmatprep.subr.mxu0 0.0
      %3357 = vmatpush1.msra.mxu0 0.0
      %3358 = vmatprep.subr.mxu0 0.0
      %3359 = vmatpush1.msra.mxu0 0.0
      %3360 = vmatprep.subr.mxu0 0.0
      %3361 = vmatpush1.msra.mxu0 0.0
      %3362 = vmatprep.subr.mxu0 0.0
      %3363 = vmatpush1.msra.mxu0 0.0
      %3364 = vmatprep.subr.mxu0 0.0
      %3365 = vmatpush1.msra.mxu0 0.0
      %3366 = vmatprep.subr.mxu0 0.0
      %3367 = vmatpush1.msra.mxu0 0.0
      %3368 = vmatprep.subr.mxu0 0.0
      %3369 = vmatpush1.msra.mxu0 0.0
      %3370 = vmatprep.mubr.f32.mxu0 0.0
      %3371 = vmatmul.mubr.f32.gmra.mrb[0].mxu0 %v654
      %v3372 = vpop.f32.mrb[0].mxu0
      %v3373 = vadd.f32 0.0, %v3372
      %v3374 = vpop.f32.mrb[0].mxu0
      %3375 = vmatprep.mubr.f32.mxu0 0.0
      %3376 = vmatmul.mubr.f32.gmra.mrb[0].mxu0 %v657
      %v3377 = vpop.f32.mrb[0].mxu0
      %v3378 = vadd.f32 0.0, %v3377
      %v3379 = vpop.f32.mrb[0].mxu0
      %3380 = vmatprep.mubr.f32.mxu0 0.0
      %3381 = vmatmul.mubr.f32.gmra.mrb[0].mxu0 %v660
      %v3382 = vpop.f32.mrb[0].mxu0
      %v3383 = vadd.f32 0.0, %v3382
      %v3384 = vpop.f32.mrb[0].mxu0
      %3385 = vmatprep.mubr.f32.mxu0 0.0
      %3386 = vmatmul.mubr.f32.gmra.mrb[0].mxu0 %v663
      %v3387 = vpop.f32.mrb[0].mxu0
      %v3388 = vadd.f32 0.0, %v3387
      %v3389 = vpop.f32.mrb[0].mxu0
      %3390 = vdwg.mxu0
      %v3392 = vsel %vm462, %v3215, 0
      %3394 = vmatprep.subr.mxu0 0.0
      %3395 = vmatpush1.msra.mxu0 %v3200
      %3396 = vmatprep.subr.mxu0 0.0
      %3397 = vmatpush1.msra.mxu0 %v3205
      %3398 = vmatprep.subr.mxu0 0.0
      %3399 = vmatpush1.msra.mxu0 %v3210
      %3400 = vmatprep.subr.mxu0 0.0
      %3401 = vmatpush1.msra.mxu0 %v3392
      %3402 = vmatprep.subr.mxu0 0.0
      %3403 = vmatpush1.msra.mxu0 0.0
      %3404 = vmatprep.subr.mxu0 0.0
      %3405 = vmatpush1.msra.mxu0 0.0
      %3406 = vmatprep.subr.mxu0 0.0
      %3407 = vmatpush1.msra.mxu0 0.0
      %3408 = vmatprep.subr.mxu0 0.0
      %3409 = vmatpush1.msra.mxu0 0.0
      %3410 = vmatprep.subr.mxu0 0.0
      %3411 = vmatpush1.msra.mxu0 0.0
      %3412 = vmatprep.subr.mxu0 0.0
      %3413 = vmatpush1.msra.mxu0 0.0
      %3414 = vmatprep.subr.mxu0 0.0
      %3415 = vmatpush1.msra.mxu0 0.0
      %3416 = vmatprep.subr.mxu0 0.0
      %3417 = vmatpush1.msra.mxu0 0.0
      %3418 = vmatprep.subr.mxu0 0.0
      %3419 = vmatpush1.msra.mxu0 0.0
      %3420 = vmatprep.subr.mxu0 0.0
      %3421 = vmatpush1.msra.mxu0 0.0
      %3422 = vmatprep.subr.mxu0 0.0
      %3423 = vmatpush1.msra.mxu0 0.0
      %3424 = vmatprep.subr.mxu0 0.0
      %3425 = vmatpush1.msra.mxu0 0.0
      %3426 = vmatprep.subr.mxu0 0.0
      %3427 = vmatpush1.msra.mxu0 0.0
      %3428 = vmatprep.subr.mxu0 0.0
      %3429 = vmatpush1.msra.mxu0 0.0
      %3430 = vmatprep.subr.mxu0 0.0
      %3431 = vmatpush1.msra.mxu0 0.0
      %3432 = vmatprep.subr.mxu0 0.0
      %3433 = vmatpush1.msra.mxu0 0.0
      %3434 = vmatprep.subr.mxu0 0.0
      %3435 = vmatpush1.msra.mxu0 0.0
      %3436 = vmatprep.subr.mxu0 0.0
      %3437 = vmatpush1.msra.mxu0 0.0
      %3438 = vmatprep.subr.mxu0 0.0
      %3439 = vmatpush1.msra.mxu0 0.0
      %3440 = vmatprep.subr.mxu0 0.0
      %3441 = vmatpush1.msra.mxu0 0.0
      %3442 = vmatprep.subr.mxu0 0.0
      %3443 = vmatpush1.msra.mxu0 0.0
      %3444 = vmatprep.subr.mxu0 0.0
      %3445 = vmatpush1.msra.mxu0 0.0
      %3446 = vmatprep.subr.mxu0 0.0
      %3447 = vmatpush1.msra.mxu0 0.0
      %3448 = vmatprep.subr.mxu0 0.0
      %3449 = vmatpush1.msra.mxu0 0.0
      %3450 = vmatprep.subr.mxu0 0.0
      %3451 = vmatpush1.msra.mxu0 0.0
      %3452 = vmatprep.subr.mxu0 0.0
      %3453 = vmatpush1.msra.mxu0 0.0
      %3454 = vmatprep.subr.mxu0 0.0
      %3455 = vmatpush1.msra.mxu0 0.0
      %3456 = vmatprep.subr.mxu0 0.0
      %3457 = vmatpush1.msra.mxu0 0.0
      %3458 = vmatprep.mubr.f32.mxu0 0.0
      %3459 = vmatmul.mubr.f32.gmra.mrb[0].mxu0 %v754
      %v3460 = vpop.f32.mrb[0].mxu0
      %v3461 = vadd.f32 %v3373, %v3460
      %v3462 = vpop.f32.mrb[0].mxu0
      %3463 = vmatprep.mubr.f32.mxu0 0.0
      %3464 = vmatmul.mubr.f32.gmra.mrb[0].mxu0 %v757
      %v3465 = vpop.f32.mrb[0].mxu0
      %v3466 = vadd.f32 %v3378, %v3465
      %v3467 = vpop.f32.mrb[0].mxu0
      %3468 = vmatprep.mubr.f32.mxu0 0.0
      %3469 = vmatmul.mubr.f32.gmra.mrb[0].mxu0 %v760
      %v3470 = vpop.f32.mrb[0].mxu0
      %v3471 = vadd.f32 %v3383, %v3470
      %v3472 = vpop.f32.mrb[0].mxu0
      %3473 = vmatprep.mubr.f32.mxu0 0.0
      %3474 = vmatmul.mubr.f32.gmra.mrb[0].mxu0 %v763
      %v3475 = vpop.f32.mrb[0].mxu0
      %v3476 = vadd.f32 %v3388, %v3475
      %v3477 = vpop.f32.mrb[0].mxu0
      %3478 = vdwg.mxu0
      %3479 = vmatprep.subr.mxu0 0.0
      %3480 = vmatpush1.msra.mxu0 %v854
      %3481 = vmatprep.subr.mxu0 0.0
      %3482 = vmatpush1.msra.mxu0 %v855
      %3483 = vmatprep.subr.mxu0 0.0
      %3484 = vmatpush1.msra.mxu0 %v856
      %3485 = vmatprep.subr.mxu0 0.0
      %3486 = vmatpush1.msra.mxu0 %v859
      %3487 = vmatprep.subr.mxu0 0.0
      %3488 = vmatpush1.msra.mxu0 0.0
      %3489 = vmatprep.subr.mxu0 0.0
      %3490 = vmatpush1.msra.mxu0 0.0
      %3491 = vmatprep.subr.mxu0 0.0
      %3492 = vmatpush1.msra.mxu0 0.0
      %3493 = vmatprep.subr.mxu0 0.0
      %3494 = vmatpush1.msra.mxu0 0.0
      %3495 = vmatprep.subr.mxu0 0.0
      %3496 = vmatpush1.msra.mxu0 0.0
      %3497 = vmatprep.subr.mxu0 0.0
      %3498 = vmatpush1.msra.mxu0 0.0
      %3499 = vmatprep.subr.mxu0 0.0
      %3500 = vmatpush1.msra.mxu0 0.0
      %3501 = vmatprep.subr.mxu0 0.0
      %3502 = vmatpush1.msra.mxu0 0.0
      %3503 = vmatprep.subr.mxu0 0.0
      %3504 = vmatpush1.msra.mxu0 0.0
      %3505 = vmatprep.subr.mxu0 0.0
      %3506 = vmatpush1.msra.mxu0 0.0
      %3507 = vmatprep.subr.mxu0 0.0
      %3508 = vmatpush1.msra.mxu0 0.0
      %3509 = vmatprep.subr.mxu0 0.0
      %3510 = vmatpush1.msra.mxu0 0.0
      %3511 = vmatprep.subr.mxu0 0.0
      %3512 = vmatpush1.msra.mxu0 0.0
      %3513 = vmatprep.subr.mxu0 0.0
      %3514 = vmatpush1.msra.mxu0 0.0
      %3515 = vmatprep.subr.mxu0 0.0
      %3516 = vmatpush1.msra.mxu0 0.0
      %3517 = vmatprep.subr.mxu0 0.0
      %3518 = vmatpush1.msra.mxu0 0.0
      %3519 = vmatprep.subr.mxu0 0.0
      %3520 = vmatpush1.msra.mxu0 0.0
      %3521 = vmatprep.subr.mxu0 0.0
      %3522 = vmatpush1.msra.mxu0 0.0
      %3523 = vmatprep.subr.mxu0 0.0
      %3524 = vmatpush1.msra.mxu0 0.0
      %3525 = vmatprep.subr.mxu0 0.0
      %3526 = vmatpush1.msra.mxu0 0.0
      %3527 = vmatprep.subr.mxu0 0.0
      %3528 = vmatpush1.msra.mxu0 0.0
      %3529 = vmatprep.subr.mxu0 0.0
      %3530 = vmatpush1.msra.mxu0 0.0
      %3531 = vmatprep.subr.mxu0 0.0
      %3532 = vmatpush1.msra.mxu0 0.0
      %3533 = vmatprep.subr.mxu0 0.0
      %3534 = vmatpush1.msra.mxu0 0.0
      %3535 = vmatprep.subr.mxu0 0.0
      %3536 = vmatpush1.msra.mxu0 0.0
      %3537 = vmatprep.subr.mxu0 0.0
      %3538 = vmatpush1.msra.mxu0 0.0
      %3539 = vmatprep.subr.mxu0 0.0
      %3540 = vmatpush1.msra.mxu0 0.0
      %3541 = vmatprep.subr.mxu0 0.0
      %3542 = vmatpush1.msra.mxu0 0.0
      %3543 = vmatprep.mubr.f32.mxu0 0.0
      %3544 = vmatmul.mubr.f32.gmra.mrb[0].mxu0 %v3122
      %v3545 = vpop.f32.mrb[0].mxu0
      %v3546 = vadd.f32 0.0, %v3545
      %v3547 = vpop.f32.mrb[0].mxu0
      %3548 = vmatprep.mubr.f32.mxu0 0.0
      %3549 = vmatmul.mubr.f32.gmra.mrb[0].mxu0 %v3125
      %v3550 = vpop.f32.mrb[0].mxu0
      %v3551 = vadd.f32 0.0, %v3550
      %v3552 = vpop.f32.mrb[0].mxu0
      %3553 = vmatprep.mubr.f32.mxu0 0.0
      %3554 = vmatmul.mubr.f32.gmra.mrb[0].mxu0 %v3128
      %v3555 = vpop.f32.mrb[0].mxu0
      %v3556 = vadd.f32 0.0, %v3555
      %v3557 = vpop.f32.mrb[0].mxu0
      %3558 = vmatprep.mubr.f32.mxu0 0.0
      %3559 = vmatmul.mubr.f32.gmra.mrb[0].mxu0 %v3131
      %v3560 = vpop.f32.mrb[0].mxu0
      %v3561 = vadd.f32 0.0, %v3560
      %v3562 = vpop.f32.mrb[0].mxu0
      %3563 = vdwg.mxu0
      %v3565 = vsel %vm462, %v3561, 0
      %3567 = vmatprep.subr.mxu0 0.0
      %3568 = vmatpush1.msra.mxu0 %v3546
      %3569 = vmatprep.subr.mxu0 0.0
      %3570 = vmatpush1.msra.mxu0 %v3551
      %3571 = vmatprep.subr.mxu0 0.0
      %3572 = vmatpush1.msra.mxu0 %v3556
      %3573 = vmatprep.subr.mxu0 0.0
      %3574 = vmatpush1.msra.mxu0 %v3565
      %3575 = vmatprep.subr.mxu0 0.0
      %3576 = vmatpush1.msra.mxu0 0.0
      %3577 = vmatprep.subr.mxu0 0.0
      %3578 = vmatpush1.msra.mxu0 0.0
      %3579 = vmatprep.subr.mxu0 0.0
      %3580 = vmatpush1.msra.mxu0 0.0
      %3581 = vmatprep.subr.mxu0 0.0
      %3582 = vmatpush1.msra.mxu0 0.0
      %3583 = vmatprep.subr.mxu0 0.0
      %3584 = vmatpush1.msra.mxu0 0.0
      %3585 = vmatprep.subr.mxu0 0.0
      %3586 = vmatpush1.msra.mxu0 0.0
      %3587 = vmatprep.subr.mxu0 0.0
      %3588 = vmatpush1.msra.mxu0 0.0
      %3589 = vmatprep.subr.mxu0 0.0
      %3590 = vmatpush1.msra.mxu0 0.0
      %3591 = vmatprep.subr.mxu0 0.0
      %3592 = vmatpush1.msra.mxu0 0.0
      %3593 = vmatprep.subr.mxu0 0.0
      %3594 = vmatpush1.msra.mxu0 0.0
      %3595 = vmatprep.subr.mxu0 0.0
      %3596 = vmatpush1.msra.mxu0 0.0
      %3597 = vmatprep.subr.mxu0 0.0
      %3598 = vmatpush1.msra.mxu0 0.0
      %3599 = vmatprep.subr.mxu0 0.0
      %3600 = vmatpush1.msra.mxu0 0.0
      %3601 = vmatprep.subr.mxu0 0.0
      %3602 = vmatpush1.msra.mxu0 0.0
      %3603 = vmatprep.subr.mxu0 0.0
      %3604 = vmatpush1.msra.mxu0 0.0
      %3605 = vmatprep.subr.mxu0 0.0
      %3606 = vmatpush1.msra.mxu0 0.0
      %3607 = vmatprep.subr.mxu0 0.0
      %3608 = vmatpush1.msra.mxu0 0.0
      %3609 = vmatprep.subr.mxu0 0.0
      %3610 = vmatpush1.msra.mxu0 0.0
      %3611 = vmatprep.subr.mxu0 0.0
      %3612 = vmatpush1.msra.mxu0 0.0
      %3613 = vmatprep.subr.mxu0 0.0
      %3614 = vmatpush1.msra.mxu0 0.0
      %3615 = vmatprep.subr.mxu0 0.0
      %3616 = vmatpush1.msra.mxu0 0.0
      %3617 = vmatprep.subr.mxu0 0.0
      %3618 = vmatpush1.msra.mxu0 0.0
      %3619 = vmatprep.subr.mxu0 0.0
      %3620 = vmatpush1.msra.mxu0 0.0
      %3621 = vmatprep.subr.mxu0 0.0
      %3622 = vmatpush1.msra.mxu0 0.0
      %3623 = vmatprep.subr.mxu0 0.0
      %3624 = vmatpush1.msra.mxu0 0.0
      %3625 = vmatprep.subr.mxu0 0.0
      %3626 = vmatpush1.msra.mxu0 0.0
      %3627 = vmatprep.subr.mxu0 0.0
      %3628 = vmatpush1.msra.mxu0 0.0
      %3629 = vmatprep.subr.mxu0 0.0
      %3630 = vmatpush1.msra.mxu0 0.0
      %3631 = vmatprep.mubr.f32.mxu0 0.0
      %3632 = vmatmul.mubr.f32.gmra.mrb[0].mxu0 %v952
      %v3633 = vpop.f32.mrb[0].mxu0
      %v3634 = vadd.f32 0.0, %v3633
      %v3635 = vpop.f32.mrb[0].mxu0
      %3636 = vmatprep.mubr.f32.mxu0 0.0
      %3637 = vmatmul.mubr.f32.gmra.mrb[0].mxu0 %v955
      %v3638 = vpop.f32.mrb[0].mxu0
      %v3639 = vadd.f32 0.0, %v3638
      %v3640 = vpop.f32.mrb[0].mxu0
      %3641 = vmatprep.mubr.f32.mxu0 0.0
      %3642 = vmatmul.mubr.f32.gmra.mrb[0].mxu0 %v958
      %v3643 = vpop.f32.mrb[0].mxu0
      %v3644 = vadd.f32 0.0, %v3643
      %v3645 = vpop.f32.mrb[0].mxu0
      %3646 = vmatprep.mubr.f32.mxu0 0.0
      %3647 = vmatmul.mubr.f32.gmra.mrb[0].mxu0 %v961
      %v3648 = vpop.f32.mrb[0].mxu0
      %v3649 = vadd.f32 0.0, %v3648
      %v3650 = vpop.f32.mrb[0].mxu0
      %3651 = vdwg.mxu0
      %v3652 = vadd.f32 %v3461, %v3634
      %v3653 = vadd.f32 %v3466, %v3639
      %v3654 = vadd.f32 %v3471, %v3644
      %v3655 = vadd.f32 %v3476, %v3649
      %3656 = vmatprep.subr.mxu0 0.0
      %3657 = vmatpush1.msra.mxu0 %v1056
      %3658 = vmatprep.subr.mxu0 0.0
      %3659 = vmatpush1.msra.mxu0 %v1057
      %3660 = vmatprep.subr.mxu0 0.0
      %3661 = vmatpush1.msra.mxu0 %v1058
      %3662 = vmatprep.subr.mxu0 0.0
      %3663 = vmatpush1.msra.mxu0 %v1061
      %3664 = vmatprep.subr.mxu0 0.0
      %3665 = vmatpush1.msra.mxu0 0.0
      %3666 = vmatprep.subr.mxu0 0.0
      %3667 = vmatpush1.msra.mxu0 0.0
      %3668 = vmatprep.subr.mxu0 0.0
      %3669 = vmatpush1.msra.mxu0 0.0
      %3670 = vmatprep.subr.mxu0 0.0
      %3671 = vmatpush1.msra.mxu0 0.0
      %3672 = vmatprep.subr.mxu0 0.0
      %3673 = vmatpush1.msra.mxu0 0.0
      %3674 = vmatprep.subr.mxu0 0.0
      %3675 = vmatpush1.msra.mxu0 0.0
      %3676 = vmatprep.subr.mxu0 0.0
      %3677 = vmatpush1.msra.mxu0 0.0
      %3678 = vmatprep.subr.mxu0 0.0
      %3679 = vmatpush1.msra.mxu0 0.0
      %3680 = vmatprep.subr.mxu0 0.0
      %3681 = vmatpush1.msra.mxu0 0.0
      %3682 = vmatprep.subr.mxu0 0.0
      %3683 = vmatpush1.msra.mxu0 0.0
      %3684 = vmatprep.subr.mxu0 0.0
      %3685 = vmatpush1.msra.mxu0 0.0
      %3686 = vmatprep.subr.mxu0 0.0
      %3687 = vmatpush1.msra.mxu0 0.0
      %3688 = vmatprep.subr.mxu0 0.0
      %3689 = vmatpush1.msra.mxu0 0.0
      %3690 = vmatprep.subr.mxu0 0.0
      %3691 = vmatpush1.msra.mxu0 0.0
      %3692 = vmatprep.subr.mxu0 0.0
      %3693 = vmatpush1.msra.mxu0 0.0
      %3694 = vmatprep.subr.mxu0 0.0
      %3695 = vmatpush1.msra.mxu0 0.0
      %3696 = vmatprep.subr.mxu0 0.0
      %3697 = vmatpush1.msra.mxu0 0.0
      %3698 = vmatprep.subr.mxu0 0.0
      %3699 = vmatpush1.msra.mxu0 0.0
      %3700 = vmatprep.subr.mxu0 0.0
      %3701 = vmatpush1.msra.mxu0 0.0
      %3702 = vmatprep.subr.mxu0 0.0
      %3703 = vmatpush1.msra.mxu0 0.0
      %3704 = vmatprep.subr.mxu0 0.0
      %3705 = vmatpush1.msra.mxu0 0.0
      %3706 = vmatprep.subr.mxu0 0.0
      %3707 = vmatpush1.msra.mxu0 0.0
      %3708 = vmatprep.subr.mxu0 0.0
      %3709 = vmatpush1.msra.mxu0 0.0
      %3710 = vmatprep.subr.mxu0 0.0
      %3711 = vmatpush1.msra.mxu0 0.0
      %3712 = vmatprep.subr.mxu0 0.0
      %3713 = vmatpush1.msra.mxu0 0.0
      %3714 = vmatprep.subr.mxu0 0.0
      %3715 = vmatpush1.msra.mxu0 0.0
      %3716 = vmatprep.subr.mxu0 0.0
      %3717 = vmatpush1.msra.mxu0 0.0
      %3718 = vmatprep.subr.mxu0 0.0
      %3719 = vmatpush1.msra.mxu0 0.0
      %3720 = vmatprep.mubr.f32.mxu0 0.0
      %3721 = vmatmul.mubr.f32.gmra.mrb[0].mxu0 %v3122
      %v3722 = vpop.f32.mrb[0].mxu0
      %v3723 = vadd.f32 0.0, %v3722
      %v3724 = vpop.f32.mrb[0].mxu0
      %3725 = vmatprep.mubr.f32.mxu0 0.0
      %3726 = vmatmul.mubr.f32.gmra.mrb[0].mxu0 %v3125
      %v3727 = vpop.f32.mrb[0].mxu0
      %v3728 = vadd.f32 0.0, %v3727
      %v3729 = vpop.f32.mrb[0].mxu0
      %3730 = vmatprep.mubr.f32.mxu0 0.0
      %3731 = vmatmul.mubr.f32.gmra.mrb[0].mxu0 %v3128
      %v3732 = vpop.f32.mrb[0].mxu0
      %v3733 = vadd.f32 0.0, %v3732
      %v3734 = vpop.f32.mrb[0].mxu0
      %3735 = vmatprep.mubr.f32.mxu0 0.0
      %3736 = vmatmul.mubr.f32.gmra.mrb[0].mxu0 %v3131
      %v3737 = vpop.f32.mrb[0].mxu0
      %v3738 = vadd.f32 0.0, %v3737
      %v3739 = vpop.f32.mrb[0].mxu0
      %3740 = vdwg.mxu0
      %v3742 = vsel %vm462, %v3738, 0
      %3744 = vmatprep.subr.mxu0 0.0
      %3745 = vmatpush1.msra.mxu0 %v3723
      %3746 = vmatprep.subr.mxu0 0.0
      %3747 = vmatpush1.msra.mxu0 %v3728
      %3748 = vmatprep.subr.mxu0 0.0
      %3749 = vmatpush1.msra.mxu0 %v3733
      %3750 = vmatprep.subr.mxu0 0.0
      %3751 = vmatpush1.msra.mxu0 %v3742
      %3752 = vmatprep.subr.mxu0 0.0
      %3753 = vmatpush1.msra.mxu0 0.0
      %3754 = vmatprep.subr.mxu0 0.0
      %3755 = vmatpush1.msra.mxu0 0.0
      %3756 = vmatprep.subr.mxu0 0.0
      %3757 = vmatpush1.msra.mxu0 0.0
      %3758 = vmatprep.subr.mxu0 0.0
      %3759 = vmatpush1.msra.mxu0 0.0
      %3760 = vmatprep.subr.mxu0 0.0
      %3761 = vmatpush1.msra.mxu0 0.0
      %3762 = vmatprep.subr.mxu0 0.0
      %3763 = vmatpush1.msra.mxu0 0.0
      %3764 = vmatprep.subr.mxu0 0.0
      %3765 = vmatpush1.msra.mxu0 0.0
      %3766 = vmatprep.subr.mxu0 0.0
      %3767 = vmatpush1.msra.mxu0 0.0
      %3768 = vmatprep.subr.mxu0 0.0
      %3769 = vmatpush1.msra.mxu0 0.0
      %3770 = vmatprep.subr.mxu0 0.0
      %3771 = vmatpush1.msra.mxu0 0.0
      %3772 = vmatprep.subr.mxu0 0.0
      %3773 = vmatpush1.msra.mxu0 0.0
      %3774 = vmatprep.subr.mxu0 0.0
      %3775 = vmatpush1.msra.mxu0 0.0
      %3776 = vmatprep.subr.mxu0 0.0
      %3777 = vmatpush1.msra.mxu0 0.0
      %3778 = vmatprep.subr.mxu0 0.0
      %3779 = vmatpush1.msra.mxu0 0.0
      %3780 = vmatprep.subr.mxu0 0.0
      %3781 = vmatpush1.msra.mxu0 0.0
      %3782 = vmatprep.subr.mxu0 0.0
      %3783 = vmatpush1.msra.mxu0 0.0
      %3784 = vmatprep.subr.mxu0 0.0
      %3785 = vmatpush1.msra.mxu0 0.0
      %3786 = vmatprep.subr.mxu0 0.0
      %3787 = vmatpush1.msra.mxu0 0.0
      %3788 = vmatprep.subr.mxu0 0.0
      %3789 = vmatpush1.msra.mxu0 0.0
      %3790 = vmatprep.subr.mxu0 0.0
      %3791 = vmatpush1.msra.mxu0 0.0
      %3792 = vmatprep.subr.mxu0 0.0
      %3793 = vmatpush1.msra.mxu0 0.0
      %3794 = vmatprep.subr.mxu0 0.0
      %3795 = vmatpush1.msra.mxu0 0.0
      %3796 = vmatprep.subr.mxu0 0.0
      %3797 = vmatpush1.msra.mxu0 0.0
      %3798 = vmatprep.subr.mxu0 0.0
      %3799 = vmatpush1.msra.mxu0 0.0
      %3800 = vmatprep.subr.mxu0 0.0
      %3801 = vmatpush1.msra.mxu0 0.0
      %3802 = vmatprep.subr.mxu0 0.0
      %3803 = vmatpush1.msra.mxu0 0.0
      %3804 = vmatprep.subr.mxu0 0.0
      %3805 = vmatpush1.msra.mxu0 0.0
      %3806 = vmatprep.subr.mxu0 0.0
      %3807 = vmatpush1.msra.mxu0 0.0
      %3808 = vmatprep.mubr.f32.mxu0 0.0
      %3809 = vmatmul.mubr.f32.gmra.mrb[0].mxu0 %v1154
      %v3810 = vpop.f32.mrb[0].mxu0
      %v3811 = vadd.f32 0.0, %v3810
      %v3812 = vpop.f32.mrb[0].mxu0
      %3813 = vmatprep.mubr.f32.mxu0 0.0
      %3814 = vmatmul.mubr.f32.gmra.mrb[0].mxu0 %v1157
      %v3815 = vpop.f32.mrb[0].mxu0
      %v3816 = vadd.f32 0.0, %v3815
      %v3817 = vpop.f32.mrb[0].mxu0
      %3818 = vmatprep.mubr.f32.mxu0 0.0
      %3819 = vmatmul.mubr.f32.gmra.mrb[0].mxu0 %v1160
      %v3820 = vpop.f32.mrb[0].mxu0
      %v3821 = vadd.f32 0.0, %v3820
      %v3822 = vpop.f32.mrb[0].mxu0
      %3823 = vmatprep.mubr.f32.mxu0 0.0
      %3824 = vmatmul.mubr.f32.gmra.mrb[0].mxu0 %v1163
      %v3825 = vpop.f32.mrb[0].mxu0
      %v3826 = vadd.f32 0.0, %v3825
      %v3827 = vpop.f32.mrb[0].mxu0
      %3828 = vdwg.mxu0
      %v3829 = vadd.f32 %v3652, %v3811
      %v3830 = vadd.f32 %v3653, %v3816
      %v3831 = vadd.f32 %v3654, %v3821
      %v3832 = vadd.f32 %v3655, %v3826
      %3833 = vmatprep.subr.mxu0 0.0
      %3834 = vmatpush1.msra.mxu0 %v1258
      %3835 = vmatprep.subr.mxu0 0.0
      %3836 = vmatpush1.msra.mxu0 %v1259
      %3837 = vmatprep.subr.mxu0 0.0
      %3838 = vmatpush1.msra.mxu0 %v1260
      %3839 = vmatprep.subr.mxu0 0.0
      %3840 = vmatpush1.msra.mxu0 %v1263
      %3841 = vmatprep.subr.mxu0 0.0
      %3842 = vmatpush1.msra.mxu0 0.0
      %3843 = vmatprep.subr.mxu0 0.0
      %3844 = vmatpush1.msra.mxu0 0.0
      %3845 = vmatprep.subr.mxu0 0.0
      %3846 = vmatpush1.msra.mxu0 0.0
      %3847 = vmatprep.subr.mxu0 0.0
      %3848 = vmatpush1.msra.mxu0 0.0
      %3849 = vmatprep.subr.mxu0 0.0
      %3850 = vmatpush1.msra.mxu0 0.0
      %3851 = vmatprep.subr.mxu0 0.0
      %3852 = vmatpush1.msra.mxu0 0.0
      %3853 = vmatprep.subr.mxu0 0.0
      %3854 = vmatpush1.msra.mxu0 0.0
      %3855 = vmatprep.subr.mxu0 0.0
      %3856 = vmatpush1.msra.mxu0 0.0
      %3857 = vmatprep.subr.mxu0 0.0
      %3858 = vmatpush1.msra.mxu0 0.0
      %3859 = vmatprep.subr.mxu0 0.0
      %3860 = vmatpush1.msra.mxu0 0.0
      %3861 = vmatprep.subr.mxu0 0.0
      %3862 = vmatpush1.msra.mxu0 0.0
      %3863 = vmatprep.subr.mxu0 0.0
      %3864 = vmatpush1.msra.mxu0 0.0
      %3865 = vmatprep.subr.mxu0 0.0
      %3866 = vmatpush1.msra.mxu0 0.0
      %3867 = vmatprep.subr.mxu0 0.0
      %3868 = vmatpush1.msra.mxu0 0.0
      %3869 = vmatprep.subr.mxu0 0.0
      %3870 = vmatpush1.msra.mxu0 0.0
      %3871 = vmatprep.subr.mxu0 0.0
      %3872 = vmatpush1.msra.mxu0 0.0
      %3873 = vmatprep.subr.mxu0 0.0
      %3874 = vmatpush1.msra.mxu0 0.0
      %3875 = vmatprep.subr.mxu0 0.0
      %3876 = vmatpush1.msra.mxu0 0.0
      %3877 = vmatprep.subr.mxu0 0.0
      %3878 = vmatpush1.msra.mxu0 0.0
      %3879 = vmatprep.subr.mxu0 0.0
      %3880 = vmatpush1.msra.mxu0 0.0
      %3881 = vmatprep.subr.mxu0 0.0
      %3882 = vmatpush1.msra.mxu0 0.0
      %3883 = vmatprep.subr.mxu0 0.0
      %3884 = vmatpush1.msra.mxu0 0.0
      %3885 = vmatprep.subr.mxu0 0.0
      %3886 = vmatpush1.msra.mxu0 0.0
      %3887 = vmatprep.subr.mxu0 0.0
      %3888 = vmatpush1.msra.mxu0 0.0
      %3889 = vmatprep.subr.mxu0 0.0
      %3890 = vmatpush1.msra.mxu0 0.0
      %3891 = vmatprep.subr.mxu0 0.0
      %3892 = vmatpush1.msra.mxu0 0.0
      %3893 = vmatprep.subr.mxu0 0.0
      %3894 = vmatpush1.msra.mxu0 0.0
      %3895 = vmatprep.subr.mxu0 0.0
      %3896 = vmatpush1.msra.mxu0 0.0
      %3897 = vmatprep.mubr.f32.mxu0 0.0
      %3898 = vmatmul.mubr.f32.gmra.mrb[0].mxu0 %v3122
      %v3899 = vpop.f32.mrb[0].mxu0
      %v3900 = vadd.f32 0.0, %v3899
      %v3901 = vpop.f32.mrb[0].mxu0
      %3902 = vmatprep.mubr.f32.mxu0 0.0
      %3903 = vmatmul.mubr.f32.gmra.mrb[0].mxu0 %v3125
      %v3904 = vpop.f32.mrb[0].mxu0
      %v3905 = vadd.f32 0.0, %v3904
      %v3906 = vpop.f32.mrb[0].mxu0
      %3907 = vmatprep.mubr.f32.mxu0 0.0
      %3908 = vmatmul.mubr.f32.gmra.mrb[0].mxu0 %v3128
      %v3909 = vpop.f32.mrb[0].mxu0
      %v3910 = vadd.f32 0.0, %v3909
      %v3911 = vpop.f32.mrb[0].mxu0
      %3912 = vmatprep.mubr.f32.mxu0 0.0
      %3913 = vmatmul.mubr.f32.gmra.mrb[0].mxu0 %v3131
      %v3914 = vpop.f32.mrb[0].mxu0
      %v3915 = vadd.f32 0.0, %v3914
      %v3916 = vpop.f32.mrb[0].mxu0
      %3917 = vdwg.mxu0
      %v3919 = vsel %vm462, %v3915, 0
      %3921 = vmatprep.subr.mxu0 0.0
      %3922 = vmatpush1.msra.mxu0 %v3900
      %3923 = vmatprep.subr.mxu0 0.0
      %3924 = vmatpush1.msra.mxu0 %v3905
      %3925 = vmatprep.subr.mxu0 0.0
      %3926 = vmatpush1.msra.mxu0 %v3910
      %3927 = vmatprep.subr.mxu0 0.0
      %3928 = vmatpush1.msra.mxu0 %v3919
      %3929 = vmatprep.subr.mxu0 0.0
      %3930 = vmatpush1.msra.mxu0 0.0
      %3931 = vmatprep.subr.mxu0 0.0
      %3932 = vmatpush1.msra.mxu0 0.0
      %3933 = vmatprep.subr.mxu0 0.0
      %3934 = vmatpush1.msra.mxu0 0.0
      %3935 = vmatprep.subr.mxu0 0.0
      %3936 = vmatpush1.msra.mxu0 0.0
      %3937 = vmatprep.subr.mxu0 0.0
      %3938 = vmatpush1.msra.mxu0 0.0
      %3939 = vmatprep.subr.mxu0 0.0
      %3940 = vmatpush1.msra.mxu0 0.0
      %3941 = vmatprep.subr.mxu0 0.0
      %3942 = vmatpush1.msra.mxu0 0.0
      %3943 = vmatprep.subr.mxu0 0.0
      %3944 = vmatpush1.msra.mxu0 0.0
      %3945 = vmatprep.subr.mxu0 0.0
      %3946 = vmatpush1.msra.mxu0 0.0
      %3947 = vmatprep.subr.mxu0 0.0
      %3948 = vmatpush1.msra.mxu0 0.0
      %3949 = vmatprep.subr.mxu0 0.0
      %3950 = vmatpush1.msra.mxu0 0.0
      %3951 = vmatprep.subr.mxu0 0.0
      %3952 = vmatpush1.msra.mxu0 0.0
      %3953 = vmatprep.subr.mxu0 0.0
      %3954 = vmatpush1.msra.mxu0 0.0
      %3955 = vmatprep.subr.mxu0 0.0
      %3956 = vmatpush1.msra.mxu0 0.0
      %3957 = vmatprep.subr.mxu0 0.0
      %3958 = vmatpush1.msra.mxu0 0.0
      %3959 = vmatprep.subr.mxu0 0.0
      %3960 = vmatpush1.msra.mxu0 0.0
      %3961 = vmatprep.subr.mxu0 0.0
      %3962 = vmatpush1.msra.mxu0 0.0
      %3963 = vmatprep.subr.mxu0 0.0
      %3964 = vmatpush1.msra.mxu0 0.0
      %3965 = vmatprep.subr.mxu0 0.0
      %3966 = vmatpush1.msra.mxu0 0.0
      %3967 = vmatprep.subr.mxu0 0.0
      %3968 = vmatpush1.msra.mxu0 0.0
      %3969 = vmatprep.subr.mxu0 0.0
      %3970 = vmatpush1.msra.mxu0 0.0
      %3971 = vmatprep.subr.mxu0 0.0
      %3972 = vmatpush1.msra.mxu0 0.0
      %3973 = vmatprep.subr.mxu0 0.0
      %3974 = vmatpush1.msra.mxu0 0.0
      %3975 = vmatprep.subr.mxu0 0.0
      %3976 = vmatpush1.msra.mxu0 0.0
      %3977 = vmatprep.subr.mxu0 0.0
      %3978 = vmatpush1.msra.mxu0 0.0
      %3979 = vmatprep.subr.mxu0 0.0
      %3980 = vmatpush1.msra.mxu0 0.0
      %3981 = vmatprep.subr.mxu0 0.0
      %3982 = vmatpush1.msra.mxu0 0.0
      %3983 = vmatprep.subr.mxu0 0.0
      %3984 = vmatpush1.msra.mxu0 0.0
      %3985 = vmatprep.mubr.f32.mxu0 0.0
      %3986 = vmatmul.mubr.f32.gmra.mrb[0].mxu0 %v1356
      %v3987 = vpop.f32.mrb[0].mxu0
      %v3988 = vadd.f32 0.0, %v3987
      %v3989 = vpop.f32.mrb[0].mxu0
      %3990 = vmatprep.mubr.f32.mxu0 0.0
      %3991 = vmatmul.mubr.f32.gmra.mrb[0].mxu0 %v1359
      %v3992 = vpop.f32.mrb[0].mxu0
      %v3993 = vadd.f32 0.0, %v3992
      %v3994 = vpop.f32.mrb[0].mxu0
      %3995 = vmatprep.mubr.f32.mxu0 0.0
      %3996 = vmatmul.mubr.f32.gmra.mrb[0].mxu0 %v1362
      %v3997 = vpop.f32.mrb[0].mxu0
      %v3998 = vadd.f32 0.0, %v3997
      %v3999 = vpop.f32.mrb[0].mxu0
      %4000 = vmatprep.mubr.f32.mxu0 0.0
      %4001 = vmatmul.mubr.f32.gmra.mrb[0].mxu0 %v1365
      %v4002 = vpop.f32.mrb[0].mxu0
      %v4003 = vadd.f32 0.0, %v4002
      %v4004 = vpop.f32.mrb[0].mxu0
      %4005 = vdwg.mxu0
      %v4006 = vadd.f32 %v3829, %v3988
      %v4007 = vadd.f32 %v3830, %v3993
      %v4008 = vadd.f32 %v3831, %v3998
      %v4009 = vadd.f32 %v3832, %v4003
      %v4010 = vsel %vm462, %v3120, 0
      %4012 = vmatprep.subr.mxu0 0.0
      %4013 = vmatpush1.msra.mxu0 %v3117
      %4014 = vmatprep.subr.mxu0 0.0
      %4015 = vmatpush1.msra.mxu0 %v3118
      %4016 = vmatprep.subr.mxu0 0.0
      %4017 = vmatpush1.msra.mxu0 %v3119
      %4018 = vmatprep.subr.mxu0 0.0
      %4019 = vmatpush1.msra.mxu0 %v4010
      %4020 = vmatprep.subr.mxu0 0.0
      %4021 = vmatpush1.msra.mxu0 0.0
      %4022 = vmatprep.subr.mxu0 0.0
      %4023 = vmatpush1.msra.mxu0 0.0
      %4024 = vmatprep.subr.mxu0 0.0
      %4025 = vmatpush1.msra.mxu0 0.0
      %4026 = vmatprep.subr.mxu0 0.0
      %4027 = vmatpush1.msra.mxu0 0.0
      %4028 = vmatprep.subr.mxu0 0.0
      %4029 = vmatpush1.msra.mxu0 0.0
      %4030 = vmatprep.subr.mxu0 0.0
      %4031 = vmatpush1.msra.mxu0 0.0
      %4032 = vmatprep.subr.mxu0 0.0
      %4033 = vmatpush1.msra.mxu0 0.0
      %4034 = vmatprep.subr.mxu0 0.0
      %4035 = vmatpush1.msra.mxu0 0.0
      %4036 = vmatprep.subr.mxu0 0.0
      %4037 = vmatpush1.msra.mxu0 0.0
      %4038 = vmatprep.subr.mxu0 0.0
      %4039 = vmatpush1.msra.mxu0 0.0
      %4040 = vmatprep.subr.mxu0 0.0
      %4041 = vmatpush1.msra.mxu0 0.0
      %4042 = vmatprep.subr.mxu0 0.0
      %4043 = vmatpush1.msra.mxu0 0.0
      %4044 = vmatprep.subr.mxu0 0.0
      %4045 = vmatpush1.msra.mxu0 0.0
      %4046 = vmatprep.subr.mxu0 0.0
      %4047 = vmatpush1.msra.mxu0 0.0
      %4048 = vmatprep.subr.mxu0 0.0
      %4049 = vmatpush1.msra.mxu0 0.0
      %4050 = vmatprep.subr.mxu0 0.0
      %4051 = vmatpush1.msra.mxu0 0.0
      %4052 = vmatprep.subr.mxu0 0.0
      %4053 = vmatpush1.msra.mxu0 0.0
      %4054 = vmatprep.subr.mxu0 0.0
      %4055 = vmatpush1.msra.mxu0 0.0
      %4056 = vmatprep.subr.mxu0 0.0
      %4057 = vmatpush1.msra.mxu0 0.0
      %4058 = vmatprep.subr.mxu0 0.0
      %4059 = vmatpush1.msra.mxu0 0.0
      %4060 = vmatprep.subr.mxu0 0.0
      %4061 = vmatpush1.msra.mxu0 0.0
      %4062 = vmatprep.subr.mxu0 0.0
      %4063 = vmatpush1.msra.mxu0 0.0
      %4064 = vmatprep.subr.mxu0 0.0
      %4065 = vmatpush1.msra.mxu0 0.0
      %4066 = vmatprep.subr.mxu0 0.0
      %4067 = vmatpush1.msra.mxu0 0.0
      %4068 = vmatprep.subr.mxu0 0.0
      %4069 = vmatpush1.msra.mxu0 0.0
      %4070 = vmatprep.subr.mxu0 0.0
      %4071 = vmatpush1.msra.mxu0 0.0
      %4072 = vmatprep.subr.mxu0 0.0
      %4073 = vmatpush1.msra.mxu0 0.0
      %4074 = vmatprep.subr.mxu0 0.0
      %4075 = vmatpush1.msra.mxu0 0.0
      %4076 = vmatprep.mubr.f32.mxu0 0.0
      %4077 = vmatmul.mubr.f32.gmra.mrb[0].mxu0 %v1465
      %v4078 = vpop.f32.mrb[0].mxu0
      %v4079 = vadd.f32 0.0, %v4078
      %v4080 = vpop.f32.mrb[0].mxu0
      %4081 = vmatprep.mubr.f32.mxu0 0.0
      %4082 = vmatmul.mubr.f32.gmra.mrb[0].mxu0 %v1468
      %v4083 = vpop.f32.mrb[0].mxu0
      %v4084 = vadd.f32 0.0, %v4083
      %v4085 = vpop.f32.mrb[0].mxu0
      %4086 = vmatprep.mubr.f32.mxu0 0.0
      %4087 = vmatmul.mubr.f32.gmra.mrb[0].mxu0 %v1471
      %v4088 = vpop.f32.mrb[0].mxu0
      %v4089 = vadd.f32 0.0, %v4088
      %v4090 = vpop.f32.mrb[0].mxu0
      %4091 = vmatprep.mubr.f32.mxu0 0.0
      %4092 = vmatmul.mubr.f32.gmra.mrb[0].mxu0 %v1474
      %v4093 = vpop.f32.mrb[0].mxu0
      %v4094 = vadd.f32 0.0, %v4093
      %v4095 = vpop.f32.mrb[0].mxu0
      %4096 = vdwg.mxu0
      %v4097 = vadd.f32 %v4006, %v4079
      %v4098 = vadd.f32 %v4007, %v4084
      %v4099 = vadd.f32 %v4008, %v4089
      %v4100 = vadd.f32 %v4009, %v4094
      %4101 = vmatprep.subr.mxu0 0.0
      %4102 = vmatpush1.msra.mxu0 %v1568
      %4103 = vmatprep.subr.mxu0 0.0
      %4104 = vmatpush1.msra.mxu0 %v1569
      %4105 = vmatprep.subr.mxu0 0.0
      %4106 = vmatpush1.msra.mxu0 %v1570
      %4107 = vmatprep.subr.mxu0 0.0
      %4108 = vmatpush1.msra.mxu0 %v1573
      %4109 = vmatprep.subr.mxu0 0.0
      %4110 = vmatpush1.msra.mxu0 0.0
      %4111 = vmatprep.subr.mxu0 0.0
      %4112 = vmatpush1.msra.mxu0 0.0
      %4113 = vmatprep.subr.mxu0 0.0
      %4114 = vmatpush1.msra.mxu0 0.0
      %4115 = vmatprep.subr.mxu0 0.0
      %4116 = vmatpush1.msra.mxu0 0.0
      %4117 = vmatprep.subr.mxu0 0.0
      %4118 = vmatpush1.msra.mxu0 0.0
      %4119 = vmatprep.subr.mxu0 0.0
      %4120 = vmatpush1.msra.mxu0 0.0
      %4121 = vmatprep.subr.mxu0 0.0
      %4122 = vmatpush1.msra.mxu0 0.0
      %4123 = vmatprep.subr.mxu0 0.0
      %4124 = vmatpush1.msra.mxu0 0.0
      %4125 = vmatprep.subr.mxu0 0.0
      %4126 = vmatpush1.msra.mxu0 0.0
      %4127 = vmatprep.subr.mxu0 0.0
      %4128 = vmatpush1.msra.mxu0 0.0
      %4129 = vmatprep.subr.mxu0 0.0
      %4130 = vmatpush1.msra.mxu0 0.0
      %4131 = vmatprep.subr.mxu0 0.0
      %4132 = vmatpush1.msra.mxu0 0.0
      %4133 = vmatprep.subr.mxu0 0.0
      %4134 = vmatpush1.msra.mxu0 0.0
      %4135 = vmatprep.subr.mxu0 0.0
      %4136 = vmatpush1.msra.mxu0 0.0
      %4137 = vmatprep.subr.mxu0 0.0
      %4138 = vmatpush1.msra.mxu0 0.0
      %4139 = vmatprep.subr.mxu0 0.0
      %4140 = vmatpush1.msra.mxu0 0.0
      %4141 = vmatprep.subr.mxu0 0.0
      %4142 = vmatpush1.msra.mxu0 0.0
      %4143 = vmatprep.subr.mxu0 0.0
      %4144 = vmatpush1.msra.mxu0 0.0
      %4145 = vmatprep.subr.mxu0 0.0
      %4146 = vmatpush1.msra.mxu0 0.0
      %4147 = vmatprep.subr.mxu0 0.0
      %4148 = vmatpush1.msra.mxu0 0.0
      %4149 = vmatprep.subr.mxu0 0.0
      %4150 = vmatpush1.msra.mxu0 0.0
      %4151 = vmatprep.subr.mxu0 0.0
      %4152 = vmatpush1.msra.mxu0 0.0
      %4153 = vmatprep.subr.mxu0 0.0
      %4154 = vmatpush1.msra.mxu0 0.0
      %4155 = vmatprep.subr.mxu0 0.0
      %4156 = vmatpush1.msra.mxu0 0.0
      %4157 = vmatprep.subr.mxu0 0.0
      %4158 = vmatpush1.msra.mxu0 0.0
      %4159 = vmatprep.subr.mxu0 0.0
      %4160 = vmatpush1.msra.mxu0 0.0
      %4161 = vmatprep.subr.mxu0 0.0
      %4162 = vmatpush1.msra.mxu0 0.0
      %4163 = vmatprep.subr.mxu0 0.0
      %4164 = vmatpush1.msra.mxu0 0.0
      %4165 = vmatprep.mubr.f32.mxu0 0.0
      %4166 = vmatmul.mubr.f32.gmra.mrb[0].mxu0 %v3122
      %v4167 = vpop.f32.mrb[0].mxu0
      %v4168 = vadd.f32 0.0, %v4167
      %v4169 = vpop.f32.mrb[0].mxu0
      %4170 = vmatprep.mubr.f32.mxu0 0.0
      %4171 = vmatmul.mubr.f32.gmra.mrb[0].mxu0 %v3125
      %v4172 = vpop.f32.mrb[0].mxu0
      %v4173 = vadd.f32 0.0, %v4172
      %v4174 = vpop.f32.mrb[0].mxu0
      %4175 = vmatprep.mubr.f32.mxu0 0.0
      %4176 = vmatmul.mubr.f32.gmra.mrb[0].mxu0 %v3128
      %v4177 = vpop.f32.mrb[0].mxu0
      %v4178 = vadd.f32 0.0, %v4177
      %v4179 = vpop.f32.mrb[0].mxu0
      %4180 = vmatprep.mubr.f32.mxu0 0.0
      %4181 = vmatmul.mubr.f32.gmra.mrb[0].mxu0 %v3131
      %v4182 = vpop.f32.mrb[0].mxu0
      %v4183 = vadd.f32 0.0, %v4182
      %v4184 = vpop.f32.mrb[0].mxu0
      %4185 = vdwg.mxu0
      %v4187 = vsel %vm462, %v4183, 0
      %4189 = vmatprep.subr.mxu0 0.0
      %4190 = vmatpush1.msra.mxu0 %v4168
      %4191 = vmatprep.subr.mxu0 0.0
      %4192 = vmatpush1.msra.mxu0 %v4173
      %4193 = vmatprep.subr.mxu0 0.0
      %4194 = vmatpush1.msra.mxu0 %v4178
      %4195 = vmatprep.subr.mxu0 0.0
      %4196 = vmatpush1.msra.mxu0 %v4187
      %4197 = vmatprep.subr.mxu0 0.0
      %4198 = vmatpush1.msra.mxu0 0.0
      %4199 = vmatprep.subr.mxu0 0.0
      %4200 = vmatpush1.msra.mxu0 0.0
      %4201 = vmatprep.subr.mxu0 0.0
      %4202 = vmatpush1.msra.mxu0 0.0
      %4203 = vmatprep.subr.mxu0 0.0
      %4204 = vmatpush1.msra.mxu0 0.0
      %4205 = vmatprep.subr.mxu0 0.0
      %4206 = vmatpush1.msra.mxu0 0.0
      %4207 = vmatprep.subr.mxu0 0.0
      %4208 = vmatpush1.msra.mxu0 0.0
      %4209 = vmatprep.subr.mxu0 0.0
      %4210 = vmatpush1.msra.mxu0 0.0
      %4211 = vmatprep.subr.mxu0 0.0
      %4212 = vmatpush1.msra.mxu0 0.0
      %4213 = vmatprep.subr.mxu0 0.0
      %4214 = vmatpush1.msra.mxu0 0.0
      %4215 = vmatprep.subr.mxu0 0.0
      %4216 = vmatpush1.msra.mxu0 0.0
      %4217 = vmatprep.subr.mxu0 0.0
      %4218 = vmatpush1.msra.mxu0 0.0
      %4219 = vmatprep.subr.mxu0 0.0
      %4220 = vmatpush1.msra.mxu0 0.0
      %4221 = vmatprep.subr.mxu0 0.0
      %4222 = vmatpush1.msra.mxu0 0.0
      %4223 = vmatprep.subr.mxu0 0.0
      %4224 = vmatpush1.msra.mxu0 0.0
      %4225 = vmatprep.subr.mxu0 0.0
      %4226 = vmatpush1.msra.mxu0 0.0
      %4227 = vmatprep.subr.mxu0 0.0
      %4228 = vmatpush1.msra.mxu0 0.0
      %4229 = vmatprep.subr.mxu0 0.0
      %4230 = vmatpush1.msra.mxu0 0.0
      %4231 = vmatprep.subr.mxu0 0.0
      %4232 = vmatpush1.msra.mxu0 0.0
      %4233 = vmatprep.subr.mxu0 0.0
      %4234 = vmatpush1.msra.mxu0 0.0
      %4235 = vmatprep.subr.mxu0 0.0
      %4236 = vmatpush1.msra.mxu0 0.0
      %4237 = vmatprep.subr.mxu0 0.0
      %4238 = vmatpush1.msra.mxu0 0.0
      %4239 = vmatprep.subr.mxu0 0.0
      %4240 = vmatpush1.msra.mxu0 0.0
      %4241 = vmatprep.subr.mxu0 0.0
      %4242 = vmatpush1.msra.mxu0 0.0
      %4243 = vmatprep.subr.mxu0 0.0
      %4244 = vmatpush1.msra.mxu0 0.0
      %4245 = vmatprep.subr.mxu0 0.0
      %4246 = vmatpush1.msra.mxu0 0.0
      %4247 = vmatprep.subr.mxu0 0.0
      %4248 = vmatpush1.msra.mxu0 0.0
      %4249 = vmatprep.subr.mxu0 0.0
      %4250 = vmatpush1.msra.mxu0 0.0
      %4251 = vmatprep.subr.mxu0 0.0
      %4252 = vmatpush1.msra.mxu0 0.0
      %4253 = vmatprep.mubr.f32.mxu0 0.0
      %4254 = vmatmul.mubr.f32.gmra.mrb[0].mxu0 %v1666
      %v4255 = vpop.f32.mrb[0].mxu0
      %v4256 = vadd.f32 0.0, %v4255
      %v4257 = vpop.f32.mrb[0].mxu0
      %4258 = vmatprep.mubr.f32.mxu0 0.0
      %4259 = vmatmul.mubr.f32.gmra.mrb[0].mxu0 %v1669
      %v4260 = vpop.f32.mrb[0].mxu0
      %v4261 = vadd.f32 0.0, %v4260
      %v4262 = vpop.f32.mrb[0].mxu0
      %4263 = vmatprep.mubr.f32.mxu0 0.0
      %4264 = vmatmul.mubr.f32.gmra.mrb[0].mxu0 %v1672
      %v4265 = vpop.f32.mrb[0].mxu0
      %v4266 = vadd.f32 0.0, %v4265
      %v4267 = vpop.f32.mrb[0].mxu0
      %4268 = vmatprep.mubr.f32.mxu0 0.0
      %4269 = vmatmul.mubr.f32.gmra.mrb[0].mxu0 %v1675
      %v4270 = vpop.f32.mrb[0].mxu0
      %v4271 = vadd.f32 0.0, %v4270
      %v4272 = vpop.f32.mrb[0].mxu0
      %4273 = vdwg.mxu0
      %v4274 = vadd.f32 %v4097, %v4256
      %v4275 = vadd.f32 %v4098, %v4261
      %v4276 = vadd.f32 %v4099, %v4266
      %v4277 = vadd.f32 %v4100, %v4271
      %4278 = vmatprep.subr.mxu0 0.0
      %4279 = vmatpush1.msra.mxu0 %v1770
      %4280 = vmatprep.subr.mxu0 0.0
      %4281 = vmatpush1.msra.mxu0 %v1771
      %4282 = vmatprep.subr.mxu0 0.0
      %4283 = vmatpush1.msra.mxu0 %v1772
      %4284 = vmatprep.subr.mxu0 0.0
      %4285 = vmatpush1.msra.mxu0 %v1775
      %4286 = vmatprep.subr.mxu0 0.0
      %4287 = vmatpush1.msra.mxu0 0.0
      %4288 = vmatprep.subr.mxu0 0.0
      %4289 = vmatpush1.msra.mxu0 0.0
      %4290 = vmatprep.subr.mxu0 0.0
      %4291 = vmatpush1.msra.mxu0 0.0
      %4292 = vmatprep.subr.mxu0 0.0
      %4293 = vmatpush1.msra.mxu0 0.0
      %4294 = vmatprep.subr.mxu0 0.0
      %4295 = vmatpush1.msra.mxu0 0.0
      %4296 = vmatprep.subr.mxu0 0.0
      %4297 = vmatpush1.msra.mxu0 0.0
      %4298 = vmatprep.subr.mxu0 0.0
      %4299 = vmatpush1.msra.mxu0 0.0
      %4300 = vmatprep.subr.mxu0 0.0
      %4301 = vmatpush1.msra.mxu0 0.0
      %4302 = vmatprep.subr.mxu0 0.0
      %4303 = vmatpush1.msra.mxu0 0.0
      %4304 = vmatprep.subr.mxu0 0.0
      %4305 = vmatpush1.msra.mxu0 0.0
      %4306 = vmatprep.subr.mxu0 0.0
      %4307 = vmatpush1.msra.mxu0 0.0
      %4308 = vmatprep.subr.mxu0 0.0
      %4309 = vmatpush1.msra.mxu0 0.0
      %4310 = vmatprep.subr.mxu0 0.0
      %4311 = vmatpush1.msra.mxu0 0.0
      %4312 = vmatprep.subr.mxu0 0.0
      %4313 = vmatpush1.msra.mxu0 0.0
      %4314 = vmatprep.subr.mxu0 0.0
      %4315 = vmatpush1.msra.mxu0 0.0
      %4316 = vmatprep.subr.mxu0 0.0
      %4317 = vmatpush1.msra.mxu0 0.0
      %4318 = vmatprep.subr.mxu0 0.0
      %4319 = vmatpush1.msra.mxu0 0.0
      %4320 = vmatprep.subr.mxu0 0.0
      %4321 = vmatpush1.msra.mxu0 0.0
      %4322 = vmatprep.subr.mxu0 0.0
      %4323 = vmatpush1.msra.mxu0 0.0
      %4324 = vmatprep.subr.mxu0 0.0
      %4325 = vmatpush1.msra.mxu0 0.0
      %4326 = vmatprep.subr.mxu0 0.0
      %4327 = vmatpush1.msra.mxu0 0.0
      %4328 = vmatprep.subr.mxu0 0.0
      %4329 = vmatpush1.msra.mxu0 0.0
      %4330 = vmatprep.subr.mxu0 0.0
      %4331 = vmatpush1.msra.mxu0 0.0
      %4332 = vmatprep.subr.mxu0 0.0
      %4333 = vmatpush1.msra.mxu0 0.0
      %4334 = vmatprep.subr.mxu0 0.0
      %4335 = vmatpush1.msra.mxu0 0.0
      %4336 = vmatprep.subr.mxu0 0.0
      %4337 = vmatpush1.msra.mxu0 0.0
      %4338 = vmatprep.subr.mxu0 0.0
      %4339 = vmatpush1.msra.mxu0 0.0
      %4340 = vmatprep.subr.mxu0 0.0
      %4341 = vmatpush1.msra.mxu0 0.0
      %4342 = vmatprep.mubr.f32.mxu0 0.0
      %4343 = vmatmul.mubr.f32.gmra.mrb[0].mxu0 %v3122
      %v4344 = vpop.f32.mrb[0].mxu0
      %v4345 = vadd.f32 0.0, %v4344
      %v4346 = vpop.f32.mrb[0].mxu0
      %4347 = vmatprep.mubr.f32.mxu0 0.0
      %4348 = vmatmul.mubr.f32.gmra.mrb[0].mxu0 %v3125
      %v4349 = vpop.f32.mrb[0].mxu0
      %v4350 = vadd.f32 0.0, %v4349
      %v4351 = vpop.f32.mrb[0].mxu0
      %4352 = vmatprep.mubr.f32.mxu0 0.0
      %4353 = vmatmul.mubr.f32.gmra.mrb[0].mxu0 %v3128
      %v4354 = vpop.f32.mrb[0].mxu0
      %v4355 = vadd.f32 0.0, %v4354
      %v4356 = vpop.f32.mrb[0].mxu0
      %4357 = vmatprep.mubr.f32.mxu0 0.0
      %4358 = vmatmul.mubr.f32.gmra.mrb[0].mxu0 %v3131
      %v4359 = vpop.f32.mrb[0].mxu0
      %v4360 = vadd.f32 0.0, %v4359
      %v4361 = vpop.f32.mrb[0].mxu0
      %4362 = vdwg.mxu0
      %v4364 = vsel %vm462, %v4360, 0
      %4366 = vmatprep.subr.mxu0 0.0
      %4367 = vmatpush1.msra.mxu0 %v4345
      %4368 = vmatprep.subr.mxu0 0.0
      %4369 = vmatpush1.msra.mxu0 %v4350
      %4370 = vmatprep.subr.mxu0 0.0
      %4371 = vmatpush1.msra.mxu0 %v4355
      %4372 = vmatprep.subr.mxu0 0.0
      %4373 = vmatpush1.msra.mxu0 %v4364
      %4374 = vmatprep.subr.mxu0 0.0
      %4375 = vmatpush1.msra.mxu0 0.0
      %4376 = vmatprep.subr.mxu0 0.0
      %4377 = vmatpush1.msra.mxu0 0.0
      %4378 = vmatprep.subr.mxu0 0.0
      %4379 = vmatpush1.msra.mxu0 0.0
      %4380 = vmatprep.subr.mxu0 0.0
      %4381 = vmatpush1.msra.mxu0 0.0
      %4382 = vmatprep.subr.mxu0 0.0
      %4383 = vmatpush1.msra.mxu0 0.0
      %4384 = vmatprep.subr.mxu0 0.0
      %4385 = vmatpush1.msra.mxu0 0.0
      %4386 = vmatprep.subr.mxu0 0.0
      %4387 = vmatpush1.msra.mxu0 0.0
      %4388 = vmatprep.subr.mxu0 0.0
      %4389 = vmatpush1.msra.mxu0 0.0
      %4390 = vmatprep.subr.mxu0 0.0
      %4391 = vmatpush1.msra.mxu0 0.0
      %4392 = vmatprep.subr.mxu0 0.0
      %4393 = vmatpush1.msra.mxu0 0.0
      %4394 = vmatprep.subr.mxu0 0.0
      %4395 = vmatpush1.msra.mxu0 0.0
      %4396 = vmatprep.subr.mxu0 0.0
      %4397 = vmatpush1.msra.mxu0 0.0
      %4398 = vmatprep.subr.mxu0 0.0
      %4399 = vmatpush1.msra.mxu0 0.0
      %4400 = vmatprep.subr.mxu0 0.0
      %4401 = vmatpush1.msra.mxu0 0.0
      %4402 = vmatprep.subr.mxu0 0.0
      %4403 = vmatpush1.msra.mxu0 0.0
      %4404 = vmatprep.subr.mxu0 0.0
      %4405 = vmatpush1.msra.mxu0 0.0
      %4406 = vmatprep.subr.mxu0 0.0
      %4407 = vmatpush1.msra.mxu0 0.0
      %4408 = vmatprep.subr.mxu0 0.0
      %4409 = vmatpush1.msra.mxu0 0.0
      %4410 = vmatprep.subr.mxu0 0.0
      %4411 = vmatpush1.msra.mxu0 0.0
      %4412 = vmatprep.subr.mxu0 0.0
      %4413 = vmatpush1.msra.mxu0 0.0
      %4414 = vmatprep.subr.mxu0 0.0
      %4415 = vmatpush1.msra.mxu0 0.0
      %4416 = vmatprep.subr.mxu0 0.0
      %4417 = vmatpush1.msra.mxu0 0.0
      %4418 = vmatprep.subr.mxu0 0.0
      %4419 = vmatpush1.msra.mxu0 0.0
      %4420 = vmatprep.subr.mxu0 0.0
      %4421 = vmatpush1.msra.mxu0 0.0
      %4422 = vmatprep.subr.mxu0 0.0
      %4423 = vmatpush1.msra.mxu0 0.0
      %4424 = vmatprep.subr.mxu0 0.0
      %4425 = vmatpush1.msra.mxu0 0.0
      %4426 = vmatprep.subr.mxu0 0.0
      %4427 = vmatpush1.msra.mxu0 0.0
      %4428 = vmatprep.subr.mxu0 0.0
      %4429 = vmatpush1.msra.mxu0 0.0
      %4430 = vmatprep.mubr.f32.mxu0 0.0
      %4431 = vmatmul.mubr.f32.gmra.mrb[0].mxu0 %v1868
      %v4432 = vpop.f32.mrb[0].mxu0
      %v4433 = vadd.f32 0.0, %v4432
      %v4434 = vpop.f32.mrb[0].mxu0
      %4435 = vmatprep.mubr.f32.mxu0 0.0
      %4436 = vmatmul.mubr.f32.gmra.mrb[0].mxu0 %v1871
      %v4437 = vpop.f32.mrb[0].mxu0
      %v4438 = vadd.f32 0.0, %v4437
      %v4439 = vpop.f32.mrb[0].mxu0
      %4440 = vmatprep.mubr.f32.mxu0 0.0
      %4441 = vmatmul.mubr.f32.gmra.mrb[0].mxu0 %v1874
      %v4442 = vpop.f32.mrb[0].mxu0
      %v4443 = vadd.f32 0.0, %v4442
      %v4444 = vpop.f32.mrb[0].mxu0
      %4445 = vmatprep.mubr.f32.mxu0 0.0
      %4446 = vmatmul.mubr.f32.gmra.mrb[0].mxu0 %v1877
      %v4447 = vpop.f32.mrb[0].mxu0
      %v4448 = vadd.f32 0.0, %v4447
      %v4449 = vpop.f32.mrb[0].mxu0
      %4450 = vdwg.mxu0
      %v4451 = vadd.f32 %v4274, %v4433
      %v4452 = vadd.f32 %v4275, %v4438
      %v4453 = vadd.f32 %v4276, %v4443
      %v4454 = vadd.f32 %v4277, %v4448
      %4455 = vmatprep.subr.mxu0 0.0
      %4456 = vmatpush1.msra.mxu0 %v1972
      %4457 = vmatprep.subr.mxu0 0.0
      %4458 = vmatpush1.msra.mxu0 %v1973
      %4459 = vmatprep.subr.mxu0 0.0
      %4460 = vmatpush1.msra.mxu0 %v1974
      %4461 = vmatprep.subr.mxu0 0.0
      %4462 = vmatpush1.msra.mxu0 %v1977
      %4463 = vmatprep.subr.mxu0 0.0
      %4464 = vmatpush1.msra.mxu0 0.0
      %4465 = vmatprep.subr.mxu0 0.0
      %4466 = vmatpush1.msra.mxu0 0.0
      %4467 = vmatprep.subr.mxu0 0.0
      %4468 = vmatpush1.msra.mxu0 0.0
      %4469 = vmatprep.subr.mxu0 0.0
      %4470 = vmatpush1.msra.mxu0 0.0
      %4471 = vmatprep.subr.mxu0 0.0
      %4472 = vmatpush1.msra.mxu0 0.0
      %4473 = vmatprep.subr.mxu0 0.0
      %4474 = vmatpush1.msra.mxu0 0.0
      %4475 = vmatprep.subr.mxu0 0.0
      %4476 = vmatpush1.msra.mxu0 0.0
      %4477 = vmatprep.subr.mxu0 0.0
      %4478 = vmatpush1.msra.mxu0 0.0
      %4479 = vmatprep.subr.mxu0 0.0
      %4480 = vmatpush1.msra.mxu0 0.0
      %4481 = vmatprep.subr.mxu0 0.0
      %4482 = vmatpush1.msra.mxu0 0.0
      %4483 = vmatprep.subr.mxu0 0.0
      %4484 = vmatpush1.msra.mxu0 0.0
      %4485 = vmatprep.subr.mxu0 0.0
      %4486 = vmatpush1.msra.mxu0 0.0
      %4487 = vmatprep.subr.mxu0 0.0
      %4488 = vmatpush1.msra.mxu0 0.0
      %4489 = vmatprep.subr.mxu0 0.0
      %4490 = vmatpush1.msra.mxu0 0.0
      %4491 = vmatprep.subr.mxu0 0.0
      %4492 = vmatpush1.msra.mxu0 0.0
      %4493 = vmatprep.subr.mxu0 0.0
      %4494 = vmatpush1.msra.mxu0 0.0
      %4495 = vmatprep.subr.mxu0 0.0
      %4496 = vmatpush1.msra.mxu0 0.0
      %4497 = vmatprep.subr.mxu0 0.0
      %4498 = vmatpush1.msra.mxu0 0.0
      %4499 = vmatprep.subr.mxu0 0.0
      %4500 = vmatpush1.msra.mxu0 0.0
      %4501 = vmatprep.subr.mxu0 0.0
      %4502 = vmatpush1.msra.mxu0 0.0
      %4503 = vmatprep.subr.mxu0 0.0
      %4504 = vmatpush1.msra.mxu0 0.0
      %4505 = vmatprep.subr.mxu0 0.0
      %4506 = vmatpush1.msra.mxu0 0.0
      %4507 = vmatprep.subr.mxu0 0.0
      %4508 = vmatpush1.msra.mxu0 0.0
      %4509 = vmatprep.subr.mxu0 0.0
      %4510 = vmatpush1.msra.mxu0 0.0
      %4511 = vmatprep.subr.mxu0 0.0
      %4512 = vmatpush1.msra.mxu0 0.0
      %4513 = vmatprep.subr.mxu0 0.0
      %4514 = vmatpush1.msra.mxu0 0.0
      %4515 = vmatprep.subr.mxu0 0.0
      %4516 = vmatpush1.msra.mxu0 0.0
      %4517 = vmatprep.subr.mxu0 0.0
      %4518 = vmatpush1.msra.mxu0 0.0
      %4519 = vmatprep.mubr.f32.mxu0 0.0
      %4520 = vmatmul.mubr.f32.gmra.mrb[0].mxu0 %v3122
      %v4521 = vpop.f32.mrb[0].mxu0
      %v4522 = vadd.f32 0.0, %v4521
      %v4523 = vpop.f32.mrb[0].mxu0
      %4524 = vmatprep.mubr.f32.mxu0 0.0
      %4525 = vmatmul.mubr.f32.gmra.mrb[0].mxu0 %v3125
      %v4526 = vpop.f32.mrb[0].mxu0
      %v4527 = vadd.f32 0.0, %v4526
      %v4528 = vpop.f32.mrb[0].mxu0
      %4529 = vmatprep.mubr.f32.mxu0 0.0
      %4530 = vmatmul.mubr.f32.gmra.mrb[0].mxu0 %v3128
      %v4531 = vpop.f32.mrb[0].mxu0
      %v4532 = vadd.f32 0.0, %v4531
      %v4533 = vpop.f32.mrb[0].mxu0
      %4534 = vmatprep.mubr.f32.mxu0 0.0
      %4535 = vmatmul.mubr.f32.gmra.mrb[0].mxu0 %v3131
      %v4536 = vpop.f32.mrb[0].mxu0
      %v4537 = vadd.f32 0.0, %v4536
      %v4538 = vpop.f32.mrb[0].mxu0
      %4539 = vdwg.mxu0
      %v4541 = vsel %vm462, %v4537, 0
      %4543 = vmatprep.subr.mxu0 0.0
      %4544 = vmatpush1.msra.mxu0 %v4522
      %4545 = vmatprep.subr.mxu0 0.0
      %4546 = vmatpush1.msra.mxu0 %v4527
      %4547 = vmatprep.subr.mxu0 0.0
      %4548 = vmatpush1.msra.mxu0 %v4532
      %4549 = vmatprep.subr.mxu0 0.0
      %4550 = vmatpush1.msra.mxu0 %v4541
      %4551 = vmatprep.subr.mxu0 0.0
      %4552 = vmatpush1.msra.mxu0 0.0
      %4553 = vmatprep.subr.mxu0 0.0
      %4554 = vmatpush1.msra.mxu0 0.0
      %4555 = vmatprep.subr.mxu0 0.0
      %4556 = vmatpush1.msra.mxu0 0.0
      %4557 = vmatprep.subr.mxu0 0.0
      %4558 = vmatpush1.msra.mxu0 0.0
      %4559 = vmatprep.subr.mxu0 0.0
      %4560 = vmatpush1.msra.mxu0 0.0
      %4561 = vmatprep.subr.mxu0 0.0
      %4562 = vmatpush1.msra.mxu0 0.0
      %4563 = vmatprep.subr.mxu0 0.0
      %4564 = vmatpush1.msra.mxu0 0.0
      %4565 = vmatprep.subr.mxu0 0.0
      %4566 = vmatpush1.msra.mxu0 0.0
      %4567 = vmatprep.subr.mxu0 0.0
      %4568 = vmatpush1.msra.mxu0 0.0
      %4569 = vmatprep.subr.mxu0 0.0
      %4570 = vmatpush1.msra.mxu0 0.0
      %4571 = vmatprep.subr.mxu0 0.0
      %4572 = vmatpush1.msra.mxu0 0.0
      %4573 = vmatprep.subr.mxu0 0.0
      %4574 = vmatpush1.msra.mxu0 0.0
      %4575 = vmatprep.subr.mxu0 0.0
      %4576 = vmatpush1.msra.mxu0 0.0
      %4577 = vmatprep.subr.mxu0 0.0
      %4578 = vmatpush1.msra.mxu0 0.0
      %4579 = vmatprep.subr.mxu0 0.0
      %4580 = vmatpush1.msra.mxu0 0.0
      %4581 = vmatprep.subr.mxu0 0.0
      %4582 = vmatpush1.msra.mxu0 0.0
      %4583 = vmatprep.subr.mxu0 0.0
      %4584 = vmatpush1.msra.mxu0 0.0
      %4585 = vmatprep.subr.mxu0 0.0
      %4586 = vmatpush1.msra.mxu0 0.0
      %4587 = vmatprep.subr.mxu0 0.0
      %4588 = vmatpush1.msra.mxu0 0.0
      %4589 = vmatprep.subr.mxu0 0.0
      %4590 = vmatpush1.msra.mxu0 0.0
      %4591 = vmatprep.subr.mxu0 0.0
      %4592 = vmatpush1.msra.mxu0 0.0
      %4593 = vmatprep.subr.mxu0 0.0
      %4594 = vmatpush1.msra.mxu0 0.0
      %4595 = vmatprep.subr.mxu0 0.0
      %4596 = vmatpush1.msra.mxu0 0.0
      %4597 = vmatprep.subr.mxu0 0.0
      %4598 = vmatpush1.msra.mxu0 0.0
      %4599 = vmatprep.subr.mxu0 0.0
      %4600 = vmatpush1.msra.mxu0 0.0
      %4601 = vmatprep.subr.mxu0 0.0
      %4602 = vmatpush1.msra.mxu0 0.0
      %4603 = vmatprep.subr.mxu0 0.0
      %4604 = vmatpush1.msra.mxu0 0.0
      %4605 = vmatprep.subr.mxu0 0.0
      %4606 = vmatpush1.msra.mxu0 0.0
      %4607 = vmatprep.mubr.f32.mxu0 0.0
      %4608 = vmatmul.mubr.f32.gmra.mrb[0].mxu0 %v2070
      %v4609 = vpop.f32.mrb[0].mxu0
      %v4610 = vadd.f32 0.0, %v4609
      %v4611 = vpop.f32.mrb[0].mxu0
      %4612 = vmatprep.mubr.f32.mxu0 0.0
      %4613 = vmatmul.mubr.f32.gmra.mrb[0].mxu0 %v2073
      %v4614 = vpop.f32.mrb[0].mxu0
      %v4615 = vadd.f32 0.0, %v4614
      %v4616 = vpop.f32.mrb[0].mxu0
      %4617 = vmatprep.mubr.f32.mxu0 0.0
      %4618 = vmatmul.mubr.f32.gmra.mrb[0].mxu0 %v2076
      %v4619 = vpop.f32.mrb[0].mxu0
      %v4620 = vadd.f32 0.0, %v4619
      %v4621 = vpop.f32.mrb[0].mxu0
      %4622 = vmatprep.mubr.f32.mxu0 0.0
      %4623 = vmatmul.mubr.f32.gmra.mrb[0].mxu0 %v2079
      %v4624 = vpop.f32.mrb[0].mxu0
      %v4625 = vadd.f32 0.0, %v4624
      %v4626 = vpop.f32.mrb[0].mxu0
      %4627 = vdwg.mxu0
      %v4628 = vadd.f32 %v4451, %v4610
      %v4629 = vadd.f32 %v4452, %v4615
      %v4630 = vadd.f32 %v4453, %v4620
      %v4631 = vadd.f32 %v4454, %v4625
      %4632 = vmatprep.subr.mxu0 0.0
      %4633 = vmatpush1.msra.mxu0 %v2174
      %4634 = vmatprep.subr.mxu0 0.0
      %4635 = vmatpush1.msra.mxu0 %v2175
      %4636 = vmatprep.subr.mxu0 0.0
      %4637 = vmatpush1.msra.mxu0 %v2176
      %4638 = vmatprep.subr.mxu0 0.0
      %4639 = vmatpush1.msra.mxu0 %v2179
      %4640 = vmatprep.subr.mxu0 0.0
      %4641 = vmatpush1.msra.mxu0 0.0
      %4642 = vmatprep.subr.mxu0 0.0
      %4643 = vmatpush1.msra.mxu0 0.0
      %4644 = vmatprep.subr.mxu0 0.0
      %4645 = vmatpush1.msra.mxu0 0.0
      %4646 = vmatprep.subr.mxu0 0.0
      %4647 = vmatpush1.msra.mxu0 0.0
      %4648 = vmatprep.subr.mxu0 0.0
      %4649 = vmatpush1.msra.mxu0 0.0
      %4650 = vmatprep.subr.mxu0 0.0
      %4651 = vmatpush1.msra.mxu0 0.0
      %4652 = vmatprep.subr.mxu0 0.0
      %4653 = vmatpush1.msra.mxu0 0.0
      %4654 = vmatprep.subr.mxu0 0.0
      %4655 = vmatpush1.msra.mxu0 0.0
      %4656 = vmatprep.subr.mxu0 0.0
      %4657 = vmatpush1.msra.mxu0 0.0
      %4658 = vmatprep.subr.mxu0 0.0
      %4659 = vmatpush1.msra.mxu0 0.0
      %4660 = vmatprep.subr.mxu0 0.0
      %4661 = vmatpush1.msra.mxu0 0.0
      %4662 = vmatprep.subr.mxu0 0.0
      %4663 = vmatpush1.msra.mxu0 0.0
      %4664 = vmatprep.subr.mxu0 0.0
      %4665 = vmatpush1.msra.mxu0 0.0
      %4666 = vmatprep.subr.mxu0 0.0
      %4667 = vmatpush1.msra.mxu0 0.0
      %4668 = vmatprep.subr.mxu0 0.0
      %4669 = vmatpush1.msra.mxu0 0.0
      %4670 = vmatprep.subr.mxu0 0.0
      %4671 = vmatpush1.msra.mxu0 0.0
      %4672 = vmatprep.subr.mxu0 0.0
      %4673 = vmatpush1.msra.mxu0 0.0
      %4674 = vmatprep.subr.mxu0 0.0
      %4675 = vmatpush1.msra.mxu0 0.0
      %4676 = vmatprep.subr.mxu0 0.0
      %4677 = vmatpush1.msra.mxu0 0.0
      %4678 = vmatprep.subr.mxu0 0.0
      %4679 = vmatpush1.msra.mxu0 0.0
      %4680 = vmatprep.subr.mxu0 0.0
      %4681 = vmatpush1.msra.mxu0 0.0
      %4682 = vmatprep.subr.mxu0 0.0
      %4683 = vmatpush1.msra.mxu0 0.0
      %4684 = vmatprep.subr.mxu0 0.0
      %4685 = vmatpush1.msra.mxu0 0.0
      %4686 = vmatprep.subr.mxu0 0.0
      %4687 = vmatpush1.msra.mxu0 0.0
      %4688 = vmatprep.subr.mxu0 0.0
      %4689 = vmatpush1.msra.mxu0 0.0
      %4690 = vmatprep.subr.mxu0 0.0
      %4691 = vmatpush1.msra.mxu0 0.0
      %4692 = vmatprep.subr.mxu0 0.0
      %4693 = vmatpush1.msra.mxu0 0.0
      %4694 = vmatprep.subr.mxu0 0.0
      %4695 = vmatpush1.msra.mxu0 0.0
      %4696 = vmatprep.mubr.f32.mxu0 0.0
      %4697 = vmatmul.mubr.f32.gmra.mrb[0].mxu0 %v3122
      %v4698 = vpop.f32.mrb[0].mxu0
      %v4699 = vadd.f32 0.0, %v4698
      %v4700 = vpop.f32.mrb[0].mxu0
      %4701 = vmatprep.mubr.f32.mxu0 0.0
      %4702 = vmatmul.mubr.f32.gmra.mrb[0].mxu0 %v3125
      %v4703 = vpop.f32.mrb[0].mxu0
      %v4704 = vadd.f32 0.0, %v4703
      %v4705 = vpop.f32.mrb[0].mxu0
      %4706 = vmatprep.mubr.f32.mxu0 0.0
      %4707 = vmatmul.mubr.f32.gmra.mrb[0].mxu0 %v3128
      %v4708 = vpop.f32.mrb[0].mxu0
      %v4709 = vadd.f32 0.0, %v4708
      %v4710 = vpop.f32.mrb[0].mxu0
      %4711 = vmatprep.mubr.f32.mxu0 0.0
      %4712 = vmatmul.mubr.f32.gmra.mrb[0].mxu0 %v3131
      %v4713 = vpop.f32.mrb[0].mxu0
      %v4714 = vadd.f32 0.0, %v4713
      %v4715 = vpop.f32.mrb[0].mxu0
      %4716 = vdwg.mxu0
      %v4718 = vsel %vm462, %v4714, 0
      %4720 = vmatprep.subr.mxu0 0.0
      %4721 = vmatpush1.msra.mxu0 %v4699
      %4722 = vmatprep.subr.mxu0 0.0
      %4723 = vmatpush1.msra.mxu0 %v4704
      %4724 = vmatprep.subr.mxu0 0.0
      %4725 = vmatpush1.msra.mxu0 %v4709
      %4726 = vmatprep.subr.mxu0 0.0
      %4727 = vmatpush1.msra.mxu0 %v4718
      %4728 = vmatprep.subr.mxu0 0.0
      %4729 = vmatpush1.msra.mxu0 0.0
      %4730 = vmatprep.subr.mxu0 0.0
      %4731 = vmatpush1.msra.mxu0 0.0
      %4732 = vmatprep.subr.mxu0 0.0
      %4733 = vmatpush1.msra.mxu0 0.0
      %4734 = vmatprep.subr.mxu0 0.0
      %4735 = vmatpush1.msra.mxu0 0.0
      %4736 = vmatprep.subr.mxu0 0.0
      %4737 = vmatpush1.msra.mxu0 0.0
      %4738 = vmatprep.subr.mxu0 0.0
      %4739 = vmatpush1.msra.mxu0 0.0
      %4740 = vmatprep.subr.mxu0 0.0
      %4741 = vmatpush1.msra.mxu0 0.0
      %4742 = vmatprep.subr.mxu0 0.0
      %4743 = vmatpush1.msra.mxu0 0.0
      %4744 = vmatprep.subr.mxu0 0.0
      %4745 = vmatpush1.msra.mxu0 0.0
      %4746 = vmatprep.subr.mxu0 0.0
      %4747 = vmatpush1.msra.mxu0 0.0
      %4748 = vmatprep.subr.mxu0 0.0
      %4749 = vmatpush1.msra.mxu0 0.0
      %4750 = vmatprep.subr.mxu0 0.0
      %4751 = vmatpush1.msra.mxu0 0.0
      %4752 = vmatprep.subr.mxu0 0.0
      %4753 = vmatpush1.msra.mxu0 0.0
      %4754 = vmatprep.subr.mxu0 0.0
      %4755 = vmatpush1.msra.mxu0 0.0
      %4756 = vmatprep.subr.mxu0 0.0
      %4757 = vmatpush1.msra.mxu0 0.0
      %4758 = vmatprep.subr.mxu0 0.0
      %4759 = vmatpush1.msra.mxu0 0.0
      %4760 = vmatprep.subr.mxu0 0.0
      %4761 = vmatpush1.msra.mxu0 0.0
      %4762 = vmatprep.subr.mxu0 0.0
      %4763 = vmatpush1.msra.mxu0 0.0
      %4764 = vmatprep.subr.mxu0 0.0
      %4765 = vmatpush1.msra.mxu0 0.0
      %4766 = vmatprep.subr.mxu0 0.0
      %4767 = vmatpush1.msra.mxu0 0.0
      %4768 = vmatprep.subr.mxu0 0.0
      %4769 = vmatpush1.msra.mxu0 0.0
      %4770 = vmatprep.subr.mxu0 0.0
      %4771 = vmatpush1.msra.mxu0 0.0
      %4772 = vmatprep.subr.mxu0 0.0
      %4773 = vmatpush1.msra.mxu0 0.0
      %4774 = vmatprep.subr.mxu0 0.0
      %4775 = vmatpush1.msra.mxu0 0.0
      %4776 = vmatprep.subr.mxu0 0.0
      %4777 = vmatpush1.msra.mxu0 0.0
      %4778 = vmatprep.subr.mxu0 0.0
      %4779 = vmatpush1.msra.mxu0 0.0
      %4780 = vmatprep.subr.mxu0 0.0
      %4781 = vmatpush1.msra.mxu0 0.0
      %4782 = vmatprep.subr.mxu0 0.0
      %4783 = vmatpush1.msra.mxu0 0.0
      %4784 = vmatprep.mubr.f32.mxu0 0.0
      %4785 = vmatmul.mubr.f32.gmra.mrb[0].mxu0 %v2272
      %v4786 = vpop.f32.mrb[0].mxu0
      %v4787 = vadd.f32 0.0, %v4786
      %v4788 = vpop.f32.mrb[0].mxu0
      %4789 = vmatprep.mubr.f32.mxu0 0.0
      %4790 = vmatmul.mubr.f32.gmra.mrb[0].mxu0 %v2275
      %v4791 = vpop.f32.mrb[0].mxu0
      %v4792 = vadd.f32 0.0, %v4791
      %v4793 = vpop.f32.mrb[0].mxu0
      %4794 = vmatprep.mubr.f32.mxu0 0.0
      %4795 = vmatmul.mubr.f32.gmra.mrb[0].mxu0 %v2278
      %v4796 = vpop.f32.mrb[0].mxu0
      %v4797 = vadd.f32 0.0, %v4796
      %v4798 = vpop.f32.mrb[0].mxu0
      %4799 = vmatprep.mubr.f32.mxu0 0.0
      %4800 = vmatmul.mubr.f32.gmra.mrb[0].mxu0 %v2281
      %v4801 = vpop.f32.mrb[0].mxu0
      %v4802 = vadd.f32 0.0, %v4801
      %v4803 = vpop.f32.mrb[0].mxu0
      %4804 = vdwg.mxu0
      %v4805 = vadd.f32 %v4628, %v4787
      %v4806 = vadd.f32 %v4629, %v4792
      %v4807 = vadd.f32 %v4630, %v4797
      %v4808 = vadd.f32 %v4631, %v4802
      %4809 = vmatprep.subr.mxu0 0.0
      %4810 = vmatpush1.msra.mxu0 %v2376
      %4811 = vmatprep.subr.mxu0 0.0
      %4812 = vmatpush1.msra.mxu0 %v2377
      %4813 = vmatprep.subr.mxu0 0.0
      %4814 = vmatpush1.msra.mxu0 %v2378
      %4815 = vmatprep.subr.mxu0 0.0
      %4816 = vmatpush1.msra.mxu0 %v2381
      %4817 = vmatprep.subr.mxu0 0.0
      %4818 = vmatpush1.msra.mxu0 0.0
      %4819 = vmatprep.subr.mxu0 0.0
      %4820 = vmatpush1.msra.mxu0 0.0
      %4821 = vmatprep.subr.mxu0 0.0
      %4822 = vmatpush1.msra.mxu0 0.0
      %4823 = vmatprep.subr.mxu0 0.0
      %4824 = vmatpush1.msra.mxu0 0.0
      %4825 = vmatprep.subr.mxu0 0.0
      %4826 = vmatpush1.msra.mxu0 0.0
      %4827 = vmatprep.subr.mxu0 0.0
      %4828 = vmatpush1.msra.mxu0 0.0
      %4829 = vmatprep.subr.mxu0 0.0
      %4830 = vmatpush1.msra.mxu0 0.0
      %4831 = vmatprep.subr.mxu0 0.0
      %4832 = vmatpush1.msra.mxu0 0.0
      %4833 = vmatprep.subr.mxu0 0.0
      %4834 = vmatpush1.msra.mxu0 0.0
      %4835 = vmatprep.subr.mxu0 0.0
      %4836 = vmatpush1.msra.mxu0 0.0
      %4837 = vmatprep.subr.mxu0 0.0
      %4838 = vmatpush1.msra.mxu0 0.0
      %4839 = vmatprep.subr.mxu0 0.0
      %4840 = vmatpush1.msra.mxu0 0.0
      %4841 = vmatprep.subr.mxu0 0.0
      %4842 = vmatpush1.msra.mxu0 0.0
      %4843 = vmatprep.subr.mxu0 0.0
      %4844 = vmatpush1.msra.mxu0 0.0
      %4845 = vmatprep.subr.mxu0 0.0
      %4846 = vmatpush1.msra.mxu0 0.0
      %4847 = vmatprep.subr.mxu0 0.0
      %4848 = vmatpush1.msra.mxu0 0.0
      %4849 = vmatprep.subr.mxu0 0.0
      %4850 = vmatpush1.msra.mxu0 0.0
      %4851 = vmatprep.subr.mxu0 0.0
      %4852 = vmatpush1.msra.mxu0 0.0
      %4853 = vmatprep.subr.mxu0 0.0
      %4854 = vmatpush1.msra.mxu0 0.0
      %4855 = vmatprep.subr.mxu0 0.0
      %4856 = vmatpush1.msra.mxu0 0.0
      %4857 = vmatprep.subr.mxu0 0.0
      %4858 = vmatpush1.msra.mxu0 0.0
      %4859 = vmatprep.subr.mxu0 0.0
      %4860 = vmatpush1.msra.mxu0 0.0
      %4861 = vmatprep.subr.mxu0 0.0
      %4862 = vmatpush1.msra.mxu0 0.0
      %4863 = vmatprep.subr.mxu0 0.0
      %4864 = vmatpush1.msra.mxu0 0.0
      %4865 = vmatprep.subr.mxu0 0.0
      %4866 = vmatpush1.msra.mxu0 0.0
      %4867 = vmatprep.subr.mxu0 0.0
      %4868 = vmatpush1.msra.mxu0 0.0
      %4869 = vmatprep.subr.mxu0 0.0
      %4870 = vmatpush1.msra.mxu0 0.0
      %4871 = vmatprep.subr.mxu0 0.0
      %4872 = vmatpush1.msra.mxu0 0.0
      %4873 = vmatprep.mubr.f32.mxu0 0.0
      %4874 = vmatmul.mubr.f32.gmra.mrb[0].mxu0 %v3122
      %v4875 = vpop.f32.mrb[0].mxu0
      %v4876 = vadd.f32 0.0, %v4875
      %v4877 = vpop.f32.mrb[0].mxu0
      %4878 = vmatprep.mubr.f32.mxu0 0.0
      %4879 = vmatmul.mubr.f32.gmra.mrb[0].mxu0 %v3125
      %v4880 = vpop.f32.mrb[0].mxu0
      %v4881 = vadd.f32 0.0, %v4880
      %v4882 = vpop.f32.mrb[0].mxu0
      %4883 = vmatprep.mubr.f32.mxu0 0.0
      %4884 = vmatmul.mubr.f32.gmra.mrb[0].mxu0 %v3128
      %v4885 = vpop.f32.mrb[0].mxu0
      %v4886 = vadd.f32 0.0, %v4885
      %v4887 = vpop.f32.mrb[0].mxu0
      %4888 = vmatprep.mubr.f32.mxu0 0.0
      %4889 = vmatmul.mubr.f32.gmra.mrb[0].mxu0 %v3131
      %v4890 = vpop.f32.mrb[0].mxu0
      %v4891 = vadd.f32 0.0, %v4890
      %v4892 = vpop.f32.mrb[0].mxu0
      %4893 = vdwg.mxu0
      %v4895 = vsel %vm462, %v4891, 0
      %4897 = vmatprep.subr.mxu0 0.0
      %4898 = vmatpush1.msra.mxu0 %v4876
      %4899 = vmatprep.subr.mxu0 0.0
      %4900 = vmatpush1.msra.mxu0 %v4881
      %4901 = vmatprep.subr.mxu0 0.0
      %4902 = vmatpush1.msra.mxu0 %v4886
      %4903 = vmatprep.subr.mxu0 0.0
      %4904 = vmatpush1.msra.mxu0 %v4895
      %4905 = vmatprep.subr.mxu0 0.0
      %4906 = vmatpush1.msra.mxu0 0.0
      %4907 = vmatprep.subr.mxu0 0.0
      %4908 = vmatpush1.msra.mxu0 0.0
      %4909 = vmatprep.subr.mxu0 0.0
      %4910 = vmatpush1.msra.mxu0 0.0
      %4911 = vmatprep.subr.mxu0 0.0
      %4912 = vmatpush1.msra.mxu0 0.0
      %4913 = vmatprep.subr.mxu0 0.0
      %4914 = vmatpush1.msra.mxu0 0.0
      %4915 = vmatprep.subr.mxu0 0.0
      %4916 = vmatpush1.msra.mxu0 0.0
      %4917 = vmatprep.subr.mxu0 0.0
      %4918 = vmatpush1.msra.mxu0 0.0
      %4919 = vmatprep.subr.mxu0 0.0
      %4920 = vmatpush1.msra.mxu0 0.0
      %4921 = vmatprep.subr.mxu0 0.0
      %4922 = vmatpush1.msra.mxu0 0.0
      %4923 = vmatprep.subr.mxu0 0.0
      %4924 = vmatpush1.msra.mxu0 0.0
      %4925 = vmatprep.subr.mxu0 0.0
      %4926 = vmatpush1.msra.mxu0 0.0
      %4927 = vmatprep.subr.mxu0 0.0
      %4928 = vmatpush1.msra.mxu0 0.0
      %4929 = vmatprep.subr.mxu0 0.0
      %4930 = vmatpush1.msra.mxu0 0.0
      %4931 = vmatprep.subr.mxu0 0.0
      %4932 = vmatpush1.msra.mxu0 0.0
      %4933 = vmatprep.subr.mxu0 0.0
      %4934 = vmatpush1.msra.mxu0 0.0
      %4935 = vmatprep.subr.mxu0 0.0
      %4936 = vmatpush1.msra.mxu0 0.0
      %4937 = vmatprep.subr.mxu0 0.0
      %4938 = vmatpush1.msra.mxu0 0.0
      %4939 = vmatprep.subr.mxu0 0.0
      %4940 = vmatpush1.msra.mxu0 0.0
      %4941 = vmatprep.subr.mxu0 0.0
      %4942 = vmatpush1.msra.mxu0 0.0
      %4943 = vmatprep.subr.mxu0 0.0
      %4944 = vmatpush1.msra.mxu0 0.0
      %4945 = vmatprep.subr.mxu0 0.0
      %4946 = vmatpush1.msra.mxu0 0.0
      %4947 = vmatprep.subr.mxu0 0.0
      %4948 = vmatpush1.msra.mxu0 0.0
      %4949 = vmatprep.subr.mxu0 0.0
      %4950 = vmatpush1.msra.mxu0 0.0
      %4951 = vmatprep.subr.mxu0 0.0
      %4952 = vmatpush1.msra.mxu0 0.0
      %4953 = vmatprep.subr.mxu0 0.0
      %4954 = vmatpush1.msra.mxu0 0.0
      %4955 = vmatprep.subr.mxu0 0.0
      %4956 = vmatpush1.msra.mxu0 0.0
      %4957 = vmatprep.subr.mxu0 0.0
      %4958 = vmatpush1.msra.mxu0 0.0
      %4959 = vmatprep.subr.mxu0 0.0
      %4960 = vmatpush1.msra.mxu0 0.0
      %4961 = vmatprep.mubr.f32.mxu0 0.0
      %4962 = vmatmul.mubr.f32.gmra.mrb[0].mxu0 %v2474
      %v4963 = vpop.f32.mrb[0].mxu0
      %v4964 = vadd.f32 0.0, %v4963
      %v4965 = vpop.f32.mrb[0].mxu0
      %4966 = vmatprep.mubr.f32.mxu0 0.0
      %4967 = vmatmul.mubr.f32.gmra.mrb[0].mxu0 %v2477
      %v4968 = vpop.f32.mrb[0].mxu0
      %v4969 = vadd.f32 0.0, %v4968
      %v4970 = vpop.f32.mrb[0].mxu0
      %4971 = vmatprep.mubr.f32.mxu0 0.0
      %4972 = vmatmul.mubr.f32.gmra.mrb[0].mxu0 %v2480
      %v4973 = vpop.f32.mrb[0].mxu0
      %v4974 = vadd.f32 0.0, %v4973
      %v4975 = vpop.f32.mrb[0].mxu0
      %4976 = vmatprep.mubr.f32.mxu0 0.0
      %4977 = vmatmul.mubr.f32.gmra.mrb[0].mxu0 %v2483
      %v4978 = vpop.f32.mrb[0].mxu0
      %v4979 = vadd.f32 0.0, %v4978
      %v4980 = vpop.f32.mrb[0].mxu0
      %4981 = vdwg.mxu0
      %v4982 = vadd.f32 %v4805, %v4964
      %v4983 = vadd.f32 %v4806, %v4969
      %v4984 = vadd.f32 %v4807, %v4974
      %v4985 = vadd.f32 %v4808, %v4979
      %v4986 = vadd.f32 %v4982, %v2584
      %v4987 = vadd.f32 %v4983, %v2589
      %v4988 = vadd.f32 %v4984, %v2594
      %v4989 = vadd.f32 %v4985, %v2599
      %v4991 = vsel %vm449, %v4986, 0
      %v4994 = vsel %vm449, %v4987, 0
      %v4997 = vsel %vm449, %v4988, 0
      %v5000 = vsel %vm449, %v4989, 0
      %5002 = vmatprep.subr.mxu0 0.0
      %5003 = vmatpush1.xpose.msra.mxu0 %v4991
      %5004 = vmatprep.subr.mxu0 0.0
      %5005 = vmatpush1.xpose.msra.mxu0 %v4994
      %5006 = vmatprep.subr.mxu0 0.0
      %5007 = vmatpush1.xpose.msra.mxu0 %v4997
      %5008 = vmatprep.subr.mxu0 0.0
      %5009 = vmatpush1.xpose.msra.mxu0 %v5000
      %5010 = vmatprep.subr.mxu0 0.0
      %5011 = vmatpush1.xpose.msra.mxu0 0.0
      %5012 = vmatprep.subr.mxu0 0.0
      %5013 = vmatpush1.xpose.msra.mxu0 0.0
      %5014 = vmatprep.subr.mxu0 0.0
      %5015 = vmatpush1.xpose.msra.mxu0 0.0
      %5016 = vmatprep.subr.mxu0 0.0
      %5017 = vmatpush1.xpose.msra.mxu0 0.0
      %5018 = vmatprep.subr.mxu0 0.0
      %5019 = vmatpush1.xpose.msra.mxu0 0.0
      %5020 = vmatprep.subr.mxu0 0.0
      %5021 = vmatpush1.xpose.msra.mxu0 0.0
      %5022 = vmatprep.subr.mxu0 0.0
      %5023 = vmatpush1.xpose.msra.mxu0 0.0
      %5024 = vmatprep.subr.mxu0 0.0
      %5025 = vmatpush1.xpose.msra.mxu0 0.0
      %5026 = vmatprep.subr.mxu0 0.0
      %5027 = vmatpush1.xpose.msra.mxu0 0.0
      %5028 = vmatprep.subr.mxu0 0.0
      %5029 = vmatpush1.xpose.msra.mxu0 0.0
      %5030 = vmatprep.subr.mxu0 0.0
      %5031 = vmatpush1.xpose.msra.mxu0 0.0
      %5032 = vmatprep.subr.mxu0 0.0
      %5033 = vmatpush1.xpose.msra.mxu0 0.0
      %5034 = vmatprep.subr.mxu0 0.0
      %5035 = vmatpush1.xpose.msra.mxu0 0.0
      %5036 = vmatprep.subr.mxu0 0.0
      %5037 = vmatpush1.xpose.msra.mxu0 0.0
      %5038 = vmatprep.subr.mxu0 0.0
      %5039 = vmatpush1.xpose.msra.mxu0 0.0
      %5040 = vmatprep.subr.mxu0 0.0
      %5041 = vmatpush1.xpose.msra.mxu0 0.0
      %5042 = vmatprep.subr.mxu0 0.0
      %5043 = vmatpush1.xpose.msra.mxu0 0.0
      %5044 = vmatprep.subr.mxu0 0.0
      %5045 = vmatpush1.xpose.msra.mxu0 0.0
      %5046 = vmatprep.subr.mxu0 0.0
      %5047 = vmatpush1.xpose.msra.mxu0 0.0
      %5048 = vmatprep.subr.mxu0 0.0
      %5049 = vmatpush1.xpose.msra.mxu0 0.0
      %5050 = vmatprep.subr.mxu0 0.0
      %5051 = vmatpush1.xpose.msra.mxu0 0.0
      %5052 = vmatprep.subr.mxu0 0.0
      %5053 = vmatpush1.xpose.msra.mxu0 0.0
      %5054 = vmatprep.subr.mxu0 0.0
      %5055 = vmatpush1.xpose.msra.mxu0 0.0
      %5056 = vmatprep.subr.mxu0 0.0
      %5057 = vmatpush1.xpose.msra.mxu0 0.0
      %5058 = vmatprep.subr.mxu0 0.0
      %5059 = vmatpush1.xpose.msra.mxu0 0.0
      %5060 = vmatprep.subr.mxu0 0.0
      %5061 = vmatpush1.xpose.msra.mxu0 0.0
      %5062 = vmatprep.subr.mxu0 0.0
      %5063 = vmatpush1.xpose.msra.mxu0 0.0
      %5064 = vmatprep.subr.mxu0 0.0
      %5065 = vmatpush1.xpose.msra.mxu0 0.0
      %5066 = vmatprep.mubr.f32.mxu0 0.0
      %5067 = vmatmul.mubr.f32.gmra.mrb[0].mxu0 %v4991
      %v5068 = vpop.f32.mrb[0].mxu0
      %v5069 = vadd.f32 0.0, %v5068
      %v5070 = vpop.f32.mrb[0].mxu0
      %5071 = vmatprep.mubr.f32.mxu0 0.0
      %5072 = vmatmul.mubr.f32.gmra.mrb[0].mxu0 %v4994
      %v5073 = vpop.f32.mrb[0].mxu0
      %v5074 = vadd.f32 0.0, %v5073
      %v5075 = vpop.f32.mrb[0].mxu0
      %5076 = vmatprep.mubr.f32.mxu0 0.0
      %5077 = vmatmul.mubr.f32.gmra.mrb[0].mxu0 %v4997
      %v5078 = vpop.f32.mrb[0].mxu0
      %v5079 = vadd.f32 0.0, %v5078
      %v5080 = vpop.f32.mrb[0].mxu0
      %5081 = vmatprep.mubr.f32.mxu0 0.0
      %5082 = vmatmul.mubr.f32.gmra.mrb[0].mxu0 %v5000
      %v5083 = vpop.f32.mrb[0].mxu0
      %v5084 = vadd.f32 0.0, %v5083
      %v5085 = vpop.f32.mrb[0].mxu0
      %5086 = vdwg.mxu0
      %vm5087 = vcmp.gt.f32.partialorder %v5069, 0.0
      %vm5088 = vcmp.gt.f32.partialorder %v5074, 0.0
      %vm5089 = vcmp.gt.f32.partialorder %v5079, 0.0
      %vm5090 = vcmp.gt.f32.partialorder %v5084, 0.0
      %v5091 = vmul.f32 %v5069, 0.2
      %v5092 = vmul.f32 %v5074, 0.2
      %v5093 = vmul.f32 %v5079, 0.2
      %v5094 = vmul.f32 %v5084, 0.2
      %v5095 = vsel %vm5087, %v5069, %v5091
      %v5096 = vsel %vm5088, %v5074, %v5092
      %v5097 = vsel %vm5089, %v5079, %v5093
      %v5098 = vsel %vm5090, %v5084, %v5094
      %v5099 = vsel %vm2714, %v5095, -inf
      %v5100 = vsel %vm2714, %v5096, -inf
      %v5101 = vsel %vm2714, %v5097, -inf
      %v5102 = vsel %vm2714, %v5098, -inf
      %v5103 = vmax.f32 %v5099, %v5100
      %v5104 = vmax.f32 %v5101, %v5102
      %v5105 = vmax.f32 %v5103, %v5104
      %v5106 = vrot.slane %v5105, 4
      %v5107 = vmax.f32 %v5105, %v5106
      %v5108 = vrot.slane %v5107, 2
      %v5109 = vmax.f32 %v5107, %v5108
      %v5110 = vrot.slane %v5109, 1
      %v5111 = vmax.f32 %v5109, %v5110
      %v5112 = vsub.f32 %v5095, %v5111
      %v5113 = vsub.f32 %v5096, %v5111
      %v5114 = vsub.f32 %v5097, %v5111
      %v5115 = vsub.f32 %v5098, %v5111
      %v5116 = vmul.f32 %v5112, 1.442695
      %v5117 = vpow.pop %v5116
      %v5118 = vmul.f32 %v5113, 1.442695
      %v5119 = vpow.pop %v5118
      %v5120 = vmul.f32 %v5114, 1.442695
      %v5121 = vpow.pop %v5120
      %v5122 = vmul.f32 %v5115, 1.442695
      %v5123 = vpow.pop %v5122
      %v5124 = vsel %vm2714, %v5117, 0.0
      %v5125 = vsel %vm2714, %v5119, 0.0
      %v5126 = vadd.f32 %v5124, %v5125
      %v5127 = vsel %vm2714, %v5121, 0.0
      %v5128 = vadd.f32 %v5126, %v5127
      %v5129 = vsel %vm2714, %v5123, 0.0
      %v5130 = vadd.f32 %v5128, %v5129
      %v5131 = vrot.slane %v5130, 4
      %v5132 = vadd.f32 %v5130, %v5131
      %v5133 = vrot.slane %v5132, 2
      %v5134 = vadd.f32 %v5132, %v5133
      %v5135 = vrot.slane %v5134, 1
      %v5136 = vadd.f32 %v5134, %v5135
      %v5137 = vrcp.pop %v5136
      %v5138 = vmul.f32 %v5117, %v5137
      %v5139 = vmul.f32 %v5119, %v5137
      %v5140 = vmul.f32 %v5121, %v5137
      %v5141 = vmul.f32 %v5123, %v5137
      %v5143 = vsel %vm2714, %v5138, 0
      %v5146 = vsel %vm2714, %v5139, 0
      %v5149 = vsel %vm2714, %v5140, 0
      %v5152 = vsel %vm2714, %v5141, 0
      %5154 = vmatprep.subr.mxu0 0.0
      %5155 = vmatpush1.msra.mxu0 %v4986
      %5156 = vmatprep.subr.mxu0 0.0
      %5157 = vmatpush1.msra.mxu0 %v4987
      %5158 = vmatprep.subr.mxu0 0.0
      %5159 = vmatpush1.msra.mxu0 %v4988
      %5160 = vmatprep.subr.mxu0 0.0
      %5161 = vmatpush1.msra.mxu0 %v4989
      %5162 = vmatprep.subr.mxu0 0.0
      %5163 = vmatpush1.msra.mxu0 0.0
      %5164 = vmatprep.subr.mxu0 0.0
      %5165 = vmatpush1.msra.mxu0 0.0
      %5166 = vmatprep.subr.mxu0 0.0
      %5167 = vmatpush1.msra.mxu0 0.0
      %5168 = vmatprep.subr.mxu0 0.0
      %5169 = vmatpush1.msra.mxu0 0.0
      %5170 = vmatprep.subr.mxu0 0.0
      %5171 = vmatpush1.msra.mxu0 0.0
      %5172 = vmatprep.subr.mxu0 0.0
      %5173 = vmatpush1.msra.mxu0 0.0
      %5174 = vmatprep.subr.mxu0 0.0
      %5175 = vmatpush1.msra.mxu0 0.0
      %5176 = vmatprep.subr.mxu0 0.0
      %5177 = vmatpush1.msra.mxu0 0.0
      %5178 = vmatprep.subr.mxu0 0.0
      %5179 = vmatpush1.msra.mxu0 0.0
      %5180 = vmatprep.subr.mxu0 0.0
      %5181 = vmatpush1.msra.mxu0 0.0
      %5182 = vmatprep.subr.mxu0 0.0
      %5183 = vmatpush1.msra.mxu0 0.0
      %5184 = vmatprep.subr.mxu0 0.0
      %5185 = vmatpush1.msra.mxu0 0.0
      %5186 = vmatprep.subr.mxu0 0.0
      %5187 = vmatpush1.msra.mxu0 0.0
      %5188 = vmatprep.subr.mxu0 0.0
      %5189 = vmatpush1.msra.mxu0 0.0
      %5190 = vmatprep.subr.mxu0 0.0
      %5191 = vmatpush1.msra.mxu0 0.0
      %5192 = vmatprep.subr.mxu0 0.0
      %5193 = vmatpush1.msra.mxu0 0.0
      %5194 = vmatprep.subr.mxu0 0.0
      %5195 = vmatpush1.msra.mxu0 0.0
      %5196 = vmatprep.subr.mxu0 0.0
      %5197 = vmatpush1.msra.mxu0 0.0
      %5198 = vmatprep.subr.mxu0 0.0
      %5199 = vmatpush1.msra.mxu0 0.0
      %5200 = vmatprep.subr.mxu0 0.0
      %5201 = vmatpush1.msra.mxu0 0.0
      %5202 = vmatprep.subr.mxu0 0.0
      %5203 = vmatpush1.msra.mxu0 0.0
      %5204 = vmatprep.subr.mxu0 0.0
      %5205 = vmatpush1.msra.mxu0 0.0
      %5206 = vmatprep.subr.mxu0 0.0
      %5207 = vmatpush1.msra.mxu0 0.0
      %5208 = vmatprep.subr.mxu0 0.0
      %5209 = vmatpush1.msra.mxu0 0.0
      %5210 = vmatprep.subr.mxu0 0.0
      %5211 = vmatpush1.msra.mxu0 0.0
      %5212 = vmatprep.subr.mxu0 0.0
      %5213 = vmatpush1.msra.mxu0 0.0
      %5214 = vmatprep.subr.mxu0 0.0
      %5215 = vmatpush1.msra.mxu0 0.0
      %5216 = vmatprep.subr.mxu0 0.0
      %5217 = vmatpush1.msra.mxu0 0.0
      %5218 = vmatprep.mubr.f32.mxu0 0.0
      %5219 = vmatmul.mubr.f32.gmra.mrb[0].mxu0 %v5143
      %v5220 = vpop.f32.mrb[0].mxu0
      %v5221 = vadd.f32 0.0, %v5220
      %v5222 = vpop.f32.mrb[0].mxu0
      %5223 = vmatprep.mubr.f32.mxu0 0.0
      %5224 = vmatmul.mubr.f32.gmra.mrb[0].mxu0 %v5146
      %v5225 = vpop.f32.mrb[0].mxu0
      %v5226 = vadd.f32 0.0, %v5225
      %v5227 = vpop.f32.mrb[0].mxu0
      %5228 = vmatprep.mubr.f32.mxu0 0.0
      %5229 = vmatmul.mubr.f32.gmra.mrb[0].mxu0 %v5149
      %v5230 = vpop.f32.mrb[0].mxu0
      %v5231 = vadd.f32 0.0, %v5230
      %v5232 = vpop.f32.mrb[0].mxu0
      %5233 = vmatprep.mubr.f32.mxu0 0.0
      %5234 = vmatmul.mubr.f32.gmra.mrb[0].mxu0 %v5152
      %v5235 = vpop.f32.mrb[0].mxu0
      %v5236 = vadd.f32 0.0, %v5235
      %v5237 = vpop.f32.mrb[0].mxu0
      %5238 = vdwg.mxu0
      %v5239 = vmul.f32 %v5221, %v2862
      %v5240 = vmul.f32 %v5226, %v2867
      %v5241 = vmul.f32 %v5231, %v2872
      %v5242 = vmul.f32 %v5236, %v2877
      %v5243 = vadd.f32 %v5239, %v2890
      %v5244 = vadd.f32 %v5240, %v2895
      %v5245 = vadd.f32 %v5241, %v2900
      %v5246 = vadd.f32 %v5242, %v2905
      %v5248 = vsel %vm449, %v5243, 0
      %v5251 = vsel %vm449, %v5244, 0
      %v5254 = vsel %vm449, %v5245, 0
      %v5257 = vsel %vm449, %v5246, 0
      %5259 = vmatprep.subr.mxu0 0.0
      %5260 = vmatpush1.msra.mxu0 %v2911
      %5261 = vmatprep.subr.mxu0 0.0
      %5262 = vmatpush1.msra.mxu0 %v2912
      %5263 = vmatprep.subr.mxu0 0.0
      %5264 = vmatpush1.msra.mxu0 %v2913
      %5265 = vmatprep.subr.mxu0 0.0
      %5266 = vmatpush1.msra.mxu0 %v2928
      %5267 = vmatprep.subr.mxu0 0.0
      %5268 = vmatpush1.msra.mxu0 0.0
      %5269 = vmatprep.subr.mxu0 0.0
      %5270 = vmatpush1.msra.mxu0 0.0
      %5271 = vmatprep.subr.mxu0 0.0
      %5272 = vmatpush1.msra.mxu0 0.0
      %5273 = vmatprep.subr.mxu0 0.0
      %5274 = vmatpush1.msra.mxu0 0.0
      %5275 = vmatprep.subr.mxu0 0.0
      %5276 = vmatpush1.msra.mxu0 0.0
      %5277 = vmatprep.subr.mxu0 0.0
      %5278 = vmatpush1.msra.mxu0 0.0
      %5279 = vmatprep.subr.mxu0 0.0
      %5280 = vmatpush1.msra.mxu0 0.0
      %5281 = vmatprep.subr.mxu0 0.0
      %5282 = vmatpush1.msra.mxu0 0.0
      %5283 = vmatprep.subr.mxu0 0.0
      %5284 = vmatpush1.msra.mxu0 0.0
      %5285 = vmatprep.subr.mxu0 0.0
      %5286 = vmatpush1.msra.mxu0 0.0
      %5287 = vmatprep.subr.mxu0 0.0
      %5288 = vmatpush1.msra.mxu0 0.0
      %5289 = vmatprep.subr.mxu0 0.0
      %5290 = vmatpush1.msra.mxu0 0.0
      %5291 = vmatprep.subr.mxu0 0.0
      %5292 = vmatpush1.msra.mxu0 0.0
      %5293 = vmatprep.subr.mxu0 0.0
      %5294 = vmatpush1.msra.mxu0 0.0
      %5295 = vmatprep.subr.mxu0 0.0
      %5296 = vmatpush1.msra.mxu0 0.0
      %5297 = vmatprep.subr.mxu0 0.0
      %5298 = vmatpush1.msra.mxu0 0.0
      %5299 = vmatprep.subr.mxu0 0.0
      %5300 = vmatpush1.msra.mxu0 0.0
      %5301 = vmatprep.subr.mxu0 0.0
      %5302 = vmatpush1.msra.mxu0 0.0
      %5303 = vmatprep.subr.mxu0 0.0
      %5304 = vmatpush1.msra.mxu0 0.0
      %5305 = vmatprep.subr.mxu0 0.0
      %5306 = vmatpush1.msra.mxu0 0.0
      %5307 = vmatprep.subr.mxu0 0.0
      %5308 = vmatpush1.msra.mxu0 0.0
      %5309 = vmatprep.subr.mxu0 0.0
      %5310 = vmatpush1.msra.mxu0 0.0
      %5311 = vmatprep.subr.mxu0 0.0
      %5312 = vmatpush1.msra.mxu0 0.0
      %5313 = vmatprep.subr.mxu0 0.0
      %5314 = vmatpush1.msra.mxu0 0.0
      %5315 = vmatprep.subr.mxu0 0.0
      %5316 = vmatpush1.msra.mxu0 0.0
      %5317 = vmatprep.subr.mxu0 0.0
      %5318 = vmatpush1.msra.mxu0 0.0
      %5319 = vmatprep.subr.mxu0 0.0
      %5320 = vmatpush1.msra.mxu0 0.0
      %5321 = vmatprep.subr.mxu0 0.0
      %5322 = vmatpush1.msra.mxu0 0.0
      %5323 = vmatprep.mubr.f32.mxu0 0.0
      %5324 = vmatmul.mubr.f32.gmra.mrb[0].mxu0 %v5248
      %v5325 = vpop.f32.mrb[0].mxu0
      %v5326 = vadd.f32 0.0, %v5325
      %v5327 = vpop.f32.mrb[0].mxu0
      %5328 = vmatprep.mubr.f32.mxu0 0.0
      %5329 = vmatmul.mubr.f32.gmra.mrb[0].mxu0 %v5251
      %v5330 = vpop.f32.mrb[0].mxu0
      %v5331 = vadd.f32 0.0, %v5330
      %v5332 = vpop.f32.mrb[0].mxu0
      %5333 = vmatprep.mubr.f32.mxu0 0.0
      %5334 = vmatmul.mubr.f32.gmra.mrb[0].mxu0 %v5254
      %v5335 = vpop.f32.mrb[0].mxu0
      %v5336 = vadd.f32 0.0, %v5335
      %v5337 = vpop.f32.mrb[0].mxu0
      %5338 = vmatprep.mubr.f32.mxu0 0.0
      %5339 = vmatmul.mubr.f32.gmra.mrb[0].mxu0 %v5257
      %v5340 = vpop.f32.mrb[0].mxu0
      %v5341 = vadd.f32 0.0, %v5340
      %v5342 = vpop.f32.mrb[0].mxu0
      %5343 = vdwg.mxu0
      %5344 = vmatprep.subr.mxu0 0.0
      %5345 = vmatpush1.msra.mxu0 %v3016
      %5346 = vmatprep.subr.mxu0 0.0
      %5347 = vmatpush1.msra.mxu0 %v3017
      %5348 = vmatprep.subr.mxu0 0.0
      %5349 = vmatpush1.msra.mxu0 %v3018
      %5350 = vmatprep.subr.mxu0 0.0
      %5351 = vmatpush1.msra.mxu0 %v3021
      %5352 = vmatprep.subr.mxu0 0.0
      %5353 = vmatpush1.msra.mxu0 0.0
      %5354 = vmatprep.subr.mxu0 0.0
      %5355 = vmatpush1.msra.mxu0 0.0
      %5356 = vmatprep.subr.mxu0 0.0
      %5357 = vmatpush1.msra.mxu0 0.0
      %5358 = vmatprep.subr.mxu0 0.0
      %5359 = vmatpush1.msra.mxu0 0.0
      %5360 = vmatprep.subr.mxu0 0.0
      %5361 = vmatpush1.msra.mxu0 0.0
      %5362 = vmatprep.subr.mxu0 0.0
      %5363 = vmatpush1.msra.mxu0 0.0
      %5364 = vmatprep.subr.mxu0 0.0
      %5365 = vmatpush1.msra.mxu0 0.0
      %5366 = vmatprep.subr.mxu0 0.0
      %5367 = vmatpush1.msra.mxu0 0.0
      %5368 = vmatprep.subr.mxu0 0.0
      %5369 = vmatpush1.msra.mxu0 0.0
      %5370 = vmatprep.subr.mxu0 0.0
      %5371 = vmatpush1.msra.mxu0 0.0
      %5372 = vmatprep.subr.mxu0 0.0
      %5373 = vmatpush1.msra.mxu0 0.0
      %5374 = vmatprep.subr.mxu0 0.0
      %5375 = vmatpush1.msra.mxu0 0.0
      %5376 = vmatprep.subr.mxu0 0.0
      %5377 = vmatpush1.msra.mxu0 0.0
      %5378 = vmatprep.subr.mxu0 0.0
      %5379 = vmatpush1.msra.mxu0 0.0
      %5380 = vmatprep.subr.mxu0 0.0
      %5381 = vmatpush1.msra.mxu0 0.0
      %5382 = vmatprep.subr.mxu0 0.0
      %5383 = vmatpush1.msra.mxu0 0.0
      %5384 = vmatprep.subr.mxu0 0.0
      %5385 = vmatpush1.msra.mxu0 0.0
      %5386 = vmatprep.subr.mxu0 0.0
      %5387 = vmatpush1.msra.mxu0 0.0
      %5388 = vmatprep.subr.mxu0 0.0
      %5389 = vmatpush1.msra.mxu0 0.0
      %5390 = vmatprep.subr.mxu0 0.0
      %5391 = vmatpush1.msra.mxu0 0.0
      %5392 = vmatprep.subr.mxu0 0.0
      %5393 = vmatpush1.msra.mxu0 0.0
      %5394 = vmatprep.subr.mxu0 0.0
      %5395 = vmatpush1.msra.mxu0 0.0
      %5396 = vmatprep.subr.mxu0 0.0
      %5397 = vmatpush1.msra.mxu0 0.0
      %5398 = vmatprep.subr.mxu0 0.0
      %5399 = vmatpush1.msra.mxu0 0.0
      %5400 = vmatprep.subr.mxu0 0.0
      %5401 = vmatpush1.msra.mxu0 0.0
      %5402 = vmatprep.subr.mxu0 0.0
      %5403 = vmatpush1.msra.mxu0 0.0
      %5404 = vmatprep.subr.mxu0 0.0
      %5405 = vmatpush1.msra.mxu0 0.0
      %5406 = vmatprep.subr.mxu0 0.0
      %5407 = vmatpush1.msra.mxu0 0.0
      %5408 = vmatprep.mubr.f32.mxu0 0.0
      %5409 = vmatmul.mubr.f32.gmra.mrb[0].mxu0 %v5248
      %v5410 = vpop.f32.mrb[0].mxu0
      %v5411 = vadd.f32 0.0, %v5410
      %v5412 = vpop.f32.mrb[0].mxu0
      %5413 = vmatprep.mubr.f32.mxu0 0.0
      %5414 = vmatmul.mubr.f32.gmra.mrb[0].mxu0 %v5251
      %v5415 = vpop.f32.mrb[0].mxu0
      %v5416 = vadd.f32 0.0, %v5415
      %v5417 = vpop.f32.mrb[0].mxu0
      %5418 = vmatprep.mubr.f32.mxu0 0.0
      %5419 = vmatmul.mubr.f32.gmra.mrb[0].mxu0 %v5254
      %v5420 = vpop.f32.mrb[0].mxu0
      %v5421 = vadd.f32 0.0, %v5420
      %v5422 = vpop.f32.mrb[0].mxu0
      %5423 = vmatprep.mubr.f32.mxu0 0.0
      %5424 = vmatmul.mubr.f32.gmra.mrb[0].mxu0 %v5257
      %v5425 = vpop.f32.mrb[0].mxu0
      %v5426 = vadd.f32 0.0, %v5425
      %v5427 = vpop.f32.mrb[0].mxu0
      %5428 = vdwg.mxu0
      %v5429 = vmax.f32 %v5326, %v5411
      %v5430 = vmax.f32 %v5331, %v5416
      %v5431 = vmax.f32 %v5336, %v5421
      %v5432 = vmax.f32 %v5341, %v5426
      %v5433 = vmax.f32 %v5429, 0.0
      %v5434 = vmax.f32 %v5430, 0.0
      %v5435 = vmax.f32 %v5431, 0.0
      %v5436 = vmax.f32 %v5432, 0.0
      %v5437 = vld [vmem:[%s8] sm:$0xff]
      %v5438 = vld [vmem:[%s8 + $0x8] sm:$0xf]
      %vm5439 = vcmask 97280
      %v5441 = vsel %vm5439, %v3112, 0
      %v5444 = vsel %vm5439, %v3113, 0
      %v5447 = vsel %vm5439, %v3114, 0
      %v5450 = vsel %vm5439, %v3115, 0
      %vm5452 = vcmask 1043456
      %v5454 = vsel %vm5452, %v5438, 0
      %5456 = vmatprep.subr.mxu0 0.0
      %5457 = vmatpush1.msra.mxu0 %v5437
      %5458 = vmatprep.subr.mxu0 0.0
      %5459 = vmatpush1.msra.mxu0 %v5454
      %5460 = vmatprep.subr.mxu0 0.0
      %5461 = vmatpush1.msra.mxu0 0.0
      %5462 = vmatprep.subr.mxu0 0.0
      %5463 = vmatpush1.msra.mxu0 0.0
      %5464 = vmatprep.subr.mxu0 0.0
      %5465 = vmatpush1.msra.mxu0 0.0
      %5466 = vmatprep.subr.mxu0 0.0
      %5467 = vmatpush1.msra.mxu0 0.0
      %5468 = vmatprep.subr.mxu0 0.0
      %5469 = vmatpush1.msra.mxu0 0.0
      %5470 = vmatprep.subr.mxu0 0.0
      %5471 = vmatpush1.msra.mxu0 0.0
      %5472 = vmatprep.subr.mxu0 0.0
      %5473 = vmatpush1.msra.mxu0 0.0
      %5474 = vmatprep.subr.mxu0 0.0
      %5475 = vmatpush1.msra.mxu0 0.0
      %5476 = vmatprep.subr.mxu0 0.0
      %5477 = vmatpush1.msra.mxu0 0.0
      %5478 = vmatprep.subr.mxu0 0.0
      %5479 = vmatpush1.msra.mxu0 0.0
      %5480 = vmatprep.subr.mxu0 0.0
      %5481 = vmatpush1.msra.mxu0 0.0
      %5482 = vmatprep.subr.mxu0 0.0
      %5483 = vmatpush1.msra.mxu0 0.0
      %5484 = vmatprep.subr.mxu0 0.0
      %5485 = vmatpush1.msra.mxu0 0.0
      %5486 = vmatprep.subr.mxu0 0.0
      %5487 = vmatpush1.msra.mxu0 0.0
      %5488 = vmatprep.subr.mxu0 0.0
      %5489 = vmatpush1.msra.mxu0 0.0
      %5490 = vmatprep.subr.mxu0 0.0
      %5491 = vmatpush1.msra.mxu0 0.0
      %5492 = vmatprep.subr.mxu0 0.0
      %5493 = vmatpush1.msra.mxu0 0.0
      %5494 = vmatprep.subr.mxu0 0.0
      %5495 = vmatpush1.msra.mxu0 0.0
      %5496 = vmatprep.subr.mxu0 0.0
      %5497 = vmatpush1.msra.mxu0 0.0
      %5498 = vmatprep.subr.mxu0 0.0
      %5499 = vmatpush1.msra.mxu0 0.0
      %5500 = vmatprep.subr.mxu0 0.0
      %5501 = vmatpush1.msra.mxu0 0.0
      %5502 = vmatprep.subr.mxu0 0.0
      %5503 = vmatpush1.msra.mxu0 0.0
      %5504 = vmatprep.subr.mxu0 0.0
      %5505 = vmatpush1.msra.mxu0 0.0
      %5506 = vmatprep.subr.mxu0 0.0
      %5507 = vmatpush1.msra.mxu0 0.0
      %5508 = vmatprep.subr.mxu0 0.0
      %5509 = vmatpush1.msra.mxu0 0.0
      %5510 = vmatprep.subr.mxu0 0.0
      %5511 = vmatpush1.msra.mxu0 0.0
      %5512 = vmatprep.subr.mxu0 0.0
      %5513 = vmatpush1.msra.mxu0 0.0
      %5514 = vmatprep.subr.mxu0 0.0
      %5515 = vmatpush1.msra.mxu0 0.0
      %5516 = vmatprep.subr.mxu0 0.0
      %5517 = vmatpush1.msra.mxu0 0.0
      %5518 = vmatprep.subr.mxu0 0.0
      %5519 = vmatpush1.msra.mxu0 0.0
      %5520 = vmatprep.mubr.f32.mxu0 0.0
      %5521 = vmatmul.mubr.f32.gmra.mrb[0].mxu0 %v5441
      %v5522 = vpop.f32.mrb[0].mxu0
      %v5523 = vadd.f32 0.0, %v5522
      %v5524 = vpop.f32.mrb[0].mxu0
      %5525 = vmatprep.mubr.f32.mxu0 0.0
      %5526 = vmatmul.mubr.f32.gmra.mrb[0].mxu0 %v5444
      %v5527 = vpop.f32.mrb[0].mxu0
      %v5528 = vadd.f32 0.0, %v5527
      %v5529 = vpop.f32.mrb[0].mxu0
      %5530 = vmatprep.mubr.f32.mxu0 0.0
      %5531 = vmatmul.mubr.f32.gmra.mrb[0].mxu0 %v5447
      %v5532 = vpop.f32.mrb[0].mxu0
      %v5533 = vadd.f32 0.0, %v5532
      %v5534 = vpop.f32.mrb[0].mxu0
      %5535 = vmatprep.mubr.f32.mxu0 0.0
      %5536 = vmatmul.mubr.f32.gmra.mrb[0].mxu0 %v5450
      %v5537 = vpop.f32.mrb[0].mxu0
      %v5538 = vadd.f32 0.0, %v5537
      %v5539 = vpop.f32.mrb[0].mxu0
      %5540 = vdwg.mxu0
      %v5541 = vld [vmem:[%s7] sm:$0xff]
      %v5542 = vld [vmem:[%s7 + $0x8] sm:$0xff]
      %v5543 = vld [vmem:[%s7 + $0x10] sm:$0xff]
      %v5544 = vld [vmem:[%s7 + $0x18] sm:$0xff]
      %s5545 = scalar_lea.vmem %s8, 16
      %v5546 = vld [vmem:[%s5545] sm:$0xff]
      %v5547 = vld [vmem:[%s5545 + $0x8] sm:$0xf]
      %v5549 = vsel %vm5452, %v5547, 0
      %5551 = vmatprep.subr.mxu0 0.0
      %5552 = vmatpush1.msra.mxu0 %v5546
      %5553 = vmatprep.subr.mxu0 0.0
      %5554 = vmatpush1.msra.mxu0 %v5549
      %5555 = vmatprep.subr.mxu0 0.0
      %5556 = vmatpush1.msra.mxu0 0.0
      %5557 = vmatprep.subr.mxu0 0.0
      %5558 = vmatpush1.msra.mxu0 0.0
      %5559 = vmatprep.subr.mxu0 0.0
      %5560 = vmatpush1.msra.mxu0 0.0
      %5561 = vmatprep.subr.mxu0 0.0
      %5562 = vmatpush1.msra.mxu0 0.0
      %5563 = vmatprep.subr.mxu0 0.0
      %5564 = vmatpush1.msra.mxu0 0.0
      %5565 = vmatprep.subr.mxu0 0.0
      %5566 = vmatpush1.msra.mxu0 0.0
      %5567 = vmatprep.subr.mxu0 0.0
      %5568 = vmatpush1.msra.mxu0 0.0
      %5569 = vmatprep.subr.mxu0 0.0
      %5570 = vmatpush1.msra.mxu0 0.0
      %5571 = vmatprep.subr.mxu0 0.0
      %5572 = vmatpush1.msra.mxu0 0.0
      %5573 = vmatprep.subr.mxu0 0.0
      %5574 = vmatpush1.msra.mxu0 0.0
      %5575 = vmatprep.subr.mxu0 0.0
      %5576 = vmatpush1.msra.mxu0 0.0
      %5577 = vmatprep.subr.mxu0 0.0
      %5578 = vmatpush1.msra.mxu0 0.0
      %5579 = vmatprep.subr.mxu0 0.0
      %5580 = vmatpush1.msra.mxu0 0.0
      %5581 = vmatprep.subr.mxu0 0.0
      %5582 = vmatpush1.msra.mxu0 0.0
      %5583 = vmatprep.subr.mxu0 0.0
      %5584 = vmatpush1.msra.mxu0 0.0
      %5585 = vmatprep.subr.mxu0 0.0
      %5586 = vmatpush1.msra.mxu0 0.0
      %5587 = vmatprep.subr.mxu0 0.0
      %5588 = vmatpush1.msra.mxu0 0.0
      %5589 = vmatprep.subr.mxu0 0.0
      %5590 = vmatpush1.msra.mxu0 0.0
      %5591 = vmatprep.subr.mxu0 0.0
      %5592 = vmatpush1.msra.mxu0 0.0
      %5593 = vmatprep.subr.mxu0 0.0
      %5594 = vmatpush1.msra.mxu0 0.0
      %5595 = vmatprep.subr.mxu0 0.0
      %5596 = vmatpush1.msra.mxu0 0.0
      %5597 = vmatprep.subr.mxu0 0.0
      %5598 = vmatpush1.msra.mxu0 0.0
      %5599 = vmatprep.subr.mxu0 0.0
      %5600 = vmatpush1.msra.mxu0 0.0
      %5601 = vmatprep.subr.mxu0 0.0
      %5602 = vmatpush1.msra.mxu0 0.0
      %5603 = vmatprep.subr.mxu0 0.0
      %5604 = vmatpush1.msra.mxu0 0.0
      %5605 = vmatprep.subr.mxu0 0.0
      %5606 = vmatpush1.msra.mxu0 0.0
      %5607 = vmatprep.subr.mxu0 0.0
      %5608 = vmatpush1.msra.mxu0 0.0
      %5609 = vmatprep.subr.mxu0 0.0
      %5610 = vmatpush1.msra.mxu0 0.0
      %5611 = vmatprep.subr.mxu0 0.0
      %5612 = vmatpush1.msra.mxu0 0.0
      %5613 = vmatprep.subr.mxu0 0.0
      %5614 = vmatpush1.msra.mxu0 0.0
      %5615 = vmatprep.mubr.f32.mxu0 0.0
      %5616 = vmatmul.mubr.f32.gmra.mrb[0].mxu0 %v5441
      %v5617 = vpop.f32.mrb[0].mxu0
      %v5618 = vadd.f32 0.0, %v5617
      %v5619 = vpop.f32.mrb[0].mxu0
      %5620 = vmatprep.mubr.f32.mxu0 0.0
      %5621 = vmatmul.mubr.f32.gmra.mrb[0].mxu0 %v5444
      %v5622 = vpop.f32.mrb[0].mxu0
      %v5623 = vadd.f32 0.0, %v5622
      %v5624 = vpop.f32.mrb[0].mxu0
      %5625 = vmatprep.mubr.f32.mxu0 0.0
      %5626 = vmatmul.mubr.f32.gmra.mrb[0].mxu0 %v5447
      %v5627 = vpop.f32.mrb[0].mxu0
      %v5628 = vadd.f32 0.0, %v5627
      %v5629 = vpop.f32.mrb[0].mxu0
      %5630 = vmatprep.mubr.f32.mxu0 0.0
      %5631 = vmatmul.mubr.f32.gmra.mrb[0].mxu0 %v5450
      %v5632 = vpop.f32.mrb[0].mxu0
      %v5633 = vadd.f32 0.0, %v5632
      %v5634 = vpop.f32.mrb[0].mxu0
      %5635 = vdwg.mxu0
      %s5636 = scalar_lea.vmem %s7, 32
      %v5637 = vld [vmem:[%s5636] sm:$0xff]
      %v5638 = vld [vmem:[%s5636 + $0x8] sm:$0xff]
      %v5639 = vld [vmem:[%s5636 + $0x10] sm:$0xff]
      %v5640 = vld [vmem:[%s5636 + $0x18] sm:$0xff]
      %v5642 = vsel %vm2714, %v5637, 0
      %v5645 = vsel %vm2714, %v5638, 0
      %v5648 = vsel %vm2714, %v5639, 0
      %v5651 = vsel %vm2714, %v5640, 0
      %5653 = vmatprep.subr.mxu0 0.0
      %5654 = vmatpush1.msra.mxu0 %v5618
      %5655 = vmatprep.subr.mxu0 0.0
      %5656 = vmatpush1.msra.mxu0 %v5623
      %5657 = vmatprep.subr.mxu0 0.0
      %5658 = vmatpush1.msra.mxu0 %v5628
      %5659 = vmatprep.subr.mxu0 0.0
      %5660 = vmatpush1.msra.mxu0 %v5633
      %5661 = vmatprep.subr.mxu0 0.0
      %5662 = vmatpush1.msra.mxu0 0.0
      %5663 = vmatprep.subr.mxu0 0.0
      %5664 = vmatpush1.msra.mxu0 0.0
      %5665 = vmatprep.subr.mxu0 0.0
      %5666 = vmatpush1.msra.mxu0 0.0
      %5667 = vmatprep.subr.mxu0 0.0
      %5668 = vmatpush1.msra.mxu0 0.0
      %5669 = vmatprep.subr.mxu0 0.0
      %5670 = vmatpush1.msra.mxu0 0.0
      %5671 = vmatprep.subr.mxu0 0.0
      %5672 = vmatpush1.msra.mxu0 0.0
      %5673 = vmatprep.subr.mxu0 0.0
      %5674 = vmatpush1.msra.mxu0 0.0
      %5675 = vmatprep.subr.mxu0 0.0
      %5676 = vmatpush1.msra.mxu0 0.0
      %5677 = vmatprep.subr.mxu0 0.0
      %5678 = vmatpush1.msra.mxu0 0.0
      %5679 = vmatprep.subr.mxu0 0.0
      %5680 = vmatpush1.msra.mxu0 0.0
      %5681 = vmatprep.subr.mxu0 0.0
      %5682 = vmatpush1.msra.mxu0 0.0
      %5683 = vmatprep.subr.mxu0 0.0
      %5684 = vmatpush1.msra.mxu0 0.0
      %5685 = vmatprep.subr.mxu0 0.0
      %5686 = vmatpush1.msra.mxu0 0.0
      %5687 = vmatprep.subr.mxu0 0.0
      %5688 = vmatpush1.msra.mxu0 0.0
      %5689 = vmatprep.subr.mxu0 0.0
      %5690 = vmatpush1.msra.mxu0 0.0
      %5691 = vmatprep.subr.mxu0 0.0
      %5692 = vmatpush1.msra.mxu0 0.0
      %5693 = vmatprep.subr.mxu0 0.0
      %5694 = vmatpush1.msra.mxu0 0.0
      %5695 = vmatprep.subr.mxu0 0.0
      %5696 = vmatpush1.msra.mxu0 0.0
      %5697 = vmatprep.subr.mxu0 0.0
      %5698 = vmatpush1.msra.mxu0 0.0
      %5699 = vmatprep.subr.mxu0 0.0
      %5700 = vmatpush1.msra.mxu0 0.0
      %5701 = vmatprep.subr.mxu0 0.0
      %5702 = vmatpush1.msra.mxu0 0.0
      %5703 = vmatprep.subr.mxu0 0.0
      %5704 = vmatpush1.msra.mxu0 0.0
      %5705 = vmatprep.subr.mxu0 0.0
      %5706 = vmatpush1.msra.mxu0 0.0
      %5707 = vmatprep.subr.mxu0 0.0
      %5708 = vmatpush1.msra.mxu0 0.0
      %5709 = vmatprep.subr.mxu0 0.0
      %5710 = vmatpush1.msra.mxu0 0.0
      %5711 = vmatprep.subr.mxu0 0.0
      %5712 = vmatpush1.msra.mxu0 0.0
      %5713 = vmatprep.subr.mxu0 0.0
      %5714 = vmatpush1.msra.mxu0 0.0
      %5715 = vmatprep.subr.mxu0 0.0
      %5716 = vmatpush1.msra.mxu0 0.0
      %5717 = vmatprep.mubr.f32.mxu0 0.0
      %5718 = vmatmul.mubr.f32.gmra.mrb[0].mxu0 %v5642
      %v5719 = vpop.f32.mrb[0].mxu0
      %v5720 = vadd.f32 0.0, %v5719
      %v5721 = vpop.f32.mrb[0].mxu0
      %5722 = vmatprep.mubr.f32.mxu0 0.0
      %5723 = vmatmul.mubr.f32.gmra.mrb[0].mxu0 %v5645
      %v5724 = vpop.f32.mrb[0].mxu0
      %v5725 = vadd.f32 0.0, %v5724
      %v5726 = vpop.f32.mrb[0].mxu0
      %5727 = vmatprep.mubr.f32.mxu0 0.0
      %5728 = vmatmul.mubr.f32.gmra.mrb[0].mxu0 %v5648
      %v5729 = vpop.f32.mrb[0].mxu0
      %v5730 = vadd.f32 0.0, %v5729
      %v5731 = vpop.f32.mrb[0].mxu0
      %5732 = vmatprep.mubr.f32.mxu0 0.0
      %5733 = vmatmul.mubr.f32.gmra.mrb[0].mxu0 %v5651
      %v5734 = vpop.f32.mrb[0].mxu0
      %v5735 = vadd.f32 0.0, %v5734
      %v5736 = vpop.f32.mrb[0].mxu0
      %5737 = vdwg.mxu0
      %v5739 = vsel %vm2714, %v5541, 0
      %v5742 = vsel %vm2714, %v5542, 0
      %v5745 = vsel %vm2714, %v5543, 0
      %v5748 = vsel %vm2714, %v5544, 0
      %5750 = vmatprep.subr.mxu0 0.0
      %5751 = vmatpush1.msra.mxu0 %v5523
      %5752 = vmatprep.subr.mxu0 0.0
      %5753 = vmatpush1.msra.mxu0 %v5528
      %5754 = vmatprep.subr.mxu0 0.0
      %5755 = vmatpush1.msra.mxu0 %v5533
      %5756 = vmatprep.subr.mxu0 0.0
      %5757 = vmatpush1.msra.mxu0 %v5538
      %5758 = vmatprep.subr.mxu0 0.0
      %5759 = vmatpush1.msra.mxu0 0.0
      %5760 = vmatprep.subr.mxu0 0.0
      %5761 = vmatpush1.msra.mxu0 0.0
      %5762 = vmatprep.subr.mxu0 0.0
      %5763 = vmatpush1.msra.mxu0 0.0
      %5764 = vmatprep.subr.mxu0 0.0
      %5765 = vmatpush1.msra.mxu0 0.0
      %5766 = vmatprep.subr.mxu0 0.0
      %5767 = vmatpush1.msra.mxu0 0.0
      %5768 = vmatprep.subr.mxu0 0.0
      %5769 = vmatpush1.msra.mxu0 0.0
      %5770 = vmatprep.subr.mxu0 0.0
      %5771 = vmatpush1.msra.mxu0 0.0
      %5772 = vmatprep.subr.mxu0 0.0
      %5773 = vmatpush1.msra.mxu0 0.0
      %5774 = vmatprep.subr.mxu0 0.0
      %5775 = vmatpush1.msra.mxu0 0.0
      %5776 = vmatprep.subr.mxu0 0.0
      %5777 = vmatpush1.msra.mxu0 0.0
      %5778 = vmatprep.subr.mxu0 0.0
      %5779 = vmatpush1.msra.mxu0 0.0
      %5780 = vmatprep.subr.mxu0 0.0
      %5781 = vmatpush1.msra.mxu0 0.0
      %5782 = vmatprep.subr.mxu0 0.0
      %5783 = vmatpush1.msra.mxu0 0.0
      %5784 = vmatprep.subr.mxu0 0.0
      %5785 = vmatpush1.msra.mxu0 0.0
      %5786 = vmatprep.subr.mxu0 0.0
      %5787 = vmatpush1.msra.mxu0 0.0
      %5788 = vmatprep.subr.mxu0 0.0
      %5789 = vmatpush1.msra.mxu0 0.0
      %5790 = vmatprep.subr.mxu0 0.0
      %5791 = vmatpush1.msra.mxu0 0.0
      %5792 = vmatprep.subr.mxu0 0.0
      %5793 = vmatpush1.msra.mxu0 0.0
      %5794 = vmatprep.subr.mxu0 0.0
      %5795 = vmatpush1.msra.mxu0 0.0
      %5796 = vmatprep.subr.mxu0 0.0
      %5797 = vmatpush1.msra.mxu0 0.0
      %5798 = vmatprep.subr.mxu0 0.0
      %5799 = vmatpush1.msra.mxu0 0.0
      %5800 = vmatprep.subr.mxu0 0.0
      %5801 = vmatpush1.msra.mxu0 0.0
      %5802 = vmatprep.subr.mxu0 0.0
      %5803 = vmatpush1.msra.mxu0 0.0
      %5804 = vmatprep.subr.mxu0 0.0
      %5805 = vmatpush1.msra.mxu0 0.0
      %5806 = vmatprep.subr.mxu0 0.0
      %5807 = vmatpush1.msra.mxu0 0.0
      %5808 = vmatprep.subr.mxu0 0.0
      %5809 = vmatpush1.msra.mxu0 0.0
      %5810 = vmatprep.subr.mxu0 0.0
      %5811 = vmatpush1.msra.mxu0 0.0
      %5812 = vmatprep.subr.mxu0 0.0
      %5813 = vmatpush1.msra.mxu0 0.0
      %5814 = vmatprep.mubr.f32.mxu0 0.0
      %5815 = vmatmul.mubr.f32.gmra.mrb[0].mxu0 %v5739
      %v5816 = vpop.f32.mrb[0].mxu0
      %v5817 = vadd.f32 %v5720, %v5816
      %v5818 = vpop.f32.mrb[0].mxu0
      %5819 = vmatprep.mubr.f32.mxu0 0.0
      %5820 = vmatmul.mubr.f32.gmra.mrb[0].mxu0 %v5742
      %v5821 = vpop.f32.mrb[0].mxu0
      %v5822 = vadd.f32 %v5725, %v5821
      %v5823 = vpop.f32.mrb[0].mxu0
      %5824 = vmatprep.mubr.f32.mxu0 0.0
      %5825 = vmatmul.mubr.f32.gmra.mrb[0].mxu0 %v5745
      %v5826 = vpop.f32.mrb[0].mxu0
      %v5827 = vadd.f32 %v5730, %v5826
      %v5828 = vpop.f32.mrb[0].mxu0
      %5829 = vmatprep.mubr.f32.mxu0 0.0
      %5830 = vmatmul.mubr.f32.gmra.mrb[0].mxu0 %v5748
      %v5831 = vpop.f32.mrb[0].mxu0
      %v5832 = vadd.f32 %v5735, %v5831
      %v5833 = vpop.f32.mrb[0].mxu0
      %5834 = vdwg.mxu0
      %s5835 = scalar_lea.vmem %s7, 64
      %v5836 = vld [vmem:[%s5835] sm:$0xff]
      %v5837 = vld [vmem:[%s5835 + $0x8] sm:$0xff]
      %v5838 = vld [vmem:[%s5835 + $0x10] sm:$0xff]
      %v5839 = vld [vmem:[%s5835 + $0x18] sm:$0xff]
      %v5841 = vsel %vm2714, %v5836, 0
      %v5844 = vsel %vm2714, %v5837, 0
      %v5847 = vsel %vm2714, %v5838, 0
      %v5850 = vsel %vm2714, %v5839, 0
      %5852 = vmatprep.subr.mxu0 0.0
      %5853 = vmatpush1.msra.mxu0 %v3112
      %5854 = vmatprep.subr.mxu0 0.0
      %5855 = vmatpush1.msra.mxu0 %v3113
      %5856 = vmatprep.subr.mxu0 0.0
      %5857 = vmatpush1.msra.mxu0 %v3114
      %5858 = vmatprep.subr.mxu0 0.0
      %5859 = vmatpush1.msra.mxu0 %v3115
      %5860 = vmatprep.subr.mxu0 0.0
      %5861 = vmatpush1.msra.mxu0 0.0
      %5862 = vmatprep.subr.mxu0 0.0
      %5863 = vmatpush1.msra.mxu0 0.0
      %5864 = vmatprep.subr.mxu0 0.0
      %5865 = vmatpush1.msra.mxu0 0.0
      %5866 = vmatprep.subr.mxu0 0.0
      %5867 = vmatpush1.msra.mxu0 0.0
      %5868 = vmatprep.subr.mxu0 0.0
      %5869 = vmatpush1.msra.mxu0 0.0
      %5870 = vmatprep.subr.mxu0 0.0
      %5871 = vmatpush1.msra.mxu0 0.0
      %5872 = vmatprep.subr.mxu0 0.0
      %5873 = vmatpush1.msra.mxu0 0.0
      %5874 = vmatprep.subr.mxu0 0.0
      %5875 = vmatpush1.msra.mxu0 0.0
      %5876 = vmatprep.subr.mxu0 0.0
      %5877 = vmatpush1.msra.mxu0 0.0
      %5878 = vmatprep.subr.mxu0 0.0
      %5879 = vmatpush1.msra.mxu0 0.0
      %5880 = vmatprep.subr.mxu0 0.0
      %5881 = vmatpush1.msra.mxu0 0.0
      %5882 = vmatprep.subr.mxu0 0.0
      %5883 = vmatpush1.msra.mxu0 0.0
      %5884 = vmatprep.subr.mxu0 0.0
      %5885 = vmatpush1.msra.mxu0 0.0
      %5886 = vmatprep.subr.mxu0 0.0
      %5887 = vmatpush1.msra.mxu0 0.0
      %5888 = vmatprep.subr.mxu0 0.0
      %5889 = vmatpush1.msra.mxu0 0.0
      %5890 = vmatprep.subr.mxu0 0.0
      %5891 = vmatpush1.msra.mxu0 0.0
      %5892 = vmatprep.subr.mxu0 0.0
      %5893 = vmatpush1.msra.mxu0 0.0
      %5894 = vmatprep.subr.mxu0 0.0
      %5895 = vmatpush1.msra.mxu0 0.0
      %5896 = vmatprep.subr.mxu0 0.0
      %5897 = vmatpush1.msra.mxu0 0.0
      %5898 = vmatprep.subr.mxu0 0.0
      %5899 = vmatpush1.msra.mxu0 0.0
      %5900 = vmatprep.subr.mxu0 0.0
      %5901 = vmatpush1.msra.mxu0 0.0
      %5902 = vmatprep.subr.mxu0 0.0
      %5903 = vmatpush1.msra.mxu0 0.0
      %5904 = vmatprep.subr.mxu0 0.0
      %5905 = vmatpush1.msra.mxu0 0.0
      %5906 = vmatprep.subr.mxu0 0.0
      %5907 = vmatpush1.msra.mxu0 0.0
      %5908 = vmatprep.subr.mxu0 0.0
      %5909 = vmatpush1.msra.mxu0 0.0
      %5910 = vmatprep.subr.mxu0 0.0
      %5911 = vmatpush1.msra.mxu0 0.0
      %5912 = vmatprep.subr.mxu0 0.0
      %5913 = vmatpush1.msra.mxu0 0.0
      %5914 = vmatprep.subr.mxu0 0.0
      %5915 = vmatpush1.msra.mxu0 0.0
      %5916 = vmatprep.mubr.f32.mxu0 0.0
      %5917 = vmatmul.mubr.f32.gmra.mrb[0].mxu0 %v5841
      %v5918 = vpop.f32.mrb[0].mxu0
      %v5919 = vadd.f32 0.0, %v5918
      %v5920 = vpop.f32.mrb[0].mxu0
      %5921 = vmatprep.mubr.f32.mxu0 0.0
      %5922 = vmatmul.mubr.f32.gmra.mrb[0].mxu0 %v5844
      %v5923 = vpop.f32.mrb[0].mxu0
      %v5924 = vadd.f32 0.0, %v5923
      %v5925 = vpop.f32.mrb[0].mxu0
      %5926 = vmatprep.mubr.f32.mxu0 0.0
      %5927 = vmatmul.mubr.f32.gmra.mrb[0].mxu0 %v5847
      %v5928 = vpop.f32.mrb[0].mxu0
      %v5929 = vadd.f32 0.0, %v5928
      %v5930 = vpop.f32.mrb[0].mxu0
      %5931 = vmatprep.mubr.f32.mxu0 0.0
      %5932 = vmatmul.mubr.f32.gmra.mrb[0].mxu0 %v5850
      %v5933 = vpop.f32.mrb[0].mxu0
      %v5934 = vadd.f32 0.0, %v5933
      %v5935 = vpop.f32.mrb[0].mxu0
      %5936 = vdwg.mxu0
      %v5937 = vadd.f32 %v5817, %v5919
      %v5938 = vadd.f32 %v5822, %v5924
      %v5939 = vadd.f32 %v5827, %v5929
      %v5940 = vadd.f32 %v5832, %v5934
      %s5941 = scalar_lea.vmem %s8, 48
      %v5942 = vld [vmem:[%s5941] sm:$0xff]
      %v5943 = vld [vmem:[%s5941 + $0x8] sm:$0xf]
      %v5945 = vsel %vm5452, %v5943, 0
      %5947 = vmatprep.subr.mxu0 0.0
      %5948 = vmatpush1.msra.mxu0 %v5942
      %5949 = vmatprep.subr.mxu0 0.0
      %5950 = vmatpush1.msra.mxu0 %v5945
      %5951 = vmatprep.subr.mxu0 0.0
      %5952 = vmatpush1.msra.mxu0 0.0
      %5953 = vmatprep.subr.mxu0 0.0
      %5954 = vmatpush1.msra.mxu0 0.0
      %5955 = vmatprep.subr.mxu0 0.0
      %5956 = vmatpush1.msra.mxu0 0.0
      %5957 = vmatprep.subr.mxu0 0.0
      %5958 = vmatpush1.msra.mxu0 0.0
      %5959 = vmatprep.subr.mxu0 0.0
      %5960 = vmatpush1.msra.mxu0 0.0
      %5961 = vmatprep.subr.mxu0 0.0
      %5962 = vmatpush1.msra.mxu0 0.0
      %5963 = vmatprep.subr.mxu0 0.0
      %5964 = vmatpush1.msra.mxu0 0.0
      %5965 = vmatprep.subr.mxu0 0.0
      %5966 = vmatpush1.msra.mxu0 0.0
      %5967 = vmatprep.subr.mxu0 0.0
      %5968 = vmatpush1.msra.mxu0 0.0
      %5969 = vmatprep.subr.mxu0 0.0
      %5970 = vmatpush1.msra.mxu0 0.0
      %5971 = vmatprep.subr.mxu0 0.0
      %5972 = vmatpush1.msra.mxu0 0.0
      %5973 = vmatprep.subr.mxu0 0.0
      %5974 = vmatpush1.msra.mxu0 0.0
      %5975 = vmatprep.subr.mxu0 0.0
      %5976 = vmatpush1.msra.mxu0 0.0
      %5977 = vmatprep.subr.mxu0 0.0
      %5978 = vmatpush1.msra.mxu0 0.0
      %5979 = vmatprep.subr.mxu0 0.0
      %5980 = vmatpush1.msra.mxu0 0.0
      %5981 = vmatprep.subr.mxu0 0.0
      %5982 = vmatpush1.msra.mxu0 0.0
      %5983 = vmatprep.subr.mxu0 0.0
      %5984 = vmatpush1.msra.mxu0 0.0
      %5985 = vmatprep.subr.mxu0 0.0
      %5986 = vmatpush1.msra.mxu0 0.0
      %5987 = vmatprep.subr.mxu0 0.0
      %5988 = vmatpush1.msra.mxu0 0.0
      %5989 = vmatprep.subr.mxu0 0.0
      %5990 = vmatpush1.msra.mxu0 0.0
      %5991 = vmatprep.subr.mxu0 0.0
      %5992 = vmatpush1.msra.mxu0 0.0
      %5993 = vmatprep.subr.mxu0 0.0
      %5994 = vmatpush1.msra.mxu0 0.0
      %5995 = vmatprep.subr.mxu0 0.0
      %5996 = vmatpush1.msra.mxu0 0.0
      %5997 = vmatprep.subr.mxu0 0.0
      %5998 = vmatpush1.msra.mxu0 0.0
      %5999 = vmatprep.subr.mxu0 0.0
      %6000 = vmatpush1.msra.mxu0 0.0
      %6001 = vmatprep.subr.mxu0 0.0
      %6002 = vmatpush1.msra.mxu0 0.0
      %6003 = vmatprep.subr.mxu0 0.0
      %6004 = vmatpush1.msra.mxu0 0.0
      %6005 = vmatprep.subr.mxu0 0.0
      %6006 = vmatpush1.msra.mxu0 0.0
      %6007 = vmatprep.subr.mxu0 0.0
      %6008 = vmatpush1.msra.mxu0 0.0
      %6009 = vmatprep.subr.mxu0 0.0
      %6010 = vmatpush1.msra.mxu0 0.0
      %6011 = vmatprep.mubr.f32.mxu0 0.0
      %6012 = vmatmul.mubr.f32.gmra.mrb[0].mxu0 %v5441
      %v6013 = vpop.f32.mrb[0].mxu0
      %v6014 = vadd.f32 0.0, %v6013
      %v6015 = vpop.f32.mrb[0].mxu0
      %6016 = vmatprep.mubr.f32.mxu0 0.0
      %6017 = vmatmul.mubr.f32.gmra.mrb[0].mxu0 %v5444
      %v6018 = vpop.f32.mrb[0].mxu0
      %v6019 = vadd.f32 0.0, %v6018
      %v6020 = vpop.f32.mrb[0].mxu0
      %6021 = vmatprep.mubr.f32.mxu0 0.0
      %6022 = vmatmul.mubr.f32.gmra.mrb[0].mxu0 %v5447
      %v6023 = vpop.f32.mrb[0].mxu0
      %v6024 = vadd.f32 0.0, %v6023
      %v6025 = vpop.f32.mrb[0].mxu0
      %6026 = vmatprep.mubr.f32.mxu0 0.0
      %6027 = vmatmul.mubr.f32.gmra.mrb[0].mxu0 %v5450
      %v6028 = vpop.f32.mrb[0].mxu0
      %v6029 = vadd.f32 0.0, %v6028
      %v6030 = vpop.f32.mrb[0].mxu0
      %6031 = vdwg.mxu0
      %s6032 = scalar_lea.vmem %s7, 96
      %v6033 = vld [vmem:[%s6032] sm:$0xff]
      %v6034 = vld [vmem:[%s6032 + $0x8] sm:$0xff]
      %v6035 = vld [vmem:[%s6032 + $0x10] sm:$0xff]
      %v6036 = vld [vmem:[%s6032 + $0x18] sm:$0xff]
      %v6038 = vsel %vm2714, %v6033, 0
      %v6041 = vsel %vm2714, %v6034, 0
      %v6044 = vsel %vm2714, %v6035, 0
      %v6047 = vsel %vm2714, %v6036, 0
      %6049 = vmatprep.subr.mxu0 0.0
      %6050 = vmatpush1.msra.mxu0 %v6014
      %6051 = vmatprep.subr.mxu0 0.0
      %6052 = vmatpush1.msra.mxu0 %v6019
      %6053 = vmatprep.subr.mxu0 0.0
      %6054 = vmatpush1.msra.mxu0 %v6024
      %6055 = vmatprep.subr.mxu0 0.0
      %6056 = vmatpush1.msra.mxu0 %v6029
      %6057 = vmatprep.subr.mxu0 0.0
      %6058 = vmatpush1.msra.mxu0 0.0
      %6059 = vmatprep.subr.mxu0 0.0
      %6060 = vmatpush1.msra.mxu0 0.0
      %6061 = vmatprep.subr.mxu0 0.0
      %6062 = vmatpush1.msra.mxu0 0.0
      %6063 = vmatprep.subr.mxu0 0.0
      %6064 = vmatpush1.msra.mxu0 0.0
      %6065 = vmatprep.subr.mxu0 0.0
      %6066 = vmatpush1.msra.mxu0 0.0
      %6067 = vmatprep.subr.mxu0 0.0
      %6068 = vmatpush1.msra.mxu0 0.0
      %6069 = vmatprep.subr.mxu0 0.0
      %6070 = vmatpush1.msra.mxu0 0.0
      %6071 = vmatprep.subr.mxu0 0.0
      %6072 = vmatpush1.msra.mxu0 0.0
      %6073 = vmatprep.subr.mxu0 0.0
      %6074 = vmatpush1.msra.mxu0 0.0
      %6075 = vmatprep.subr.mxu0 0.0
      %6076 = vmatpush1.msra.mxu0 0.0
      %6077 = vmatprep.subr.mxu0 0.0
      %6078 = vmatpush1.msra.mxu0 0.0
      %6079 = vmatprep.subr.mxu0 0.0
      %6080 = vmatpush1.msra.mxu0 0.0
      %6081 = vmatprep.subr.mxu0 0.0
      %6082 = vmatpush1.msra.mxu0 0.0
      %6083 = vmatprep.subr.mxu0 0.0
      %6084 = vmatpush1.msra.mxu0 0.0
      %6085 = vmatprep.subr.mxu0 0.0
      %6086 = vmatpush1.msra.mxu0 0.0
      %6087 = vmatprep.subr.mxu0 0.0
      %6088 = vmatpush1.msra.mxu0 0.0
      %6089 = vmatprep.subr.mxu0 0.0
      %6090 = vmatpush1.msra.mxu0 0.0
      %6091 = vmatprep.subr.mxu0 0.0
      %6092 = vmatpush1.msra.mxu0 0.0
      %6093 = vmatprep.subr.mxu0 0.0
      %6094 = vmatpush1.msra.mxu0 0.0
      %6095 = vmatprep.subr.mxu0 0.0
      %6096 = vmatpush1.msra.mxu0 0.0
      %6097 = vmatprep.subr.mxu0 0.0
      %6098 = vmatpush1.msra.mxu0 0.0
      %6099 = vmatprep.subr.mxu0 0.0
      %6100 = vmatpush1.msra.mxu0 0.0
      %6101 = vmatprep.subr.mxu0 0.0
      %6102 = vmatpush1.msra.mxu0 0.0
      %6103 = vmatprep.subr.mxu0 0.0
      %6104 = vmatpush1.msra.mxu0 0.0
      %6105 = vmatprep.subr.mxu0 0.0
      %6106 = vmatpush1.msra.mxu0 0.0
      %6107 = vmatprep.subr.mxu0 0.0
      %6108 = vmatpush1.msra.mxu0 0.0
      %6109 = vmatprep.subr.mxu0 0.0
      %6110 = vmatpush1.msra.mxu0 0.0
      %6111 = vmatprep.subr.mxu0 0.0
      %6112 = vmatpush1.msra.mxu0 0.0
      %6113 = vmatprep.mubr.f32.mxu0 0.0
      %6114 = vmatmul.mubr.f32.gmra.mrb[0].mxu0 %v6038
      %v6115 = vpop.f32.mrb[0].mxu0
      %v6116 = vadd.f32 0.0, %v6115
      %v6117 = vpop.f32.mrb[0].mxu0
      %6118 = vmatprep.mubr.f32.mxu0 0.0
      %6119 = vmatmul.mubr.f32.gmra.mrb[0].mxu0 %v6041
      %v6120 = vpop.f32.mrb[0].mxu0
      %v6121 = vadd.f32 0.0, %v6120
      %v6122 = vpop.f32.mrb[0].mxu0
      %6123 = vmatprep.mubr.f32.mxu0 0.0
      %6124 = vmatmul.mubr.f32.gmra.mrb[0].mxu0 %v6044
      %v6125 = vpop.f32.mrb[0].mxu0
      %v6126 = vadd.f32 0.0, %v6125
      %v6127 = vpop.f32.mrb[0].mxu0
      %6128 = vmatprep.mubr.f32.mxu0 0.0
      %6129 = vmatmul.mubr.f32.gmra.mrb[0].mxu0 %v6047
      %v6130 = vpop.f32.mrb[0].mxu0
      %v6131 = vadd.f32 0.0, %v6130
      %v6132 = vpop.f32.mrb[0].mxu0
      %6133 = vdwg.mxu0
      %v6134 = vadd.f32 %v5937, %v6116
      %v6135 = vadd.f32 %v5938, %v6121
      %v6136 = vadd.f32 %v5939, %v6126
      %v6137 = vadd.f32 %v5940, %v6131
      %s6138 = scalar_lea.vmem %s8, 64
      %v6139 = vld [vmem:[%s6138] sm:$0xff]
      %v6140 = vld [vmem:[%s6138 + $0x8] sm:$0xf]
      %v6142 = vsel %vm5452, %v6140, 0
      %6144 = vmatprep.subr.mxu0 0.0
      %6145 = vmatpush1.msra.mxu0 %v6139
      %6146 = vmatprep.subr.mxu0 0.0
      %6147 = vmatpush1.msra.mxu0 %v6142
      %6148 = vmatprep.subr.mxu0 0.0
      %6149 = vmatpush1.msra.mxu0 0.0
      %6150 = vmatprep.subr.mxu0 0.0
      %6151 = vmatpush1.msra.mxu0 0.0
      %6152 = vmatprep.subr.mxu0 0.0
      %6153 = vmatpush1.msra.mxu0 0.0
      %6154 = vmatprep.subr.mxu0 0.0
      %6155 = vmatpush1.msra.mxu0 0.0
      %6156 = vmatprep.subr.mxu0 0.0
      %6157 = vmatpush1.msra.mxu0 0.0
      %6158 = vmatprep.subr.mxu0 0.0
      %6159 = vmatpush1.msra.mxu0 0.0
      %6160 = vmatprep.subr.mxu0 0.0
      %6161 = vmatpush1.msra.mxu0 0.0
      %6162 = vmatprep.subr.mxu0 0.0
      %6163 = vmatpush1.msra.mxu0 0.0
      %6164 = vmatprep.subr.mxu0 0.0
      %6165 = vmatpush1.msra.mxu0 0.0
      %6166 = vmatprep.subr.mxu0 0.0
      %6167 = vmatpush1.msra.mxu0 0.0
      %6168 = vmatprep.subr.mxu0 0.0
      %6169 = vmatpush1.msra.mxu0 0.0
      %6170 = vmatprep.subr.mxu0 0.0
      %6171 = vmatpush1.msra.mxu0 0.0
      %6172 = vmatprep.subr.mxu0 0.0
      %6173 = vmatpush1.msra.mxu0 0.0
      %6174 = vmatprep.subr.mxu0 0.0
      %6175 = vmatpush1.msra.mxu0 0.0
      %6176 = vmatprep.subr.mxu0 0.0
      %6177 = vmatpush1.msra.mxu0 0.0
      %6178 = vmatprep.subr.mxu0 0.0
      %6179 = vmatpush1.msra.mxu0 0.0
      %6180 = vmatprep.subr.mxu0 0.0
      %6181 = vmatpush1.msra.mxu0 0.0
      %6182 = vmatprep.subr.mxu0 0.0
      %6183 = vmatpush1.msra.mxu0 0.0
      %6184 = vmatprep.subr.mxu0 0.0
      %6185 = vmatpush1.msra.mxu0 0.0
      %6186 = vmatprep.subr.mxu0 0.0
      %6187 = vmatpush1.msra.mxu0 0.0
      %6188 = vmatprep.subr.mxu0 0.0
      %6189 = vmatpush1.msra.mxu0 0.0
      %6190 = vmatprep.subr.mxu0 0.0
      %6191 = vmatpush1.msra.mxu0 0.0
      %6192 = vmatprep.subr.mxu0 0.0
      %6193 = vmatpush1.msra.mxu0 0.0
      %6194 = vmatprep.subr.mxu0 0.0
      %6195 = vmatpush1.msra.mxu0 0.0
      %6196 = vmatprep.subr.mxu0 0.0
      %6197 = vmatpush1.msra.mxu0 0.0
      %6198 = vmatprep.subr.mxu0 0.0
      %6199 = vmatpush1.msra.mxu0 0.0
      %6200 = vmatprep.subr.mxu0 0.0
      %6201 = vmatpush1.msra.mxu0 0.0
      %6202 = vmatprep.subr.mxu0 0.0
      %6203 = vmatpush1.msra.mxu0 0.0
      %6204 = vmatprep.subr.mxu0 0.0
      %6205 = vmatpush1.msra.mxu0 0.0
      %6206 = vmatprep.subr.mxu0 0.0
      %6207 = vmatpush1.msra.mxu0 0.0
      %6208 = vmatprep.mubr.f32.mxu0 0.0
      %6209 = vmatmul.mubr.f32.gmra.mrb[0].mxu0 %v5441
      %v6210 = vpop.f32.mrb[0].mxu0
      %v6211 = vadd.f32 0.0, %v6210
      %v6212 = vpop.f32.mrb[0].mxu0
      %6213 = vmatprep.mubr.f32.mxu0 0.0
      %6214 = vmatmul.mubr.f32.gmra.mrb[0].mxu0 %v5444
      %v6215 = vpop.f32.mrb[0].mxu0
      %v6216 = vadd.f32 0.0, %v6215
      %v6217 = vpop.f32.mrb[0].mxu0
      %6218 = vmatprep.mubr.f32.mxu0 0.0
      %6219 = vmatmul.mubr.f32.gmra.mrb[0].mxu0 %v5447
      %v6220 = vpop.f32.mrb[0].mxu0
      %v6221 = vadd.f32 0.0, %v6220
      %v6222 = vpop.f32.mrb[0].mxu0
      %6223 = vmatprep.mubr.f32.mxu0 0.0
      %6224 = vmatmul.mubr.f32.gmra.mrb[0].mxu0 %v5450
      %v6225 = vpop.f32.mrb[0].mxu0
      %v6226 = vadd.f32 0.0, %v6225
      %v6227 = vpop.f32.mrb[0].mxu0
      %6228 = vdwg.mxu0
      %s6229 = scalar_lea.vmem %s7, 128
      %v6230 = vld [vmem:[%s6229] sm:$0xff]
      %v6231 = vld [vmem:[%s6229 + $0x8] sm:$0xff]
      %v6232 = vld [vmem:[%s6229 + $0x10] sm:$0xff]
      %v6233 = vld [vmem:[%s6229 + $0x18] sm:$0xff]
      %v6235 = vsel %vm2714, %v6230, 0
      %v6238 = vsel %vm2714, %v6231, 0
      %v6241 = vsel %vm2714, %v6232, 0
      %v6244 = vsel %vm2714, %v6233, 0
      %6246 = vmatprep.subr.mxu0 0.0
      %6247 = vmatpush1.msra.mxu0 %v6211
      %6248 = vmatprep.subr.mxu0 0.0
      %6249 = vmatpush1.msra.mxu0 %v6216
      %6250 = vmatprep.subr.mxu0 0.0
      %6251 = vmatpush1.msra.mxu0 %v6221
      %6252 = vmatprep.subr.mxu0 0.0
      %6253 = vmatpush1.msra.mxu0 %v6226
      %6254 = vmatprep.subr.mxu0 0.0
      %6255 = vmatpush1.msra.mxu0 0.0
      %6256 = vmatprep.subr.mxu0 0.0
      %6257 = vmatpush1.msra.mxu0 0.0
      %6258 = vmatprep.subr.mxu0 0.0
      %6259 = vmatpush1.msra.mxu0 0.0
      %6260 = vmatprep.subr.mxu0 0.0
      %6261 = vmatpush1.msra.mxu0 0.0
      %6262 = vmatprep.subr.mxu0 0.0
      %6263 = vmatpush1.msra.mxu0 0.0
      %6264 = vmatprep.subr.mxu0 0.0
      %6265 = vmatpush1.msra.mxu0 0.0
      %6266 = vmatprep.subr.mxu0 0.0
      %6267 = vmatpush1.msra.mxu0 0.0
      %6268 = vmatprep.subr.mxu0 0.0
      %6269 = vmatpush1.msra.mxu0 0.0
      %6270 = vmatprep.subr.mxu0 0.0
      %6271 = vmatpush1.msra.mxu0 0.0
      %6272 = vmatprep.subr.mxu0 0.0
      %6273 = vmatpush1.msra.mxu0 0.0
      %6274 = vmatprep.subr.mxu0 0.0
      %6275 = vmatpush1.msra.mxu0 0.0
      %6276 = vmatprep.subr.mxu0 0.0
      %6277 = vmatpush1.msra.mxu0 0.0
      %6278 = vmatprep.subr.mxu0 0.0
      %6279 = vmatpush1.msra.mxu0 0.0
      %6280 = vmatprep.subr.mxu0 0.0
      %6281 = vmatpush1.msra.mxu0 0.0
      %6282 = vmatprep.subr.mxu0 0.0
      %6283 = vmatpush1.msra.mxu0 0.0
      %6284 = vmatprep.subr.mxu0 0.0
      %6285 = vmatpush1.msra.mxu0 0.0
      %6286 = vmatprep.subr.mxu0 0.0
      %6287 = vmatpush1.msra.mxu0 0.0
      %6288 = vmatprep.subr.mxu0 0.0
      %6289 = vmatpush1.msra.mxu0 0.0
      %6290 = vmatprep.subr.mxu0 0.0
      %6291 = vmatpush1.msra.mxu0 0.0
      %6292 = vmatprep.subr.mxu0 0.0
      %6293 = vmatpush1.msra.mxu0 0.0
      %6294 = vmatprep.subr.mxu0 0.0
      %6295 = vmatpush1.msra.mxu0 0.0
      %6296 = vmatprep.subr.mxu0 0.0
      %6297 = vmatpush1.msra.mxu0 0.0
      %6298 = vmatprep.subr.mxu0 0.0
      %6299 = vmatpush1.msra.mxu0 0.0
      %6300 = vmatprep.subr.mxu0 0.0
      %6301 = vmatpush1.msra.mxu0 0.0
      %6302 = vmatprep.subr.mxu0 0.0
      %6303 = vmatpush1.msra.mxu0 0.0
      %6304 = vmatprep.subr.mxu0 0.0
      %6305 = vmatpush1.msra.mxu0 0.0
      %6306 = vmatprep.subr.mxu0 0.0
      %6307 = vmatpush1.msra.mxu0 0.0
      %6308 = vmatprep.subr.mxu0 0.0
      %6309 = vmatpush1.msra.mxu0 0.0
      %6310 = vmatprep.mubr.f32.mxu0 0.0
      %6311 = vmatmul.mubr.f32.gmra.mrb[0].mxu0 %v6235
      %v6312 = vpop.f32.mrb[0].mxu0
      %v6313 = vadd.f32 0.0, %v6312
      %v6314 = vpop.f32.mrb[0].mxu0
      %6315 = vmatprep.mubr.f32.mxu0 0.0
      %6316 = vmatmul.mubr.f32.gmra.mrb[0].mxu0 %v6238
      %v6317 = vpop.f32.mrb[0].mxu0
      %v6318 = vadd.f32 0.0, %v6317
      %v6319 = vpop.f32.mrb[0].mxu0
      %6320 = vmatprep.mubr.f32.mxu0 0.0
      %6321 = vmatmul.mubr.f32.gmra.mrb[0].mxu0 %v6241
      %v6322 = vpop.f32.mrb[0].mxu0
      %v6323 = vadd.f32 0.0, %v6322
      %v6324 = vpop.f32.mrb[0].mxu0
      %6325 = vmatprep.mubr.f32.mxu0 0.0
      %6326 = vmatmul.mubr.f32.gmra.mrb[0].mxu0 %v6244
      %v6327 = vpop.f32.mrb[0].mxu0
      %v6328 = vadd.f32 0.0, %v6327
      %v6329 = vpop.f32.mrb[0].mxu0
      %6330 = vdwg.mxu0
      %v6331 = vadd.f32 %v6134, %v6313
      %v6332 = vadd.f32 %v6135, %v6318
      %v6333 = vadd.f32 %v6136, %v6323
      %v6334 = vadd.f32 %v6137, %v6328
      %v6335 = vld [vmem:[%s9] sm:$0xff]
      %v6336 = vld [vmem:[%s9 + $0x8] sm:$0xff]
      %v6337 = vld [vmem:[%s9 + $0x10] sm:$0xff]
      %v6338 = vld [vmem:[%s9 + $0x18] sm:$0xff]
      %6340 = vset.pattern.permute.xlu0 0
      %6341 = vperm.xlu0 %6340, %v6335
      %v6342 = vpop.permute.xlu0 %6341
      %6345 = vset.pattern.permute.xlu0 0
      %6346 = vperm.xlu0 %6345, %v6336
      %v6347 = vpop.permute.xlu0 %6346
      %6350 = vset.pattern.permute.xlu0 0
      %6351 = vperm.xlu0 %6350, %v6337
      %v6352 = vpop.permute.xlu0 %6351
      %6355 = vset.pattern.permute.xlu0 0
      %6356 = vperm.xlu0 %6355, %v6338
      %v6357 = vpop.permute.xlu0 %6356
      %v6359 = vadd.f32 %v6331, %v6342
      %v6360 = vadd.f32 %v6332, %v6347
      %v6361 = vadd.f32 %v6333, %v6352
      %v6362 = vadd.f32 %v6334, %v6357
      %v6364 = vsel %vm5439, %v5433, 0
      %v6367 = vsel %vm5439, %v5434, 0
      %v6370 = vsel %vm5439, %v5435, 0
      %v6373 = vsel %vm5439, %v5436, 0
      %6375 = vmatprep.subr.mxu0 0.0
      %6376 = vmatpush1.msra.mxu0 %v5437
      %6377 = vmatprep.subr.mxu0 0.0
      %6378 = vmatpush1.msra.mxu0 %v5454
      %6379 = vmatprep.subr.mxu0 0.0
      %6380 = vmatpush1.msra.mxu0 0.0
      %6381 = vmatprep.subr.mxu0 0.0
      %6382 = vmatpush1.msra.mxu0 0.0
      %6383 = vmatprep.subr.mxu0 0.0
      %6384 = vmatpush1.msra.mxu0 0.0
      %6385 = vmatprep.subr.mxu0 0.0
      %6386 = vmatpush1.msra.mxu0 0.0
      %6387 = vmatprep.subr.mxu0 0.0
      %6388 = vmatpush1.msra.mxu0 0.0
      %6389 = vmatprep.subr.mxu0 0.0
      %6390 = vmatpush1.msra.mxu0 0.0
      %6391 = vmatprep.subr.mxu0 0.0
      %6392 = vmatpush1.msra.mxu0 0.0
      %6393 = vmatprep.subr.mxu0 0.0
      %6394 = vmatpush1.msra.mxu0 0.0
      %6395 = vmatprep.subr.mxu0 0.0
      %6396 = vmatpush1.msra.mxu0 0.0
      %6397 = vmatprep.subr.mxu0 0.0
      %6398 = vmatpush1.msra.mxu0 0.0
      %6399 = vmatprep.subr.mxu0 0.0
      %6400 = vmatpush1.msra.mxu0 0.0
      %6401 = vmatprep.subr.mxu0 0.0
      %6402 = vmatpush1.msra.mxu0 0.0
      %6403 = vmatprep.subr.mxu0 0.0
      %6404 = vmatpush1.msra.mxu0 0.0
      %6405 = vmatprep.subr.mxu0 0.0
      %6406 = vmatpush1.msra.mxu0 0.0
      %6407 = vmatprep.subr.mxu0 0.0
      %6408 = vmatpush1.msra.mxu0 0.0
      %6409 = vmatprep.subr.mxu0 0.0
      %6410 = vmatpush1.msra.mxu0 0.0
      %6411 = vmatprep.subr.mxu0 0.0
      %6412 = vmatpush1.msra.mxu0 0.0
      %6413 = vmatprep.subr.mxu0 0.0
      %6414 = vmatpush1.msra.mxu0 0.0
      %6415 = vmatprep.subr.mxu0 0.0
      %6416 = vmatpush1.msra.mxu0 0.0
      %6417 = vmatprep.subr.mxu0 0.0
      %6418 = vmatpush1.msra.mxu0 0.0
      %6419 = vmatprep.subr.mxu0 0.0
      %6420 = vmatpush1.msra.mxu0 0.0
      %6421 = vmatprep.subr.mxu0 0.0
      %6422 = vmatpush1.msra.mxu0 0.0
      %6423 = vmatprep.subr.mxu0 0.0
      %6424 = vmatpush1.msra.mxu0 0.0
      %6425 = vmatprep.subr.mxu0 0.0
      %6426 = vmatpush1.msra.mxu0 0.0
      %6427 = vmatprep.subr.mxu0 0.0
      %6428 = vmatpush1.msra.mxu0 0.0
      %6429 = vmatprep.subr.mxu0 0.0
      %6430 = vmatpush1.msra.mxu0 0.0
      %6431 = vmatprep.subr.mxu0 0.0
      %6432 = vmatpush1.msra.mxu0 0.0
      %6433 = vmatprep.subr.mxu0 0.0
      %6434 = vmatpush1.msra.mxu0 0.0
      %6435 = vmatprep.subr.mxu0 0.0
      %6436 = vmatpush1.msra.mxu0 0.0
      %6437 = vmatprep.subr.mxu0 0.0
      %6438 = vmatpush1.msra.mxu0 0.0
      %6439 = vmatprep.mubr.f32.mxu0 0.0
      %6440 = vmatmul.mubr.f32.gmra.mrb[0].mxu0 %v6364
      %v6441 = vpop.f32.mrb[0].mxu0
      %v6442 = vadd.f32 0.0, %v6441
      %v6443 = vpop.f32.mrb[0].mxu0
      %6444 = vmatprep.mubr.f32.mxu0 0.0
      %6445 = vmatmul.mubr.f32.gmra.mrb[0].mxu0 %v6367
      %v6446 = vpop.f32.mrb[0].mxu0
      %v6447 = vadd.f32 0.0, %v6446
      %v6448 = vpop.f32.mrb[0].mxu0
      %6449 = vmatprep.mubr.f32.mxu0 0.0
      %6450 = vmatmul.mubr.f32.gmra.mrb[0].mxu0 %v6370
      %v6451 = vpop.f32.mrb[0].mxu0
      %v6452 = vadd.f32 0.0, %v6451
      %v6453 = vpop.f32.mrb[0].mxu0
      %6454 = vmatprep.mubr.f32.mxu0 0.0
      %6455 = vmatmul.mubr.f32.gmra.mrb[0].mxu0 %v6373
      %v6456 = vpop.f32.mrb[0].mxu0
      %v6457 = vadd.f32 0.0, %v6456
      %v6458 = vpop.f32.mrb[0].mxu0
      %6459 = vdwg.mxu0
      %6460 = vmatprep.subr.mxu0 0.0
      %6461 = vmatpush1.msra.mxu0 %v5546
      %6462 = vmatprep.subr.mxu0 0.0
      %6463 = vmatpush1.msra.mxu0 %v5549
      %6464 = vmatprep.subr.mxu0 0.0
      %6465 = vmatpush1.msra.mxu0 0.0
      %6466 = vmatprep.subr.mxu0 0.0
      %6467 = vmatpush1.msra.mxu0 0.0
      %6468 = vmatprep.subr.mxu0 0.0
      %6469 = vmatpush1.msra.mxu0 0.0
      %6470 = vmatprep.subr.mxu0 0.0
      %6471 = vmatpush1.msra.mxu0 0.0
      %6472 = vmatprep.subr.mxu0 0.0
      %6473 = vmatpush1.msra.mxu0 0.0
      %6474 = vmatprep.subr.mxu0 0.0
      %6475 = vmatpush1.msra.mxu0 0.0
      %6476 = vmatprep.subr.mxu0 0.0
      %6477 = vmatpush1.msra.mxu0 0.0
      %6478 = vmatprep.subr.mxu0 0.0
      %6479 = vmatpush1.msra.mxu0 0.0
      %6480 = vmatprep.subr.mxu0 0.0
      %6481 = vmatpush1.msra.mxu0 0.0
      %6482 = vmatprep.subr.mxu0 0.0
      %6483 = vmatpush1.msra.mxu0 0.0
      %6484 = vmatprep.subr.mxu0 0.0
      %6485 = vmatpush1.msra.mxu0 0.0
      %6486 = vmatprep.subr.mxu0 0.0
      %6487 = vmatpush1.msra.mxu0 0.0
      %6488 = vmatprep.subr.mxu0 0.0
      %6489 = vmatpush1.msra.mxu0 0.0
      %6490 = vmatprep.subr.mxu0 0.0
      %6491 = vmatpush1.msra.mxu0 0.0
      %6492 = vmatprep.subr.mxu0 0.0
      %6493 = vmatpush1.msra.mxu0 0.0
      %6494 = vmatprep.subr.mxu0 0.0
      %6495 = vmatpush1.msra.mxu0 0.0
      %6496 = vmatprep.subr.mxu0 0.0
      %6497 = vmatpush1.msra.mxu0 0.0
      %6498 = vmatprep.subr.mxu0 0.0
      %6499 = vmatpush1.msra.mxu0 0.0
      %6500 = vmatprep.subr.mxu0 0.0
      %6501 = vmatpush1.msra.mxu0 0.0
      %6502 = vmatprep.subr.mxu0 0.0
      %6503 = vmatpush1.msra.mxu0 0.0
      %6504 = vmatprep.subr.mxu0 0.0
      %6505 = vmatpush1.msra.mxu0 0.0
      %6506 = vmatprep.subr.mxu0 0.0
      %6507 = vmatpush1.msra.mxu0 0.0
      %6508 = vmatprep.subr.mxu0 0.0
      %6509 = vmatpush1.msra.mxu0 0.0
      %6510 = vmatprep.subr.mxu0 0.0
      %6511 = vmatpush1.msra.mxu0 0.0
      %6512 = vmatprep.subr.mxu0 0.0
      %6513 = vmatpush1.msra.mxu0 0.0
      %6514 = vmatprep.subr.mxu0 0.0
      %6515 = vmatpush1.msra.mxu0 0.0
      %6516 = vmatprep.subr.mxu0 0.0
      %6517 = vmatpush1.msra.mxu0 0.0
      %6518 = vmatprep.subr.mxu0 0.0
      %6519 = vmatpush1.msra.mxu0 0.0
      %6520 = vmatprep.subr.mxu0 0.0
      %6521 = vmatpush1.msra.mxu0 0.0
      %6522 = vmatprep.subr.mxu0 0.0
      %6523 = vmatpush1.msra.mxu0 0.0
      %6524 = vmatprep.mubr.f32.mxu0 0.0
      %6525 = vmatmul.mubr.f32.gmra.mrb[0].mxu0 %v6364
      %v6526 = vpop.f32.mrb[0].mxu0
      %v6527 = vadd.f32 0.0, %v6526
      %v6528 = vpop.f32.mrb[0].mxu0
      %6529 = vmatprep.mubr.f32.mxu0 0.0
      %6530 = vmatmul.mubr.f32.gmra.mrb[0].mxu0 %v6367
      %v6531 = vpop.f32.mrb[0].mxu0
      %v6532 = vadd.f32 0.0, %v6531
      %v6533 = vpop.f32.mrb[0].mxu0
      %6534 = vmatprep.mubr.f32.mxu0 0.0
      %6535 = vmatmul.mubr.f32.gmra.mrb[0].mxu0 %v6370
      %v6536 = vpop.f32.mrb[0].mxu0
      %v6537 = vadd.f32 0.0, %v6536
      %v6538 = vpop.f32.mrb[0].mxu0
      %6539 = vmatprep.mubr.f32.mxu0 0.0
      %6540 = vmatmul.mubr.f32.gmra.mrb[0].mxu0 %v6373
      %v6541 = vpop.f32.mrb[0].mxu0
      %v6542 = vadd.f32 0.0, %v6541
      %v6543 = vpop.f32.mrb[0].mxu0
      %6544 = vdwg.mxu0
      %6545 = vmatprep.subr.mxu0 0.0
      %6546 = vmatpush1.msra.mxu0 %v6527
      %6547 = vmatprep.subr.mxu0 0.0
      %6548 = vmatpush1.msra.mxu0 %v6532
      %6549 = vmatprep.subr.mxu0 0.0
      %6550 = vmatpush1.msra.mxu0 %v6537
      %6551 = vmatprep.subr.mxu0 0.0
      %6552 = vmatpush1.msra.mxu0 %v6542
      %6553 = vmatprep.subr.mxu0 0.0
      %6554 = vmatpush1.msra.mxu0 0.0
      %6555 = vmatprep.subr.mxu0 0.0
      %6556 = vmatpush1.msra.mxu0 0.0
      %6557 = vmatprep.subr.mxu0 0.0
      %6558 = vmatpush1.msra.mxu0 0.0
      %6559 = vmatprep.subr.mxu0 0.0
      %6560 = vmatpush1.msra.mxu0 0.0
      %6561 = vmatprep.subr.mxu0 0.0
      %6562 = vmatpush1.msra.mxu0 0.0
      %6563 = vmatprep.subr.mxu0 0.0
      %6564 = vmatpush1.msra.mxu0 0.0
      %6565 = vmatprep.subr.mxu0 0.0
      %6566 = vmatpush1.msra.mxu0 0.0
      %6567 = vmatprep.subr.mxu0 0.0
      %6568 = vmatpush1.msra.mxu0 0.0
      %6569 = vmatprep.subr.mxu0 0.0
      %6570 = vmatpush1.msra.mxu0 0.0
      %6571 = vmatprep.subr.mxu0 0.0
      %6572 = vmatpush1.msra.mxu0 0.0
      %6573 = vmatprep.subr.mxu0 0.0
      %6574 = vmatpush1.msra.mxu0 0.0
      %6575 = vmatprep.subr.mxu0 0.0
      %6576 = vmatpush1.msra.mxu0 0.0
      %6577 = vmatprep.subr.mxu0 0.0
      %6578 = vmatpush1.msra.mxu0 0.0
      %6579 = vmatprep.subr.mxu0 0.0
      %6580 = vmatpush1.msra.mxu0 0.0
      %6581 = vmatprep.subr.mxu0 0.0
      %6582 = vmatpush1.msra.mxu0 0.0
      %6583 = vmatprep.subr.mxu0 0.0
      %6584 = vmatpush1.msra.mxu0 0.0
      %6585 = vmatprep.subr.mxu0 0.0
      %6586 = vmatpush1.msra.mxu0 0.0
      %6587 = vmatprep.subr.mxu0 0.0
      %6588 = vmatpush1.msra.mxu0 0.0
      %6589 = vmatprep.subr.mxu0 0.0
      %6590 = vmatpush1.msra.mxu0 0.0
      %6591 = vmatprep.subr.mxu0 0.0
      %6592 = vmatpush1.msra.mxu0 0.0
      %6593 = vmatprep.subr.mxu0 0.0
      %6594 = vmatpush1.msra.mxu0 0.0
      %6595 = vmatprep.subr.mxu0 0.0
      %6596 = vmatpush1.msra.mxu0 0.0
      %6597 = vmatprep.subr.mxu0 0.0
      %6598 = vmatpush1.msra.mxu0 0.0
      %6599 = vmatprep.subr.mxu0 0.0
      %6600 = vmatpush1.msra.mxu0 0.0
      %6601 = vmatprep.subr.mxu0 0.0
      %6602 = vmatpush1.msra.mxu0 0.0
      %6603 = vmatprep.subr.mxu0 0.0
      %6604 = vmatpush1.msra.mxu0 0.0
      %6605 = vmatprep.subr.mxu0 0.0
      %6606 = vmatpush1.msra.mxu0 0.0
      %6607 = vmatprep.subr.mxu0 0.0
      %6608 = vmatpush1.msra.mxu0 0.0
      %6609 = vmatprep.mubr.f32.mxu0 0.0
      %6610 = vmatmul.mubr.f32.gmra.mrb[0].mxu0 %v5642
      %v6611 = vpop.f32.mrb[0].mxu0
      %v6612 = vadd.f32 0.0, %v6611
      %v6613 = vpop.f32.mrb[0].mxu0
      %6614 = vmatprep.mubr.f32.mxu0 0.0
      %6615 = vmatmul.mubr.f32.gmra.mrb[0].mxu0 %v5645
      %v6616 = vpop.f32.mrb[0].mxu0
      %v6617 = vadd.f32 0.0, %v6616
      %v6618 = vpop.f32.mrb[0].mxu0
      %6619 = vmatprep.mubr.f32.mxu0 0.0
      %6620 = vmatmul.mubr.f32.gmra.mrb[0].mxu0 %v5648
      %v6621 = vpop.f32.mrb[0].mxu0
      %v6622 = vadd.f32 0.0, %v6621
      %v6623 = vpop.f32.mrb[0].mxu0
      %6624 = vmatprep.mubr.f32.mxu0 0.0
      %6625 = vmatmul.mubr.f32.gmra.mrb[0].mxu0 %v5651
      %v6626 = vpop.f32.mrb[0].mxu0
      %v6627 = vadd.f32 0.0, %v6626
      %v6628 = vpop.f32.mrb[0].mxu0
      %6629 = vdwg.mxu0
      %6630 = vmatprep.subr.mxu0 0.0
      %6631 = vmatpush1.msra.mxu0 %v6442
      %6632 = vmatprep.subr.mxu0 0.0
      %6633 = vmatpush1.msra.mxu0 %v6447
      %6634 = vmatprep.subr.mxu0 0.0
      %6635 = vmatpush1.msra.mxu0 %v6452
      %6636 = vmatprep.subr.mxu0 0.0
      %6637 = vmatpush1.msra.mxu0 %v6457
      %6638 = vmatprep.subr.mxu0 0.0
      %6639 = vmatpush1.msra.mxu0 0.0
      %6640 = vmatprep.subr.mxu0 0.0
      %6641 = vmatpush1.msra.mxu0 0.0
      %6642 = vmatprep.subr.mxu0 0.0
      %6643 = vmatpush1.msra.mxu0 0.0
      %6644 = vmatprep.subr.mxu0 0.0
      %6645 = vmatpush1.msra.mxu0 0.0
      %6646 = vmatprep.subr.mxu0 0.0
      %6647 = vmatpush1.msra.mxu0 0.0
      %6648 = vmatprep.subr.mxu0 0.0
      %6649 = vmatpush1.msra.mxu0 0.0
      %6650 = vmatprep.subr.mxu0 0.0
      %6651 = vmatpush1.msra.mxu0 0.0
      %6652 = vmatprep.subr.mxu0 0.0
      %6653 = vmatpush1.msra.mxu0 0.0
      %6654 = vmatprep.subr.mxu0 0.0
      %6655 = vmatpush1.msra.mxu0 0.0
      %6656 = vmatprep.subr.mxu0 0.0
      %6657 = vmatpush1.msra.mxu0 0.0
      %6658 = vmatprep.subr.mxu0 0.0
      %6659 = vmatpush1.msra.mxu0 0.0
      %6660 = vmatprep.subr.mxu0 0.0
      %6661 = vmatpush1.msra.mxu0 0.0
      %6662 = vmatprep.subr.mxu0 0.0
      %6663 = vmatpush1.msra.mxu0 0.0
      %6664 = vmatprep.subr.mxu0 0.0
      %6665 = vmatpush1.msra.mxu0 0.0
      %6666 = vmatprep.subr.mxu0 0.0
      %6667 = vmatpush1.msra.mxu0 0.0
      %6668 = vmatprep.subr.mxu0 0.0
      %6669 = vmatpush1.msra.mxu0 0.0
      %6670 = vmatprep.subr.mxu0 0.0
      %6671 = vmatpush1.msra.mxu0 0.0
      %6672 = vmatprep.subr.mxu0 0.0
      %6673 = vmatpush1.msra.mxu0 0.0
      %6674 = vmatprep.subr.mxu0 0.0
      %6675 = vmatpush1.msra.mxu0 0.0
      %6676 = vmatprep.subr.mxu0 0.0
      %6677 = vmatpush1.msra.mxu0 0.0
      %6678 = vmatprep.subr.mxu0 0.0
      %6679 = vmatpush1.msra.mxu0 0.0
      %6680 = vmatprep.subr.mxu0 0.0
      %6681 = vmatpush1.msra.mxu0 0.0
      %6682 = vmatprep.subr.mxu0 0.0
      %6683 = vmatpush1.msra.mxu0 0.0
      %6684 = vmatprep.subr.mxu0 0.0
      %6685 = vmatpush1.msra.mxu0 0.0
      %6686 = vmatprep.subr.mxu0 0.0
      %6687 = vmatpush1.msra.mxu0 0.0
      %6688 = vmatprep.subr.mxu0 0.0
      %6689 = vmatpush1.msra.mxu0 0.0
      %6690 = vmatprep.subr.mxu0 0.0
      %6691 = vmatpush1.msra.mxu0 0.0
      %6692 = vmatprep.subr.mxu0 0.0
      %6693 = vmatpush1.msra.mxu0 0.0
      %6694 = vmatprep.mubr.f32.mxu0 0.0
      %6695 = vmatmul.mubr.f32.gmra.mrb[0].mxu0 %v5739
      %v6696 = vpop.f32.mrb[0].mxu0
      %v6697 = vadd.f32 %v6612, %v6696
      %v6698 = vpop.f32.mrb[0].mxu0
      %6699 = vmatprep.mubr.f32.mxu0 0.0
      %6700 = vmatmul.mubr.f32.gmra.mrb[0].mxu0 %v5742
      %v6701 = vpop.f32.mrb[0].mxu0
      %v6702 = vadd.f32 %v6617, %v6701
      %v6703 = vpop.f32.mrb[0].mxu0
      %6704 = vmatprep.mubr.f32.mxu0 0.0
      %6705 = vmatmul.mubr.f32.gmra.mrb[0].mxu0 %v5745
      %v6706 = vpop.f32.mrb[0].mxu0
      %v6707 = vadd.f32 %v6622, %v6706
      %v6708 = vpop.f32.mrb[0].mxu0
      %6709 = vmatprep.mubr.f32.mxu0 0.0
      %6710 = vmatmul.mubr.f32.gmra.mrb[0].mxu0 %v5748
      %v6711 = vpop.f32.mrb[0].mxu0
      %v6712 = vadd.f32 %v6627, %v6711
      %v6713 = vpop.f32.mrb[0].mxu0
      %6714 = vdwg.mxu0
      %6715 = vmatprep.subr.mxu0 0.0
      %6716 = vmatpush1.msra.mxu0 %v5433
      %6717 = vmatprep.subr.mxu0 0.0
      %6718 = vmatpush1.msra.mxu0 %v5434
      %6719 = vmatprep.subr.mxu0 0.0
      %6720 = vmatpush1.msra.mxu0 %v5435
      %6721 = vmatprep.subr.mxu0 0.0
      %6722 = vmatpush1.msra.mxu0 %v5436
      %6723 = vmatprep.subr.mxu0 0.0
      %6724 = vmatpush1.msra.mxu0 0.0
      %6725 = vmatprep.subr.mxu0 0.0
      %6726 = vmatpush1.msra.mxu0 0.0
      %6727 = vmatprep.subr.mxu0 0.0
      %6728 = vmatpush1.msra.mxu0 0.0
      %6729 = vmatprep.subr.mxu0 0.0
      %6730 = vmatpush1.msra.mxu0 0.0
      %6731 = vmatprep.subr.mxu0 0.0
      %6732 = vmatpush1.msra.mxu0 0.0
      %6733 = vmatprep.subr.mxu0 0.0
      %6734 = vmatpush1.msra.mxu0 0.0
      %6735 = vmatprep.subr.mxu0 0.0
      %6736 = vmatpush1.msra.mxu0 0.0
      %6737 = vmatprep.subr.mxu0 0.0
      %6738 = vmatpush1.msra.mxu0 0.0
      %6739 = vmatprep.subr.mxu0 0.0
      %6740 = vmatpush1.msra.mxu0 0.0
      %6741 = vmatprep.subr.mxu0 0.0
      %6742 = vmatpush1.msra.mxu0 0.0
      %6743 = vmatprep.subr.mxu0 0.0
      %6744 = vmatpush1.msra.mxu0 0.0
      %6745 = vmatprep.subr.mxu0 0.0
      %6746 = vmatpush1.msra.mxu0 0.0
      %6747 = vmatprep.subr.mxu0 0.0
      %6748 = vmatpush1.msra.mxu0 0.0
      %6749 = vmatprep.subr.mxu0 0.0
      %6750 = vmatpush1.msra.mxu0 0.0
      %6751 = vmatprep.subr.mxu0 0.0
      %6752 = vmatpush1.msra.mxu0 0.0
      %6753 = vmatprep.subr.mxu0 0.0
      %6754 = vmatpush1.msra.mxu0 0.0
      %6755 = vmatprep.subr.mxu0 0.0
      %6756 = vmatpush1.msra.mxu0 0.0
      %6757 = vmatprep.subr.mxu0 0.0
      %6758 = vmatpush1.msra.mxu0 0.0
      %6759 = vmatprep.subr.mxu0 0.0
      %6760 = vmatpush1.msra.mxu0 0.0
      %6761 = vmatprep.subr.mxu0 0.0
      %6762 = vmatpush1.msra.mxu0 0.0
      %6763 = vmatprep.subr.mxu0 0.0
      %6764 = vmatpush1.msra.mxu0 0.0
      %6765 = vmatprep.subr.mxu0 0.0
      %6766 = vmatpush1.msra.mxu0 0.0
      %6767 = vmatprep.subr.mxu0 0.0
      %6768 = vmatpush1.msra.mxu0 0.0
      %6769 = vmatprep.subr.mxu0 0.0
      %6770 = vmatpush1.msra.mxu0 0.0
      %6771 = vmatprep.subr.mxu0 0.0
      %6772 = vmatpush1.msra.mxu0 0.0
      %6773 = vmatprep.subr.mxu0 0.0
      %6774 = vmatpush1.msra.mxu0 0.0
      %6775 = vmatprep.subr.mxu0 0.0
      %6776 = vmatpush1.msra.mxu0 0.0
      %6777 = vmatprep.subr.mxu0 0.0
      %6778 = vmatpush1.msra.mxu0 0.0
      %6779 = vmatprep.mubr.f32.mxu0 0.0
      %6780 = vmatmul.mubr.f32.gmra.mrb[0].mxu0 %v5841
      %v6781 = vpop.f32.mrb[0].mxu0
      %v6782 = vadd.f32 0.0, %v6781
      %v6783 = vpop.f32.mrb[0].mxu0
      %6784 = vmatprep.mubr.f32.mxu0 0.0
      %6785 = vmatmul.mubr.f32.gmra.mrb[0].mxu0 %v5844
      %v6786 = vpop.f32.mrb[0].mxu0
      %v6787 = vadd.f32 0.0, %v6786
      %v6788 = vpop.f32.mrb[0].mxu0
      %6789 = vmatprep.mubr.f32.mxu0 0.0
      %6790 = vmatmul.mubr.f32.gmra.mrb[0].mxu0 %v5847
      %v6791 = vpop.f32.mrb[0].mxu0
      %v6792 = vadd.f32 0.0, %v6791
      %v6793 = vpop.f32.mrb[0].mxu0
      %6794 = vmatprep.mubr.f32.mxu0 0.0
      %6795 = vmatmul.mubr.f32.gmra.mrb[0].mxu0 %v5850
      %v6796 = vpop.f32.mrb[0].mxu0
      %v6797 = vadd.f32 0.0, %v6796
      %v6798 = vpop.f32.mrb[0].mxu0
      %6799 = vdwg.mxu0
      %v6800 = vadd.f32 %v6697, %v6782
      %v6801 = vadd.f32 %v6702, %v6787
      %v6802 = vadd.f32 %v6707, %v6792
      %v6803 = vadd.f32 %v6712, %v6797
      %6804 = vmatprep.subr.mxu0 0.0
      %6805 = vmatpush1.msra.mxu0 %v5942
      %6806 = vmatprep.subr.mxu0 0.0
      %6807 = vmatpush1.msra.mxu0 %v5945
      %6808 = vmatprep.subr.mxu0 0.0
      %6809 = vmatpush1.msra.mxu0 0.0
      %6810 = vmatprep.subr.mxu0 0.0
      %6811 = vmatpush1.msra.mxu0 0.0
      %6812 = vmatprep.subr.mxu0 0.0
      %6813 = vmatpush1.msra.mxu0 0.0
      %6814 = vmatprep.subr.mxu0 0.0
      %6815 = vmatpush1.msra.mxu0 0.0
      %6816 = vmatprep.subr.mxu0 0.0
      %6817 = vmatpush1.msra.mxu0 0.0
      %6818 = vmatprep.subr.mxu0 0.0
      %6819 = vmatpush1.msra.mxu0 0.0
      %6820 = vmatprep.subr.mxu0 0.0
      %6821 = vmatpush1.msra.mxu0 0.0
      %6822 = vmatprep.subr.mxu0 0.0
      %6823 = vmatpush1.msra.mxu0 0.0
      %6824 = vmatprep.subr.mxu0 0.0
      %6825 = vmatpush1.msra.mxu0 0.0
      %6826 = vmatprep.subr.mxu0 0.0
      %6827 = vmatpush1.msra.mxu0 0.0
      %6828 = vmatprep.subr.mxu0 0.0
      %6829 = vmatpush1.msra.mxu0 0.0
      %6830 = vmatprep.subr.mxu0 0.0
      %6831 = vmatpush1.msra.mxu0 0.0
      %6832 = vmatprep.subr.mxu0 0.0
      %6833 = vmatpush1.msra.mxu0 0.0
      %6834 = vmatprep.subr.mxu0 0.0
      %6835 = vmatpush1.msra.mxu0 0.0
      %6836 = vmatprep.subr.mxu0 0.0
      %6837 = vmatpush1.msra.mxu0 0.0
      %6838 = vmatprep.subr.mxu0 0.0
      %6839 = vmatpush1.msra.mxu0 0.0
      %6840 = vmatprep.subr.mxu0 0.0
      %6841 = vmatpush1.msra.mxu0 0.0
      %6842 = vmatprep.subr.mxu0 0.0
      %6843 = vmatpush1.msra.mxu0 0.0
      %6844 = vmatprep.subr.mxu0 0.0
      %6845 = vmatpush1.msra.mxu0 0.0
      %6846 = vmatprep.subr.mxu0 0.0
      %6847 = vmatpush1.msra.mxu0 0.0
      %6848 = vmatprep.subr.mxu0 0.0
      %6849 = vmatpush1.msra.mxu0 0.0
      %6850 = vmatprep.subr.mxu0 0.0
      %6851 = vmatpush1.msra.mxu0 0.0
      %6852 = vmatprep.subr.mxu0 0.0
      %6853 = vmatpush1.msra.mxu0 0.0
      %6854 = vmatprep.subr.mxu0 0.0
      %6855 = vmatpush1.msra.mxu0 0.0
      %6856 = vmatprep.subr.mxu0 0.0
      %6857 = vmatpush1.msra.mxu0 0.0
      %6858 = vmatprep.subr.mxu0 0.0
      %6859 = vmatpush1.msra.mxu0 0.0
      %6860 = vmatprep.subr.mxu0 0.0
      %6861 = vmatpush1.msra.mxu0 0.0
      %6862 = vmatprep.subr.mxu0 0.0
      %6863 = vmatpush1.msra.mxu0 0.0
      %6864 = vmatprep.subr.mxu0 0.0
      %6865 = vmatpush1.msra.mxu0 0.0
      %6866 = vmatprep.subr.mxu0 0.0
      %6867 = vmatpush1.msra.mxu0 0.0
      %6868 = vmatprep.mubr.f32.mxu0 0.0
      %6869 = vmatmul.mubr.f32.gmra.mrb[0].mxu0 %v6364
      %v6870 = vpop.f32.mrb[0].mxu0
      %v6871 = vadd.f32 0.0, %v6870
      %v6872 = vpop.f32.mrb[0].mxu0
      %6873 = vmatprep.mubr.f32.mxu0 0.0
      %6874 = vmatmul.mubr.f32.gmra.mrb[0].mxu0 %v6367
      %v6875 = vpop.f32.mrb[0].mxu0
      %v6876 = vadd.f32 0.0, %v6875
      %v6877 = vpop.f32.mrb[0].mxu0
      %6878 = vmatprep.mubr.f32.mxu0 0.0
      %6879 = vmatmul.mubr.f32.gmra.mrb[0].mxu0 %v6370
      %v6880 = vpop.f32.mrb[0].mxu0
      %v6881 = vadd.f32 0.0, %v6880
      %v6882 = vpop.f32.mrb[0].mxu0
      %6883 = vmatprep.mubr.f32.mxu0 0.0
      %6884 = vmatmul.mubr.f32.gmra.mrb[0].mxu0 %v6373
      %v6885 = vpop.f32.mrb[0].mxu0
      %v6886 = vadd.f32 0.0, %v6885
      %v6887 = vpop.f32.mrb[0].mxu0
      %6888 = vdwg.mxu0
      %6889 = vmatprep.subr.mxu0 0.0
      %6890 = vmatpush1.msra.mxu0 %v6871
      %6891 = vmatprep.subr.mxu0 0.0
      %6892 = vmatpush1.msra.mxu0 %v6876
      %6893 = vmatprep.subr.mxu0 0.0
      %6894 = vmatpush1.msra.mxu0 %v6881
      %6895 = vmatprep.subr.mxu0 0.0
      %6896 = vmatpush1.msra.mxu0 %v6886
      %6897 = vmatprep.subr.mxu0 0.0
      %6898 = vmatpush1.msra.mxu0 0.0
      %6899 = vmatprep.subr.mxu0 0.0
      %6900 = vmatpush1.msra.mxu0 0.0
      %6901 = vmatprep.subr.mxu0 0.0
      %6902 = vmatpush1.msra.mxu0 0.0
      %6903 = vmatprep.subr.mxu0 0.0
      %6904 = vmatpush1.msra.mxu0 0.0
      %6905 = vmatprep.subr.mxu0 0.0
      %6906 = vmatpush1.msra.mxu0 0.0
      %6907 = vmatprep.subr.mxu0 0.0
      %6908 = vmatpush1.msra.mxu0 0.0
      %6909 = vmatprep.subr.mxu0 0.0
      %6910 = vmatpush1.msra.mxu0 0.0
      %6911 = vmatprep.subr.mxu0 0.0
      %6912 = vmatpush1.msra.mxu0 0.0
      %6913 = vmatprep.subr.mxu0 0.0
      %6914 = vmatpush1.msra.mxu0 0.0
      %6915 = vmatprep.subr.mxu0 0.0
      %6916 = vmatpush1.msra.mxu0 0.0
      %6917 = vmatprep.subr.mxu0 0.0
      %6918 = vmatpush1.msra.mxu0 0.0
      %6919 = vmatprep.subr.mxu0 0.0
      %6920 = vmatpush1.msra.mxu0 0.0
      %6921 = vmatprep.subr.mxu0 0.0
      %6922 = vmatpush1.msra.mxu0 0.0
      %6923 = vmatprep.subr.mxu0 0.0
      %6924 = vmatpush1.msra.mxu0 0.0
      %6925 = vmatprep.subr.mxu0 0.0
      %6926 = vmatpush1.msra.mxu0 0.0
      %6927 = vmatprep.subr.mxu0 0.0
      %6928 = vmatpush1.msra.mxu0 0.0
      %6929 = vmatprep.subr.mxu0 0.0
      %6930 = vmatpush1.msra.mxu0 0.0
      %6931 = vmatprep.subr.mxu0 0.0
      %6932 = vmatpush1.msra.mxu0 0.0
      %6933 = vmatprep.subr.mxu0 0.0
      %6934 = vmatpush1.msra.mxu0 0.0
      %6935 = vmatprep.subr.mxu0 0.0
      %6936 = vmatpush1.msra.mxu0 0.0
      %6937 = vmatprep.subr.mxu0 0.0
      %6938 = vmatpush1.msra.mxu0 0.0
      %6939 = vmatprep.subr.mxu0 0.0
      %6940 = vmatpush1.msra.mxu0 0.0
      %6941 = vmatprep.subr.mxu0 0.0
      %6942 = vmatpush1.msra.mxu0 0.0
      %6943 = vmatprep.subr.mxu0 0.0
      %6944 = vmatpush1.msra.mxu0 0.0
      %6945 = vmatprep.subr.mxu0 0.0
      %6946 = vmatpush1.msra.mxu0 0.0
      %6947 = vmatprep.subr.mxu0 0.0
      %6948 = vmatpush1.msra.mxu0 0.0
      %6949 = vmatprep.subr.mxu0 0.0
      %6950 = vmatpush1.msra.mxu0 0.0
      %6951 = vmatprep.subr.mxu0 0.0
      %6952 = vmatpush1.msra.mxu0 0.0
      %6953 = vmatprep.mubr.f32.mxu0 0.0
      %6954 = vmatmul.mubr.f32.gmra.mrb[0].mxu0 %v6038
      %v6955 = vpop.f32.mrb[0].mxu0
      %v6956 = vadd.f32 0.0, %v6955
      %v6957 = vpop.f32.mrb[0].mxu0
      %6958 = vmatprep.mubr.f32.mxu0 0.0
      %6959 = vmatmul.mubr.f32.gmra.mrb[0].mxu0 %v6041
      %v6960 = vpop.f32.mrb[0].mxu0
      %v6961 = vadd.f32 0.0, %v6960
      %v6962 = vpop.f32.mrb[0].mxu0
      %6963 = vmatprep.mubr.f32.mxu0 0.0
      %6964 = vmatmul.mubr.f32.gmra.mrb[0].mxu0 %v6044
      %v6965 = vpop.f32.mrb[0].mxu0
      %v6966 = vadd.f32 0.0, %v6965
      %v6967 = vpop.f32.mrb[0].mxu0
      %6968 = vmatprep.mubr.f32.mxu0 0.0
      %6969 = vmatmul.mubr.f32.gmra.mrb[0].mxu0 %v6047
      %v6970 = vpop.f32.mrb[0].mxu0
      %v6971 = vadd.f32 0.0, %v6970
      %v6972 = vpop.f32.mrb[0].mxu0
      %6973 = vdwg.mxu0
      %v6974 = vadd.f32 %v6800, %v6956
      %v6975 = vadd.f32 %v6801, %v6961
      %v6976 = vadd.f32 %v6802, %v6966
      %v6977 = vadd.f32 %v6803, %v6971
      %6978 = vmatprep.subr.mxu0 0.0
      %6979 = vmatpush1.msra.mxu0 %v6139
      %6980 = vmatprep.subr.mxu0 0.0
      %6981 = vmatpush1.msra.mxu0 %v6142
      %6982 = vmatprep.subr.mxu0 0.0
      %6983 = vmatpush1.msra.mxu0 0.0
      %6984 = vmatprep.subr.mxu0 0.0
      %6985 = vmatpush1.msra.mxu0 0.0
      %6986 = vmatprep.subr.mxu0 0.0
      %6987 = vmatpush1.msra.mxu0 0.0
      %6988 = vmatprep.subr.mxu0 0.0
      %6989 = vmatpush1.msra.mxu0 0.0
      %6990 = vmatprep.subr.mxu0 0.0
      %6991 = vmatpush1.msra.mxu0 0.0
      %6992 = vmatprep.subr.mxu0 0.0
      %6993 = vmatpush1.msra.mxu0 0.0
      %6994 = vmatprep.subr.mxu0 0.0
      %6995 = vmatpush1.msra.mxu0 0.0
      %6996 = vmatprep.subr.mxu0 0.0
      %6997 = vmatpush1.msra.mxu0 0.0
      %6998 = vmatprep.subr.mxu0 0.0
      %6999 = vmatpush1.msra.mxu0 0.0
      %7000 = vmatprep.subr.mxu0 0.0
      %7001 = vmatpush1.msra.mxu0 0.0
      %7002 = vmatprep.subr.mxu0 0.0
      %7003 = vmatpush1.msra.mxu0 0.0
      %7004 = vmatprep.subr.mxu0 0.0
      %7005 = vmatpush1.msra.mxu0 0.0
      %7006 = vmatprep.subr.mxu0 0.0
      %7007 = vmatpush1.msra.mxu0 0.0
      %7008 = vmatprep.subr.mxu0 0.0
      %7009 = vmatpush1.msra.mxu0 0.0
      %7010 = vmatprep.subr.mxu0 0.0
      %7011 = vmatpush1.msra.mxu0 0.0
      %7012 = vmatprep.subr.mxu0 0.0
      %7013 = vmatpush1.msra.mxu0 0.0
      %7014 = vmatprep.subr.mxu0 0.0
      %7015 = vmatpush1.msra.mxu0 0.0
      %7016 = vmatprep.subr.mxu0 0.0
      %7017 = vmatpush1.msra.mxu0 0.0
      %7018 = vmatprep.subr.mxu0 0.0
      %7019 = vmatpush1.msra.mxu0 0.0
      %7020 = vmatprep.subr.mxu0 0.0
      %7021 = vmatpush1.msra.mxu0 0.0
      %7022 = vmatprep.subr.mxu0 0.0
      %7023 = vmatpush1.msra.mxu0 0.0
      %7024 = vmatprep.subr.mxu0 0.0
      %7025 = vmatpush1.msra.mxu0 0.0
      %7026 = vmatprep.subr.mxu0 0.0
      %7027 = vmatpush1.msra.mxu0 0.0
      %7028 = vmatprep.subr.mxu0 0.0
      %7029 = vmatpush1.msra.mxu0 0.0
      %7030 = vmatprep.subr.mxu0 0.0
      %7031 = vmatpush1.msra.mxu0 0.0
      %7032 = vmatprep.subr.mxu0 0.0
      %7033 = vmatpush1.msra.mxu0 0.0
      %7034 = vmatprep.subr.mxu0 0.0
      %7035 = vmatpush1.msra.mxu0 0.0
      %7036 = vmatprep.subr.mxu0 0.0
      %7037 = vmatpush1.msra.mxu0 0.0
      %7038 = vmatprep.subr.mxu0 0.0
      %7039 = vmatpush1.msra.mxu0 0.0
      %7040 = vmatprep.subr.mxu0 0.0
      %7041 = vmatpush1.msra.mxu0 0.0
      %7042 = vmatprep.mubr.f32.mxu0 0.0
      %7043 = vmatmul.mubr.f32.gmra.mrb[0].mxu0 %v6364
      %v7044 = vpop.f32.mrb[0].mxu0
      %v7045 = vadd.f32 0.0, %v7044
      %v7046 = vpop.f32.mrb[0].mxu0
      %7047 = vmatprep.mubr.f32.mxu0 0.0
      %7048 = vmatmul.mubr.f32.gmra.mrb[0].mxu0 %v6367
      %v7049 = vpop.f32.mrb[0].mxu0
      %v7050 = vadd.f32 0.0, %v7049
      %v7051 = vpop.f32.mrb[0].mxu0
      %7052 = vmatprep.mubr.f32.mxu0 0.0
      %7053 = vmatmul.mubr.f32.gmra.mrb[0].mxu0 %v6370
      %v7054 = vpop.f32.mrb[0].mxu0
      %v7055 = vadd.f32 0.0, %v7054
      %v7056 = vpop.f32.mrb[0].mxu0
      %7057 = vmatprep.mubr.f32.mxu0 0.0
      %7058 = vmatmul.mubr.f32.gmra.mrb[0].mxu0 %v6373
      %v7059 = vpop.f32.mrb[0].mxu0
      %v7060 = vadd.f32 0.0, %v7059
      %v7061 = vpop.f32.mrb[0].mxu0
      %7062 = vdwg.mxu0
      %7063 = vmatprep.subr.mxu0 0.0
      %7064 = vmatpush1.msra.mxu0 %v7045
      %7065 = vmatprep.subr.mxu0 0.0
      %7066 = vmatpush1.msra.mxu0 %v7050
      %7067 = vmatprep.subr.mxu0 0.0
      %7068 = vmatpush1.msra.mxu0 %v7055
      %7069 = vmatprep.subr.mxu0 0.0
      %7070 = vmatpush1.msra.mxu0 %v7060
      %7071 = vmatprep.subr.mxu0 0.0
      %7072 = vmatpush1.msra.mxu0 0.0
      %7073 = vmatprep.subr.mxu0 0.0
      %7074 = vmatpush1.msra.mxu0 0.0
      %7075 = vmatprep.subr.mxu0 0.0
      %7076 = vmatpush1.msra.mxu0 0.0
      %7077 = vmatprep.subr.mxu0 0.0
      %7078 = vmatpush1.msra.mxu0 0.0
      %7079 = vmatprep.subr.mxu0 0.0
      %7080 = vmatpush1.msra.mxu0 0.0
      %7081 = vmatprep.subr.mxu0 0.0
      %7082 = vmatpush1.msra.mxu0 0.0
      %7083 = vmatprep.subr.mxu0 0.0
      %7084 = vmatpush1.msra.mxu0 0.0
      %7085 = vmatprep.subr.mxu0 0.0
      %7086 = vmatpush1.msra.mxu0 0.0
      %7087 = vmatprep.subr.mxu0 0.0
      %7088 = vmatpush1.msra.mxu0 0.0
      %7089 = vmatprep.subr.mxu0 0.0
      %7090 = vmatpush1.msra.mxu0 0.0
      %7091 = vmatprep.subr.mxu0 0.0
      %7092 = vmatpush1.msra.mxu0 0.0
      %7093 = vmatprep.subr.mxu0 0.0
      %7094 = vmatpush1.msra.mxu0 0.0
      %7095 = vmatprep.subr.mxu0 0.0
      %7096 = vmatpush1.msra.mxu0 0.0
      %7097 = vmatprep.subr.mxu0 0.0
      %7098 = vmatpush1.msra.mxu0 0.0
      %7099 = vmatprep.subr.mxu0 0.0
      %7100 = vmatpush1.msra.mxu0 0.0
      %7101 = vmatprep.subr.mxu0 0.0
      %7102 = vmatpush1.msra.mxu0 0.0
      %7103 = vmatprep.subr.mxu0 0.0
      %7104 = vmatpush1.msra.mxu0 0.0
      %7105 = vmatprep.subr.mxu0 0.0
      %7106 = vmatpush1.msra.mxu0 0.0
      %7107 = vmatprep.subr.mxu0 0.0
      %7108 = vmatpush1.msra.mxu0 0.0
      %7109 = vmatprep.subr.mxu0 0.0
      %7110 = vmatpush1.msra.mxu0 0.0
      %7111 = vmatprep.subr.mxu0 0.0
      %7112 = vmatpush1.msra.mxu0 0.0
      %7113 = vmatprep.subr.mxu0 0.0
      %7114 = vmatpush1.msra.mxu0 0.0
      %7115 = vmatprep.subr.mxu0 0.0
      %7116 = vmatpush1.msra.mxu0 0.0
      %7117 = vmatprep.subr.mxu0 0.0
      %7118 = vmatpush1.msra.mxu0 0.0
      %7119 = vmatprep.subr.mxu0 0.0
      %7120 = vmatpush1.msra.mxu0 0.0
      %7121 = vmatprep.subr.mxu0 0.0
      %7122 = vmatpush1.msra.mxu0 0.0
      %7123 = vmatprep.subr.mxu0 0.0
      %7124 = vmatpush1.msra.mxu0 0.0
      %7125 = vmatprep.subr.mxu0 0.0
      %7126 = vmatpush1.msra.mxu0 0.0
      %7127 = vmatprep.mubr.f32.mxu0 0.0
      %7128 = vmatmul.mubr.f32.gmra.mrb[0].mxu0 %v6235
      %v7129 = vpop.f32.mrb[0].mxu0
      %v7130 = vadd.f32 0.0, %v7129
      %v7131 = vpop.f32.mrb[0].mxu0
      %7132 = vmatprep.mubr.f32.mxu0 0.0
      %7133 = vmatmul.mubr.f32.gmra.mrb[0].mxu0 %v6238
      %v7134 = vpop.f32.mrb[0].mxu0
      %v7135 = vadd.f32 0.0, %v7134
      %v7136 = vpop.f32.mrb[0].mxu0
      %7137 = vmatprep.mubr.f32.mxu0 0.0
      %7138 = vmatmul.mubr.f32.gmra.mrb[0].mxu0 %v6241
      %v7139 = vpop.f32.mrb[0].mxu0
      %v7140 = vadd.f32 0.0, %v7139
      %v7141 = vpop.f32.mrb[0].mxu0
      %7142 = vmatprep.mubr.f32.mxu0 0.0
      %7143 = vmatmul.mubr.f32.gmra.mrb[0].mxu0 %v6244
      %v7144 = vpop.f32.mrb[0].mxu0
      %v7145 = vadd.f32 0.0, %v7144
      %v7146 = vpop.f32.mrb[0].mxu0
      %7147 = vdwg.mxu0
      %v7148 = vadd.f32 %v6974, %v7130
      %v7149 = vadd.f32 %v6975, %v7135
      %v7150 = vadd.f32 %v6976, %v7140
      %v7151 = vadd.f32 %v6977, %v7145
      %v7152 = vadd.f32 %v7148, %v6342
      %v7153 = vadd.f32 %v7149, %v6347
      %v7154 = vadd.f32 %v7150, %v6352
      %v7155 = vadd.f32 %v7151, %v6357
      %v7157 = vsel %vm5439, %v6359, 0
      %v7160 = vsel %vm5439, %v6360, 0
      %v7163 = vsel %vm5439, %v6361, 0
      %v7166 = vsel %vm5439, %v6362, 0
      %v7169 = vsel %vm5439, %v7152, 0
      %v7172 = vsel %vm5439, %v7153, 0
      %v7175 = vsel %vm5439, %v7154, 0
      %v7178 = vsel %vm5439, %v7155, 0
      %7180 = vmatprep.subr.mxu0 0.0
      %7181 = vmatpush1.xpose.msra.mxu0 %v7169
      %7182 = vmatprep.subr.mxu0 0.0
      %7183 = vmatpush1.xpose.msra.mxu0 %v7172
      %7184 = vmatprep.subr.mxu0 0.0
      %7185 = vmatpush1.xpose.msra.mxu0 %v7175
      %7186 = vmatprep.subr.mxu0 0.0
      %7187 = vmatpush1.xpose.msra.mxu0 %v7178
      %7188 = vmatprep.subr.mxu0 0.0
      %7189 = vmatpush1.xpose.msra.mxu0 0.0
      %7190 = vmatprep.subr.mxu0 0.0
      %7191 = vmatpush1.xpose.msra.mxu0 0.0
      %7192 = vmatprep.subr.mxu0 0.0
      %7193 = vmatpush1.xpose.msra.mxu0 0.0
      %7194 = vmatprep.subr.mxu0 0.0
      %7195 = vmatpush1.xpose.msra.mxu0 0.0
      %7196 = vmatprep.subr.mxu0 0.0
      %7197 = vmatpush1.xpose.msra.mxu0 0.0
      %7198 = vmatprep.subr.mxu0 0.0
      %7199 = vmatpush1.xpose.msra.mxu0 0.0
      %7200 = vmatprep.subr.mxu0 0.0
      %7201 = vmatpush1.xpose.msra.mxu0 0.0
      %7202 = vmatprep.subr.mxu0 0.0
      %7203 = vmatpush1.xpose.msra.mxu0 0.0
      %7204 = vmatprep.subr.mxu0 0.0
      %7205 = vmatpush1.xpose.msra.mxu0 0.0
      %7206 = vmatprep.subr.mxu0 0.0
      %7207 = vmatpush1.xpose.msra.mxu0 0.0
      %7208 = vmatprep.subr.mxu0 0.0
      %7209 = vmatpush1.xpose.msra.mxu0 0.0
      %7210 = vmatprep.subr.mxu0 0.0
      %7211 = vmatpush1.xpose.msra.mxu0 0.0
      %7212 = vmatprep.subr.mxu0 0.0
      %7213 = vmatpush1.xpose.msra.mxu0 0.0
      %7214 = vmatprep.subr.mxu0 0.0
      %7215 = vmatpush1.xpose.msra.mxu0 0.0
      %7216 = vmatprep.subr.mxu0 0.0
      %7217 = vmatpush1.xpose.msra.mxu0 0.0
      %7218 = vmatprep.subr.mxu0 0.0
      %7219 = vmatpush1.xpose.msra.mxu0 0.0
      %7220 = vmatprep.subr.mxu0 0.0
      %7221 = vmatpush1.xpose.msra.mxu0 0.0
      %7222 = vmatprep.subr.mxu0 0.0
      %7223 = vmatpush1.xpose.msra.mxu0 0.0
      %7224 = vmatprep.subr.mxu0 0.0
      %7225 = vmatpush1.xpose.msra.mxu0 0.0
      %7226 = vmatprep.subr.mxu0 0.0
      %7227 = vmatpush1.xpose.msra.mxu0 0.0
      %7228 = vmatprep.subr.mxu0 0.0
      %7229 = vmatpush1.xpose.msra.mxu0 0.0
      %7230 = vmatprep.subr.mxu0 0.0
      %7231 = vmatpush1.xpose.msra.mxu0 0.0
      %7232 = vmatprep.subr.mxu0 0.0
      %7233 = vmatpush1.xpose.msra.mxu0 0.0
      %7234 = vmatprep.subr.mxu0 0.0
      %7235 = vmatpush1.xpose.msra.mxu0 0.0
      %7236 = vmatprep.subr.mxu0 0.0
      %7237 = vmatpush1.xpose.msra.mxu0 0.0
      %7238 = vmatprep.subr.mxu0 0.0
      %7239 = vmatpush1.xpose.msra.mxu0 0.0
      %7240 = vmatprep.subr.mxu0 0.0
      %7241 = vmatpush1.xpose.msra.mxu0 0.0
      %7242 = vmatprep.subr.mxu0 0.0
      %7243 = vmatpush1.xpose.msra.mxu0 0.0
      %7244 = vmatprep.mubr.f32.mxu0 0.0
      %7245 = vmatmul.mubr.f32.gmra.mrb[0].mxu0 %v7157
      %v7246 = vpop.f32.mrb[0].mxu0
      %v7247 = vadd.f32 0.0, %v7246
      %v7248 = vpop.f32.mrb[0].mxu0
      %7249 = vmatprep.mubr.f32.mxu0 0.0
      %7250 = vmatmul.mubr.f32.gmra.mrb[0].mxu0 %v7160
      %v7251 = vpop.f32.mrb[0].mxu0
      %v7252 = vadd.f32 0.0, %v7251
      %v7253 = vpop.f32.mrb[0].mxu0
      %7254 = vmatprep.mubr.f32.mxu0 0.0
      %7255 = vmatmul.mubr.f32.gmra.mrb[0].mxu0 %v7163
      %v7256 = vpop.f32.mrb[0].mxu0
      %v7257 = vadd.f32 0.0, %v7256
      %v7258 = vpop.f32.mrb[0].mxu0
      %7259 = vmatprep.mubr.f32.mxu0 0.0
      %7260 = vmatmul.mubr.f32.gmra.mrb[0].mxu0 %v7166
      %v7261 = vpop.f32.mrb[0].mxu0
      %v7262 = vadd.f32 0.0, %v7261
      %v7263 = vpop.f32.mrb[0].mxu0
      %7264 = vdwg.mxu0
      %vm7265 = vcmp.gt.f32.partialorder %v7247, 0.0
      %vm7266 = vcmp.gt.f32.partialorder %v7252, 0.0
      %vm7267 = vcmp.gt.f32.partialorder %v7257, 0.0
      %vm7268 = vcmp.gt.f32.partialorder %v7262, 0.0
      %v7269 = vmul.f32 %v7247, 0.2
      %v7270 = vmul.f32 %v7252, 0.2
      %v7271 = vmul.f32 %v7257, 0.2
      %v7272 = vmul.f32 %v7262, 0.2
      %v7273 = vsel %vm7265, %v7247, %v7269
      %v7274 = vsel %vm7266, %v7252, %v7270
      %v7275 = vsel %vm7267, %v7257, %v7271
      %v7276 = vsel %vm7268, %v7262, %v7272
      %v7277 = vsel %vm2714, %v7273, -inf
      %v7278 = vsel %vm2714, %v7274, -inf
      %v7279 = vsel %vm2714, %v7275, -inf
      %v7280 = vsel %vm2714, %v7276, -inf
      %v7281 = vmax.f32 %v7277, %v7278
      %v7282 = vmax.f32 %v7279, %v7280
      %v7283 = vmax.f32 %v7281, %v7282
      %v7284 = vrot.slane %v7283, 4
      %v7285 = vmax.f32 %v7283, %v7284
      %v7286 = vrot.slane %v7285, 2
      %v7287 = vmax.f32 %v7285, %v7286
      %v7288 = vrot.slane %v7287, 1
      %v7289 = vmax.f32 %v7287, %v7288
      %v7290 = vsub.f32 %v7273, %v7289
      %v7291 = vsub.f32 %v7274, %v7289
      %v7292 = vsub.f32 %v7275, %v7289
      %v7293 = vsub.f32 %v7276, %v7289
      %v7294 = vmul.f32 %v7290, 1.442695
      %v7295 = vpow.pop %v7294
      %v7296 = vmul.f32 %v7291, 1.442695
      %v7297 = vpow.pop %v7296
      %v7298 = vmul.f32 %v7292, 1.442695
      %v7299 = vpow.pop %v7298
      %v7300 = vmul.f32 %v7293, 1.442695
      %v7301 = vpow.pop %v7300
      %v7302 = vsel %vm2714, %v7295, 0.0
      %v7303 = vsel %vm2714, %v7297, 0.0
      %v7304 = vadd.f32 %v7302, %v7303
      %v7305 = vsel %vm2714, %v7299, 0.0
      %v7306 = vadd.f32 %v7304, %v7305
      %v7307 = vsel %vm2714, %v7301, 0.0
      %v7308 = vadd.f32 %v7306, %v7307
      %v7309 = vrot.slane %v7308, 4
      %v7310 = vadd.f32 %v7308, %v7309
      %v7311 = vrot.slane %v7310, 2
      %v7312 = vadd.f32 %v7310, %v7311
      %v7313 = vrot.slane %v7312, 1
      %v7314 = vadd.f32 %v7312, %v7313
      %v7315 = vrcp.pop %v7314
      %v7316 = vmul.f32 %v7295, %v7315
      %v7317 = vmul.f32 %v7297, %v7315
      %v7318 = vmul.f32 %v7299, %v7315
      %v7319 = vmul.f32 %v7301, %v7315
      %v7321 = vsel %vm2714, %v7316, 0
      %v7324 = vsel %vm2714, %v7317, 0
      %v7327 = vsel %vm2714, %v7318, 0
      %v7330 = vsel %vm2714, %v7319, 0
      %7332 = vmatprep.subr.mxu0 0.0
      %7333 = vmatpush1.msra.mxu0 %v6359
      %7334 = vmatprep.subr.mxu0 0.0
      %7335 = vmatpush1.msra.mxu0 %v6360
      %7336 = vmatprep.subr.mxu0 0.0
      %7337 = vmatpush1.msra.mxu0 %v6361
      %7338 = vmatprep.subr.mxu0 0.0
      %7339 = vmatpush1.msra.mxu0 %v6362
      %7340 = vmatprep.subr.mxu0 0.0
      %7341 = vmatpush1.msra.mxu0 0.0
      %7342 = vmatprep.subr.mxu0 0.0
      %7343 = vmatpush1.msra.mxu0 0.0
      %7344 = vmatprep.subr.mxu0 0.0
      %7345 = vmatpush1.msra.mxu0 0.0
      %7346 = vmatprep.subr.mxu0 0.0
      %7347 = vmatpush1.msra.mxu0 0.0
      %7348 = vmatprep.subr.mxu0 0.0
      %7349 = vmatpush1.msra.mxu0 0.0
      %7350 = vmatprep.subr.mxu0 0.0
      %7351 = vmatpush1.msra.mxu0 0.0
      %7352 = vmatprep.subr.mxu0 0.0
      %7353 = vmatpush1.msra.mxu0 0.0
      %7354 = vmatprep.subr.mxu0 0.0
      %7355 = vmatpush1.msra.mxu0 0.0
      %7356 = vmatprep.subr.mxu0 0.0
      %7357 = vmatpush1.msra.mxu0 0.0
      %7358 = vmatprep.subr.mxu0 0.0
      %7359 = vmatpush1.msra.mxu0 0.0
      %7360 = vmatprep.subr.mxu0 0.0
      %7361 = vmatpush1.msra.mxu0 0.0
      %7362 = vmatprep.subr.mxu0 0.0
      %7363 = vmatpush1.msra.mxu0 0.0
      %7364 = vmatprep.subr.mxu0 0.0
      %7365 = vmatpush1.msra.mxu0 0.0
      %7366 = vmatprep.subr.mxu0 0.0
      %7367 = vmatpush1.msra.mxu0 0.0
      %7368 = vmatprep.subr.mxu0 0.0
      %7369 = vmatpush1.msra.mxu0 0.0
      %7370 = vmatprep.subr.mxu0 0.0
      %7371 = vmatpush1.msra.mxu0 0.0
      %7372 = vmatprep.subr.mxu0 0.0
      %7373 = vmatpush1.msra.mxu0 0.0
      %7374 = vmatprep.subr.mxu0 0.0
      %7375 = vmatpush1.msra.mxu0 0.0
      %7376 = vmatprep.subr.mxu0 0.0
      %7377 = vmatpush1.msra.mxu0 0.0
      %7378 = vmatprep.subr.mxu0 0.0
      %7379 = vmatpush1.msra.mxu0 0.0
      %7380 = vmatprep.subr.mxu0 0.0
      %7381 = vmatpush1.msra.mxu0 0.0
      %7382 = vmatprep.subr.mxu0 0.0
      %7383 = vmatpush1.msra.mxu0 0.0
      %7384 = vmatprep.subr.mxu0 0.0
      %7385 = vmatpush1.msra.mxu0 0.0
      %7386 = vmatprep.subr.mxu0 0.0
      %7387 = vmatpush1.msra.mxu0 0.0
      %7388 = vmatprep.subr.mxu0 0.0
      %7389 = vmatpush1.msra.mxu0 0.0
      %7390 = vmatprep.subr.mxu0 0.0
      %7391 = vmatpush1.msra.mxu0 0.0
      %7392 = vmatprep.subr.mxu0 0.0
      %7393 = vmatpush1.msra.mxu0 0.0
      %7394 = vmatprep.subr.mxu0 0.0
      %7395 = vmatpush1.msra.mxu0 0.0
      %7396 = vmatprep.mubr.f32.mxu0 0.0
      %7397 = vmatmul.mubr.f32.gmra.mrb[0].mxu0 %v7321
      %v7398 = vpop.f32.mrb[0].mxu0
      %v7399 = vadd.f32 0.0, %v7398
      %v7400 = vpop.f32.mrb[0].mxu0
      %7401 = vmatprep.mubr.f32.mxu0 0.0
      %7402 = vmatmul.mubr.f32.gmra.mrb[0].mxu0 %v7324
      %v7403 = vpop.f32.mrb[0].mxu0
      %v7404 = vadd.f32 0.0, %v7403
      %v7405 = vpop.f32.mrb[0].mxu0
      %7406 = vmatprep.mubr.f32.mxu0 0.0
      %7407 = vmatmul.mubr.f32.gmra.mrb[0].mxu0 %v7327
      %v7408 = vpop.f32.mrb[0].mxu0
      %v7409 = vadd.f32 0.0, %v7408
      %v7410 = vpop.f32.mrb[0].mxu0
      %7411 = vmatprep.mubr.f32.mxu0 0.0
      %7412 = vmatmul.mubr.f32.gmra.mrb[0].mxu0 %v7330
      %v7413 = vpop.f32.mrb[0].mxu0
      %v7414 = vadd.f32 0.0, %v7413
      %v7415 = vpop.f32.mrb[0].mxu0
      %7416 = vdwg.mxu0
      %v7417 = vld [vmem:[%s10] sm:$0xff]
      %v7418 = vld [vmem:[%s10 + $0x8] sm:$0xff]
      %v7419 = vld [vmem:[%s10 + $0x10] sm:$0xff]
      %v7420 = vld [vmem:[%s10 + $0x18] sm:$0xff]
      %7422 = vset.pattern.permute.xlu0 0
      %7423 = vperm.xlu0 %7422, %v7417
      %v7424 = vpop.permute.xlu0 %7423
      %7427 = vset.pattern.permute.xlu0 0
      %7428 = vperm.xlu0 %7427, %v7418
      %v7429 = vpop.permute.xlu0 %7428
      %7432 = vset.pattern.permute.xlu0 0
      %7433 = vperm.xlu0 %7432, %v7419
      %v7434 = vpop.permute.xlu0 %7433
      %7437 = vset.pattern.permute.xlu0 0
      %7438 = vperm.xlu0 %7437, %v7420
      %v7439 = vpop.permute.xlu0 %7438
      %v7441 = vmul.f32 %v7399, %v7424
      %v7442 = vmul.f32 %v7404, %v7429
      %v7443 = vmul.f32 %v7409, %v7434
      %v7444 = vmul.f32 %v7414, %v7439
      %v7445 = vld [vmem:[%s11] sm:$0xff]
      %v7446 = vld [vmem:[%s11 + $0x8] sm:$0xff]
      %v7447 = vld [vmem:[%s11 + $0x10] sm:$0xff]
      %v7448 = vld [vmem:[%s11 + $0x18] sm:$0xff]
      %7450 = vset.pattern.permute.xlu0 0
      %7451 = vperm.xlu0 %7450, %v7445
      %v7452 = vpop.permute.xlu0 %7451
      %7455 = vset.pattern.permute.xlu0 0
      %7456 = vperm.xlu0 %7455, %v7446
      %v7457 = vpop.permute.xlu0 %7456
      %7460 = vset.pattern.permute.xlu0 0
      %7461 = vperm.xlu0 %7460, %v7447
      %v7462 = vpop.permute.xlu0 %7461
      %7465 = vset.pattern.permute.xlu0 0
      %7466 = vperm.xlu0 %7465, %v7448
      %v7467 = vpop.permute.xlu0 %7466
      %v7469 = vadd.f32 %v7441, %v7452
      %v7470 = vadd.f32 %v7442, %v7457
      %v7471 = vadd.f32 %v7443, %v7462
      %v7472 = vadd.f32 %v7444, %v7467
      %v7473 = vld [vmem:[%s12] sm:$0xff]
      %v7474 = vld [vmem:[%s12 + $0x8] sm:$0xf]
      %v7476 = vsel %vm5439, %v7469, 0
      %v7479 = vsel %vm5439, %v7470, 0
      %v7482 = vsel %vm5439, %v7471, 0
      %v7485 = vsel %vm5439, %v7472, 0
      %v7488 = vsel %vm5452, %v7474, 0
      %7490 = vmatprep.subr.mxu0 0.0
      %7491 = vmatpush1.msra.mxu0 %v7473
      %7492 = vmatprep.subr.mxu0 0.0
      %7493 = vmatpush1.msra.mxu0 %v7488
      %7494 = vmatprep.subr.mxu0 0.0
      %7495 = vmatpush1.msra.mxu0 0.0
      %7496 = vmatprep.subr.mxu0 0.0
      %7497 = vmatpush1.msra.mxu0 0.0
      %7498 = vmatprep.subr.mxu0 0.0
      %7499 = vmatpush1.msra.mxu0 0.0
      %7500 = vmatprep.subr.mxu0 0.0
      %7501 = vmatpush1.msra.mxu0 0.0
      %7502 = vmatprep.subr.mxu0 0.0
      %7503 = vmatpush1.msra.mxu0 0.0
      %7504 = vmatprep.subr.mxu0 0.0
      %7505 = vmatpush1.msra.mxu0 0.0
      %7506 = vmatprep.subr.mxu0 0.0
      %7507 = vmatpush1.msra.mxu0 0.0
      %7508 = vmatprep.subr.mxu0 0.0
      %7509 = vmatpush1.msra.mxu0 0.0
      %7510 = vmatprep.subr.mxu0 0.0
      %7511 = vmatpush1.msra.mxu0 0.0
      %7512 = vmatprep.subr.mxu0 0.0
      %7513 = vmatpush1.msra.mxu0 0.0
      %7514 = vmatprep.subr.mxu0 0.0
      %7515 = vmatpush1.msra.mxu0 0.0
      %7516 = vmatprep.subr.mxu0 0.0
      %7517 = vmatpush1.msra.mxu0 0.0
      %7518 = vmatprep.subr.mxu0 0.0
      %7519 = vmatpush1.msra.mxu0 0.0
      %7520 = vmatprep.subr.mxu0 0.0
      %7521 = vmatpush1.msra.mxu0 0.0
      %7522 = vmatprep.subr.mxu0 0.0
      %7523 = vmatpush1.msra.mxu0 0.0
      %7524 = vmatprep.subr.mxu0 0.0
      %7525 = vmatpush1.msra.mxu0 0.0
      %7526 = vmatprep.subr.mxu0 0.0
      %7527 = vmatpush1.msra.mxu0 0.0
      %7528 = vmatprep.subr.mxu0 0.0
      %7529 = vmatpush1.msra.mxu0 0.0
      %7530 = vmatprep.subr.mxu0 0.0
      %7531 = vmatpush1.msra.mxu0 0.0
      %7532 = vmatprep.subr.mxu0 0.0
      %7533 = vmatpush1.msra.mxu0 0.0
      %7534 = vmatprep.subr.mxu0 0.0
      %7535 = vmatpush1.msra.mxu0 0.0
      %7536 = vmatprep.subr.mxu0 0.0
      %7537 = vmatpush1.msra.mxu0 0.0
      %7538 = vmatprep.subr.mxu0 0.0
      %7539 = vmatpush1.msra.mxu0 0.0
      %7540 = vmatprep.subr.mxu0 0.0
      %7541 = vmatpush1.msra.mxu0 0.0
      %7542 = vmatprep.subr.mxu0 0.0
      %7543 = vmatpush1.msra.mxu0 0.0
      %7544 = vmatprep.subr.mxu0 0.0
      %7545 = vmatpush1.msra.mxu0 0.0
      %7546 = vmatprep.subr.mxu0 0.0
      %7547 = vmatpush1.msra.mxu0 0.0
      %7548 = vmatprep.subr.mxu0 0.0
      %7549 = vmatpush1.msra.mxu0 0.0
      %7550 = vmatprep.subr.mxu0 0.0
      %7551 = vmatpush1.msra.mxu0 0.0
      %7552 = vmatprep.subr.mxu0 0.0
      %7553 = vmatpush1.msra.mxu0 0.0
      %7554 = vmatprep.mubr.f32.mxu0 0.0
      %7555 = vmatmul.mubr.f32.gmra.mrb[0].mxu0 %v7476
      %v7556 = vpop.f32.mrb[0].mxu0
      %v7557 = vadd.f32 0.0, %v7556
      %v7558 = vpop.f32.mrb[0].mxu0
      %7559 = vmatprep.mubr.f32.mxu0 0.0
      %7560 = vmatmul.mubr.f32.gmra.mrb[0].mxu0 %v7479
      %v7561 = vpop.f32.mrb[0].mxu0
      %v7562 = vadd.f32 0.0, %v7561
      %v7563 = vpop.f32.mrb[0].mxu0
      %7564 = vmatprep.mubr.f32.mxu0 0.0
      %7565 = vmatmul.mubr.f32.gmra.mrb[0].mxu0 %v7482
      %v7566 = vpop.f32.mrb[0].mxu0
      %v7567 = vadd.f32 0.0, %v7566
      %v7568 = vpop.f32.mrb[0].mxu0
      %7569 = vmatprep.mubr.f32.mxu0 0.0
      %7570 = vmatmul.mubr.f32.gmra.mrb[0].mxu0 %v7485
      %v7571 = vpop.f32.mrb[0].mxu0
      %v7572 = vadd.f32 0.0, %v7571
      %v7573 = vpop.f32.mrb[0].mxu0
      %7574 = vdwg.mxu0
      %s7575 = scalar_lea.vmem %s12, 16
      %v7576 = vld [vmem:[%s7575] sm:$0xff]
      %v7577 = vld [vmem:[%s7575 + $0x8] sm:$0xf]
      %v7579 = vsel %vm5452, %v7577, 0
      %7581 = vmatprep.subr.mxu0 0.0
      %7582 = vmatpush1.msra.mxu0 %v7576
      %7583 = vmatprep.subr.mxu0 0.0
      %7584 = vmatpush1.msra.mxu0 %v7579
      %7585 = vmatprep.subr.mxu0 0.0
      %7586 = vmatpush1.msra.mxu0 0.0
      %7587 = vmatprep.subr.mxu0 0.0
      %7588 = vmatpush1.msra.mxu0 0.0
      %7589 = vmatprep.subr.mxu0 0.0
      %7590 = vmatpush1.msra.mxu0 0.0
      %7591 = vmatprep.subr.mxu0 0.0
      %7592 = vmatpush1.msra.mxu0 0.0
      %7593 = vmatprep.subr.mxu0 0.0
      %7594 = vmatpush1.msra.mxu0 0.0
      %7595 = vmatprep.subr.mxu0 0.0
      %7596 = vmatpush1.msra.mxu0 0.0
      %7597 = vmatprep.subr.mxu0 0.0
      %7598 = vmatpush1.msra.mxu0 0.0
      %7599 = vmatprep.subr.mxu0 0.0
      %7600 = vmatpush1.msra.mxu0 0.0
      %7601 = vmatprep.subr.mxu0 0.0
      %7602 = vmatpush1.msra.mxu0 0.0
      %7603 = vmatprep.subr.mxu0 0.0
      %7604 = vmatpush1.msra.mxu0 0.0
      %7605 = vmatprep.subr.mxu0 0.0
      %7606 = vmatpush1.msra.mxu0 0.0
      %7607 = vmatprep.subr.mxu0 0.0
      %7608 = vmatpush1.msra.mxu0 0.0
      %7609 = vmatprep.subr.mxu0 0.0
      %7610 = vmatpush1.msra.mxu0 0.0
      %7611 = vmatprep.subr.mxu0 0.0
      %7612 = vmatpush1.msra.mxu0 0.0
      %7613 = vmatprep.subr.mxu0 0.0
      %7614 = vmatpush1.msra.mxu0 0.0
      %7615 = vmatprep.subr.mxu0 0.0
      %7616 = vmatpush1.msra.mxu0 0.0
      %7617 = vmatprep.subr.mxu0 0.0
      %7618 = vmatpush1.msra.mxu0 0.0
      %7619 = vmatprep.subr.mxu0 0.0
      %7620 = vmatpush1.msra.mxu0 0.0
      %7621 = vmatprep.subr.mxu0 0.0
      %7622 = vmatpush1.msra.mxu0 0.0
      %7623 = vmatprep.subr.mxu0 0.0
      %7624 = vmatpush1.msra.mxu0 0.0
      %7625 = vmatprep.subr.mxu0 0.0
      %7626 = vmatpush1.msra.mxu0 0.0
      %7627 = vmatprep.subr.mxu0 0.0
      %7628 = vmatpush1.msra.mxu0 0.0
      %7629 = vmatprep.subr.mxu0 0.0
      %7630 = vmatpush1.msra.mxu0 0.0
      %7631 = vmatprep.subr.mxu0 0.0
      %7632 = vmatpush1.msra.mxu0 0.0
      %7633 = vmatprep.subr.mxu0 0.0
      %7634 = vmatpush1.msra.mxu0 0.0
      %7635 = vmatprep.subr.mxu0 0.0
      %7636 = vmatpush1.msra.mxu0 0.0
      %7637 = vmatprep.subr.mxu0 0.0
      %7638 = vmatpush1.msra.mxu0 0.0
      %7639 = vmatprep.subr.mxu0 0.0
      %7640 = vmatpush1.msra.mxu0 0.0
      %7641 = vmatprep.subr.mxu0 0.0
      %7642 = vmatpush1.msra.mxu0 0.0
      %7643 = vmatprep.subr.mxu0 0.0
      %7644 = vmatpush1.msra.mxu0 0.0
      %7645 = vmatprep.mubr.f32.mxu0 0.0
      %7646 = vmatmul.mubr.f32.gmra.mrb[0].mxu0 %v7476
      %v7647 = vpop.f32.mrb[0].mxu0
      %v7648 = vadd.f32 0.0, %v7647
      %v7649 = vpop.f32.mrb[0].mxu0
      %7650 = vmatprep.mubr.f32.mxu0 0.0
      %7651 = vmatmul.mubr.f32.gmra.mrb[0].mxu0 %v7479
      %v7652 = vpop.f32.mrb[0].mxu0
      %v7653 = vadd.f32 0.0, %v7652
      %v7654 = vpop.f32.mrb[0].mxu0
      %7655 = vmatprep.mubr.f32.mxu0 0.0
      %7656 = vmatmul.mubr.f32.gmra.mrb[0].mxu0 %v7482
      %v7657 = vpop.f32.mrb[0].mxu0
      %v7658 = vadd.f32 0.0, %v7657
      %v7659 = vpop.f32.mrb[0].mxu0
      %7660 = vmatprep.mubr.f32.mxu0 0.0
      %7661 = vmatmul.mubr.f32.gmra.mrb[0].mxu0 %v7485
      %v7662 = vpop.f32.mrb[0].mxu0
      %v7663 = vadd.f32 0.0, %v7662
      %v7664 = vpop.f32.mrb[0].mxu0
      %7665 = vdwg.mxu0
      %v7666 = vmax.f32 %v7557, %v7648
      %v7667 = vmax.f32 %v7562, %v7653
      %v7668 = vmax.f32 %v7567, %v7658
      %v7669 = vmax.f32 %v7572, %v7663
      %v7670 = vmax.f32 %v7666, 0.0
      %v7671 = vmax.f32 %v7667, 0.0
      %v7672 = vmax.f32 %v7668, 0.0
      %v7673 = vmax.f32 %v7669, 0.0
      %7674 = vmatprep.subr.mxu0 0.0
      %7675 = vmatpush1.xpose.msra.mxu0 %v7157
      %7676 = vmatprep.subr.mxu0 0.0
      %7677 = vmatpush1.xpose.msra.mxu0 %v7160
      %7678 = vmatprep.subr.mxu0 0.0
      %7679 = vmatpush1.xpose.msra.mxu0 %v7163
      %7680 = vmatprep.subr.mxu0 0.0
      %7681 = vmatpush1.xpose.msra.mxu0 %v7166
      %7682 = vmatprep.subr.mxu0 0.0
      %7683 = vmatpush1.xpose.msra.mxu0 0.0
      %7684 = vmatprep.subr.mxu0 0.0
      %7685 = vmatpush1.xpose.msra.mxu0 0.0
      %7686 = vmatprep.subr.mxu0 0.0
      %7687 = vmatpush1.xpose.msra.mxu0 0.0
      %7688 = vmatprep.subr.mxu0 0.0
      %7689 = vmatpush1.xpose.msra.mxu0 0.0
      %7690 = vmatprep.subr.mxu0 0.0
      %7691 = vmatpush1.xpose.msra.mxu0 0.0
      %7692 = vmatprep.subr.mxu0 0.0
      %7693 = vmatpush1.xpose.msra.mxu0 0.0
      %7694 = vmatprep.subr.mxu0 0.0
      %7695 = vmatpush1.xpose.msra.mxu0 0.0
      %7696 = vmatprep.subr.mxu0 0.0
      %7697 = vmatpush1.xpose.msra.mxu0 0.0
      %7698 = vmatprep.subr.mxu0 0.0
      %7699 = vmatpush1.xpose.msra.mxu0 0.0
      %7700 = vmatprep.subr.mxu0 0.0
      %7701 = vmatpush1.xpose.msra.mxu0 0.0
      %7702 = vmatprep.subr.mxu0 0.0
      %7703 = vmatpush1.xpose.msra.mxu0 0.0
      %7704 = vmatprep.subr.mxu0 0.0
      %7705 = vmatpush1.xpose.msra.mxu0 0.0
      %7706 = vmatprep.subr.mxu0 0.0
      %7707 = vmatpush1.xpose.msra.mxu0 0.0
      %7708 = vmatprep.subr.mxu0 0.0
      %7709 = vmatpush1.xpose.msra.mxu0 0.0
      %7710 = vmatprep.subr.mxu0 0.0
      %7711 = vmatpush1.xpose.msra.mxu0 0.0
      %7712 = vmatprep.subr.mxu0 0.0
      %7713 = vmatpush1.xpose.msra.mxu0 0.0
      %7714 = vmatprep.subr.mxu0 0.0
      %7715 = vmatpush1.xpose.msra.mxu0 0.0
      %7716 = vmatprep.subr.mxu0 0.0
      %7717 = vmatpush1.xpose.msra.mxu0 0.0
      %7718 = vmatprep.subr.mxu0 0.0
      %7719 = vmatpush1.xpose.msra.mxu0 0.0
      %7720 = vmatprep.subr.mxu0 0.0
      %7721 = vmatpush1.xpose.msra.mxu0 0.0
      %7722 = vmatprep.subr.mxu0 0.0
      %7723 = vmatpush1.xpose.msra.mxu0 0.0
      %7724 = vmatprep.subr.mxu0 0.0
      %7725 = vmatpush1.xpose.msra.mxu0 0.0
      %7726 = vmatprep.subr.mxu0 0.0
      %7727 = vmatpush1.xpose.msra.mxu0 0.0
      %7728 = vmatprep.subr.mxu0 0.0
      %7729 = vmatpush1.xpose.msra.mxu0 0.0
      %7730 = vmatprep.subr.mxu0 0.0
      %7731 = vmatpush1.xpose.msra.mxu0 0.0
      %7732 = vmatprep.subr.mxu0 0.0
      %7733 = vmatpush1.xpose.msra.mxu0 0.0
      %7734 = vmatprep.subr.mxu0 0.0
      %7735 = vmatpush1.xpose.msra.mxu0 0.0
      %7736 = vmatprep.subr.mxu0 0.0
      %7737 = vmatpush1.xpose.msra.mxu0 0.0
      %7738 = vmatprep.mubr.f32.mxu0 0.0
      %7739 = vmatmul.mubr.f32.gmra.mrb[0].mxu0 %v7169
      %v7740 = vpop.f32.mrb[0].mxu0
      %v7741 = vadd.f32 0.0, %v7740
      %v7742 = vpop.f32.mrb[0].mxu0
      %7743 = vmatprep.mubr.f32.mxu0 0.0
      %7744 = vmatmul.mubr.f32.gmra.mrb[0].mxu0 %v7172
      %v7745 = vpop.f32.mrb[0].mxu0
      %v7746 = vadd.f32 0.0, %v7745
      %v7747 = vpop.f32.mrb[0].mxu0
      %7748 = vmatprep.mubr.f32.mxu0 0.0
      %7749 = vmatmul.mubr.f32.gmra.mrb[0].mxu0 %v7175
      %v7750 = vpop.f32.mrb[0].mxu0
      %v7751 = vadd.f32 0.0, %v7750
      %v7752 = vpop.f32.mrb[0].mxu0
      %7753 = vmatprep.mubr.f32.mxu0 0.0
      %7754 = vmatmul.mubr.f32.gmra.mrb[0].mxu0 %v7178
      %v7755 = vpop.f32.mrb[0].mxu0
      %v7756 = vadd.f32 0.0, %v7755
      %v7757 = vpop.f32.mrb[0].mxu0
      %7758 = vdwg.mxu0
      %vm7759 = vcmp.gt.f32.partialorder %v7741, 0.0
      %vm7760 = vcmp.gt.f32.partialorder %v7746, 0.0
      %vm7761 = vcmp.gt.f32.partialorder %v7751, 0.0
      %vm7762 = vcmp.gt.f32.partialorder %v7756, 0.0
      %v7763 = vmul.f32 %v7741, 0.2
      %v7764 = vmul.f32 %v7746, 0.2
      %v7765 = vmul.f32 %v7751, 0.2
      %v7766 = vmul.f32 %v7756, 0.2
      %v7767 = vsel %vm7759, %v7741, %v7763
      %v7768 = vsel %vm7760, %v7746, %v7764
      %v7769 = vsel %vm7761, %v7751, %v7765
      %v7770 = vsel %vm7762, %v7756, %v7766
      %v7771 = vsel %vm2714, %v7767, -inf
      %v7772 = vsel %vm2714, %v7768, -inf
      %v7773 = vsel %vm2714, %v7769, -inf
      %v7774 = vsel %vm2714, %v7770, -inf
      %v7775 = vmax.f32 %v7771, %v7772
      %v7776 = vmax.f32 %v7773, %v7774
      %v7777 = vmax.f32 %v7775, %v7776
      %v7778 = vrot.slane %v7777, 4
      %v7779 = vmax.f32 %v7777, %v7778
      %v7780 = vrot.slane %v7779, 2
      %v7781 = vmax.f32 %v7779, %v7780
      %v7782 = vrot.slane %v7781, 1
      %v7783 = vmax.f32 %v7781, %v7782
      %v7784 = vsub.f32 %v7767, %v7783
      %v7785 = vsub.f32 %v7768, %v7783
      %v7786 = vsub.f32 %v7769, %v7783
      %v7787 = vsub.f32 %v7770, %v7783
      %v7788 = vmul.f32 %v7784, 1.442695
      %v7789 = vpow.pop %v7788
      %v7790 = vmul.f32 %v7785, 1.442695
      %v7791 = vpow.pop %v7790
      %v7792 = vmul.f32 %v7786, 1.442695
      %v7793 = vpow.pop %v7792
      %v7794 = vmul.f32 %v7787, 1.442695
      %v7795 = vpow.pop %v7794
      %v7796 = vsel %vm2714, %v7789, 0.0
      %v7797 = vsel %vm2714, %v7791, 0.0
      %v7798 = vadd.f32 %v7796, %v7797
      %v7799 = vsel %vm2714, %v7793, 0.0
      %v7800 = vadd.f32 %v7798, %v7799
      %v7801 = vsel %vm2714, %v7795, 0.0
      %v7802 = vadd.f32 %v7800, %v7801
      %v7803 = vrot.slane %v7802, 4
      %v7804 = vadd.f32 %v7802, %v7803
      %v7805 = vrot.slane %v7804, 2
      %v7806 = vadd.f32 %v7804, %v7805
      %v7807 = vrot.slane %v7806, 1
      %v7808 = vadd.f32 %v7806, %v7807
      %v7809 = vrcp.pop %v7808
      %v7810 = vmul.f32 %v7789, %v7809
      %v7811 = vmul.f32 %v7791, %v7809
      %v7812 = vmul.f32 %v7793, %v7809
      %v7813 = vmul.f32 %v7795, %v7809
      %v7815 = vsel %vm2714, %v7810, 0
      %v7818 = vsel %vm2714, %v7811, 0
      %v7821 = vsel %vm2714, %v7812, 0
      %v7824 = vsel %vm2714, %v7813, 0
      %7826 = vmatprep.subr.mxu0 0.0
      %7827 = vmatpush1.msra.mxu0 %v7152
      %7828 = vmatprep.subr.mxu0 0.0
      %7829 = vmatpush1.msra.mxu0 %v7153
      %7830 = vmatprep.subr.mxu0 0.0
      %7831 = vmatpush1.msra.mxu0 %v7154
      %7832 = vmatprep.subr.mxu0 0.0
      %7833 = vmatpush1.msra.mxu0 %v7155
      %7834 = vmatprep.subr.mxu0 0.0
      %7835 = vmatpush1.msra.mxu0 0.0
      %7836 = vmatprep.subr.mxu0 0.0
      %7837 = vmatpush1.msra.mxu0 0.0
      %7838 = vmatprep.subr.mxu0 0.0
      %7839 = vmatpush1.msra.mxu0 0.0
      %7840 = vmatprep.subr.mxu0 0.0
      %7841 = vmatpush1.msra.mxu0 0.0
      %7842 = vmatprep.subr.mxu0 0.0
      %7843 = vmatpush1.msra.mxu0 0.0
      %7844 = vmatprep.subr.mxu0 0.0
      %7845 = vmatpush1.msra.mxu0 0.0
      %7846 = vmatprep.subr.mxu0 0.0
      %7847 = vmatpush1.msra.mxu0 0.0
      %7848 = vmatprep.subr.mxu0 0.0
      %7849 = vmatpush1.msra.mxu0 0.0
      %7850 = vmatprep.subr.mxu0 0.0
      %7851 = vmatpush1.msra.mxu0 0.0
      %7852 = vmatprep.subr.mxu0 0.0
      %7853 = vmatpush1.msra.mxu0 0.0
      %7854 = vmatprep.subr.mxu0 0.0
      %7855 = vmatpush1.msra.mxu0 0.0
      %7856 = vmatprep.subr.mxu0 0.0
      %7857 = vmatpush1.msra.mxu0 0.0
      %7858 = vmatprep.subr.mxu0 0.0
      %7859 = vmatpush1.msra.mxu0 0.0
      %7860 = vmatprep.subr.mxu0 0.0
      %7861 = vmatpush1.msra.mxu0 0.0
      %7862 = vmatprep.subr.mxu0 0.0
      %7863 = vmatpush1.msra.mxu0 0.0
      %7864 = vmatprep.subr.mxu0 0.0
      %7865 = vmatpush1.msra.mxu0 0.0
      %7866 = vmatprep.subr.mxu0 0.0
      %7867 = vmatpush1.msra.mxu0 0.0
      %7868 = vmatprep.subr.mxu0 0.0
      %7869 = vmatpush1.msra.mxu0 0.0
      %7870 = vmatprep.subr.mxu0 0.0
      %7871 = vmatpush1.msra.mxu0 0.0
      %7872 = vmatprep.subr.mxu0 0.0
      %7873 = vmatpush1.msra.mxu0 0.0
      %7874 = vmatprep.subr.mxu0 0.0
      %7875 = vmatpush1.msra.mxu0 0.0
      %7876 = vmatprep.subr.mxu0 0.0
      %7877 = vmatpush1.msra.mxu0 0.0
      %7878 = vmatprep.subr.mxu0 0.0
      %7879 = vmatpush1.msra.mxu0 0.0
      %7880 = vmatprep.subr.mxu0 0.0
      %7881 = vmatpush1.msra.mxu0 0.0
      %7882 = vmatprep.subr.mxu0 0.0
      %7883 = vmatpush1.msra.mxu0 0.0
      %7884 = vmatprep.subr.mxu0 0.0
      %7885 = vmatpush1.msra.mxu0 0.0
      %7886 = vmatprep.subr.mxu0 0.0
      %7887 = vmatpush1.msra.mxu0 0.0
      %7888 = vmatprep.subr.mxu0 0.0
      %7889 = vmatpush1.msra.mxu0 0.0
      %7890 = vmatprep.mubr.f32.mxu0 0.0
      %7891 = vmatmul.mubr.f32.gmra.mrb[0].mxu0 %v7815
      %v7892 = vpop.f32.mrb[0].mxu0
      %v7893 = vadd.f32 0.0, %v7892
      %v7894 = vpop.f32.mrb[0].mxu0
      %7895 = vmatprep.mubr.f32.mxu0 0.0
      %7896 = vmatmul.mubr.f32.gmra.mrb[0].mxu0 %v7818
      %v7897 = vpop.f32.mrb[0].mxu0
      %v7898 = vadd.f32 0.0, %v7897
      %v7899 = vpop.f32.mrb[0].mxu0
      %7900 = vmatprep.mubr.f32.mxu0 0.0
      %7901 = vmatmul.mubr.f32.gmra.mrb[0].mxu0 %v7821
      %v7902 = vpop.f32.mrb[0].mxu0
      %v7903 = vadd.f32 0.0, %v7902
      %v7904 = vpop.f32.mrb[0].mxu0
      %7905 = vmatprep.mubr.f32.mxu0 0.0
      %7906 = vmatmul.mubr.f32.gmra.mrb[0].mxu0 %v7824
      %v7907 = vpop.f32.mrb[0].mxu0
      %v7908 = vadd.f32 0.0, %v7907
      %v7909 = vpop.f32.mrb[0].mxu0
      %7910 = vdwg.mxu0
      %v7911 = vmul.f32 %v7893, %v7424
      %v7912 = vmul.f32 %v7898, %v7429
      %v7913 = vmul.f32 %v7903, %v7434
      %v7914 = vmul.f32 %v7908, %v7439
      %v7915 = vadd.f32 %v7911, %v7452
      %v7916 = vadd.f32 %v7912, %v7457
      %v7917 = vadd.f32 %v7913, %v7462
      %v7918 = vadd.f32 %v7914, %v7467
      %v7920 = vsel %vm5439, %v7915, 0
      %v7923 = vsel %vm5439, %v7916, 0
      %v7926 = vsel %vm5439, %v7917, 0
      %v7929 = vsel %vm5439, %v7918, 0
      %7931 = vmatprep.subr.mxu0 0.0
      %7932 = vmatpush1.msra.mxu0 %v7473
      %7933 = vmatprep.subr.mxu0 0.0
      %7934 = vmatpush1.msra.mxu0 %v7488
      %7935 = vmatprep.subr.mxu0 0.0
      %7936 = vmatpush1.msra.mxu0 0.0
      %7937 = vmatprep.subr.mxu0 0.0
      %7938 = vmatpush1.msra.mxu0 0.0
      %7939 = vmatprep.subr.mxu0 0.0
      %7940 = vmatpush1.msra.mxu0 0.0
      %7941 = vmatprep.subr.mxu0 0.0
      %7942 = vmatpush1.msra.mxu0 0.0
      %7943 = vmatprep.subr.mxu0 0.0
      %7944 = vmatpush1.msra.mxu0 0.0
      %7945 = vmatprep.subr.mxu0 0.0
      %7946 = vmatpush1.msra.mxu0 0.0
      %7947 = vmatprep.subr.mxu0 0.0
      %7948 = vmatpush1.msra.mxu0 0.0
      %7949 = vmatprep.subr.mxu0 0.0
      %7950 = vmatpush1.msra.mxu0 0.0
      %7951 = vmatprep.subr.mxu0 0.0
      %7952 = vmatpush1.msra.mxu0 0.0
      %7953 = vmatprep.subr.mxu0 0.0
      %7954 = vmatpush1.msra.mxu0 0.0
      %7955 = vmatprep.subr.mxu0 0.0
      %7956 = vmatpush1.msra.mxu0 0.0
      %7957 = vmatprep.subr.mxu0 0.0
      %7958 = vmatpush1.msra.mxu0 0.0
      %7959 = vmatprep.subr.mxu0 0.0
      %7960 = vmatpush1.msra.mxu0 0.0
      %7961 = vmatprep.subr.mxu0 0.0
      %7962 = vmatpush1.msra.mxu0 0.0
      %7963 = vmatprep.subr.mxu0 0.0
      %7964 = vmatpush1.msra.mxu0 0.0
      %7965 = vmatprep.subr.mxu0 0.0
      %7966 = vmatpush1.msra.mxu0 0.0
      %7967 = vmatprep.subr.mxu0 0.0
      %7968 = vmatpush1.msra.mxu0 0.0
      %7969 = vmatprep.subr.mxu0 0.0
      %7970 = vmatpush1.msra.mxu0 0.0
      %7971 = vmatprep.subr.mxu0 0.0
      %7972 = vmatpush1.msra.mxu0 0.0
      %7973 = vmatprep.subr.mxu0 0.0
      %7974 = vmatpush1.msra.mxu0 0.0
      %7975 = vmatprep.subr.mxu0 0.0
      %7976 = vmatpush1.msra.mxu0 0.0
      %7977 = vmatprep.subr.mxu0 0.0
      %7978 = vmatpush1.msra.mxu0 0.0
      %7979 = vmatprep.subr.mxu0 0.0
      %7980 = vmatpush1.msra.mxu0 0.0
      %7981 = vmatprep.subr.mxu0 0.0
      %7982 = vmatpush1.msra.mxu0 0.0
      %7983 = vmatprep.subr.mxu0 0.0
      %7984 = vmatpush1.msra.mxu0 0.0
      %7985 = vmatprep.subr.mxu0 0.0
      %7986 = vmatpush1.msra.mxu0 0.0
      %7987 = vmatprep.subr.mxu0 0.0
      %7988 = vmatpush1.msra.mxu0 0.0
      %7989 = vmatprep.subr.mxu0 0.0
      %7990 = vmatpush1.msra.mxu0 0.0
      %7991 = vmatprep.subr.mxu0 0.0
      %7992 = vmatpush1.msra.mxu0 0.0
      %7993 = vmatprep.subr.mxu0 0.0
      %7994 = vmatpush1.msra.mxu0 0.0
      %7995 = vmatprep.mubr.f32.mxu0 0.0
      %7996 = vmatmul.mubr.f32.gmra.mrb[0].mxu0 %v7920
      %v7997 = vpop.f32.mrb[0].mxu0
      %v7998 = vadd.f32 0.0, %v7997
      %v7999 = vpop.f32.mrb[0].mxu0
      %8000 = vmatprep.mubr.f32.mxu0 0.0
      %8001 = vmatmul.mubr.f32.gmra.mrb[0].mxu0 %v7923
      %v8002 = vpop.f32.mrb[0].mxu0
      %v8003 = vadd.f32 0.0, %v8002
      %v8004 = vpop.f32.mrb[0].mxu0
      %8005 = vmatprep.mubr.f32.mxu0 0.0
      %8006 = vmatmul.mubr.f32.gmra.mrb[0].mxu0 %v7926
      %v8007 = vpop.f32.mrb[0].mxu0
      %v8008 = vadd.f32 0.0, %v8007
      %v8009 = vpop.f32.mrb[0].mxu0
      %8010 = vmatprep.mubr.f32.mxu0 0.0
      %8011 = vmatmul.mubr.f32.gmra.mrb[0].mxu0 %v7929
      %v8012 = vpop.f32.mrb[0].mxu0
      %v8013 = vadd.f32 0.0, %v8012
      %v8014 = vpop.f32.mrb[0].mxu0
      %8015 = vdwg.mxu0
      %8016 = vmatprep.subr.mxu0 0.0
      %8017 = vmatpush1.msra.mxu0 %v7576
      %8018 = vmatprep.subr.mxu0 0.0
      %8019 = vmatpush1.msra.mxu0 %v7579
      %8020 = vmatprep.subr.mxu0 0.0
      %8021 = vmatpush1.msra.mxu0 0.0
      %8022 = vmatprep.subr.mxu0 0.0
      %8023 = vmatpush1.msra.mxu0 0.0
      %8024 = vmatprep.subr.mxu0 0.0
      %8025 = vmatpush1.msra.mxu0 0.0
      %8026 = vmatprep.subr.mxu0 0.0
      %8027 = vmatpush1.msra.mxu0 0.0
      %8028 = vmatprep.subr.mxu0 0.0
      %8029 = vmatpush1.msra.mxu0 0.0
      %8030 = vmatprep.subr.mxu0 0.0
      %8031 = vmatpush1.msra.mxu0 0.0
      %8032 = vmatprep.subr.mxu0 0.0
      %8033 = vmatpush1.msra.mxu0 0.0
      %8034 = vmatprep.subr.mxu0 0.0
      %8035 = vmatpush1.msra.mxu0 0.0
      %8036 = vmatprep.subr.mxu0 0.0
      %8037 = vmatpush1.msra.mxu0 0.0
      %8038 = vmatprep.subr.mxu0 0.0
      %8039 = vmatpush1.msra.mxu0 0.0
      %8040 = vmatprep.subr.mxu0 0.0
      %8041 = vmatpush1.msra.mxu0 0.0
      %8042 = vmatprep.subr.mxu0 0.0
      %8043 = vmatpush1.msra.mxu0 0.0
      %8044 = vmatprep.subr.mxu0 0.0
      %8045 = vmatpush1.msra.mxu0 0.0
      %8046 = vmatprep.subr.mxu0 0.0
      %8047 = vmatpush1.msra.mxu0 0.0
      %8048 = vmatprep.subr.mxu0 0.0
      %8049 = vmatpush1.msra.mxu0 0.0
      %8050 = vmatprep.subr.mxu0 0.0
      %8051 = vmatpush1.msra.mxu0 0.0
      %8052 = vmatprep.subr.mxu0 0.0
      %8053 = vmatpush1.msra.mxu0 0.0
      %8054 = vmatprep.subr.mxu0 0.0
      %8055 = vmatpush1.msra.mxu0 0.0
      %8056 = vmatprep.subr.mxu0 0.0
      %8057 = vmatpush1.msra.mxu0 0.0
      %8058 = vmatprep.subr.mxu0 0.0
      %8059 = vmatpush1.msra.mxu0 0.0
      %8060 = vmatprep.subr.mxu0 0.0
      %8061 = vmatpush1.msra.mxu0 0.0
      %8062 = vmatprep.subr.mxu0 0.0
      %8063 = vmatpush1.msra.mxu0 0.0
      %8064 = vmatprep.subr.mxu0 0.0
      %8065 = vmatpush1.msra.mxu0 0.0
      %8066 = vmatprep.subr.mxu0 0.0
      %8067 = vmatpush1.msra.mxu0 0.0
      %8068 = vmatprep.subr.mxu0 0.0
      %8069 = vmatpush1.msra.mxu0 0.0
      %8070 = vmatprep.subr.mxu0 0.0
      %8071 = vmatpush1.msra.mxu0 0.0
      %8072 = vmatprep.subr.mxu0 0.0
      %8073 = vmatpush1.msra.mxu0 0.0
      %8074 = vmatprep.subr.mxu0 0.0
      %8075 = vmatpush1.msra.mxu0 0.0
      %8076 = vmatprep.subr.mxu0 0.0
      %8077 = vmatpush1.msra.mxu0 0.0
      %8078 = vmatprep.subr.mxu0 0.0
      %8079 = vmatpush1.msra.mxu0 0.0
      %8080 = vmatprep.mubr.f32.mxu0 0.0
      %8081 = vmatmul.mubr.f32.gmra.mrb[0].mxu0 %v7920
      %v8082 = vpop.f32.mrb[0].mxu0
      %v8083 = vadd.f32 0.0, %v8082
      %v8084 = vpop.f32.mrb[0].mxu0
      %8085 = vmatprep.mubr.f32.mxu0 0.0
      %8086 = vmatmul.mubr.f32.gmra.mrb[0].mxu0 %v7923
      %v8087 = vpop.f32.mrb[0].mxu0
      %v8088 = vadd.f32 0.0, %v8087
      %v8089 = vpop.f32.mrb[0].mxu0
      %8090 = vmatprep.mubr.f32.mxu0 0.0
      %8091 = vmatmul.mubr.f32.gmra.mrb[0].mxu0 %v7926
      %v8092 = vpop.f32.mrb[0].mxu0
      %v8093 = vadd.f32 0.0, %v8092
      %v8094 = vpop.f32.mrb[0].mxu0
      %8095 = vmatprep.mubr.f32.mxu0 0.0
      %8096 = vmatmul.mubr.f32.gmra.mrb[0].mxu0 %v7929
      %v8097 = vpop.f32.mrb[0].mxu0
      %v8098 = vadd.f32 0.0, %v8097
      %v8099 = vpop.f32.mrb[0].mxu0
      %8100 = vdwg.mxu0
      %v8101 = vmax.f32 %v7998, %v8083
      %v8102 = vmax.f32 %v8003, %v8088
      %v8103 = vmax.f32 %v8008, %v8093
      %v8104 = vmax.f32 %v8013, %v8098
      %v8105 = vmax.f32 %v8101, 0.0
      %v8106 = vmax.f32 %v8102, 0.0
      %v8107 = vmax.f32 %v8103, 0.0
      %v8108 = vmax.f32 %v8104, 0.0
      %vm8109 = vcmask 48128
      %8110 = vst.msk [vmem:[%s440] sm:$0xff] %vm8109, %v7670
      %8111 = vst.msk [vmem:[%s440 + $0x8] sm:$0xff] %vm8109, %v7671
      %8112 = vst.msk [vmem:[%s440 + $0x10] sm:$0xff] %vm8109, %v7672
      %8113 = vst.msk [vmem:[%s440 + $0x18] sm:$0xff] %vm8109, %v7673
      %8118 = vrot.lane.b32.xlu0 %v8105, 6
      %v8119 = vpop.permute.xlu0 %8118
      %8120 = vrot.lane.b32.xlu0 %v8106, 6
      %v8121 = vpop.permute.xlu0 %8120
      %8122 = vrot.lane.b32.xlu0 %v8107, 6
      %v8123 = vpop.permute.xlu0 %8122
      %8124 = vrot.lane.b32.xlu0 %v8108, 6
      %v8125 = vpop.permute.xlu0 %8124
      %vm8130 = vcmask 97328
      %8131 = vst.msk [vmem:[%s440] sm:$0xff] %vm8130, %v8119
      %8132 = vst.msk [vmem:[%s440 + $0x8] sm:$0xff] %vm8130, %v8121
      %8133 = vst.msk [vmem:[%s440 + $0x10] sm:$0xff] %vm8130, %v8123
      %8134 = vst.msk [vmem:[%s440 + $0x18] sm:$0xff] %vm8130, %v8125
      %p8135 = scmp.lt.s32.totalorder %s24, 1
      %s8136 = scalar_select %p8135, %s24, 1
      %s8137 = smul.addr %s8136, 4
      %s8138 = smul.addr %s8137, 8
      %s8139 = scalar_lea.vmem %s13, %s8138
      // Predicated region
      $region73: #{gcn_forward.2} parent=71 // pred_check
        %p8140 = pneg %p320
      $region74: #{gcn_forward.2} parent=71 // pred_check_branch
        %8142 = sbr.rel (%p8140) target = $region76
      $region75: #{gcn_forward.2} parent=71 // pred_region
        _
      $region76: #{gcn_forward.2} parent=71 // pred_fallthru
        _
    $region72: #{gcn_forward.2} parent=5 // pred_fallthru
      _
    %p8143 = scmp.le.s32.totalorder 2, %s19
    // Predicated region
    $region77: #{gcn_forward.2} parent=5 // pred_check
      %p8144 = pneg %p8143
    $region78: #{gcn_forward.2} parent=5 // pred_check_branch
      %8146 = sbr.rel (%p8144) target = $region80
    $region79: #{gcn_forward.2} parent=5 // pred_region
      %s8147 = ssub.s32 %s19, 2
      // Predicated region
      $region81: #{gcn_forward.2} parent=79 // pred_check
        %p8148 = pneg %p326
      $region82: #{gcn_forward.2} parent=79 // pred_check_branch
        %8150 = sbr.rel (%p8148) target = $region84
      $region83: #{gcn_forward.2} parent=79 // pred_region
        %p8151 = scmp.lt.s32.totalorder %s25, 1
        %s8152 = scalar_select %p8151, %s25, 1
        %s8153 = smul.addr %s8152, 4
        %s8154 = smul.addr %s8153, 8
        %s8155 = scalar_lea.vmem %s13, %s8154
      $region84: #{gcn_forward.2} parent=79 // pred_fallthru
        _
    $region80: #{gcn_forward.2} parent=5 // pred_fallthru
      _
  $region6: #{gcn_forward.2} parent=0 // loop_footer
    %s23 = sadd.s32 1, %s19
  $region7: #{gcn_forward.2} parent=0 // loop_footer_branch
    %18 = sbr.rel target = $region3
  $region8: #{gcn_forward.2} parent=0 // loop_exit
    _

</llo_original>
